<compile_context>
chip_gen: v5e
topology: v5e:2x2
jax: 0.10.0
libtpu: 0.0.40
codegen_flags: <defaults>
</compile_context>

<pallas_src>
import jax
import jax.numpy as jnp
from jax.experimental import pallas as pl
from jax.experimental.pallas import tpu as pltpu

# ---- model hyper-parameters (match the PyTorch module) ----------------------
H = 128            # annotate_embed_size (LSTM hidden size per direction)
VOCAB = 20         # synthetic vocabulary size
EMB_DIM = 32       # input_embeddings.size()[1]
OUTPUT_SIZE = 16   # output_size
BATCH = 2
SEQ = 8

B_PAD = 8          # pad batch (sublane dim) to a full 8-sublane vreg
OUT_PAD = 128      # pad logits lane dim to 128 for unmasked stores

# PyTorch gate block order in the 4H axis: i, f, g, o.
# Fused 8H column order used by the kernel (blocks of width H):
#   [i_f, i_b, f_f, f_b, o_f, o_b, g_f, g_b]
_FWD_GATE_OF_BLOCK = (0, None, 1, None, 3, None, 2, None)
_BWD_GATE_OF_BLOCK = (None, 0, None, 1, None, 3, None, 2)


# ---- Pallas kernel -----------------------------------------------------------
def classifier_kernel(x0_ref,
                      w_in0_ref, b_in0_ref, w_rec0_ref,
                      w_in1_ref, b_in1_ref, w_rec1_ref,
                      w1_ref, b1_ref, w2_ref, b2_ref, w3_ref, b3_ref,
                      out_ref):
    T = x0_ref.shape[0] // B_PAD

    def fused_bilstm(x_all, w_in, b_in, w_rec):
        """x_all: (T*B_PAD, D_in) time-major slab -> per-step fwd/bwd outputs."""
        # One MXU-efficient matmul for ALL input projections, bias folded in.
        xp = jnp.dot(x_all, w_in, preferred_element_type=jnp.float32) + b_in

        h = jnp.zeros((B_PAD, 2 * H), jnp.float32)   # [h_fwd | h_bwd]
        c = jnp.zeros((B_PAD, 2 * H), jnp.float32)   # [c_fwd | c_bwd]
        outs_f, outs_b = [], []
        for s in range(T):
            # fwd direction consumes time s, bwd direction consumes time T-1-s
            a = xp[s * B_PAD:(s + 1) * B_PAD, :]
            r = xp[(T - 1 - s) * B_PAD:(T - s) * B_PAD, :]
            xp_step = jnp.concatenate(
                [a[:, 0 * H:1 * H], r[:, 1 * H:2 * H],
                 a[:, 2 * H:3 * H], r[:, 3 * H:4 * H],
                 a[:, 4 * H:5 * H], r[:, 5 * H:6 * H],
                 a[:, 6 * H:7 * H], r[:, 7 * H:8 * H]], axis=1)

            # single fused recurrent matmul for BOTH directions (block w_rec)
            gates = xp_step + jnp.dot(h, w_rec, preferred_element_type=jnp.float32)

            sg = jax.nn.sigmoid(gates[:, 0:6 * H])   # i/f/o for both directions
            g = jnp.tanh(gates[:, 6 * H:8 * H])      # g for both directions
            i = sg[:, 0:2 * H]
            f = sg[:, 2 * H:4 * H]
            o = sg[:, 4 * H:6 * H]

            c = f * c + i * g
            h = o * jnp.tanh(c)

            outs_f.append(h[:, :H])     # fwd output at time s
            outs_b.append(h[:, H:])     # bwd output at time T-1-s
        return outs_f, outs_b

    # layer 0
    outs_f0, outs_b0 = fused_bilstm(
        x0_ref[...], w_in0_ref[...], b_in0_ref[...], w_rec0_ref[...])
    # stack layer-0 per-time outputs into one (T*B_PAD, 2H) slab for layer 1
    x1 = jnp.concatenate(
        [jnp.concatenate([outs_f0[t], outs_b0[T - 1 - t]], axis=1)
         for t in range(T)], axis=0)
    # layer 1
    outs_f1, outs_b1 = fused_bilstm(
        x1, w_in1_ref[...], b_in1_ref[...], w_rec1_ref[...])

    # encoded_x = x[:, 0, :] + x[:, -1, :]
    out_t0 = jnp.concatenate([outs_f1[0], outs_b1[T - 1]], axis=1)
    out_tl = jnp.concatenate([outs_f1[T - 1], outs_b1[0]], axis=1)
    encoded = out_t0 + out_tl                                        # (B_PAD, 2H)

    # MLP head: Linear(256,128)+ReLU -> Linear(128,256)+ReLU -> Linear(256,out)
    hm = jnp.dot(encoded, w1_ref[...], preferred_element_type=jnp.float32) + b1_ref[...]
    hm = jnp.maximum(hm, 0.0)
    hm = jnp.dot(hm, w2_ref[...], preferred_element_type=jnp.float32) + b2_ref[...]
    hm = jnp.maximum(hm, 0.0)
    out_ref[...] = (jnp.dot(hm, w3_ref[...], preferred_element_type=jnp.float32)
                    + b3_ref[...])


# ---- parameter fusion / permutation / padding (plain JAX glue) ---------------
def _blk(w, j):
    return w[:, j * H:(j + 1) * H]


def _fuse_bilstm_params(w_ih_f, w_hh_f, b_f, w_ih_b, w_hh_b, b_b):
    """Build fused input-projection, bias and block-structured recurrent weight."""
    in_cols, b_cols, rec_cols = [], [], []
    zeros_h = jnp.zeros((H, H), jnp.float32)
    for k in range(8):
        gf, gb = _FWD_GATE_OF_BLOCK[k], _BWD_GATE_OF_BLOCK[k]
        if gf is not None:          # block belongs to the forward direction
            in_cols.append(_blk(w_ih_f, gf))
            b_cols.append(_blk(b_f, gf))
            rec_cols.append(jnp.concatenate([_blk(w_hh_f, gf), zeros_h], axis=0))
        else:                       # block belongs to the backward direction
            in_cols.append(_blk(w_ih_b, gb))
            b_cols.append(_blk(b_b, gb))
            rec_cols.append(jnp.concatenate([zeros_h, _blk(w_hh_b, gb)], axis=0))
    w_in = jnp.concatenate(in_cols, axis=1)     # (D_in, 8H)
    b_in = jnp.concatenate(b_cols, axis=1)      # (1, 8H)
    w_rec = jnp.concatenate(rec_cols, axis=1)   # (2H, 8H)
    return w_in, b_in, w_rec


def prepare_kernel_params(p):
    w_in0, b_in0, w_rec0 = _fuse_bilstm_params(
        p["w_ih_l0f"], p["w_hh_l0f"], p["b_l0f"],
        p["w_ih_l0b"], p["w_hh_l0b"], p["b_l0b"])
    w_in1, b_in1, w_rec1 = _fuse_bilstm_params(
        p["w_ih_l1f"], p["w_hh_l1f"], p["b_l1f"],
        p["w_ih_l1b"], p["w_hh_l1b"], p["b_l1b"])
    w3p = jnp.pad(p["w3"], ((0, 0), (0, OUT_PAD - OUTPUT_SIZE)))
    b3p = jnp.pad(p["b3"], ((0, 0), (0, OUT_PAD - OUTPUT_SIZE)))
    return (w_in0, b_in0, w_rec0, w_in1, b_in1, w_rec1,
            p["w1"], p["b1"], p["w2"], p["b2"], w3p, b3p)


# ---- wrapper -----------------------------------------------------------------
def activity_classifier(annotate, params):
    """annotate: (B, T) int32 token ids."""
    B, T = annotate.shape
    # embedding lookup (gather) is glue, done in plain JAX
    emb = params["embedding"][annotate]                      # (B, T, D)
    e = jnp.transpose(emb, (1, 0, 2)).astype(jnp.float32)    # (T, B, D) time-major
    e = jnp.pad(e, ((0, 0), (0, B_PAD - B), (0, 0)))         # pad batch -> full sublanes
    x0 = e.reshape(T * B_PAD, EMB_DIM)                       # lane-dense stacked slab

    kp = prepare_kernel_params(params)
    vmem = pl.BlockSpec(memory_space=pltpu.MemorySpace.VMEM)

    out = pl.pallas_call(
        classifier_kernel,
        out_shape=jax.ShapeDtypeStruct((B_PAD, OUT_PAD), jnp.float32),
        in_specs=[vmem] * (1 + len(kp)),
        out_specs=vmem,
    )(x0, *kp)
    return out[:B, :OUTPUT_SIZE]


# ---- pure-JAX reference (original un-fused math, PyTorch gate order) ----------
def _lstm_cell_ref(x, h, c, w_ih, w_hh, b):
    gates = x @ w_ih + h @ w_hh + b
    i = jax.nn.sigmoid(gates[:, 0 * H:1 * H])
    f = jax.nn.sigmoid(gates[:, 1 * H:2 * H])
    g = jnp.tanh(gates[:, 2 * H:3 * H])
    o = jax.nn.sigmoid(gates[:, 3 * H:4 * H])
    c_new = f * c + i * g
    return o * jnp.tanh(c_new), c_new


def _bilstm_layer_ref(xs, w_ih_f, w_hh_f, b_f, w_ih_b, w_hh_b, b_b):
    T = len(xs)
    B = xs[0].shape[0]
    h = jnp.zeros((B, H), jnp.float32); c = jnp.zeros((B, H), jnp.float32)
    fwd = []
    for t in range(T):
        h, c = _lstm_cell_ref(xs[t], h, c, w_ih_f, w_hh_f, b_f)
        fwd.append(h)
    h = jnp.zeros((B, H), jnp.float32); c = jnp.zeros((B, H), jnp.float32)
    bwd = [None] * T
    for t in range(T - 1, -1, -1):
        h, c = _lstm_cell_ref(xs[t], h, c, w_ih_b, w_hh_b, b_b)
        bwd[t] = h
    return [jnp.concatenate([fwd[t], bwd[t]], axis=-1) for t in range(T)]


def reference_forward(annotate, p):
    emb = p["embedding"][annotate]
    e = jnp.transpose(emb, (1, 0, 2)).astype(jnp.float32)
    T = e.shape[0]
    xs0 = [e[t] for t in range(T)]
    xs1 = _bilstm_layer_ref(xs0, p["w_ih_l0f"], p["w_hh_l0f"], p["b_l0f"],
                            p["w_ih_l0b"], p["w_hh_l0b"], p["b_l0b"])
    xs2 = _bilstm_layer_ref(xs1, p["w_ih_l1f"], p["w_hh_l1f"], p["b_l1f"],
                            p["w_ih_l1b"], p["w_hh_l1b"], p["b_l1b"])
    enc = xs2[0] + xs2[-1]
    h = jax.nn.relu(enc @ p["w1"] + p["b1"])
    h = jax.nn.relu(h @ p["w2"] + p["b2"])
    return h @ p["w3"] + p["b3"]


# ---- deterministic parameter init ---------------------------------------------
def make_params(key):
    shapes = {
        "embedding": (VOCAB, EMB_DIM),
        # layer 0 (input size = EMB_DIM), forward / backward
        "w_ih_l0f": (EMB_DIM, 4 * H), "w_hh_l0f": (H, 4 * H), "b_l0f": (1, 4 * H),
        "w_ih_l0b": (EMB_DIM, 4 * H), "w_hh_l0b": (H, 4 * H), "b_l0b": (1, 4 * H),
        # layer 1 (input size = 2H), forward / backward
        "w_ih_l1f": (2 * H, 4 * H), "w_hh_l1f": (H, 4 * H), "b_l1f": (1, 4 * H),
        "w_ih_l1b": (2 * H, 4 * H), "w_hh_l1b": (H, 4 * H), "b_l1b": (1, 4 * H),
        # MLP head
        "w1": (2 * H, 128), "b1": (1, 128),
        "w2": (128, 256), "b2": (1, 256),
        "w3": (256, OUTPUT_SIZE), "b3": (1, OUTPUT_SIZE),
    }
    keys = jax.random.split(key, len(shapes))
    params = {}
    for k, (name, shape) in zip(keys, sorted(shapes.items())):
        params[name] = 0.08 * jax.random.normal(k, shape, jnp.float32)
    return params


if __name__ == "__main__":
    root = jax.random.PRNGKey(0)
    k_params, k_tokens = jax.random.split(root)

    params = make_params(k_params)
    annotate = jax.random.randint(k_tokens, (BATCH, SEQ), 0, VOCAB, dtype=jnp.int32)

    out = activity_classifier(annotate, params)
    out = jax.block_until_ready(out)

    ref = jax.block_until_ready(reference_forward(annotate, params))
    assert out.shape == (BATCH, OUTPUT_SIZE)
    assert jnp.allclose(out, ref, rtol=1e-3, atol=1e-3)

    print("KERNEL_OK")
</pallas_src>

<mosaic_0001>
module attributes {stable_mosaic.version = 11 : i64} {
  func.func @classifier_kernel(%arg0: memref<64x32xf32, #tpu.memory_space<vmem>>, %arg1: memref<32x1024xf32, #tpu.memory_space<vmem>>, %arg2: memref<1x1024xf32, #tpu.memory_space<vmem>>, %arg3: memref<256x1024xf32, #tpu.memory_space<vmem>>, %arg4: memref<256x1024xf32, #tpu.memory_space<vmem>>, %arg5: memref<1x1024xf32, #tpu.memory_space<vmem>>, %arg6: memref<256x1024xf32, #tpu.memory_space<vmem>>, %arg7: memref<256x128xf32, #tpu.memory_space<vmem>>, %arg8: memref<1x128xf32, #tpu.memory_space<vmem>>, %arg9: memref<128x256xf32, #tpu.memory_space<vmem>>, %arg10: memref<1x256xf32, #tpu.memory_space<vmem>>, %arg11: memref<256x128xf32, #tpu.memory_space<vmem>>, %arg12: memref<1x128xf32, #tpu.memory_space<vmem>>, %arg13: memref<8x128xf32, #tpu.memory_space<vmem>>) attributes {dimension_semantics = [], scalar_prefetch = 0 : i64, scratch_operands = 0 : i64, tpu.core_type = #tpu.core_type<tc>} {
    %c0 = arith.constant 0 : index
    %c0_0 = arith.constant 0 : index
    %0 = vector.load %arg0[%c0, %c0_0] : memref<64x32xf32, #tpu.memory_space<vmem>>, vector<64x32xf32>
    %c0_1 = arith.constant 0 : index
    %c0_2 = arith.constant 0 : index
    %1 = vector.load %arg1[%c0_1, %c0_2] : memref<32x1024xf32, #tpu.memory_space<vmem>>, vector<32x1024xf32>
    %c0_3 = arith.constant 0 : index
    %c0_4 = arith.constant 0 : index
    %2 = vector.load %arg2[%c0_3, %c0_4] : memref<1x1024xf32, #tpu.memory_space<vmem>>, vector<1x1024xf32>
    %c0_5 = arith.constant 0 : index
    %c0_6 = arith.constant 0 : index
    %3 = vector.load %arg3[%c0_5, %c0_6] : memref<256x1024xf32, #tpu.memory_space<vmem>>, vector<256x1024xf32>
    %cst = arith.constant dense<0.000000e+00> : vector<64x1024xf32>
    %4 = tpu.matmul %0, %1, %cst {dimension_numbers = #tpu.dot_dimension_numbers<[1], [0], [0], [1], [0, 0, 1, 1], [], []>} : vector<64x32xf32>, vector<32x1024xf32>, vector<64x1024xf32> -> vector<64x1024xf32>
    %5 = vector.broadcast %2 : vector<1x1024xf32> to vector<64x1024xf32>
    %6 = arith.addf %4, %5 : vector<64x1024xf32>
    %cst_7 = arith.constant 0.000000e+00 : f32
    %7 = vector.broadcast %cst_7 : f32 to vector<8x256xf32>
    %cst_8 = arith.constant 0.000000e+00 : f32
    %8 = vector.broadcast %cst_8 : f32 to vector<8x256xf32>
    %9 = vector.extract_strided_slice %6 {offsets = [0, 0], sizes = [8, 1024], strides = [1, 1]} : vector<64x1024xf32> to vector<8x1024xf32>
    %10 = vector.extract_strided_slice %6 {offsets = [56, 0], sizes = [8, 1024], strides = [1, 1]} : vector<64x1024xf32> to vector<8x1024xf32>
    %11 = vector.extract_strided_slice %9 {offsets = [0, 0], sizes = [8, 128], strides = [1, 1]} : vector<8x1024xf32> to vector<8x128xf32>
    %12 = vector.extract_strided_slice %10 {offsets = [0, 128], sizes = [8, 128], strides = [1, 1]} : vector<8x1024xf32> to vector<8x128xf32>
    %13 = vector.extract_strided_slice %9 {offsets = [0, 256], sizes = [8, 128], strides = [1, 1]} : vector<8x1024xf32> to vector<8x128xf32>
    %14 = vector.extract_strided_slice %10 {offsets = [0, 384], sizes = [8, 128], strides = [1, 1]} : vector<8x1024xf32> to vector<8x128xf32>
    %15 = vector.extract_strided_slice %9 {offsets = [0, 512], sizes = [8, 128], strides = [1, 1]} : vector<8x1024xf32> to vector<8x128xf32>
    %16 = vector.extract_strided_slice %10 {offsets = [0, 640], sizes = [8, 128], strides = [1, 1]} : vector<8x1024xf32> to vector<8x128xf32>
    %17 = vector.extract_strided_slice %9 {offsets = [0, 768], sizes = [8, 128], strides = [1, 1]} : vector<8x1024xf32> to vector<8x128xf32>
    %18 = vector.extract_strided_slice %10 {offsets = [0, 896], sizes = [8, 128], strides = [1, 1]} : vector<8x1024xf32> to vector<8x128xf32>
    %19 = tpu.concatenate %11, %12, %13, %14, %15, %16, %17, %18 in 1 : vector<8x128xf32>, vector<8x128xf32>, vector<8x128xf32>, vector<8x128xf32>, vector<8x128xf32>, vector<8x128xf32>, vector<8x128xf32>, vector<8x128xf32> -> vector<8x1024xf32>
    %cst_9 = arith.constant dense<0.000000e+00> : vector<8x1024xf32>
    %20 = tpu.matmul %7, %3, %cst_9 {dimension_numbers = #tpu.dot_dimension_numbers<[1], [0], [0], [1], [0, 0, 1, 1], [], []>} : vector<8x256xf32>, vector<256x1024xf32>, vector<8x1024xf32> -> vector<8x1024xf32>
    %21 = arith.addf %19, %20 : vector<8x1024xf32>
    %22 = vector.extract_strided_slice %21 {offsets = [0, 0], sizes = [8, 768], strides = [1, 1]} : vector<8x1024xf32> to vector<8x768xf32>
    %23 = arith.negf %22 : vector<8x768xf32>
    %24 = math.exp %23 : vector<8x768xf32>
    %cst_10 = arith.constant 1.000000e+00 : f32
    %25 = vector.broadcast %cst_10 : f32 to vector<8x768xf32>
    %26 = arith.addf %25, %24 : vector<8x768xf32>
    %27 = arith.divf %25, %26 : vector<8x768xf32>
    %28 = vector.extract_strided_slice %21 {offsets = [0, 768], sizes = [8, 256], strides = [1, 1]} : vector<8x1024xf32> to vector<8x256xf32>
    %29 = math.tanh %28 : vector<8x256xf32>
    %30 = vector.extract_strided_slice %27 {offsets = [0, 0], sizes = [8, 256], strides = [1, 1]} : vector<8x768xf32> to vector<8x256xf32>
    %31 = vector.extract_strided_slice %27 {offsets = [0, 256], sizes = [8, 256], strides = [1, 1]} : vector<8x768xf32> to vector<8x256xf32>
    %32 = vector.extract_strided_slice %27 {offsets = [0, 512], sizes = [8, 256], strides = [1, 1]} : vector<8x768xf32> to vector<8x256xf32>
    %33 = arith.mulf %31, %8 : vector<8x256xf32>
    %34 = arith.mulf %30, %29 : vector<8x256xf32>
    %35 = arith.addf %33, %34 : vector<8x256xf32>
    %36 = math.tanh %35 : vector<8x256xf32>
    %37 = arith.mulf %32, %36 : vector<8x256xf32>
    %38 = vector.extract_strided_slice %37 {offsets = [0, 0], sizes = [8, 128], strides = [1, 1]} : vector<8x256xf32> to vector<8x128xf32>
    %39 = vector.extract_strided_slice %37 {offsets = [0, 128], sizes = [8, 128], strides = [1, 1]} : vector<8x256xf32> to vector<8x128xf32>
    %40 = vector.extract_strided_slice %6 {offsets = [8, 0], sizes = [8, 1024], strides = [1, 1]} : vector<64x1024xf32> to vector<8x1024xf32>
    %41 = vector.extract_strided_slice %6 {offsets = [48, 0], sizes = [8, 1024], strides = [1, 1]} : vector<64x1024xf32> to vector<8x1024xf32>
    %42 = vector.extract_strided_slice %40 {offsets = [0, 0], sizes = [8, 128], strides = [1, 1]} : vector<8x1024xf32> to vector<8x128xf32>
    %43 = vector.extract_strided_slice %41 {offsets = [0, 128], sizes = [8, 128], strides = [1, 1]} : vector<8x1024xf32> to vector<8x128xf32>
    %44 = vector.extract_strided_slice %40 {offsets = [0, 256], sizes = [8, 128], strides = [1, 1]} : vector<8x1024xf32> to vector<8x128xf32>
    %45 = vector.extract_strided_slice %41 {offsets = [0, 384], sizes = [8, 128], strides = [1, 1]} : vector<8x1024xf32> to vector<8x128xf32>
    %46 = vector.extract_strided_slice %40 {offsets = [0, 512], sizes = [8, 128], strides = [1, 1]} : vector<8x1024xf32> to vector<8x128xf32>
    %47 = vector.extract_strided_slice %41 {offsets = [0, 640], sizes = [8, 128], strides = [1, 1]} : vector<8x1024xf32> to vector<8x128xf32>
    %48 = vector.extract_strided_slice %40 {offsets = [0, 768], sizes = [8, 128], strides = [1, 1]} : vector<8x1024xf32> to vector<8x128xf32>
    %49 = vector.extract_strided_slice %41 {offsets = [0, 896], sizes = [8, 128], strides = [1, 1]} : vector<8x1024xf32> to vector<8x128xf32>
    %50 = tpu.concatenate %42, %43, %44, %45, %46, %47, %48, %49 in 1 : vector<8x128xf32>, vector<8x128xf32>, vector<8x128xf32>, vector<8x128xf32>, vector<8x128xf32>, vector<8x128xf32>, vector<8x128xf32>, vector<8x128xf32> -> vector<8x1024xf32>
    %cst_11 = arith.constant dense<0.000000e+00> : vector<8x1024xf32>
    %51 = tpu.matmul %37, %3, %cst_11 {dimension_numbers = #tpu.dot_dimension_numbers<[1], [0], [0], [1], [0, 0, 1, 1], [], []>} : vector<8x256xf32>, vector<256x1024xf32>, vector<8x1024xf32> -> vector<8x1024xf32>
    %52 = arith.addf %50, %51 : vector<8x1024xf32>
    %53 = vector.extract_strided_slice %52 {offsets = [0, 0], sizes = [8, 768], strides = [1, 1]} : vector<8x1024xf32> to vector<8x768xf32>
    %54 = arith.negf %53 : vector<8x768xf32>
    %55 = math.exp %54 : vector<8x768xf32>
    %cst_12 = arith.constant 1.000000e+00 : f32
    %56 = vector.broadcast %cst_12 : f32 to vector<8x768xf32>
    %57 = arith.addf %56, %55 : vector<8x768xf32>
    %58 = arith.divf %56, %57 : vector<8x768xf32>
    %59 = vector.extract_strided_slice %52 {offsets = [0, 768], sizes = [8, 256], strides = [1, 1]} : vector<8x1024xf32> to vector<8x256xf32>
    %60 = math.tanh %59 : vector<8x256xf32>
    %61 = vector.extract_strided_slice %58 {offsets = [0, 0], sizes = [8, 256], strides = [1, 1]} : vector<8x768xf32> to vector<8x256xf32>
    %62 = vector.extract_strided_slice %58 {offsets = [0, 256], sizes = [8, 256], strides = [1, 1]} : vector<8x768xf32> to vector<8x256xf32>
    %63 = vector.extract_strided_slice %58 {offsets = [0, 512], sizes = [8, 256], strides = [1, 1]} : vector<8x768xf32> to vector<8x256xf32>
    %64 = arith.mulf %62, %35 : vector<8x256xf32>
    %65 = arith.mulf %61, %60 : vector<8x256xf32>
    %66 = arith.addf %64, %65 : vector<8x256xf32>
    %67 = math.tanh %66 : vector<8x256xf32>
    %68 = arith.mulf %63, %67 : vector<8x256xf32>
    %69 = vector.extract_strided_slice %68 {offsets = [0, 0], sizes = [8, 128], strides = [1, 1]} : vector<8x256xf32> to vector<8x128xf32>
    %70 = vector.extract_strided_slice %68 {offsets = [0, 128], sizes = [8, 128], strides = [1, 1]} : vector<8x256xf32> to vector<8x128xf32>
    %71 = vector.extract_strided_slice %6 {offsets = [16, 0], sizes = [8, 1024], strides = [1, 1]} : vector<64x1024xf32> to vector<8x1024xf32>
    %72 = vector.extract_strided_slice %6 {offsets = [40, 0], sizes = [8, 1024], strides = [1, 1]} : vector<64x1024xf32> to vector<8x1024xf32>
    %73 = vector.extract_strided_slice %71 {offsets = [0, 0], sizes = [8, 128], strides = [1, 1]} : vector<8x1024xf32> to vector<8x128xf32>
    %74 = vector.extract_strided_slice %72 {offsets = [0, 128], sizes = [8, 128], strides = [1, 1]} : vector<8x1024xf32> to vector<8x128xf32>
    %75 = vector.extract_strided_slice %71 {offsets = [0, 256], sizes = [8, 128], strides = [1, 1]} : vector<8x1024xf32> to vector<8x128xf32>
    %76 = vector.extract_strided_slice %72 {offsets = [0, 384], sizes = [8, 128], strides = [1, 1]} : vector<8x1024xf32> to vector<8x128xf32>
    %77 = vector.extract_strided_slice %71 {offsets = [0, 512], sizes = [8, 128], strides = [1, 1]} : vector<8x1024xf32> to vector<8x128xf32>
    %78 = vector.extract_strided_slice %72 {offsets = [0, 640], sizes = [8, 128], strides = [1, 1]} : vector<8x1024xf32> to vector<8x128xf32>
    %79 = vector.extract_strided_slice %71 {offsets = [0, 768], sizes = [8, 128], strides = [1, 1]} : vector<8x1024xf32> to vector<8x128xf32>
    %80 = vector.extract_strided_slice %72 {offsets = [0, 896], sizes = [8, 128], strides = [1, 1]} : vector<8x1024xf32> to vector<8x128xf32>
    %81 = tpu.concatenate %73, %74, %75, %76, %77, %78, %79, %80 in 1 : vector<8x128xf32>, vector<8x128xf32>, vector<8x128xf32>, vector<8x128xf32>, vector<8x128xf32>, vector<8x128xf32>, vector<8x128xf32>, vector<8x128xf32> -> vector<8x1024xf32>
    %cst_13 = arith.constant dense<0.000000e+00> : vector<8x1024xf32>
    %82 = tpu.matmul %68, %3, %cst_13 {dimension_numbers = #tpu.dot_dimension_numbers<[1], [0], [0], [1], [0, 0, 1, 1], [], []>} : vector<8x256xf32>, vector<256x1024xf32>, vector<8x1024xf32> -> vector<8x1024xf32>
    %83 = arith.addf %81, %82 : vector<8x1024xf32>
    %84 = vector.extract_strided_slice %83 {offsets = [0, 0], sizes = [8, 768], strides = [1, 1]} : vector<8x1024xf32> to vector<8x768xf32>
    %85 = arith.negf %84 : vector<8x768xf32>
    %86 = math.exp %85 : vector<8x768xf32>
    %cst_14 = arith.constant 1.000000e+00 : f32
    %87 = vector.broadcast %cst_14 : f32 to vector<8x768xf32>
    %88 = arith.addf %87, %86 : vector<8x768xf32>
    %89 = arith.divf %87, %88 : vector<8x768xf32>
    %90 = vector.extract_strided_slice %83 {offsets = [0, 768], sizes = [8, 256], strides = [1, 1]} : vector<8x1024xf32> to vector<8x256xf32>
    %91 = math.tanh %90 : vector<8x256xf32>
    %92 = vector.extract_strided_slice %89 {offsets = [0, 0], sizes = [8, 256], strides = [1, 1]} : vector<8x768xf32> to vector<8x256xf32>
    %93 = vector.extract_strided_slice %89 {offsets = [0, 256], sizes = [8, 256], strides = [1, 1]} : vector<8x768xf32> to vector<8x256xf32>
    %94 = vector.extract_strided_slice %89 {offsets = [0, 512], sizes = [8, 256], strides = [1, 1]} : vector<8x768xf32> to vector<8x256xf32>
    %95 = arith.mulf %93, %66 : vector<8x256xf32>
    %96 = arith.mulf %92, %91 : vector<8x256xf32>
    %97 = arith.addf %95, %96 : vector<8x256xf32>
    %98 = math.tanh %97 : vector<8x256xf32>
    %99 = arith.mulf %94, %98 : vector<8x256xf32>
    %100 = vector.extract_strided_slice %99 {offsets = [0, 0], sizes = [8, 128], strides = [1, 1]} : vector<8x256xf32> to vector<8x128xf32>
    %101 = vector.extract_strided_slice %99 {offsets = [0, 128], sizes = [8, 128], strides = [1, 1]} : vector<8x256xf32> to vector<8x128xf32>
    %102 = vector.extract_strided_slice %6 {offsets = [24, 0], sizes = [8, 1024], strides = [1, 1]} : vector<64x1024xf32> to vector<8x1024xf32>
    %103 = vector.extract_strided_slice %6 {offsets = [32, 0], sizes = [8, 1024], strides = [1, 1]} : vector<64x1024xf32> to vector<8x1024xf32>
    %104 = vector.extract_strided_slice %102 {offsets = [0, 0], sizes = [8, 128], strides = [1, 1]} : vector<8x1024xf32> to vector<8x128xf32>
    %105 = vector.extract_strided_slice %103 {offsets = [0, 128], sizes = [8, 128], strides = [1, 1]} : vector<8x1024xf32> to vector<8x128xf32>
    %106 = vector.extract_strided_slice %102 {offsets = [0, 256], sizes = [8, 128], strides = [1, 1]} : vector<8x1024xf32> to vector<8x128xf32>
    %107 = vector.extract_strided_slice %103 {offsets = [0, 384], sizes = [8, 128], strides = [1, 1]} : vector<8x1024xf32> to vector<8x128xf32>
    %108 = vector.extract_strided_slice %102 {offsets = [0, 512], sizes = [8, 128], strides = [1, 1]} : vector<8x1024xf32> to vector<8x128xf32>
    %109 = vector.extract_strided_slice %103 {offsets = [0, 640], sizes = [8, 128], strides = [1, 1]} : vector<8x1024xf32> to vector<8x128xf32>
    %110 = vector.extract_strided_slice %102 {offsets = [0, 768], sizes = [8, 128], strides = [1, 1]} : vector<8x1024xf32> to vector<8x128xf32>
    %111 = vector.extract_strided_slice %103 {offsets = [0, 896], sizes = [8, 128], strides = [1, 1]} : vector<8x1024xf32> to vector<8x128xf32>
    %112 = tpu.concatenate %104, %105, %106, %107, %108, %109, %110, %111 in 1 : vector<8x128xf32>, vector<8x128xf32>, vector<8x128xf32>, vector<8x128xf32>, vector<8x128xf32>, vector<8x128xf32>, vector<8x128xf32>, vector<8x128xf32> -> vector<8x1024xf32>
    %cst_15 = arith.constant dense<0.000000e+00> : vector<8x1024xf32>
    %113 = tpu.matmul %99, %3, %cst_15 {dimension_numbers = #tpu.dot_dimension_numbers<[1], [0], [0], [1], [0, 0, 1, 1], [], []>} : vector<8x256xf32>, vector<256x1024xf32>, vector<8x1024xf32> -> vector<8x1024xf32>
    %114 = arith.addf %112, %113 : vector<8x1024xf32>
    %115 = vector.extract_strided_slice %114 {offsets = [0, 0], sizes = [8, 768], strides = [1, 1]} : vector<8x1024xf32> to vector<8x768xf32>
    %116 = arith.negf %115 : vector<8x768xf32>
    %117 = math.exp %116 : vector<8x768xf32>
    %cst_16 = arith.constant 1.000000e+00 : f32
    %118 = vector.broadcast %cst_16 : f32 to vector<8x768xf32>
    %119 = arith.addf %118, %117 : vector<8x768xf32>
    %120 = arith.divf %118, %119 : vector<8x768xf32>
    %121 = vector.extract_strided_slice %114 {offsets = [0, 768], sizes = [8, 256], strides = [1, 1]} : vector<8x1024xf32> to vector<8x256xf32>
    %122 = math.tanh %121 : vector<8x256xf32>
    %123 = vector.extract_strided_slice %120 {offsets = [0, 0], sizes = [8, 256], strides = [1, 1]} : vector<8x768xf32> to vector<8x256xf32>
    %124 = vector.extract_strided_slice %120 {offsets = [0, 256], sizes = [8, 256], strides = [1, 1]} : vector<8x768xf32> to vector<8x256xf32>
    %125 = vector.extract_strided_slice %120 {offsets = [0, 512], sizes = [8, 256], strides = [1, 1]} : vector<8x768xf32> to vector<8x256xf32>
    %126 = arith.mulf %124, %97 : vector<8x256xf32>
    %127 = arith.mulf %123, %122 : vector<8x256xf32>
    %128 = arith.addf %126, %127 : vector<8x256xf32>
    %129 = math.tanh %128 : vector<8x256xf32>
    %130 = arith.mulf %125, %129 : vector<8x256xf32>
    %131 = vector.extract_strided_slice %130 {offsets = [0, 0], sizes = [8, 128], strides = [1, 1]} : vector<8x256xf32> to vector<8x128xf32>
    %132 = vector.extract_strided_slice %130 {offsets = [0, 128], sizes = [8, 128], strides = [1, 1]} : vector<8x256xf32> to vector<8x128xf32>
    %133 = vector.extract_strided_slice %6 {offsets = [32, 0], sizes = [8, 1024], strides = [1, 1]} : vector<64x1024xf32> to vector<8x1024xf32>
    %134 = vector.extract_strided_slice %6 {offsets = [24, 0], sizes = [8, 1024], strides = [1, 1]} : vector<64x1024xf32> to vector<8x1024xf32>
    %135 = vector.extract_strided_slice %133 {offsets = [0, 0], sizes = [8, 128], strides = [1, 1]} : vector<8x1024xf32> to vector<8x128xf32>
    %136 = vector.extract_strided_slice %134 {offsets = [0, 128], sizes = [8, 128], strides = [1, 1]} : vector<8x1024xf32> to vector<8x128xf32>
    %137 = vector.extract_strided_slice %133 {offsets = [0, 256], sizes = [8, 128], strides = [1, 1]} : vector<8x1024xf32> to vector<8x128xf32>
    %138 = vector.extract_strided_slice %134 {offsets = [0, 384], sizes = [8, 128], strides = [1, 1]} : vector<8x1024xf32> to vector<8x128xf32>
    %139 = vector.extract_strided_slice %133 {offsets = [0, 512], sizes = [8, 128], strides = [1, 1]} : vector<8x1024xf32> to vector<8x128xf32>
    %140 = vector.extract_strided_slice %134 {offsets = [0, 640], sizes = [8, 128], strides = [1, 1]} : vector<8x1024xf32> to vector<8x128xf32>
    %141 = vector.extract_strided_slice %133 {offsets = [0, 768], sizes = [8, 128], strides = [1, 1]} : vector<8x1024xf32> to vector<8x128xf32>
    %142 = vector.extract_strided_slice %134 {offsets = [0, 896], sizes = [8, 128], strides = [1, 1]} : vector<8x1024xf32> to vector<8x128xf32>
    %143 = tpu.concatenate %135, %136, %137, %138, %139, %140, %141, %142 in 1 : vector<8x128xf32>, vector<8x128xf32>, vector<8x128xf32>, vector<8x128xf32>, vector<8x128xf32>, vector<8x128xf32>, vector<8x128xf32>, vector<8x128xf32> -> vector<8x1024xf32>
    %cst_17 = arith.constant dense<0.000000e+00> : vector<8x1024xf32>
    %144 = tpu.matmul %130, %3, %cst_17 {dimension_numbers = #tpu.dot_dimension_numbers<[1], [0], [0], [1], [0, 0, 1, 1], [], []>} : vector<8x256xf32>, vector<256x1024xf32>, vector<8x1024xf32> -> vector<8x1024xf32>
    %145 = arith.addf %143, %144 : vector<8x1024xf32>
    %146 = vector.extract_strided_slice %145 {offsets = [0, 0], sizes = [8, 768], strides = [1, 1]} : vector<8x1024xf32> to vector<8x768xf32>
    %147 = arith.negf %146 : vector<8x768xf32>
    %148 = math.exp %147 : vector<8x768xf32>
    %cst_18 = arith.constant 1.000000e+00 : f32
    %149 = vector.broadcast %cst_18 : f32 to vector<8x768xf32>
    %150 = arith.addf %149, %148 : vector<8x768xf32>
    %151 = arith.divf %149, %150 : vector<8x768xf32>
    %152 = vector.extract_strided_slice %145 {offsets = [0, 768], sizes = [8, 256], strides = [1, 1]} : vector<8x1024xf32> to vector<8x256xf32>
    %153 = math.tanh %152 : vector<8x256xf32>
    %154 = vector.extract_strided_slice %151 {offsets = [0, 0], sizes = [8, 256], strides = [1, 1]} : vector<8x768xf32> to vector<8x256xf32>
    %155 = vector.extract_strided_slice %151 {offsets = [0, 256], sizes = [8, 256], strides = [1, 1]} : vector<8x768xf32> to vector<8x256xf32>
    %156 = vector.extract_strided_slice %151 {offsets = [0, 512], sizes = [8, 256], strides = [1, 1]} : vector<8x768xf32> to vector<8x256xf32>
    %157 = arith.mulf %155, %128 : vector<8x256xf32>
    %158 = arith.mulf %154, %153 : vector<8x256xf32>
    %159 = arith.addf %157, %158 : vector<8x256xf32>
    %160 = math.tanh %159 : vector<8x256xf32>
    %161 = arith.mulf %156, %160 : vector<8x256xf32>
    %162 = vector.extract_strided_slice %161 {offsets = [0, 0], sizes = [8, 128], strides = [1, 1]} : vector<8x256xf32> to vector<8x128xf32>
    %163 = vector.extract_strided_slice %161 {offsets = [0, 128], sizes = [8, 128], strides = [1, 1]} : vector<8x256xf32> to vector<8x128xf32>
    %164 = vector.extract_strided_slice %6 {offsets = [40, 0], sizes = [8, 1024], strides = [1, 1]} : vector<64x1024xf32> to vector<8x1024xf32>
    %165 = vector.extract_strided_slice %6 {offsets = [16, 0], sizes = [8, 1024], strides = [1, 1]} : vector<64x1024xf32> to vector<8x1024xf32>
    %166 = vector.extract_strided_slice %164 {offsets = [0, 0], sizes = [8, 128], strides = [1, 1]} : vector<8x1024xf32> to vector<8x128xf32>
    %167 = vector.extract_strided_slice %165 {offsets = [0, 128], sizes = [8, 128], strides = [1, 1]} : vector<8x1024xf32> to vector<8x128xf32>
    %168 = vector.extract_strided_slice %164 {offsets = [0, 256], sizes = [8, 128], strides = [1, 1]} : vector<8x1024xf32> to vector<8x128xf32>
    %169 = vector.extract_strided_slice %165 {offsets = [0, 384], sizes = [8, 128], strides = [1, 1]} : vector<8x1024xf32> to vector<8x128xf32>
    %170 = vector.extract_strided_slice %164 {offsets = [0, 512], sizes = [8, 128], strides = [1, 1]} : vector<8x1024xf32> to vector<8x128xf32>
    %171 = vector.extract_strided_slice %165 {offsets = [0, 640], sizes = [8, 128], strides = [1, 1]} : vector<8x1024xf32> to vector<8x128xf32>
    %172 = vector.extract_strided_slice %164 {offsets = [0, 768], sizes = [8, 128], strides = [1, 1]} : vector<8x1024xf32> to vector<8x128xf32>
    %173 = vector.extract_strided_slice %165 {offsets = [0, 896], sizes = [8, 128], strides = [1, 1]} : vector<8x1024xf32> to vector<8x128xf32>
    %174 = tpu.concatenate %166, %167, %168, %169, %170, %171, %172, %173 in 1 : vector<8x128xf32>, vector<8x128xf32>, vector<8x128xf32>, vector<8x128xf32>, vector<8x128xf32>, vector<8x128xf32>, vector<8x128xf32>, vector<8x128xf32> -> vector<8x1024xf32>
    %cst_19 = arith.constant dense<0.000000e+00> : vector<8x1024xf32>
    %175 = tpu.matmul %161, %3, %cst_19 {dimension_numbers = #tpu.dot_dimension_numbers<[1], [0], [0], [1], [0, 0, 1, 1], [], []>} : vector<8x256xf32>, vector<256x1024xf32>, vector<8x1024xf32> -> vector<8x1024xf32>
    %176 = arith.addf %174, %175 : vector<8x1024xf32>
    %177 = vector.extract_strided_slice %176 {offsets = [0, 0], sizes = [8, 768], strides = [1, 1]} : vector<8x1024xf32> to vector<8x768xf32>
    %178 = arith.negf %177 : vector<8x768xf32>
    %179 = math.exp %178 : vector<8x768xf32>
    %cst_20 = arith.constant 1.000000e+00 : f32
    %180 = vector.broadcast %cst_20 : f32 to vector<8x768xf32>
    %181 = arith.addf %180, %179 : vector<8x768xf32>
    %182 = arith.divf %180, %181 : vector<8x768xf32>
    %183 = vector.extract_strided_slice %176 {offsets = [0, 768], sizes = [8, 256], strides = [1, 1]} : vector<8x1024xf32> to vector<8x256xf32>
    %184 = math.tanh %183 : vector<8x256xf32>
    %185 = vector.extract_strided_slice %182 {offsets = [0, 0], sizes = [8, 256], strides = [1, 1]} : vector<8x768xf32> to vector<8x256xf32>
    %186 = vector.extract_strided_slice %182 {offsets = [0, 256], sizes = [8, 256], strides = [1, 1]} : vector<8x768xf32> to vector<8x256xf32>
    %187 = vector.extract_strided_slice %182 {offsets = [0, 512], sizes = [8, 256], strides = [1, 1]} : vector<8x768xf32> to vector<8x256xf32>
    %188 = arith.mulf %186, %159 : vector<8x256xf32>
    %189 = arith.mulf %185, %184 : vector<8x256xf32>
    %190 = arith.addf %188, %189 : vector<8x256xf32>
    %191 = math.tanh %190 : vector<8x256xf32>
    %192 = arith.mulf %187, %191 : vector<8x256xf32>
    %193 = vector.extract_strided_slice %192 {offsets = [0, 0], sizes = [8, 128], strides = [1, 1]} : vector<8x256xf32> to vector<8x128xf32>
    %194 = vector.extract_strided_slice %192 {offsets = [0, 128], sizes = [8, 128], strides = [1, 1]} : vector<8x256xf32> to vector<8x128xf32>
    %195 = vector.extract_strided_slice %6 {offsets = [48, 0], sizes = [8, 1024], strides = [1, 1]} : vector<64x1024xf32> to vector<8x1024xf32>
    %196 = vector.extract_strided_slice %6 {offsets = [8, 0], sizes = [8, 1024], strides = [1, 1]} : vector<64x1024xf32> to vector<8x1024xf32>
    %197 = vector.extract_strided_slice %195 {offsets = [0, 0], sizes = [8, 128], strides = [1, 1]} : vector<8x1024xf32> to vector<8x128xf32>
    %198 = vector.extract_strided_slice %196 {offsets = [0, 128], sizes = [8, 128], strides = [1, 1]} : vector<8x1024xf32> to vector<8x128xf32>
    %199 = vector.extract_strided_slice %195 {offsets = [0, 256], sizes = [8, 128], strides = [1, 1]} : vector<8x1024xf32> to vector<8x128xf32>
    %200 = vector.extract_strided_slice %196 {offsets = [0, 384], sizes = [8, 128], strides = [1, 1]} : vector<8x1024xf32> to vector<8x128xf32>
    %201 = vector.extract_strided_slice %195 {offsets = [0, 512], sizes = [8, 128], strides = [1, 1]} : vector<8x1024xf32> to vector<8x128xf32>
    %202 = vector.extract_strided_slice %196 {offsets = [0, 640], sizes = [8, 128], strides = [1, 1]} : vector<8x1024xf32> to vector<8x128xf32>
    %203 = vector.extract_strided_slice %195 {offsets = [0, 768], sizes = [8, 128], strides = [1, 1]} : vector<8x1024xf32> to vector<8x128xf32>
    %204 = vector.extract_strided_slice %196 {offsets = [0, 896], sizes = [8, 128], strides = [1, 1]} : vector<8x1024xf32> to vector<8x128xf32>
    %205 = tpu.concatenate %197, %198, %199, %200, %201, %202, %203, %204 in 1 : vector<8x128xf32>, vector<8x128xf32>, vector<8x128xf32>, vector<8x128xf32>, vector<8x128xf32>, vector<8x128xf32>, vector<8x128xf32>, vector<8x128xf32> -> vector<8x1024xf32>
    %cst_21 = arith.constant dense<0.000000e+00> : vector<8x1024xf32>
    %206 = tpu.matmul %192, %3, %cst_21 {dimension_numbers = #tpu.dot_dimension_numbers<[1], [0], [0], [1], [0, 0, 1, 1], [], []>} : vector<8x256xf32>, vector<256x1024xf32>, vector<8x1024xf32> -> vector<8x1024xf32>
    %207 = arith.addf %205, %206 : vector<8x1024xf32>
    %208 = vector.extract_strided_slice %207 {offsets = [0, 0], sizes = [8, 768], strides = [1, 1]} : vector<8x1024xf32> to vector<8x768xf32>
    %209 = arith.negf %208 : vector<8x768xf32>
    %210 = math.exp %209 : vector<8x768xf32>
    %cst_22 = arith.constant 1.000000e+00 : f32
    %211 = vector.broadcast %cst_22 : f32 to vector<8x768xf32>
    %212 = arith.addf %211, %210 : vector<8x768xf32>
    %213 = arith.divf %211, %212 : vector<8x768xf32>
    %214 = vector.extract_strided_slice %207 {offsets = [0, 768], sizes = [8, 256], strides = [1, 1]} : vector<8x1024xf32> to vector<8x256xf32>
    %215 = math.tanh %214 : vector<8x256xf32>
    %216 = vector.extract_strided_slice %213 {offsets = [0, 0], sizes = [8, 256], strides = [1, 1]} : vector<8x768xf32> to vector<8x256xf32>
    %217 = vector.extract_strided_slice %213 {offsets = [0, 256], sizes = [8, 256], strides = [1, 1]} : vector<8x768xf32> to vector<8x256xf32>
    %218 = vector.extract_strided_slice %213 {offsets = [0, 512], sizes = [8, 256], strides = [1, 1]} : vector<8x768xf32> to vector<8x256xf32>
    %219 = arith.mulf %217, %190 : vector<8x256xf32>
    %220 = arith.mulf %216, %215 : vector<8x256xf32>
    %221 = arith.addf %219, %220 : vector<8x256xf32>
    %222 = math.tanh %221 : vector<8x256xf32>
    %223 = arith.mulf %218, %222 : vector<8x256xf32>
    %224 = vector.extract_strided_slice %223 {offsets = [0, 0], sizes = [8, 128], strides = [1, 1]} : vector<8x256xf32> to vector<8x128xf32>
    %225 = vector.extract_strided_slice %223 {offsets = [0, 128], sizes = [8, 128], strides = [1, 1]} : vector<8x256xf32> to vector<8x128xf32>
    %226 = vector.extract_strided_slice %6 {offsets = [56, 0], sizes = [8, 1024], strides = [1, 1]} : vector<64x1024xf32> to vector<8x1024xf32>
    %227 = vector.extract_strided_slice %6 {offsets = [0, 0], sizes = [8, 1024], strides = [1, 1]} : vector<64x1024xf32> to vector<8x1024xf32>
    %228 = vector.extract_strided_slice %226 {offsets = [0, 0], sizes = [8, 128], strides = [1, 1]} : vector<8x1024xf32> to vector<8x128xf32>
    %229 = vector.extract_strided_slice %227 {offsets = [0, 128], sizes = [8, 128], strides = [1, 1]} : vector<8x1024xf32> to vector<8x128xf32>
    %230 = vector.extract_strided_slice %226 {offsets = [0, 256], sizes = [8, 128], strides = [1, 1]} : vector<8x1024xf32> to vector<8x128xf32>
    %231 = vector.extract_strided_slice %227 {offsets = [0, 384], sizes = [8, 128], strides = [1, 1]} : vector<8x1024xf32> to vector<8x128xf32>
    %232 = vector.extract_strided_slice %226 {offsets = [0, 512], sizes = [8, 128], strides = [1, 1]} : vector<8x1024xf32> to vector<8x128xf32>
    %233 = vector.extract_strided_slice %227 {offsets = [0, 640], sizes = [8, 128], strides = [1, 1]} : vector<8x1024xf32> to vector<8x128xf32>
    %234 = vector.extract_strided_slice %226 {offsets = [0, 768], sizes = [8, 128], strides = [1, 1]} : vector<8x1024xf32> to vector<8x128xf32>
    %235 = vector.extract_strided_slice %227 {offsets = [0, 896], sizes = [8, 128], strides = [1, 1]} : vector<8x1024xf32> to vector<8x128xf32>
    %236 = tpu.concatenate %228, %229, %230, %231, %232, %233, %234, %235 in 1 : vector<8x128xf32>, vector<8x128xf32>, vector<8x128xf32>, vector<8x128xf32>, vector<8x128xf32>, vector<8x128xf32>, vector<8x128xf32>, vector<8x128xf32> -> vector<8x1024xf32>
    %cst_23 = arith.constant dense<0.000000e+00> : vector<8x1024xf32>
    %237 = tpu.matmul %223, %3, %cst_23 {dimension_numbers = #tpu.dot_dimension_numbers<[1], [0], [0], [1], [0, 0, 1, 1], [], []>} : vector<8x256xf32>, vector<256x1024xf32>, vector<8x1024xf32> -> vector<8x1024xf32>
    %238 = arith.addf %236, %237 : vector<8x1024xf32>
    %239 = vector.extract_strided_slice %238 {offsets = [0, 0], sizes = [8, 768], strides = [1, 1]} : vector<8x1024xf32> to vector<8x768xf32>
    %240 = arith.negf %239 : vector<8x768xf32>
    %241 = math.exp %240 : vector<8x768xf32>
    %cst_24 = arith.constant 1.000000e+00 : f32
    %242 = vector.broadcast %cst_24 : f32 to vector<8x768xf32>
    %243 = arith.addf %242, %241 : vector<8x768xf32>
    %244 = arith.divf %242, %243 : vector<8x768xf32>
    %245 = vector.extract_strided_slice %238 {offsets = [0, 768], sizes = [8, 256], strides = [1, 1]} : vector<8x1024xf32> to vector<8x256xf32>
    %246 = math.tanh %245 : vector<8x256xf32>
    %247 = vector.extract_strided_slice %244 {offsets = [0, 0], sizes = [8, 256], strides = [1, 1]} : vector<8x768xf32> to vector<8x256xf32>
    %248 = vector.extract_strided_slice %244 {offsets = [0, 256], sizes = [8, 256], strides = [1, 1]} : vector<8x768xf32> to vector<8x256xf32>
    %249 = vector.extract_strided_slice %244 {offsets = [0, 512], sizes = [8, 256], strides = [1, 1]} : vector<8x768xf32> to vector<8x256xf32>
    %250 = arith.mulf %248, %221 : vector<8x256xf32>
    %251 = arith.mulf %247, %246 : vector<8x256xf32>
    %252 = arith.addf %250, %251 : vector<8x256xf32>
    %253 = math.tanh %252 : vector<8x256xf32>
    %254 = arith.mulf %249, %253 : vector<8x256xf32>
    %255 = vector.extract_strided_slice %254 {offsets = [0, 0], sizes = [8, 128], strides = [1, 1]} : vector<8x256xf32> to vector<8x128xf32>
    %256 = vector.extract_strided_slice %254 {offsets = [0, 128], sizes = [8, 128], strides = [1, 1]} : vector<8x256xf32> to vector<8x128xf32>
    %257 = tpu.concatenate %38, %256 in 1 : vector<8x128xf32>, vector<8x128xf32> -> vector<8x256xf32>
    %258 = tpu.concatenate %69, %225 in 1 : vector<8x128xf32>, vector<8x128xf32> -> vector<8x256xf32>
    %259 = tpu.concatenate %100, %194 in 1 : vector<8x128xf32>, vector<8x128xf32> -> vector<8x256xf32>
    %260 = tpu.concatenate %131, %163 in 1 : vector<8x128xf32>, vector<8x128xf32> -> vector<8x256xf32>
    %261 = tpu.concatenate %162, %132 in 1 : vector<8x128xf32>, vector<8x128xf32> -> vector<8x256xf32>
    %262 = tpu.concatenate %193, %101 in 1 : vector<8x128xf32>, vector<8x128xf32> -> vector<8x256xf32>
    %263 = tpu.concatenate %224, %70 in 1 : vector<8x128xf32>, vector<8x128xf32> -> vector<8x256xf32>
    %264 = tpu.concatenate %255, %39 in 1 : vector<8x128xf32>, vector<8x128xf32> -> vector<8x256xf32>
    %265 = tpu.concatenate %257, %258, %259, %260, %261, %262, %263, %264 in 0 : vector<8x256xf32>, vector<8x256xf32>, vector<8x256xf32>, vector<8x256xf32>, vector<8x256xf32>, vector<8x256xf32>, vector<8x256xf32>, vector<8x256xf32> -> vector<64x256xf32>
    %c0_25 = arith.constant 0 : index
    %c0_26 = arith.constant 0 : index
    %266 = vector.load %arg4[%c0_25, %c0_26] : memref<256x1024xf32, #tpu.memory_space<vmem>>, vector<256x1024xf32>
    %c0_27 = arith.constant 0 : index
    %c0_28 = arith.constant 0 : index
    %267 = vector.load %arg5[%c0_27, %c0_28] : memref<1x1024xf32, #tpu.memory_space<vmem>>, vector<1x1024xf32>
    %c0_29 = arith.constant 0 : index
    %c0_30 = arith.constant 0 : index
    %268 = vector.load %arg6[%c0_29, %c0_30] : memref<256x1024xf32, #tpu.memory_space<vmem>>, vector<256x1024xf32>
    %cst_31 = arith.constant dense<0.000000e+00> : vector<64x1024xf32>
    %269 = tpu.matmul %265, %266, %cst_31 {dimension_numbers = #tpu.dot_dimension_numbers<[1], [0], [0], [1], [0, 0, 1, 1], [], []>} : vector<64x256xf32>, vector<256x1024xf32>, vector<64x1024xf32> -> vector<64x1024xf32>
    %270 = vector.broadcast %267 : vector<1x1024xf32> to vector<64x1024xf32>
    %271 = arith.addf %269, %270 : vector<64x1024xf32>
    %cst_32 = arith.constant 0.000000e+00 : f32
    %272 = vector.broadcast %cst_32 : f32 to vector<8x256xf32>
    %cst_33 = arith.constant 0.000000e+00 : f32
    %273 = vector.broadcast %cst_33 : f32 to vector<8x256xf32>
    %274 = vector.extract_strided_slice %271 {offsets = [0, 0], sizes = [8, 1024], strides = [1, 1]} : vector<64x1024xf32> to vector<8x1024xf32>
    %275 = vector.extract_strided_slice %271 {offsets = [56, 0], sizes = [8, 1024], strides = [1, 1]} : vector<64x1024xf32> to vector<8x1024xf32>
    %276 = vector.extract_strided_slice %274 {offsets = [0, 0], sizes = [8, 128], strides = [1, 1]} : vector<8x1024xf32> to vector<8x128xf32>
    %277 = vector.extract_strided_slice %275 {offsets = [0, 128], sizes = [8, 128], strides = [1, 1]} : vector<8x1024xf32> to vector<8x128xf32>
    %278 = vector.extract_strided_slice %274 {offsets = [0, 256], sizes = [8, 128], strides = [1, 1]} : vector<8x1024xf32> to vector<8x128xf32>
    %279 = vector.extract_strided_slice %275 {offsets = [0, 384], sizes = [8, 128], strides = [1, 1]} : vector<8x1024xf32> to vector<8x128xf32>
    %280 = vector.extract_strided_slice %274 {offsets = [0, 512], sizes = [8, 128], strides = [1, 1]} : vector<8x1024xf32> to vector<8x128xf32>
    %281 = vector.extract_strided_slice %275 {offsets = [0, 640], sizes = [8, 128], strides = [1, 1]} : vector<8x1024xf32> to vector<8x128xf32>
    %282 = vector.extract_strided_slice %274 {offsets = [0, 768], sizes = [8, 128], strides = [1, 1]} : vector<8x1024xf32> to vector<8x128xf32>
    %283 = vector.extract_strided_slice %275 {offsets = [0, 896], sizes = [8, 128], strides = [1, 1]} : vector<8x1024xf32> to vector<8x128xf32>
    %284 = tpu.concatenate %276, %277, %278, %279, %280, %281, %282, %283 in 1 : vector<8x128xf32>, vector<8x128xf32>, vector<8x128xf32>, vector<8x128xf32>, vector<8x128xf32>, vector<8x128xf32>, vector<8x128xf32>, vector<8x128xf32> -> vector<8x1024xf32>
    %cst_34 = arith.constant dense<0.000000e+00> : vector<8x1024xf32>
    %285 = tpu.matmul %272, %268, %cst_34 {dimension_numbers = #tpu.dot_dimension_numbers<[1], [0], [0], [1], [0, 0, 1, 1], [], []>} : vector<8x256xf32>, vector<256x1024xf32>, vector<8x1024xf32> -> vector<8x1024xf32>
    %286 = arith.addf %284, %285 : vector<8x1024xf32>
    %287 = vector.extract_strided_slice %286 {offsets = [0, 0], sizes = [8, 768], strides = [1, 1]} : vector<8x1024xf32> to vector<8x768xf32>
    %288 = arith.negf %287 : vector<8x768xf32>
    %289 = math.exp %288 : vector<8x768xf32>
    %cst_35 = arith.constant 1.000000e+00 : f32
    %290 = vector.broadcast %cst_35 : f32 to vector<8x768xf32>
    %291 = arith.addf %290, %289 : vector<8x768xf32>
    %292 = arith.divf %290, %291 : vector<8x768xf32>
    %293 = vector.extract_strided_slice %286 {offsets = [0, 768], sizes = [8, 256], strides = [1, 1]} : vector<8x1024xf32> to vector<8x256xf32>
    %294 = math.tanh %293 : vector<8x256xf32>
    %295 = vector.extract_strided_slice %292 {offsets = [0, 0], sizes = [8, 256], strides = [1, 1]} : vector<8x768xf32> to vector<8x256xf32>
    %296 = vector.extract_strided_slice %292 {offsets = [0, 256], sizes = [8, 256], strides = [1, 1]} : vector<8x768xf32> to vector<8x256xf32>
    %297 = vector.extract_strided_slice %292 {offsets = [0, 512], sizes = [8, 256], strides = [1, 1]} : vector<8x768xf32> to vector<8x256xf32>
    %298 = arith.mulf %296, %273 : vector<8x256xf32>
    %299 = arith.mulf %295, %294 : vector<8x256xf32>
    %300 = arith.addf %298, %299 : vector<8x256xf32>
    %301 = math.tanh %300 : vector<8x256xf32>
    %302 = arith.mulf %297, %301 : vector<8x256xf32>
    %303 = vector.extract_strided_slice %302 {offsets = [0, 0], sizes = [8, 128], strides = [1, 1]} : vector<8x256xf32> to vector<8x128xf32>
    %304 = vector.extract_strided_slice %302 {offsets = [0, 128], sizes = [8, 128], strides = [1, 1]} : vector<8x256xf32> to vector<8x128xf32>
    %305 = vector.extract_strided_slice %271 {offsets = [8, 0], sizes = [8, 1024], strides = [1, 1]} : vector<64x1024xf32> to vector<8x1024xf32>
    %306 = vector.extract_strided_slice %271 {offsets = [48, 0], sizes = [8, 1024], strides = [1, 1]} : vector<64x1024xf32> to vector<8x1024xf32>
    %307 = vector.extract_strided_slice %305 {offsets = [0, 0], sizes = [8, 128], strides = [1, 1]} : vector<8x1024xf32> to vector<8x128xf32>
    %308 = vector.extract_strided_slice %306 {offsets = [0, 128], sizes = [8, 128], strides = [1, 1]} : vector<8x1024xf32> to vector<8x128xf32>
    %309 = vector.extract_strided_slice %305 {offsets = [0, 256], sizes = [8, 128], strides = [1, 1]} : vector<8x1024xf32> to vector<8x128xf32>
    %310 = vector.extract_strided_slice %306 {offsets = [0, 384], sizes = [8, 128], strides = [1, 1]} : vector<8x1024xf32> to vector<8x128xf32>
    %311 = vector.extract_strided_slice %305 {offsets = [0, 512], sizes = [8, 128], strides = [1, 1]} : vector<8x1024xf32> to vector<8x128xf32>
    %312 = vector.extract_strided_slice %306 {offsets = [0, 640], sizes = [8, 128], strides = [1, 1]} : vector<8x1024xf32> to vector<8x128xf32>
    %313 = vector.extract_strided_slice %305 {offsets = [0, 768], sizes = [8, 128], strides = [1, 1]} : vector<8x1024xf32> to vector<8x128xf32>
    %314 = vector.extract_strided_slice %306 {offsets = [0, 896], sizes = [8, 128], strides = [1, 1]} : vector<8x1024xf32> to vector<8x128xf32>
    %315 = tpu.concatenate %307, %308, %309, %310, %311, %312, %313, %314 in 1 : vector<8x128xf32>, vector<8x128xf32>, vector<8x128xf32>, vector<8x128xf32>, vector<8x128xf32>, vector<8x128xf32>, vector<8x128xf32>, vector<8x128xf32> -> vector<8x1024xf32>
    %cst_36 = arith.constant dense<0.000000e+00> : vector<8x1024xf32>
    %316 = tpu.matmul %302, %268, %cst_36 {dimension_numbers = #tpu.dot_dimension_numbers<[1], [0], [0], [1], [0, 0, 1, 1], [], []>} : vector<8x256xf32>, vector<256x1024xf32>, vector<8x1024xf32> -> vector<8x1024xf32>
    %317 = arith.addf %315, %316 : vector<8x1024xf32>
    %318 = vector.extract_strided_slice %317 {offsets = [0, 0], sizes = [8, 768], strides = [1, 1]} : vector<8x1024xf32> to vector<8x768xf32>
    %319 = arith.negf %318 : vector<8x768xf32>
    %320 = math.exp %319 : vector<8x768xf32>
    %cst_37 = arith.constant 1.000000e+00 : f32
    %321 = vector.broadcast %cst_37 : f32 to vector<8x768xf32>
    %322 = arith.addf %321, %320 : vector<8x768xf32>
    %323 = arith.divf %321, %322 : vector<8x768xf32>
    %324 = vector.extract_strided_slice %317 {offsets = [0, 768], sizes = [8, 256], strides = [1, 1]} : vector<8x1024xf32> to vector<8x256xf32>
    %325 = math.tanh %324 : vector<8x256xf32>
    %326 = vector.extract_strided_slice %323 {offsets = [0, 0], sizes = [8, 256], strides = [1, 1]} : vector<8x768xf32> to vector<8x256xf32>
    %327 = vector.extract_strided_slice %323 {offsets = [0, 256], sizes = [8, 256], strides = [1, 1]} : vector<8x768xf32> to vector<8x256xf32>
    %328 = vector.extract_strided_slice %323 {offsets = [0, 512], sizes = [8, 256], strides = [1, 1]} : vector<8x768xf32> to vector<8x256xf32>
    %329 = arith.mulf %327, %300 : vector<8x256xf32>
    %330 = arith.mulf %326, %325 : vector<8x256xf32>
    %331 = arith.addf %329, %330 : vector<8x256xf32>
    %332 = math.tanh %331 : vector<8x256xf32>
    %333 = arith.mulf %328, %332 : vector<8x256xf32>
    %334 = vector.extract_strided_slice %271 {offsets = [16, 0], sizes = [8, 1024], strides = [1, 1]} : vector<64x1024xf32> to vector<8x1024xf32>
    %335 = vector.extract_strided_slice %271 {offsets = [40, 0], sizes = [8, 1024], strides = [1, 1]} : vector<64x1024xf32> to vector<8x1024xf32>
    %336 = vector.extract_strided_slice %334 {offsets = [0, 0], sizes = [8, 128], strides = [1, 1]} : vector<8x1024xf32> to vector<8x128xf32>
    %337 = vector.extract_strided_slice %335 {offsets = [0, 128], sizes = [8, 128], strides = [1, 1]} : vector<8x1024xf32> to vector<8x128xf32>
    %338 = vector.extract_strided_slice %334 {offsets = [0, 256], sizes = [8, 128], strides = [1, 1]} : vector<8x1024xf32> to vector<8x128xf32>
    %339 = vector.extract_strided_slice %335 {offsets = [0, 384], sizes = [8, 128], strides = [1, 1]} : vector<8x1024xf32> to vector<8x128xf32>
    %340 = vector.extract_strided_slice %334 {offsets = [0, 512], sizes = [8, 128], strides = [1, 1]} : vector<8x1024xf32> to vector<8x128xf32>
    %341 = vector.extract_strided_slice %335 {offsets = [0, 640], sizes = [8, 128], strides = [1, 1]} : vector<8x1024xf32> to vector<8x128xf32>
    %342 = vector.extract_strided_slice %334 {offsets = [0, 768], sizes = [8, 128], strides = [1, 1]} : vector<8x1024xf32> to vector<8x128xf32>
    %343 = vector.extract_strided_slice %335 {offsets = [0, 896], sizes = [8, 128], strides = [1, 1]} : vector<8x1024xf32> to vector<8x128xf32>
    %344 = tpu.concatenate %336, %337, %338, %339, %340, %341, %342, %343 in 1 : vector<8x128xf32>, vector<8x128xf32>, vector<8x128xf32>, vector<8x128xf32>, vector<8x128xf32>, vector<8x128xf32>, vector<8x128xf32>, vector<8x128xf32> -> vector<8x1024xf32>
    %cst_38 = arith.constant dense<0.000000e+00> : vector<8x1024xf32>
    %345 = tpu.matmul %333, %268, %cst_38 {dimension_numbers = #tpu.dot_dimension_numbers<[1], [0], [0], [1], [0, 0, 1, 1], [], []>} : vector<8x256xf32>, vector<256x1024xf32>, vector<8x1024xf32> -> vector<8x1024xf32>
    %346 = arith.addf %344, %345 : vector<8x1024xf32>
    %347 = vector.extract_strided_slice %346 {offsets = [0, 0], sizes = [8, 768], strides = [1, 1]} : vector<8x1024xf32> to vector<8x768xf32>
    %348 = arith.negf %347 : vector<8x768xf32>
    %349 = math.exp %348 : vector<8x768xf32>
    %cst_39 = arith.constant 1.000000e+00 : f32
    %350 = vector.broadcast %cst_39 : f32 to vector<8x768xf32>
    %351 = arith.addf %350, %349 : vector<8x768xf32>
    %352 = arith.divf %350, %351 : vector<8x768xf32>
    %353 = vector.extract_strided_slice %346 {offsets = [0, 768], sizes = [8, 256], strides = [1, 1]} : vector<8x1024xf32> to vector<8x256xf32>
    %354 = math.tanh %353 : vector<8x256xf32>
    %355 = vector.extract_strided_slice %352 {offsets = [0, 0], sizes = [8, 256], strides = [1, 1]} : vector<8x768xf32> to vector<8x256xf32>
    %356 = vector.extract_strided_slice %352 {offsets = [0, 256], sizes = [8, 256], strides = [1, 1]} : vector<8x768xf32> to vector<8x256xf32>
    %357 = vector.extract_strided_slice %352 {offsets = [0, 512], sizes = [8, 256], strides = [1, 1]} : vector<8x768xf32> to vector<8x256xf32>
    %358 = arith.mulf %356, %331 : vector<8x256xf32>
    %359 = arith.mulf %355, %354 : vector<8x256xf32>
    %360 = arith.addf %358, %359 : vector<8x256xf32>
    %361 = math.tanh %360 : vector<8x256xf32>
    %362 = arith.mulf %357, %361 : vector<8x256xf32>
    %363 = vector.extract_strided_slice %271 {offsets = [24, 0], sizes = [8, 1024], strides = [1, 1]} : vector<64x1024xf32> to vector<8x1024xf32>
    %364 = vector.extract_strided_slice %271 {offsets = [32, 0], sizes = [8, 1024], strides = [1, 1]} : vector<64x1024xf32> to vector<8x1024xf32>
    %365 = vector.extract_strided_slice %363 {offsets = [0, 0], sizes = [8, 128], strides = [1, 1]} : vector<8x1024xf32> to vector<8x128xf32>
    %366 = vector.extract_strided_slice %364 {offsets = [0, 128], sizes = [8, 128], strides = [1, 1]} : vector<8x1024xf32> to vector<8x128xf32>
    %367 = vector.extract_strided_slice %363 {offsets = [0, 256], sizes = [8, 128], strides = [1, 1]} : vector<8x1024xf32> to vector<8x128xf32>
    %368 = vector.extract_strided_slice %364 {offsets = [0, 384], sizes = [8, 128], strides = [1, 1]} : vector<8x1024xf32> to vector<8x128xf32>
    %369 = vector.extract_strided_slice %363 {offsets = [0, 512], sizes = [8, 128], strides = [1, 1]} : vector<8x1024xf32> to vector<8x128xf32>
    %370 = vector.extract_strided_slice %364 {offsets = [0, 640], sizes = [8, 128], strides = [1, 1]} : vector<8x1024xf32> to vector<8x128xf32>
    %371 = vector.extract_strided_slice %363 {offsets = [0, 768], sizes = [8, 128], strides = [1, 1]} : vector<8x1024xf32> to vector<8x128xf32>
    %372 = vector.extract_strided_slice %364 {offsets = [0, 896], sizes = [8, 128], strides = [1, 1]} : vector<8x1024xf32> to vector<8x128xf32>
    %373 = tpu.concatenate %365, %366, %367, %368, %369, %370, %371, %372 in 1 : vector<8x128xf32>, vector<8x128xf32>, vector<8x128xf32>, vector<8x128xf32>, vector<8x128xf32>, vector<8x128xf32>, vector<8x128xf32>, vector<8x128xf32> -> vector<8x1024xf32>
    %cst_40 = arith.constant dense<0.000000e+00> : vector<8x1024xf32>
    %374 = tpu.matmul %362, %268, %cst_40 {dimension_numbers = #tpu.dot_dimension_numbers<[1], [0], [0], [1], [0, 0, 1, 1], [], []>} : vector<8x256xf32>, vector<256x1024xf32>, vector<8x1024xf32> -> vector<8x1024xf32>
    %375 = arith.addf %373, %374 : vector<8x1024xf32>
    %376 = vector.extract_strided_slice %375 {offsets = [0, 0], sizes = [8, 768], strides = [1, 1]} : vector<8x1024xf32> to vector<8x768xf32>
    %377 = arith.negf %376 : vector<8x768xf32>
    %378 = math.exp %377 : vector<8x768xf32>
    %cst_41 = arith.constant 1.000000e+00 : f32
    %379 = vector.broadcast %cst_41 : f32 to vector<8x768xf32>
    %380 = arith.addf %379, %378 : vector<8x768xf32>
    %381 = arith.divf %379, %380 : vector<8x768xf32>
    %382 = vector.extract_strided_slice %375 {offsets = [0, 768], sizes = [8, 256], strides = [1, 1]} : vector<8x1024xf32> to vector<8x256xf32>
    %383 = math.tanh %382 : vector<8x256xf32>
    %384 = vector.extract_strided_slice %381 {offsets = [0, 0], sizes = [8, 256], strides = [1, 1]} : vector<8x768xf32> to vector<8x256xf32>
    %385 = vector.extract_strided_slice %381 {offsets = [0, 256], sizes = [8, 256], strides = [1, 1]} : vector<8x768xf32> to vector<8x256xf32>
    %386 = vector.extract_strided_slice %381 {offsets = [0, 512], sizes = [8, 256], strides = [1, 1]} : vector<8x768xf32> to vector<8x256xf32>
    %387 = arith.mulf %385, %360 : vector<8x256xf32>
    %388 = arith.mulf %384, %383 : vector<8x256xf32>
    %389 = arith.addf %387, %388 : vector<8x256xf32>
    %390 = math.tanh %389 : vector<8x256xf32>
    %391 = arith.mulf %386, %390 : vector<8x256xf32>
    %392 = vector.extract_strided_slice %271 {offsets = [32, 0], sizes = [8, 1024], strides = [1, 1]} : vector<64x1024xf32> to vector<8x1024xf32>
    %393 = vector.extract_strided_slice %271 {offsets = [24, 0], sizes = [8, 1024], strides = [1, 1]} : vector<64x1024xf32> to vector<8x1024xf32>
    %394 = vector.extract_strided_slice %392 {offsets = [0, 0], sizes = [8, 128], strides = [1, 1]} : vector<8x1024xf32> to vector<8x128xf32>
    %395 = vector.extract_strided_slice %393 {offsets = [0, 128], sizes = [8, 128], strides = [1, 1]} : vector<8x1024xf32> to vector<8x128xf32>
    %396 = vector.extract_strided_slice %392 {offsets = [0, 256], sizes = [8, 128], strides = [1, 1]} : vector<8x1024xf32> to vector<8x128xf32>
    %397 = vector.extract_strided_slice %393 {offsets = [0, 384], sizes = [8, 128], strides = [1, 1]} : vector<8x1024xf32> to vector<8x128xf32>
    %398 = vector.extract_strided_slice %392 {offsets = [0, 512], sizes = [8, 128], strides = [1, 1]} : vector<8x1024xf32> to vector<8x128xf32>
    %399 = vector.extract_strided_slice %393 {offsets = [0, 640], sizes = [8, 128], strides = [1, 1]} : vector<8x1024xf32> to vector<8x128xf32>
    %400 = vector.extract_strided_slice %392 {offsets = [0, 768], sizes = [8, 128], strides = [1, 1]} : vector<8x1024xf32> to vector<8x128xf32>
    %401 = vector.extract_strided_slice %393 {offsets = [0, 896], sizes = [8, 128], strides = [1, 1]} : vector<8x1024xf32> to vector<8x128xf32>
    %402 = tpu.concatenate %394, %395, %396, %397, %398, %399, %400, %401 in 1 : vector<8x128xf32>, vector<8x128xf32>, vector<8x128xf32>, vector<8x128xf32>, vector<8x128xf32>, vector<8x128xf32>, vector<8x128xf32>, vector<8x128xf32> -> vector<8x1024xf32>
    %cst_42 = arith.constant dense<0.000000e+00> : vector<8x1024xf32>
    %403 = tpu.matmul %391, %268, %cst_42 {dimension_numbers = #tpu.dot_dimension_numbers<[1], [0], [0], [1], [0, 0, 1, 1], [], []>} : vector<8x256xf32>, vector<256x1024xf32>, vector<8x1024xf32> -> vector<8x1024xf32>
    %404 = arith.addf %402, %403 : vector<8x1024xf32>
    %405 = vector.extract_strided_slice %404 {offsets = [0, 0], sizes = [8, 768], strides = [1, 1]} : vector<8x1024xf32> to vector<8x768xf32>
    %406 = arith.negf %405 : vector<8x768xf32>
    %407 = math.exp %406 : vector<8x768xf32>
    %cst_43 = arith.constant 1.000000e+00 : f32
    %408 = vector.broadcast %cst_43 : f32 to vector<8x768xf32>
    %409 = arith.addf %408, %407 : vector<8x768xf32>
    %410 = arith.divf %408, %409 : vector<8x768xf32>
    %411 = vector.extract_strided_slice %404 {offsets = [0, 768], sizes = [8, 256], strides = [1, 1]} : vector<8x1024xf32> to vector<8x256xf32>
    %412 = math.tanh %411 : vector<8x256xf32>
    %413 = vector.extract_strided_slice %410 {offsets = [0, 0], sizes = [8, 256], strides = [1, 1]} : vector<8x768xf32> to vector<8x256xf32>
    %414 = vector.extract_strided_slice %410 {offsets = [0, 256], sizes = [8, 256], strides = [1, 1]} : vector<8x768xf32> to vector<8x256xf32>
    %415 = vector.extract_strided_slice %410 {offsets = [0, 512], sizes = [8, 256], strides = [1, 1]} : vector<8x768xf32> to vector<8x256xf32>
    %416 = arith.mulf %414, %389 : vector<8x256xf32>
    %417 = arith.mulf %413, %412 : vector<8x256xf32>
    %418 = arith.addf %416, %417 : vector<8x256xf32>
    %419 = math.tanh %418 : vector<8x256xf32>
    %420 = arith.mulf %415, %419 : vector<8x256xf32>
    %421 = vector.extract_strided_slice %271 {offsets = [40, 0], sizes = [8, 1024], strides = [1, 1]} : vector<64x1024xf32> to vector<8x1024xf32>
    %422 = vector.extract_strided_slice %271 {offsets = [16, 0], sizes = [8, 1024], strides = [1, 1]} : vector<64x1024xf32> to vector<8x1024xf32>
    %423 = vector.extract_strided_slice %421 {offsets = [0, 0], sizes = [8, 128], strides = [1, 1]} : vector<8x1024xf32> to vector<8x128xf32>
    %424 = vector.extract_strided_slice %422 {offsets = [0, 128], sizes = [8, 128], strides = [1, 1]} : vector<8x1024xf32> to vector<8x128xf32>
    %425 = vector.extract_strided_slice %421 {offsets = [0, 256], sizes = [8, 128], strides = [1, 1]} : vector<8x1024xf32> to vector<8x128xf32>
    %426 = vector.extract_strided_slice %422 {offsets = [0, 384], sizes = [8, 128], strides = [1, 1]} : vector<8x1024xf32> to vector<8x128xf32>
    %427 = vector.extract_strided_slice %421 {offsets = [0, 512], sizes = [8, 128], strides = [1, 1]} : vector<8x1024xf32> to vector<8x128xf32>
    %428 = vector.extract_strided_slice %422 {offsets = [0, 640], sizes = [8, 128], strides = [1, 1]} : vector<8x1024xf32> to vector<8x128xf32>
    %429 = vector.extract_strided_slice %421 {offsets = [0, 768], sizes = [8, 128], strides = [1, 1]} : vector<8x1024xf32> to vector<8x128xf32>
    %430 = vector.extract_strided_slice %422 {offsets = [0, 896], sizes = [8, 128], strides = [1, 1]} : vector<8x1024xf32> to vector<8x128xf32>
    %431 = tpu.concatenate %423, %424, %425, %426, %427, %428, %429, %430 in 1 : vector<8x128xf32>, vector<8x128xf32>, vector<8x128xf32>, vector<8x128xf32>, vector<8x128xf32>, vector<8x128xf32>, vector<8x128xf32>, vector<8x128xf32> -> vector<8x1024xf32>
    %cst_44 = arith.constant dense<0.000000e+00> : vector<8x1024xf32>
    %432 = tpu.matmul %420, %268, %cst_44 {dimension_numbers = #tpu.dot_dimension_numbers<[1], [0], [0], [1], [0, 0, 1, 1], [], []>} : vector<8x256xf32>, vector<256x1024xf32>, vector<8x1024xf32> -> vector<8x1024xf32>
    %433 = arith.addf %431, %432 : vector<8x1024xf32>
    %434 = vector.extract_strided_slice %433 {offsets = [0, 0], sizes = [8, 768], strides = [1, 1]} : vector<8x1024xf32> to vector<8x768xf32>
    %435 = arith.negf %434 : vector<8x768xf32>
    %436 = math.exp %435 : vector<8x768xf32>
    %cst_45 = arith.constant 1.000000e+00 : f32
    %437 = vector.broadcast %cst_45 : f32 to vector<8x768xf32>
    %438 = arith.addf %437, %436 : vector<8x768xf32>
    %439 = arith.divf %437, %438 : vector<8x768xf32>
    %440 = vector.extract_strided_slice %433 {offsets = [0, 768], sizes = [8, 256], strides = [1, 1]} : vector<8x1024xf32> to vector<8x256xf32>
    %441 = math.tanh %440 : vector<8x256xf32>
    %442 = vector.extract_strided_slice %439 {offsets = [0, 0], sizes = [8, 256], strides = [1, 1]} : vector<8x768xf32> to vector<8x256xf32>
    %443 = vector.extract_strided_slice %439 {offsets = [0, 256], sizes = [8, 256], strides = [1, 1]} : vector<8x768xf32> to vector<8x256xf32>
    %444 = vector.extract_strided_slice %439 {offsets = [0, 512], sizes = [8, 256], strides = [1, 1]} : vector<8x768xf32> to vector<8x256xf32>
    %445 = arith.mulf %443, %418 : vector<8x256xf32>
    %446 = arith.mulf %442, %441 : vector<8x256xf32>
    %447 = arith.addf %445, %446 : vector<8x256xf32>
    %448 = math.tanh %447 : vector<8x256xf32>
    %449 = arith.mulf %444, %448 : vector<8x256xf32>
    %450 = vector.extract_strided_slice %271 {offsets = [48, 0], sizes = [8, 1024], strides = [1, 1]} : vector<64x1024xf32> to vector<8x1024xf32>
    %451 = vector.extract_strided_slice %271 {offsets = [8, 0], sizes = [8, 1024], strides = [1, 1]} : vector<64x1024xf32> to vector<8x1024xf32>
    %452 = vector.extract_strided_slice %450 {offsets = [0, 0], sizes = [8, 128], strides = [1, 1]} : vector<8x1024xf32> to vector<8x128xf32>
    %453 = vector.extract_strided_slice %451 {offsets = [0, 128], sizes = [8, 128], strides = [1, 1]} : vector<8x1024xf32> to vector<8x128xf32>
    %454 = vector.extract_strided_slice %450 {offsets = [0, 256], sizes = [8, 128], strides = [1, 1]} : vector<8x1024xf32> to vector<8x128xf32>
    %455 = vector.extract_strided_slice %451 {offsets = [0, 384], sizes = [8, 128], strides = [1, 1]} : vector<8x1024xf32> to vector<8x128xf32>
    %456 = vector.extract_strided_slice %450 {offsets = [0, 512], sizes = [8, 128], strides = [1, 1]} : vector<8x1024xf32> to vector<8x128xf32>
    %457 = vector.extract_strided_slice %451 {offsets = [0, 640], sizes = [8, 128], strides = [1, 1]} : vector<8x1024xf32> to vector<8x128xf32>
    %458 = vector.extract_strided_slice %450 {offsets = [0, 768], sizes = [8, 128], strides = [1, 1]} : vector<8x1024xf32> to vector<8x128xf32>
    %459 = vector.extract_strided_slice %451 {offsets = [0, 896], sizes = [8, 128], strides = [1, 1]} : vector<8x1024xf32> to vector<8x128xf32>
    %460 = tpu.concatenate %452, %453, %454, %455, %456, %457, %458, %459 in 1 : vector<8x128xf32>, vector<8x128xf32>, vector<8x128xf32>, vector<8x128xf32>, vector<8x128xf32>, vector<8x128xf32>, vector<8x128xf32>, vector<8x128xf32> -> vector<8x1024xf32>
    %cst_46 = arith.constant dense<0.000000e+00> : vector<8x1024xf32>
    %461 = tpu.matmul %449, %268, %cst_46 {dimension_numbers = #tpu.dot_dimension_numbers<[1], [0], [0], [1], [0, 0, 1, 1], [], []>} : vector<8x256xf32>, vector<256x1024xf32>, vector<8x1024xf32> -> vector<8x1024xf32>
    %462 = arith.addf %460, %461 : vector<8x1024xf32>
    %463 = vector.extract_strided_slice %462 {offsets = [0, 0], sizes = [8, 768], strides = [1, 1]} : vector<8x1024xf32> to vector<8x768xf32>
    %464 = arith.negf %463 : vector<8x768xf32>
    %465 = math.exp %464 : vector<8x768xf32>
    %cst_47 = arith.constant 1.000000e+00 : f32
    %466 = vector.broadcast %cst_47 : f32 to vector<8x768xf32>
    %467 = arith.addf %466, %465 : vector<8x768xf32>
    %468 = arith.divf %466, %467 : vector<8x768xf32>
    %469 = vector.extract_strided_slice %462 {offsets = [0, 768], sizes = [8, 256], strides = [1, 1]} : vector<8x1024xf32> to vector<8x256xf32>
    %470 = math.tanh %469 : vector<8x256xf32>
    %471 = vector.extract_strided_slice %468 {offsets = [0, 0], sizes = [8, 256], strides = [1, 1]} : vector<8x768xf32> to vector<8x256xf32>
    %472 = vector.extract_strided_slice %468 {offsets = [0, 256], sizes = [8, 256], strides = [1, 1]} : vector<8x768xf32> to vector<8x256xf32>
    %473 = vector.extract_strided_slice %468 {offsets = [0, 512], sizes = [8, 256], strides = [1, 1]} : vector<8x768xf32> to vector<8x256xf32>
    %474 = arith.mulf %472, %447 : vector<8x256xf32>
    %475 = arith.mulf %471, %470 : vector<8x256xf32>
    %476 = arith.addf %474, %475 : vector<8x256xf32>
    %477 = math.tanh %476 : vector<8x256xf32>
    %478 = arith.mulf %473, %477 : vector<8x256xf32>
    %479 = vector.extract_strided_slice %271 {offsets = [56, 0], sizes = [8, 1024], strides = [1, 1]} : vector<64x1024xf32> to vector<8x1024xf32>
    %480 = vector.extract_strided_slice %271 {offsets = [0, 0], sizes = [8, 1024], strides = [1, 1]} : vector<64x1024xf32> to vector<8x1024xf32>
    %481 = vector.extract_strided_slice %479 {offsets = [0, 0], sizes = [8, 128], strides = [1, 1]} : vector<8x1024xf32> to vector<8x128xf32>
    %482 = vector.extract_strided_slice %480 {offsets = [0, 128], sizes = [8, 128], strides = [1, 1]} : vector<8x1024xf32> to vector<8x128xf32>
    %483 = vector.extract_strided_slice %479 {offsets = [0, 256], sizes = [8, 128], strides = [1, 1]} : vector<8x1024xf32> to vector<8x128xf32>
    %484 = vector.extract_strided_slice %480 {offsets = [0, 384], sizes = [8, 128], strides = [1, 1]} : vector<8x1024xf32> to vector<8x128xf32>
    %485 = vector.extract_strided_slice %479 {offsets = [0, 512], sizes = [8, 128], strides = [1, 1]} : vector<8x1024xf32> to vector<8x128xf32>
    %486 = vector.extract_strided_slice %480 {offsets = [0, 640], sizes = [8, 128], strides = [1, 1]} : vector<8x1024xf32> to vector<8x128xf32>
    %487 = vector.extract_strided_slice %479 {offsets = [0, 768], sizes = [8, 128], strides = [1, 1]} : vector<8x1024xf32> to vector<8x128xf32>
    %488 = vector.extract_strided_slice %480 {offsets = [0, 896], sizes = [8, 128], strides = [1, 1]} : vector<8x1024xf32> to vector<8x128xf32>
    %489 = tpu.concatenate %481, %482, %483, %484, %485, %486, %487, %488 in 1 : vector<8x128xf32>, vector<8x128xf32>, vector<8x128xf32>, vector<8x128xf32>, vector<8x128xf32>, vector<8x128xf32>, vector<8x128xf32>, vector<8x128xf32> -> vector<8x1024xf32>
    %cst_48 = arith.constant dense<0.000000e+00> : vector<8x1024xf32>
    %490 = tpu.matmul %478, %268, %cst_48 {dimension_numbers = #tpu.dot_dimension_numbers<[1], [0], [0], [1], [0, 0, 1, 1], [], []>} : vector<8x256xf32>, vector<256x1024xf32>, vector<8x1024xf32> -> vector<8x1024xf32>
    %491 = arith.addf %489, %490 : vector<8x1024xf32>
    %492 = vector.extract_strided_slice %491 {offsets = [0, 0], sizes = [8, 768], strides = [1, 1]} : vector<8x1024xf32> to vector<8x768xf32>
    %493 = arith.negf %492 : vector<8x768xf32>
    %494 = math.exp %493 : vector<8x768xf32>
    %cst_49 = arith.constant 1.000000e+00 : f32
    %495 = vector.broadcast %cst_49 : f32 to vector<8x768xf32>
    %496 = arith.addf %495, %494 : vector<8x768xf32>
    %497 = arith.divf %495, %496 : vector<8x768xf32>
    %498 = vector.extract_strided_slice %491 {offsets = [0, 768], sizes = [8, 256], strides = [1, 1]} : vector<8x1024xf32> to vector<8x256xf32>
    %499 = math.tanh %498 : vector<8x256xf32>
    %500 = vector.extract_strided_slice %497 {offsets = [0, 0], sizes = [8, 256], strides = [1, 1]} : vector<8x768xf32> to vector<8x256xf32>
    %501 = vector.extract_strided_slice %497 {offsets = [0, 256], sizes = [8, 256], strides = [1, 1]} : vector<8x768xf32> to vector<8x256xf32>
    %502 = vector.extract_strided_slice %497 {offsets = [0, 512], sizes = [8, 256], strides = [1, 1]} : vector<8x768xf32> to vector<8x256xf32>
    %503 = arith.mulf %501, %476 : vector<8x256xf32>
    %504 = arith.mulf %500, %499 : vector<8x256xf32>
    %505 = arith.addf %503, %504 : vector<8x256xf32>
    %506 = math.tanh %505 : vector<8x256xf32>
    %507 = arith.mulf %502, %506 : vector<8x256xf32>
    %508 = vector.extract_strided_slice %507 {offsets = [0, 0], sizes = [8, 128], strides = [1, 1]} : vector<8x256xf32> to vector<8x128xf32>
    %509 = vector.extract_strided_slice %507 {offsets = [0, 128], sizes = [8, 128], strides = [1, 1]} : vector<8x256xf32> to vector<8x128xf32>
    %510 = tpu.concatenate %303, %509 in 1 : vector<8x128xf32>, vector<8x128xf32> -> vector<8x256xf32>
    %511 = tpu.concatenate %508, %304 in 1 : vector<8x128xf32>, vector<8x128xf32> -> vector<8x256xf32>
    %512 = arith.addf %510, %511 : vector<8x256xf32>
    %c0_50 = arith.constant 0 : index
    %c0_51 = arith.constant 0 : index
    %513 = vector.load %arg7[%c0_50, %c0_51] : memref<256x128xf32, #tpu.memory_space<vmem>>, vector<256x128xf32>
    %cst_52 = arith.constant dense<0.000000e+00> : vector<8x128xf32>
    %514 = tpu.matmul %512, %513, %cst_52 {dimension_numbers = #tpu.dot_dimension_numbers<[1], [0], [0], [1], [0, 0, 1, 1], [], []>} : vector<8x256xf32>, vector<256x128xf32>, vector<8x128xf32> -> vector<8x128xf32>
    %c0_53 = arith.constant 0 : index
    %c0_54 = arith.constant 0 : index
    %515 = vector.load %arg8[%c0_53, %c0_54] : memref<1x128xf32, #tpu.memory_space<vmem>>, vector<1x128xf32>
    %516 = vector.broadcast %515 : vector<1x128xf32> to vector<8x128xf32>
    %517 = arith.addf %514, %516 : vector<8x128xf32>
    %cst_55 = arith.constant 0.000000e+00 : f32
    %518 = vector.broadcast %cst_55 : f32 to vector<8x128xf32>
    %519 = arith.maximumf %517, %518 : vector<8x128xf32>
    %c0_56 = arith.constant 0 : index
    %c0_57 = arith.constant 0 : index
    %520 = vector.load %arg9[%c0_56, %c0_57] : memref<128x256xf32, #tpu.memory_space<vmem>>, vector<128x256xf32>
    %cst_58 = arith.constant dense<0.000000e+00> : vector<8x256xf32>
    %521 = tpu.matmul %519, %520, %cst_58 {dimension_numbers = #tpu.dot_dimension_numbers<[1], [0], [0], [1], [0, 0, 1, 1], [], []>} : vector<8x128xf32>, vector<128x256xf32>, vector<8x256xf32> -> vector<8x256xf32>
    %c0_59 = arith.constant 0 : index
    %c0_60 = arith.constant 0 : index
    %522 = vector.load %arg10[%c0_59, %c0_60] : memref<1x256xf32, #tpu.memory_space<vmem>>, vector<1x256xf32>
    %523 = vector.broadcast %522 : vector<1x256xf32> to vector<8x256xf32>
    %524 = arith.addf %521, %523 : vector<8x256xf32>
    %cst_61 = arith.constant 0.000000e+00 : f32
    %525 = vector.broadcast %cst_61 : f32 to vector<8x256xf32>
    %526 = arith.maximumf %524, %525 : vector<8x256xf32>
    %c0_62 = arith.constant 0 : index
    %c0_63 = arith.constant 0 : index
    %527 = vector.load %arg11[%c0_62, %c0_63] : memref<256x128xf32, #tpu.memory_space<vmem>>, vector<256x128xf32>
    %cst_64 = arith.constant dense<0.000000e+00> : vector<8x128xf32>
    %528 = tpu.matmul %526, %527, %cst_64 {dimension_numbers = #tpu.dot_dimension_numbers<[1], [0], [0], [1], [0, 0, 1, 1], [], []>} : vector<8x256xf32>, vector<256x128xf32>, vector<8x128xf32> -> vector<8x128xf32>
    %c0_65 = arith.constant 0 : index
    %c0_66 = arith.constant 0 : index
    %529 = vector.load %arg12[%c0_65, %c0_66] : memref<1x128xf32, #tpu.memory_space<vmem>>, vector<1x128xf32>
    %530 = vector.broadcast %529 : vector<1x128xf32> to vector<8x128xf32>
    %531 = arith.addf %528, %530 : vector<8x128xf32>
    %c0_67 = arith.constant 0 : index
    %c0_68 = arith.constant 0 : index
    %532 = vector.load %arg13[%c0_67, %c0_68] : memref<8x128xf32, #tpu.memory_space<vmem>>, vector<8x128xf32>
    tpu.vector_store %arg13[%c0_67, %c0_68], %531 {strides = array<i32>} : memref<8x128xf32, #tpu.memory_space<vmem>>, vector<8x128xf32>,
    return
  }
}

</mosaic_0001>

<llo_original>
// kernel: tpu_custom_call.1
$region0: #{tpu_custom_call.1}
  #allocation0 [shape = 'u32[]', space=smem, size = 0x4, offset = 0x4, fixed_abs, tag = 'smem constant byte address 0x4 - core index']
  #allocation1 [shape = 'u32[72,128]{1,0:T(1,128)}', space=vmem, size = 0x9000, scoped, tag = 'internal scratch']
  %s0 = inlined_call_operand.vmem [shape: f32[64,32], index: 0, kind: input, shape index: {}]
  %s1 = inlined_call_operand.hbm [shape: f32[32,1024], index: 1, kind: input, shape index: {}]
  %s2 = inlined_call_operand.vmem [shape: f32[1,1024], index: 2, kind: input, shape index: {}]
  %s3 = inlined_call_operand.hbm [shape: f32[256,1024], index: 3, kind: input, shape index: {}]
  %s4 = inlined_call_operand.hbm [shape: f32[256,1024], index: 4, kind: input, shape index: {}]
  %s5 = inlined_call_operand.vmem [shape: f32[1,1024], index: 5, kind: input, shape index: {}]
  %s6 = inlined_call_operand.hbm [shape: f32[256,1024], index: 6, kind: input, shape index: {}]
  %s7 = inlined_call_operand.hbm [shape: f32[256,128], index: 7, kind: input, shape index: {}]
  %s8 = inlined_call_operand.vmem [shape: f32[1,128], index: 8, kind: input, shape index: {}]
  %s9 = inlined_call_operand.hbm [shape: f32[128,256], index: 9, kind: input, shape index: {}]
  %s10 = inlined_call_operand.vmem [shape: f32[1,256], index: 10, kind: input, shape index: {}]
  %s11 = inlined_call_operand.hbm [shape: f32[256,128], index: 11, kind: input, shape index: {}]
  %s12 = inlined_call_operand.vmem [shape: f32[1,128], index: 12, kind: input, shape index: {}]
  %s13 = inlined_call_operand.hbm [shape: f32[8,128], index: 13, kind: output, shape index: {}]
  %s14 = sld [smem:[#allocation0]]
  $region90: #{tpu_custom_call.1} parent=0
    _
  %s16 = ssub.s32 1, %s14
  %s17 = scalar_select 0, %s16, %s14
  $region1: #{tpu_custom_call.1} parent=0
    #allocation2 [shape = 'u8[131072]{0}', space=vmem, size = 0x20000, scoped, tag = 'input window, operand 1, single buffered']
    #allocation3 [shape = 's32[1]{0}', space=sflag, size = 0x4, scoped, tag = 'scoped memory for tpu_custom_call.1']
    #allocation4 [shape = 's32[1]{0}', space=sflag, size = 0x4, scoped, tag = 'scoped memory for tpu_custom_call.1']
    #allocation5 [shape = 'u8[1048576]{0}', space=vmem, size = 0x100000, scoped, tag = 'input window, operand 3, single buffered']
    #allocation6 [shape = 's32[1]{0}', space=sflag, size = 0x4, scoped, tag = 'scoped memory for tpu_custom_call.1']
    #allocation7 [shape = 'u8[1048576]{0}', space=vmem, size = 0x100000, scoped, tag = 'input window, operand 4, single buffered']
    #allocation8 [shape = 'u8[1048576]{0}', space=vmem, size = 0x100000, scoped, tag = 'input window, operand 6, single buffered']
    #allocation9 [shape = 's32[1]{0}', space=sflag, size = 0x4, scoped, tag = 'scoped memory for tpu_custom_call.1']
    #allocation10 [shape = 'u8[131072]{0}', space=vmem, size = 0x20000, scoped, tag = 'input window, operand 7, single buffered']
    #allocation11 [shape = 'u8[131072]{0}', space=vmem, size = 0x20000, scoped, tag = 'input window, operand 9, single buffered']
    #allocation12 [shape = 's32[1]{0}', space=sflag, size = 0x4, scoped, tag = 'scoped memory for tpu_custom_call.1']
    #allocation13 [shape = 'u8[131072]{0}', space=vmem, size = 0x20000, scoped, tag = 'input window, operand 11, single buffered']
    #allocation14 [shape = 'u8[4096]{0}', space=vmem, size = 0x1000, scoped, tag = 'output window, operand 0, single buffered']
    %18 = vsyncpa [#allocation3], 0
    %19 = vsyncpa [#allocation6], 0
    %20 = vsyncpa [#allocation9], 0
    %21 = vsyncpa [#allocation12], 0
    %22 = vsyncpa [#allocation4], 0
    // Predicated region
    $region2: #{tpu_custom_call.1} parent=1 // pred_check
      _
    $region3: #{tpu_custom_call.1} parent=1 // pred_check_branch
      %24 = sbr.rel (0) target = $region5
    $region4: #{tpu_custom_call.1} parent=1 // pred_region
      _
    $region5: #{tpu_custom_call.1} parent=1 // pred_fallthru
      _
    // Predicated region
    $region6: #{tpu_custom_call.1} parent=1 // pred_check
      _
    $region7: #{tpu_custom_call.1} parent=1 // pred_check_branch
      %26 = sbr.rel (0) target = $region9
    $region8: #{tpu_custom_call.1} parent=1 // pred_region
      %28 = vsyncadd [#allocation3], 0
      %s29 = sshll.u32 %s1, 4
      %s30 = int_to_ptr.hbm [resolvable:$true] %s29
      %s31 = sshll.u32 [#allocation2], 4
      %s32 = int_to_ptr.vmem [resolvable:$true] %s31
      %37 = dma.hbm_to_vmem [thread:$0]  %s30, 4096, %s32, [#allocation3], 1024, 1024, 64
    $region9: #{tpu_custom_call.1} parent=1 // pred_fallthru
      _
    // Predicated region
    $region10: #{tpu_custom_call.1} parent=1 // pred_check
      _
    $region11: #{tpu_custom_call.1} parent=1 // pred_check_branch
      %39 = sbr.rel (0) target = $region13
    $region12: #{tpu_custom_call.1} parent=1 // pred_region
      _
    $region13: #{tpu_custom_call.1} parent=1 // pred_fallthru
      _
    // Predicated region
    $region14: #{tpu_custom_call.1} parent=1 // pred_check
      _
    $region15: #{tpu_custom_call.1} parent=1 // pred_check_branch
      %41 = sbr.rel (0) target = $region17
    $region16: #{tpu_custom_call.1} parent=1 // pred_region
      %43 = vsyncadd [#allocation6], 0
      %s44 = sshll.u32 %s3, 4
      %s45 = int_to_ptr.hbm [resolvable:$true] %s44
      %s46 = sshll.u32 [#allocation5], 4
      %s47 = int_to_ptr.vmem [resolvable:$true] %s46
      %52 = dma.hbm_to_vmem [thread:$0]  %s45, 32768, %s47, [#allocation6], 1024, 1024, 64
    $region17: #{tpu_custom_call.1} parent=1 // pred_fallthru
      _
    // Predicated region
    $region18: #{tpu_custom_call.1} parent=1 // pred_check
      _
    $region19: #{tpu_custom_call.1} parent=1 // pred_check_branch
      %54 = sbr.rel (0) target = $region21
    $region20: #{tpu_custom_call.1} parent=1 // pred_region
      %56 = vsyncadd [#allocation6], 0
      %s57 = sshll.u32 %s4, 4
      %s58 = int_to_ptr.hbm [resolvable:$true] %s57
      %s59 = sshll.u32 [#allocation7], 4
      %s60 = int_to_ptr.vmem [resolvable:$true] %s59
      %65 = dma.hbm_to_vmem [thread:$0]  %s58, 32768, %s60, [#allocation6], 1024, 1024, 64
    $region21: #{tpu_custom_call.1} parent=1 // pred_fallthru
      _
    // Predicated region
    $region22: #{tpu_custom_call.1} parent=1 // pred_check
      _
    $region23: #{tpu_custom_call.1} parent=1 // pred_check_branch
      %67 = sbr.rel (0) target = $region25
    $region24: #{tpu_custom_call.1} parent=1 // pred_region
      _
    $region25: #{tpu_custom_call.1} parent=1 // pred_fallthru
      _
    // Predicated region
    $region26: #{tpu_custom_call.1} parent=1 // pred_check
      _
    $region27: #{tpu_custom_call.1} parent=1 // pred_check_branch
      %69 = sbr.rel (0) target = $region29
    $region28: #{tpu_custom_call.1} parent=1 // pred_region
      %71 = vsyncadd [#allocation9], 0
      %s72 = sshll.u32 %s6, 4
      %s73 = int_to_ptr.hbm [resolvable:$true] %s72
      %s74 = sshll.u32 [#allocation8], 4
      %s75 = int_to_ptr.vmem [resolvable:$true] %s74
      %80 = dma.hbm_to_vmem [thread:$0]  %s73, 32768, %s75, [#allocation9], 1024, 1024, 64
    $region29: #{tpu_custom_call.1} parent=1 // pred_fallthru
      _
    // Predicated region
    $region30: #{tpu_custom_call.1} parent=1 // pred_check
      _
    $region31: #{tpu_custom_call.1} parent=1 // pred_check_branch
      %82 = sbr.rel (0) target = $region33
    $region32: #{tpu_custom_call.1} parent=1 // pred_region
      %84 = vsyncadd [#allocation9], 0
      %s85 = sshll.u32 %s7, 4
      %s86 = int_to_ptr.hbm [resolvable:$true] %s85
      %s87 = sshll.u32 [#allocation10], 4
      %s88 = int_to_ptr.vmem [resolvable:$true] %s87
      %93 = dma.hbm_to_vmem [thread:$0]  %s86, 4096, %s88, [#allocation9], 128, 128, 8
    $region33: #{tpu_custom_call.1} parent=1 // pred_fallthru
      _
    // Predicated region
    $region34: #{tpu_custom_call.1} parent=1 // pred_check
      _
    $region35: #{tpu_custom_call.1} parent=1 // pred_check_branch
      %95 = sbr.rel (0) target = $region37
    $region36: #{tpu_custom_call.1} parent=1 // pred_region
      _
    $region37: #{tpu_custom_call.1} parent=1 // pred_fallthru
      _
    // Predicated region
    $region38: #{tpu_custom_call.1} parent=1 // pred_check
      _
    $region39: #{tpu_custom_call.1} parent=1 // pred_check_branch
      %97 = sbr.rel (0) target = $region41
    $region40: #{tpu_custom_call.1} parent=1 // pred_region
      %99 = vsyncadd [#allocation12], 0
      %s100 = sshll.u32 %s9, 4
      %s101 = int_to_ptr.hbm [resolvable:$true] %s100
      %s102 = sshll.u32 [#allocation11], 4
      %s103 = int_to_ptr.vmem [resolvable:$true] %s102
      %108 = dma.hbm_to_vmem [thread:$0]  %s101, 4096, %s103, [#allocation12], 256, 256, 16
    $region41: #{tpu_custom_call.1} parent=1 // pred_fallthru
      _
    // Predicated region
    $region42: #{tpu_custom_call.1} parent=1 // pred_check
      _
    $region43: #{tpu_custom_call.1} parent=1 // pred_check_branch
      %110 = sbr.rel (0) target = $region45
    $region44: #{tpu_custom_call.1} parent=1 // pred_region
      _
    $region45: #{tpu_custom_call.1} parent=1 // pred_fallthru
      _
    // Predicated region
    $region46: #{tpu_custom_call.1} parent=1 // pred_check
      _
    $region47: #{tpu_custom_call.1} parent=1 // pred_check_branch
      %112 = sbr.rel (0) target = $region49
    $region48: #{tpu_custom_call.1} parent=1 // pred_region
      %114 = vsyncadd [#allocation12], 0
      %s115 = sshll.u32 %s11, 4
      %s116 = int_to_ptr.hbm [resolvable:$true] %s115
      %s117 = sshll.u32 [#allocation13], 4
      %s118 = int_to_ptr.vmem [resolvable:$true] %s117
      %123 = dma.hbm_to_vmem [thread:$0]  %s116, 4096, %s118, [#allocation12], 128, 128, 8
    $region49: #{tpu_custom_call.1} parent=1 // pred_fallthru
      _
    // Predicated region
    $region50: #{tpu_custom_call.1} parent=1 // pred_check
      _
    $region51: #{tpu_custom_call.1} parent=1 // pred_check_branch
      %125 = sbr.rel (0) target = $region53
    $region52: #{tpu_custom_call.1} parent=1 // pred_region
      _
    $region53: #{tpu_custom_call.1} parent=1 // pred_fallthru
      _
    // Predicated region
    $region54: #{tpu_custom_call.1} parent=1 // pred_check
      _
    $region55: #{tpu_custom_call.1} parent=1 // pred_check_branch
      %127 = sbr.rel (0) target = $region57
    $region56: #{tpu_custom_call.1} parent=1 // pred_region
      %129 = dma.done [#allocation3], 4096
    $region57: #{tpu_custom_call.1} parent=1 // pred_fallthru
      _
    // Predicated region
    $region58: #{tpu_custom_call.1} parent=1 // pred_check
      _
    $region59: #{tpu_custom_call.1} parent=1 // pred_check_branch
      %131 = sbr.rel (0) target = $region61
    $region60: #{tpu_custom_call.1} parent=1 // pred_region
      %133 = dma.done [#allocation6], 32768
    $region61: #{tpu_custom_call.1} parent=1 // pred_fallthru
      _
    // Predicated region
    $region62: #{tpu_custom_call.1} parent=1 // pred_check
      _
    $region63: #{tpu_custom_call.1} parent=1 // pred_check_branch
      %135 = sbr.rel (0) target = $region65
    $region64: #{tpu_custom_call.1} parent=1 // pred_region
      %137 = dma.done [#allocation6], 32768
    $region65: #{tpu_custom_call.1} parent=1 // pred_fallthru
      _
    // Predicated region
    $region66: #{tpu_custom_call.1} parent=1 // pred_check
      _
    $region67: #{tpu_custom_call.1} parent=1 // pred_check_branch
      %139 = sbr.rel (0) target = $region69
    $region68: #{tpu_custom_call.1} parent=1 // pred_region
      %141 = dma.done [#allocation9], 32768
    $region69: #{tpu_custom_call.1} parent=1 // pred_fallthru
      _
    // Predicated region
    $region70: #{tpu_custom_call.1} parent=1 // pred_check
      _
    $region71: #{tpu_custom_call.1} parent=1 // pred_check_branch
      %143 = sbr.rel (0) target = $region73
    $region72: #{tpu_custom_call.1} parent=1 // pred_region
      %145 = dma.done [#allocation9], 4096
    $region73: #{tpu_custom_call.1} parent=1 // pred_fallthru
      _
    // Predicated region
    $region74: #{tpu_custom_call.1} parent=1 // pred_check
      _
    $region75: #{tpu_custom_call.1} parent=1 // pred_check_branch
      %147 = sbr.rel (0) target = $region77
    $region76: #{tpu_custom_call.1} parent=1 // pred_region
      %149 = dma.done [#allocation12], 4096
    $region77: #{tpu_custom_call.1} parent=1 // pred_fallthru
      _
    // Predicated region
    $region78: #{tpu_custom_call.1} parent=1 // pred_check
      _
    $region79: #{tpu_custom_call.1} parent=1 // pred_check_branch
      %151 = sbr.rel (0) target = $region81
    $region80: #{tpu_custom_call.1} parent=1 // pred_region
      %153 = dma.done [#allocation12], 4096
    $region81: #{tpu_custom_call.1} parent=1 // pred_fallthru
      _
    %v154 = vld [vmem:[%s0] sm:$0xff]
    %v155 = vld [vmem:[%s0 + $0x8] sm:$0xff]
    %v156 = vld [vmem:[%s0 + $0x10] sm:$0xff]
    %v157 = vld [vmem:[%s0 + $0x18] sm:$0xff]
    %v158 = vld [vmem:[%s0 + $0x20] sm:$0xff]
    %v159 = vld [vmem:[%s0 + $0x28] sm:$0xff]
    %v160 = vld [vmem:[%s0 + $0x30] sm:$0xff]
    %v161 = vld [vmem:[%s0 + $0x38] sm:$0xff]
    %v162 = vld [vmem:[#allocation2] sm:$0xff]
    %v163 = vld [vmem:[#allocation2 + $0x8] sm:$0xff]
    %v164 = vld [vmem:[#allocation2 + $0x10] sm:$0xff]
    %v165 = vld [vmem:[#allocation2 + $0x18] sm:$0xff]
    %v166 = vld [vmem:[#allocation2 + $0x20] sm:$0xff]
    %v167 = vld [vmem:[#allocation2 + $0x28] sm:$0xff]
    %v168 = vld [vmem:[#allocation2 + $0x30] sm:$0xff]
    %v169 = vld [vmem:[#allocation2 + $0x38] sm:$0xff]
    %v170 = vld [vmem:[#allocation2 + $0x40] sm:$0xff]
    %v171 = vld [vmem:[#allocation2 + $0x48] sm:$0xff]
    %v172 = vld [vmem:[#allocation2 + $0x50] sm:$0xff]
    %v173 = vld [vmem:[#allocation2 + $0x58] sm:$0xff]
    %v174 = vld [vmem:[#allocation2 + $0x60] sm:$0xff]
    %v175 = vld [vmem:[#allocation2 + $0x68] sm:$0xff]
    %v176 = vld [vmem:[#allocation2 + $0x70] sm:$0xff]
    %v177 = vld [vmem:[#allocation2 + $0x78] sm:$0xff]
    %v178 = vld [vmem:[#allocation2 + $0x80] sm:$0xff]
    %v179 = vld [vmem:[#allocation2 + $0x88] sm:$0xff]
    %v180 = vld [vmem:[#allocation2 + $0x90] sm:$0xff]
    %v181 = vld [vmem:[#allocation2 + $0x98] sm:$0xff]
    %v182 = vld [vmem:[#allocation2 + $0xa0] sm:$0xff]
    %v183 = vld [vmem:[#allocation2 + $0xa8] sm:$0xff]
    %v184 = vld [vmem:[#allocation2 + $0xb0] sm:$0xff]
    %v185 = vld [vmem:[#allocation2 + $0xb8] sm:$0xff]
    %v186 = vld [vmem:[#allocation2 + $0xc0] sm:$0xff]
    %v187 = vld [vmem:[#allocation2 + $0xc8] sm:$0xff]
    %v188 = vld [vmem:[#allocation2 + $0xd0] sm:$0xff]
    %v189 = vld [vmem:[#allocation2 + $0xd8] sm:$0xff]
    %v190 = vld [vmem:[#allocation2 + $0xe0] sm:$0xff]
    %v191 = vld [vmem:[#allocation2 + $0xe8] sm:$0xff]
    %v192 = vld [vmem:[#allocation2 + $0xf0] sm:$0xff]
    %v193 = vld [vmem:[#allocation2 + $0xf8] sm:$0xff]
    %v194 = vld [vmem:[%s2] sm:$0xff]
    %v195 = vld [vmem:[#allocation5] sm:$0xff]
    %v196 = vld [vmem:[#allocation5 + $0x8] sm:$0xff]
    %v197 = vld [vmem:[#allocation5 + $0x10] sm:$0xff]
    %v198 = vld [vmem:[#allocation5 + $0x18] sm:$0xff]
    %v199 = vld [vmem:[#allocation5 + $0x20] sm:$0xff]
    %v200 = vld [vmem:[#allocation5 + $0x28] sm:$0xff]
    %v201 = vld [vmem:[#allocation5 + $0x30] sm:$0xff]
    %v202 = vld [vmem:[#allocation5 + $0x38] sm:$0xff]
    %v203 = vld [vmem:[#allocation5 + $0x40] sm:$0xff]
    %v204 = vld [vmem:[#allocation5 + $0x48] sm:$0xff]
    %v205 = vld [vmem:[#allocation5 + $0x50] sm:$0xff]
    %v206 = vld [vmem:[#allocation5 + $0x58] sm:$0xff]
    %v207 = vld [vmem:[#allocation5 + $0x60] sm:$0xff]
    %v208 = vld [vmem:[#allocation5 + $0x68] sm:$0xff]
    %v209 = vld [vmem:[#allocation5 + $0x70] sm:$0xff]
    %v210 = vld [vmem:[#allocation5 + $0x78] sm:$0xff]
    %v211 = vld [vmem:[#allocation5 + $0x80] sm:$0xff]
    %v212 = vld [vmem:[#allocation5 + $0x88] sm:$0xff]
    %v213 = vld [vmem:[#allocation5 + $0x90] sm:$0xff]
    %v214 = vld [vmem:[#allocation5 + $0x98] sm:$0xff]
    %v215 = vld [vmem:[#allocation5 + $0xa0] sm:$0xff]
    %v216 = vld [vmem:[#allocation5 + $0xa8] sm:$0xff]
    %v217 = vld [vmem:[#allocation5 + $0xb0] sm:$0xff]
    %v218 = vld [vmem:[#allocation5 + $0xb8] sm:$0xff]
    %v219 = vld [vmem:[#allocation5 + $0xc0] sm:$0xff]
    %v220 = vld [vmem:[#allocation5 + $0xc8] sm:$0xff]
    %v221 = vld [vmem:[#allocation5 + $0xd0] sm:$0xff]
    %v222 = vld [vmem:[#allocation5 + $0xd8] sm:$0xff]
    %v223 = vld [vmem:[#allocation5 + $0xe0] sm:$0xff]
    %v224 = vld [vmem:[#allocation5 + $0xe8] sm:$0xff]
    %v225 = vld [vmem:[#allocation5 + $0xf0] sm:$0xff]
    %v226 = vld [vmem:[#allocation5 + $0xf8] sm:$0xff]
    %v227 = vld [vmem:[#allocation5 + $0x100] sm:$0xff]
    %v228 = vld [vmem:[#allocation5 + $0x108] sm:$0xff]
    %v229 = vld [vmem:[#allocation5 + $0x110] sm:$0xff]
    %v230 = vld [vmem:[#allocation5 + $0x118] sm:$0xff]
    %v231 = vld [vmem:[#allocation5 + $0x120] sm:$0xff]
    %v232 = vld [vmem:[#allocation5 + $0x128] sm:$0xff]
    %v233 = vld [vmem:[#allocation5 + $0x130] sm:$0xff]
    %v234 = vld [vmem:[#allocation5 + $0x138] sm:$0xff]
    %v235 = vld [vmem:[#allocation5 + $0x140] sm:$0xff]
    %v236 = vld [vmem:[#allocation5 + $0x148] sm:$0xff]
    %v237 = vld [vmem:[#allocation5 + $0x150] sm:$0xff]
    %v238 = vld [vmem:[#allocation5 + $0x158] sm:$0xff]
    %v239 = vld [vmem:[#allocation5 + $0x160] sm:$0xff]
    %v240 = vld [vmem:[#allocation5 + $0x168] sm:$0xff]
    %v241 = vld [vmem:[#allocation5 + $0x170] sm:$0xff]
    %v242 = vld [vmem:[#allocation5 + $0x178] sm:$0xff]
    %v243 = vld [vmem:[#allocation5 + $0x180] sm:$0xff]
    %v244 = vld [vmem:[#allocation5 + $0x188] sm:$0xff]
    %v245 = vld [vmem:[#allocation5 + $0x190] sm:$0xff]
    %v246 = vld [vmem:[#allocation5 + $0x198] sm:$0xff]
    %v247 = vld [vmem:[#allocation5 + $0x1a0] sm:$0xff]
    %v248 = vld [vmem:[#allocation5 + $0x1a8] sm:$0xff]
    %v249 = vld [vmem:[#allocation5 + $0x1b0] sm:$0xff]
    %v250 = vld [vmem:[#allocation5 + $0x1b8] sm:$0xff]
    %v251 = vld [vmem:[#allocation5 + $0x1c0] sm:$0xff]
    %v252 = vld [vmem:[#allocation5 + $0x1c8] sm:$0xff]
    %v253 = vld [vmem:[#allocation5 + $0x1d0] sm:$0xff]
    %v254 = vld [vmem:[#allocation5 + $0x1d8] sm:$0xff]
    %v255 = vld [vmem:[#allocation5 + $0x1e0] sm:$0xff]
    %v256 = vld [vmem:[#allocation5 + $0x1e8] sm:$0xff]
    %v257 = vld [vmem:[#allocation5 + $0x1f0] sm:$0xff]
    %v258 = vld [vmem:[#allocation5 + $0x1f8] sm:$0xff]
    %v259 = vld [vmem:[#allocation5 + $0x200] sm:$0xff]
    %v260 = vld [vmem:[#allocation5 + $0x208] sm:$0xff]
    %v261 = vld [vmem:[#allocation5 + $0x210] sm:$0xff]
    %v262 = vld [vmem:[#allocation5 + $0x218] sm:$0xff]
    %v263 = vld [vmem:[#allocation5 + $0x220] sm:$0xff]
    %v264 = vld [vmem:[#allocation5 + $0x228] sm:$0xff]
    %v265 = vld [vmem:[#allocation5 + $0x230] sm:$0xff]
    %v266 = vld [vmem:[#allocation5 + $0x238] sm:$0xff]
    %v267 = vld [vmem:[#allocation5 + $0x240] sm:$0xff]
    %v268 = vld [vmem:[#allocation5 + $0x248] sm:$0xff]
    %v269 = vld [vmem:[#allocation5 + $0x250] sm:$0xff]
    %v270 = vld [vmem:[#allocation5 + $0x258] sm:$0xff]
    %v271 = vld [vmem:[#allocation5 + $0x260] sm:$0xff]
    %v272 = vld [vmem:[#allocation5 + $0x268] sm:$0xff]
    %v273 = vld [vmem:[#allocation5 + $0x270] sm:$0xff]
    %v274 = vld [vmem:[#allocation5 + $0x278] sm:$0xff]
    %v275 = vld [vmem:[#allocation5 + $0x280] sm:$0xff]
    %v276 = vld [vmem:[#allocation5 + $0x288] sm:$0xff]
    %v277 = vld [vmem:[#allocation5 + $0x290] sm:$0xff]
    %v278 = vld [vmem:[#allocation5 + $0x298] sm:$0xff]
    %v279 = vld [vmem:[#allocation5 + $0x2a0] sm:$0xff]
    %v280 = vld [vmem:[#allocation5 + $0x2a8] sm:$0xff]
    %v281 = vld [vmem:[#allocation5 + $0x2b0] sm:$0xff]
    %v282 = vld [vmem:[#allocation5 + $0x2b8] sm:$0xff]
    %v283 = vld [vmem:[#allocation5 + $0x2c0] sm:$0xff]
    %v284 = vld [vmem:[#allocation5 + $0x2c8] sm:$0xff]
    %v285 = vld [vmem:[#allocation5 + $0x2d0] sm:$0xff]
    %v286 = vld [vmem:[#allocation5 + $0x2d8] sm:$0xff]
    %v287 = vld [vmem:[#allocation5 + $0x2e0] sm:$0xff]
    %v288 = vld [vmem:[#allocation5 + $0x2e8] sm:$0xff]
    %v289 = vld [vmem:[#allocation5 + $0x2f0] sm:$0xff]
    %v290 = vld [vmem:[#allocation5 + $0x2f8] sm:$0xff]
    %v291 = vld [vmem:[#allocation5 + $0x300] sm:$0xff]
    %v292 = vld [vmem:[#allocation5 + $0x308] sm:$0xff]
    %v293 = vld [vmem:[#allocation5 + $0x310] sm:$0xff]
    %v294 = vld [vmem:[#allocation5 + $0x318] sm:$0xff]
    %v295 = vld [vmem:[#allocation5 + $0x320] sm:$0xff]
    %v296 = vld [vmem:[#allocation5 + $0x328] sm:$0xff]
    %v297 = vld [vmem:[#allocation5 + $0x330] sm:$0xff]
    %v298 = vld [vmem:[#allocation5 + $0x338] sm:$0xff]
    %v299 = vld [vmem:[#allocation5 + $0x340] sm:$0xff]
    %v300 = vld [vmem:[#allocation5 + $0x348] sm:$0xff]
    %v301 = vld [vmem:[#allocation5 + $0x350] sm:$0xff]
    %v302 = vld [vmem:[#allocation5 + $0x358] sm:$0xff]
    %v303 = vld [vmem:[#allocation5 + $0x360] sm:$0xff]
    %v304 = vld [vmem:[#allocation5 + $0x368] sm:$0xff]
    %v305 = vld [vmem:[#allocation5 + $0x370] sm:$0xff]
    %v306 = vld [vmem:[#allocation5 + $0x378] sm:$0xff]
    %v307 = vld [vmem:[#allocation5 + $0x380] sm:$0xff]
    %v308 = vld [vmem:[#allocation5 + $0x388] sm:$0xff]
    %v309 = vld [vmem:[#allocation5 + $0x390] sm:$0xff]
    %v310 = vld [vmem:[#allocation5 + $0x398] sm:$0xff]
    %v311 = vld [vmem:[#allocation5 + $0x3a0] sm:$0xff]
    %v312 = vld [vmem:[#allocation5 + $0x3a8] sm:$0xff]
    %v313 = vld [vmem:[#allocation5 + $0x3b0] sm:$0xff]
    %v314 = vld [vmem:[#allocation5 + $0x3b8] sm:$0xff]
    %v315 = vld [vmem:[#allocation5 + $0x3c0] sm:$0xff]
    %v316 = vld [vmem:[#allocation5 + $0x3c8] sm:$0xff]
    %v317 = vld [vmem:[#allocation5 + $0x3d0] sm:$0xff]
    %v318 = vld [vmem:[#allocation5 + $0x3d8] sm:$0xff]
    %v319 = vld [vmem:[#allocation5 + $0x3e0] sm:$0xff]
    %v320 = vld [vmem:[#allocation5 + $0x3e8] sm:$0xff]
    %v321 = vld [vmem:[#allocation5 + $0x3f0] sm:$0xff]
    %v322 = vld [vmem:[#allocation5 + $0x3f8] sm:$0xff]
    %v323 = vld [vmem:[#allocation5 + $0x400] sm:$0xff]
    %v324 = vld [vmem:[#allocation5 + $0x408] sm:$0xff]
    %v325 = vld [vmem:[#allocation5 + $0x410] sm:$0xff]
    %v326 = vld [vmem:[#allocation5 + $0x418] sm:$0xff]
    %v327 = vld [vmem:[#allocation5 + $0x420] sm:$0xff]
    %v328 = vld [vmem:[#allocation5 + $0x428] sm:$0xff]
    %v329 = vld [vmem:[#allocation5 + $0x430] sm:$0xff]
    %v330 = vld [vmem:[#allocation5 + $0x438] sm:$0xff]
    %v331 = vld [vmem:[#allocation5 + $0x440] sm:$0xff]
    %v332 = vld [vmem:[#allocation5 + $0x448] sm:$0xff]
    %v333 = vld [vmem:[#allocation5 + $0x450] sm:$0xff]
    %v334 = vld [vmem:[#allocation5 + $0x458] sm:$0xff]
    %v335 = vld [vmem:[#allocation5 + $0x460] sm:$0xff]
    %v336 = vld [vmem:[#allocation5 + $0x468] sm:$0xff]
    %v337 = vld [vmem:[#allocation5 + $0x470] sm:$0xff]
    %v338 = vld [vmem:[#allocation5 + $0x478] sm:$0xff]
    %v339 = vld [vmem:[#allocation5 + $0x480] sm:$0xff]
    %v340 = vld [vmem:[#allocation5 + $0x488] sm:$0xff]
    %v341 = vld [vmem:[#allocation5 + $0x490] sm:$0xff]
    %v342 = vld [vmem:[#allocation5 + $0x498] sm:$0xff]
    %v343 = vld [vmem:[#allocation5 + $0x4a0] sm:$0xff]
    %v344 = vld [vmem:[#allocation5 + $0x4a8] sm:$0xff]
    %v345 = vld [vmem:[#allocation5 + $0x4b0] sm:$0xff]
    %v346 = vld [vmem:[#allocation5 + $0x4b8] sm:$0xff]
    %v347 = vld [vmem:[#allocation5 + $0x4c0] sm:$0xff]
    %v348 = vld [vmem:[#allocation5 + $0x4c8] sm:$0xff]
    %v349 = vld [vmem:[#allocation5 + $0x4d0] sm:$0xff]
    %v350 = vld [vmem:[#allocation5 + $0x4d8] sm:$0xff]
    %v351 = vld [vmem:[#allocation5 + $0x4e0] sm:$0xff]
    %v352 = vld [vmem:[#allocation5 + $0x4e8] sm:$0xff]
    %v353 = vld [vmem:[#allocation5 + $0x4f0] sm:$0xff]
    %v354 = vld [vmem:[#allocation5 + $0x4f8] sm:$0xff]
    %v355 = vld [vmem:[#allocation5 + $0x500] sm:$0xff]
    %v356 = vld [vmem:[#allocation5 + $0x508] sm:$0xff]
    %v357 = vld [vmem:[#allocation5 + $0x510] sm:$0xff]
    %v358 = vld [vmem:[#allocation5 + $0x518] sm:$0xff]
    %v359 = vld [vmem:[#allocation5 + $0x520] sm:$0xff]
    %v360 = vld [vmem:[#allocation5 + $0x528] sm:$0xff]
    %v361 = vld [vmem:[#allocation5 + $0x530] sm:$0xff]
    %v362 = vld [vmem:[#allocation5 + $0x538] sm:$0xff]
    %v363 = vld [vmem:[#allocation5 + $0x540] sm:$0xff]
    %v364 = vld [vmem:[#allocation5 + $0x548] sm:$0xff]
    %v365 = vld [vmem:[#allocation5 + $0x550] sm:$0xff]
    %v366 = vld [vmem:[#allocation5 + $0x558] sm:$0xff]
    %v367 = vld [vmem:[#allocation5 + $0x560] sm:$0xff]
    %v368 = vld [vmem:[#allocation5 + $0x568] sm:$0xff]
    %v369 = vld [vmem:[#allocation5 + $0x570] sm:$0xff]
    %v370 = vld [vmem:[#allocation5 + $0x578] sm:$0xff]
    %v371 = vld [vmem:[#allocation5 + $0x580] sm:$0xff]
    %v372 = vld [vmem:[#allocation5 + $0x588] sm:$0xff]
    %v373 = vld [vmem:[#allocation5 + $0x590] sm:$0xff]
    %v374 = vld [vmem:[#allocation5 + $0x598] sm:$0xff]
    %v375 = vld [vmem:[#allocation5 + $0x5a0] sm:$0xff]
    %v376 = vld [vmem:[#allocation5 + $0x5a8] sm:$0xff]
    %v377 = vld [vmem:[#allocation5 + $0x5b0] sm:$0xff]
    %v378 = vld [vmem:[#allocation5 + $0x5b8] sm:$0xff]
    %v379 = vld [vmem:[#allocation5 + $0x5c0] sm:$0xff]
    %v380 = vld [vmem:[#allocation5 + $0x5c8] sm:$0xff]
    %v381 = vld [vmem:[#allocation5 + $0x5d0] sm:$0xff]
    %v382 = vld [vmem:[#allocation5 + $0x5d8] sm:$0xff]
    %v383 = vld [vmem:[#allocation5 + $0x5e0] sm:$0xff]
    %v384 = vld [vmem:[#allocation5 + $0x5e8] sm:$0xff]
    %v385 = vld [vmem:[#allocation5 + $0x5f0] sm:$0xff]
    %v386 = vld [vmem:[#allocation5 + $0x5f8] sm:$0xff]
    %v387 = vld [vmem:[#allocation5 + $0x600] sm:$0xff]
    %v388 = vld [vmem:[#allocation5 + $0x608] sm:$0xff]
    %v389 = vld [vmem:[#allocation5 + $0x610] sm:$0xff]
    %v390 = vld [vmem:[#allocation5 + $0x618] sm:$0xff]
    %v391 = vld [vmem:[#allocation5 + $0x620] sm:$0xff]
    %v392 = vld [vmem:[#allocation5 + $0x628] sm:$0xff]
    %v393 = vld [vmem:[#allocation5 + $0x630] sm:$0xff]
    %v394 = vld [vmem:[#allocation5 + $0x638] sm:$0xff]
    %v395 = vld [vmem:[#allocation5 + $0x640] sm:$0xff]
    %v396 = vld [vmem:[#allocation5 + $0x648] sm:$0xff]
    %v397 = vld [vmem:[#allocation5 + $0x650] sm:$0xff]
    %v398 = vld [vmem:[#allocation5 + $0x658] sm:$0xff]
    %v399 = vld [vmem:[#allocation5 + $0x660] sm:$0xff]
    %v400 = vld [vmem:[#allocation5 + $0x668] sm:$0xff]
    %v401 = vld [vmem:[#allocation5 + $0x670] sm:$0xff]
    %v402 = vld [vmem:[#allocation5 + $0x678] sm:$0xff]
    %v403 = vld [vmem:[#allocation5 + $0x680] sm:$0xff]
    %v404 = vld [vmem:[#allocation5 + $0x688] sm:$0xff]
    %v405 = vld [vmem:[#allocation5 + $0x690] sm:$0xff]
    %v406 = vld [vmem:[#allocation5 + $0x698] sm:$0xff]
    %v407 = vld [vmem:[#allocation5 + $0x6a0] sm:$0xff]
    %v408 = vld [vmem:[#allocation5 + $0x6a8] sm:$0xff]
    %v409 = vld [vmem:[#allocation5 + $0x6b0] sm:$0xff]
    %v410 = vld [vmem:[#allocation5 + $0x6b8] sm:$0xff]
    %v411 = vld [vmem:[#allocation5 + $0x6c0] sm:$0xff]
    %v412 = vld [vmem:[#allocation5 + $0x6c8] sm:$0xff]
    %v413 = vld [vmem:[#allocation5 + $0x6d0] sm:$0xff]
    %v414 = vld [vmem:[#allocation5 + $0x6d8] sm:$0xff]
    %v415 = vld [vmem:[#allocation5 + $0x6e0] sm:$0xff]
    %v416 = vld [vmem:[#allocation5 + $0x6e8] sm:$0xff]
    %v417 = vld [vmem:[#allocation5 + $0x6f0] sm:$0xff]
    %v418 = vld [vmem:[#allocation5 + $0x6f8] sm:$0xff]
    %v419 = vld [vmem:[#allocation5 + $0x700] sm:$0xff]
    %v420 = vld [vmem:[#allocation5 + $0x708] sm:$0xff]
    %v421 = vld [vmem:[#allocation5 + $0x710] sm:$0xff]
    %v422 = vld [vmem:[#allocation5 + $0x718] sm:$0xff]
    %v423 = vld [vmem:[#allocation5 + $0x720] sm:$0xff]
    %v424 = vld [vmem:[#allocation5 + $0x728] sm:$0xff]
    %v425 = vld [vmem:[#allocation5 + $0x730] sm:$0xff]
    %v426 = vld [vmem:[#allocation5 + $0x738] sm:$0xff]
    %v427 = vld [vmem:[#allocation5 + $0x740] sm:$0xff]
    %v428 = vld [vmem:[#allocation5 + $0x748] sm:$0xff]
    %v429 = vld [vmem:[#allocation5 + $0x750] sm:$0xff]
    %v430 = vld [vmem:[#allocation5 + $0x758] sm:$0xff]
    %v431 = vld [vmem:[#allocation5 + $0x760] sm:$0xff]
    %v432 = vld [vmem:[#allocation5 + $0x768] sm:$0xff]
    %v433 = vld [vmem:[#allocation5 + $0x770] sm:$0xff]
    %v434 = vld [vmem:[#allocation5 + $0x778] sm:$0xff]
    %v435 = vld [vmem:[#allocation5 + $0x780] sm:$0xff]
    %v436 = vld [vmem:[#allocation5 + $0x788] sm:$0xff]
    %v437 = vld [vmem:[#allocation5 + $0x790] sm:$0xff]
    %v438 = vld [vmem:[#allocation5 + $0x798] sm:$0xff]
    %v439 = vld [vmem:[#allocation5 + $0x7a0] sm:$0xff]
    %v440 = vld [vmem:[#allocation5 + $0x7a8] sm:$0xff]
    %v441 = vld [vmem:[#allocation5 + $0x7b0] sm:$0xff]
    %v442 = vld [vmem:[#allocation5 + $0x7b8] sm:$0xff]
    %v443 = vld [vmem:[#allocation5 + $0x7c0] sm:$0xff]
    %v444 = vld [vmem:[#allocation5 + $0x7c8] sm:$0xff]
    %v445 = vld [vmem:[#allocation5 + $0x7d0] sm:$0xff]
    %v446 = vld [vmem:[#allocation5 + $0x7d8] sm:$0xff]
    %v447 = vld [vmem:[#allocation5 + $0x7e0] sm:$0xff]
    %v448 = vld [vmem:[#allocation5 + $0x7e8] sm:$0xff]
    %v449 = vld [vmem:[#allocation5 + $0x7f0] sm:$0xff]
    %v450 = vld [vmem:[#allocation5 + $0x7f8] sm:$0xff]
    %v452 = vperm.slane %v194, 0
    %v453 = vperm.slane %v194, 1
    %v454 = vperm.slane %v194, 2
    %v455 = vperm.slane %v194, 3
    %v456 = vperm.slane %v194, 4
    %v457 = vperm.slane %v194, 5
    %v458 = vperm.slane %v194, 6
    %v459 = vperm.slane %v194, 7
    %vm468 = vcmask 261120
    %v470 = vsel %vm468, %v154, 0
    %v473 = vsel %vm468, %v155, 0
    %v476 = vsel %vm468, %v156, 0
    %v479 = vsel %vm468, %v157, 0
    %v482 = vsel %vm468, %v158, 0
    %v485 = vsel %vm468, %v159, 0
    %v488 = vsel %vm468, %v160, 0
    %v491 = vsel %vm468, %v161, 0
    %493 = vmatpush.msra.mxu0 0.0
    %494 = vmatpush.msra.mxu0 0.0
    %495 = vmatpush.msra.mxu0 0.0
    %496 = vmatpush.msra.mxu0 0.0
    %497 = vmatpush.msra.mxu0 0.0
    %498 = vmatpush.msra.mxu0 0.0
    %499 = vmatpush.msra.mxu0 0.0
    %500 = vmatpush.msra.mxu0 0.0
    %501 = vmatpush.msra.mxu0 0.0
    %502 = vmatpush.msra.mxu0 0.0
    %503 = vmatpush.msra.mxu0 0.0
    %504 = vmatpush.msra.mxu0 0.0
    %505 = vmatpush.msra.mxu0 %v186
    %506 = vmatpush.msra.mxu0 %v178
    %507 = vmatpush.msra.mxu0 %v170
    %508 = vmatpush.msra.mxu0 %v162
    %509 = vmatmul.f32.gmra.mxu0 %v470
    %v510 = vpop.f32.mrf.mxu0
    %v511 = vadd.f32 %v452, %v510
    %512 = vmatmul.f32.gmra.mxu0 %v473
    %v513 = vpop.f32.mrf.mxu0
    %v514 = vadd.f32 %v452, %v513
    %515 = vmatmul.f32.gmra.mxu0 %v476
    %v516 = vpop.f32.mrf.mxu0
    %v517 = vadd.f32 %v452, %v516
    %518 = vmatmul.f32.gmra.mxu0 %v479
    %v519 = vpop.f32.mrf.mxu0
    %v520 = vadd.f32 %v452, %v519
    %521 = vmatmul.f32.gmra.mxu0 %v482
    %v522 = vpop.f32.mrf.mxu0
    %v523 = vadd.f32 %v452, %v522
    %524 = vmatmul.f32.gmra.mxu0 %v485
    %v525 = vpop.f32.mrf.mxu0
    %v526 = vadd.f32 %v452, %v525
    %527 = vmatmul.f32.gmra.mxu0 %v488
    %v528 = vpop.f32.mrf.mxu0
    %v529 = vadd.f32 %v452, %v528
    %530 = vmatmul.f32.gmra.mxu0 %v491
    %v531 = vpop.f32.mrf.mxu0
    %v532 = vadd.f32 %v452, %v531
    %533 = vdwg.mxu0
    %534 = vmatpush.msra.mxu0 0.0
    %535 = vmatpush.msra.mxu0 0.0
    %536 = vmatpush.msra.mxu0 0.0
    %537 = vmatpush.msra.mxu0 0.0
    %538 = vmatpush.msra.mxu0 0.0
    %539 = vmatpush.msra.mxu0 0.0
    %540 = vmatpush.msra.mxu0 0.0
    %541 = vmatpush.msra.mxu0 0.0
    %542 = vmatpush.msra.mxu0 0.0
    %543 = vmatpush.msra.mxu0 0.0
    %544 = vmatpush.msra.mxu0 0.0
    %545 = vmatpush.msra.mxu0 0.0
    %546 = vmatpush.msra.mxu0 %v187
    %547 = vmatpush.msra.mxu0 %v179
    %548 = vmatpush.msra.mxu0 %v171
    %549 = vmatpush.msra.mxu0 %v163
    %550 = vmatmul.f32.gmra.mxu0 %v470
    %v551 = vpop.f32.mrf.mxu0
    %v552 = vadd.f32 %v453, %v551
    %553 = vmatmul.f32.gmra.mxu0 %v473
    %v554 = vpop.f32.mrf.mxu0
    %v555 = vadd.f32 %v453, %v554
    %556 = vmatmul.f32.gmra.mxu0 %v476
    %v557 = vpop.f32.mrf.mxu0
    %v558 = vadd.f32 %v453, %v557
    %559 = vmatmul.f32.gmra.mxu0 %v479
    %v560 = vpop.f32.mrf.mxu0
    %v561 = vadd.f32 %v453, %v560
    %562 = vmatmul.f32.gmra.mxu0 %v482
    %v563 = vpop.f32.mrf.mxu0
    %v564 = vadd.f32 %v453, %v563
    %565 = vmatmul.f32.gmra.mxu0 %v485
    %v566 = vpop.f32.mrf.mxu0
    %v567 = vadd.f32 %v453, %v566
    %568 = vmatmul.f32.gmra.mxu0 %v488
    %v569 = vpop.f32.mrf.mxu0
    %v570 = vadd.f32 %v453, %v569
    %571 = vmatmul.f32.gmra.mxu0 %v491
    %v572 = vpop.f32.mrf.mxu0
    %v573 = vadd.f32 %v453, %v572
    %574 = vdwg.mxu0
    %575 = vmatpush.msra.mxu0 0.0
    %576 = vmatpush.msra.mxu0 0.0
    %577 = vmatpush.msra.mxu0 0.0
    %578 = vmatpush.msra.mxu0 0.0
    %579 = vmatpush.msra.mxu0 0.0
    %580 = vmatpush.msra.mxu0 0.0
    %581 = vmatpush.msra.mxu0 0.0
    %582 = vmatpush.msra.mxu0 0.0
    %583 = vmatpush.msra.mxu0 0.0
    %584 = vmatpush.msra.mxu0 0.0
    %585 = vmatpush.msra.mxu0 0.0
    %586 = vmatpush.msra.mxu0 0.0
    %587 = vmatpush.msra.mxu0 %v188
    %588 = vmatpush.msra.mxu0 %v180
    %589 = vmatpush.msra.mxu0 %v172
    %590 = vmatpush.msra.mxu0 %v164
    %591 = vmatmul.f32.gmra.mxu0 %v470
    %v592 = vpop.f32.mrf.mxu0
    %v593 = vadd.f32 %v454, %v592
    %594 = vmatmul.f32.gmra.mxu0 %v473
    %v595 = vpop.f32.mrf.mxu0
    %v596 = vadd.f32 %v454, %v595
    %597 = vmatmul.f32.gmra.mxu0 %v476
    %v598 = vpop.f32.mrf.mxu0
    %v599 = vadd.f32 %v454, %v598
    %600 = vmatmul.f32.gmra.mxu0 %v479
    %v601 = vpop.f32.mrf.mxu0
    %v602 = vadd.f32 %v454, %v601
    %603 = vmatmul.f32.gmra.mxu0 %v482
    %v604 = vpop.f32.mrf.mxu0
    %v605 = vadd.f32 %v454, %v604
    %606 = vmatmul.f32.gmra.mxu0 %v485
    %v607 = vpop.f32.mrf.mxu0
    %v608 = vadd.f32 %v454, %v607
    %609 = vmatmul.f32.gmra.mxu0 %v488
    %v610 = vpop.f32.mrf.mxu0
    %v611 = vadd.f32 %v454, %v610
    %612 = vmatmul.f32.gmra.mxu0 %v491
    %v613 = vpop.f32.mrf.mxu0
    %v614 = vadd.f32 %v454, %v613
    %615 = vdwg.mxu0
    %616 = vmatpush.msra.mxu0 0.0
    %617 = vmatpush.msra.mxu0 0.0
    %618 = vmatpush.msra.mxu0 0.0
    %619 = vmatpush.msra.mxu0 0.0
    %620 = vmatpush.msra.mxu0 0.0
    %621 = vmatpush.msra.mxu0 0.0
    %622 = vmatpush.msra.mxu0 0.0
    %623 = vmatpush.msra.mxu0 0.0
    %624 = vmatpush.msra.mxu0 0.0
    %625 = vmatpush.msra.mxu0 0.0
    %626 = vmatpush.msra.mxu0 0.0
    %627 = vmatpush.msra.mxu0 0.0
    %628 = vmatpush.msra.mxu0 %v189
    %629 = vmatpush.msra.mxu0 %v181
    %630 = vmatpush.msra.mxu0 %v173
    %631 = vmatpush.msra.mxu0 %v165
    %632 = vmatmul.f32.gmra.mxu0 %v470
    %v633 = vpop.f32.mrf.mxu0
    %v634 = vadd.f32 %v455, %v633
    %635 = vmatmul.f32.gmra.mxu0 %v473
    %v636 = vpop.f32.mrf.mxu0
    %v637 = vadd.f32 %v455, %v636
    %638 = vmatmul.f32.gmra.mxu0 %v476
    %v639 = vpop.f32.mrf.mxu0
    %v640 = vadd.f32 %v455, %v639
    %641 = vmatmul.f32.gmra.mxu0 %v479
    %v642 = vpop.f32.mrf.mxu0
    %v643 = vadd.f32 %v455, %v642
    %644 = vmatmul.f32.gmra.mxu0 %v482
    %v645 = vpop.f32.mrf.mxu0
    %v646 = vadd.f32 %v455, %v645
    %647 = vmatmul.f32.gmra.mxu0 %v485
    %v648 = vpop.f32.mrf.mxu0
    %v649 = vadd.f32 %v455, %v648
    %650 = vmatmul.f32.gmra.mxu0 %v488
    %v651 = vpop.f32.mrf.mxu0
    %v652 = vadd.f32 %v455, %v651
    %653 = vmatmul.f32.gmra.mxu0 %v491
    %v654 = vpop.f32.mrf.mxu0
    %v655 = vadd.f32 %v455, %v654
    %656 = vdwg.mxu0
    %657 = vmatpush.msra.mxu0 0.0
    %658 = vmatpush.msra.mxu0 0.0
    %659 = vmatpush.msra.mxu0 0.0
    %660 = vmatpush.msra.mxu0 0.0
    %661 = vmatpush.msra.mxu0 0.0
    %662 = vmatpush.msra.mxu0 0.0
    %663 = vmatpush.msra.mxu0 0.0
    %664 = vmatpush.msra.mxu0 0.0
    %665 = vmatpush.msra.mxu0 0.0
    %666 = vmatpush.msra.mxu0 0.0
    %667 = vmatpush.msra.mxu0 0.0
    %668 = vmatpush.msra.mxu0 0.0
    %669 = vmatpush.msra.mxu0 %v190
    %670 = vmatpush.msra.mxu0 %v182
    %671 = vmatpush.msra.mxu0 %v174
    %672 = vmatpush.msra.mxu0 %v166
    %673 = vmatmul.f32.gmra.mxu0 %v470
    %v674 = vpop.f32.mrf.mxu0
    %v675 = vadd.f32 %v456, %v674
    %676 = vmatmul.f32.gmra.mxu0 %v473
    %v677 = vpop.f32.mrf.mxu0
    %v678 = vadd.f32 %v456, %v677
    %679 = vmatmul.f32.gmra.mxu0 %v476
    %v680 = vpop.f32.mrf.mxu0
    %v681 = vadd.f32 %v456, %v680
    %682 = vmatmul.f32.gmra.mxu0 %v479
    %v683 = vpop.f32.mrf.mxu0
    %v684 = vadd.f32 %v456, %v683
    %685 = vmatmul.f32.gmra.mxu0 %v482
    %v686 = vpop.f32.mrf.mxu0
    %v687 = vadd.f32 %v456, %v686
    %688 = vmatmul.f32.gmra.mxu0 %v485
    %v689 = vpop.f32.mrf.mxu0
    %v690 = vadd.f32 %v456, %v689
    %691 = vmatmul.f32.gmra.mxu0 %v488
    %v692 = vpop.f32.mrf.mxu0
    %v693 = vadd.f32 %v456, %v692
    %694 = vmatmul.f32.gmra.mxu0 %v491
    %v695 = vpop.f32.mrf.mxu0
    %v696 = vadd.f32 %v456, %v695
    %697 = vdwg.mxu0
    %698 = vmatpush.msra.mxu0 0.0
    %699 = vmatpush.msra.mxu0 0.0
    %700 = vmatpush.msra.mxu0 0.0
    %701 = vmatpush.msra.mxu0 0.0
    %702 = vmatpush.msra.mxu0 0.0
    %703 = vmatpush.msra.mxu0 0.0
    %704 = vmatpush.msra.mxu0 0.0
    %705 = vmatpush.msra.mxu0 0.0
    %706 = vmatpush.msra.mxu0 0.0
    %707 = vmatpush.msra.mxu0 0.0
    %708 = vmatpush.msra.mxu0 0.0
    %709 = vmatpush.msra.mxu0 0.0
    %710 = vmatpush.msra.mxu0 %v191
    %711 = vmatpush.msra.mxu0 %v183
    %712 = vmatpush.msra.mxu0 %v175
    %713 = vmatpush.msra.mxu0 %v167
    %714 = vmatmul.f32.gmra.mxu0 %v470
    %v715 = vpop.f32.mrf.mxu0
    %v716 = vadd.f32 %v457, %v715
    %717 = vmatmul.f32.gmra.mxu0 %v473
    %v718 = vpop.f32.mrf.mxu0
    %v719 = vadd.f32 %v457, %v718
    %720 = vmatmul.f32.gmra.mxu0 %v476
    %v721 = vpop.f32.mrf.mxu0
    %v722 = vadd.f32 %v457, %v721
    %723 = vmatmul.f32.gmra.mxu0 %v479
    %v724 = vpop.f32.mrf.mxu0
    %v725 = vadd.f32 %v457, %v724
    %726 = vmatmul.f32.gmra.mxu0 %v482
    %v727 = vpop.f32.mrf.mxu0
    %v728 = vadd.f32 %v457, %v727
    %729 = vmatmul.f32.gmra.mxu0 %v485
    %v730 = vpop.f32.mrf.mxu0
    %v731 = vadd.f32 %v457, %v730
    %732 = vmatmul.f32.gmra.mxu0 %v488
    %v733 = vpop.f32.mrf.mxu0
    %v734 = vadd.f32 %v457, %v733
    %735 = vmatmul.f32.gmra.mxu0 %v491
    %v736 = vpop.f32.mrf.mxu0
    %v737 = vadd.f32 %v457, %v736
    %738 = vdwg.mxu0
    %739 = vmatpush.msra.mxu0 0.0
    %740 = vmatpush.msra.mxu0 0.0
    %741 = vmatpush.msra.mxu0 0.0
    %742 = vmatpush.msra.mxu0 0.0
    %743 = vmatpush.msra.mxu0 0.0
    %744 = vmatpush.msra.mxu0 0.0
    %745 = vmatpush.msra.mxu0 0.0
    %746 = vmatpush.msra.mxu0 0.0
    %747 = vmatpush.msra.mxu0 0.0
    %748 = vmatpush.msra.mxu0 0.0
    %749 = vmatpush.msra.mxu0 0.0
    %750 = vmatpush.msra.mxu0 0.0
    %751 = vmatpush.msra.mxu0 %v192
    %752 = vmatpush.msra.mxu0 %v184
    %753 = vmatpush.msra.mxu0 %v176
    %754 = vmatpush.msra.mxu0 %v168
    %755 = vmatmul.f32.gmra.mxu0 %v470
    %v756 = vpop.f32.mrf.mxu0
    %v757 = vadd.f32 %v458, %v756
    %758 = vmatmul.f32.gmra.mxu0 %v473
    %v759 = vpop.f32.mrf.mxu0
    %v760 = vadd.f32 %v458, %v759
    %761 = vmatmul.f32.gmra.mxu0 %v476
    %v762 = vpop.f32.mrf.mxu0
    %v763 = vadd.f32 %v458, %v762
    %764 = vmatmul.f32.gmra.mxu0 %v479
    %v765 = vpop.f32.mrf.mxu0
    %v766 = vadd.f32 %v458, %v765
    %767 = vmatmul.f32.gmra.mxu0 %v482
    %v768 = vpop.f32.mrf.mxu0
    %v769 = vadd.f32 %v458, %v768
    %770 = vmatmul.f32.gmra.mxu0 %v485
    %v771 = vpop.f32.mrf.mxu0
    %v772 = vadd.f32 %v458, %v771
    %773 = vmatmul.f32.gmra.mxu0 %v488
    %v774 = vpop.f32.mrf.mxu0
    %v775 = vadd.f32 %v458, %v774
    %776 = vmatmul.f32.gmra.mxu0 %v491
    %v777 = vpop.f32.mrf.mxu0
    %v778 = vadd.f32 %v458, %v777
    %779 = vdwg.mxu0
    %780 = vmatpush.msra.mxu0 0.0
    %781 = vmatpush.msra.mxu0 0.0
    %782 = vmatpush.msra.mxu0 0.0
    %783 = vmatpush.msra.mxu0 0.0
    %784 = vmatpush.msra.mxu0 0.0
    %785 = vmatpush.msra.mxu0 0.0
    %786 = vmatpush.msra.mxu0 0.0
    %787 = vmatpush.msra.mxu0 0.0
    %788 = vmatpush.msra.mxu0 0.0
    %789 = vmatpush.msra.mxu0 0.0
    %790 = vmatpush.msra.mxu0 0.0
    %791 = vmatpush.msra.mxu0 0.0
    %792 = vmatpush.msra.mxu0 %v193
    %793 = vmatpush.msra.mxu0 %v185
    %794 = vmatpush.msra.mxu0 %v177
    %795 = vmatpush.msra.mxu0 %v169
    %796 = vmatmul.f32.gmra.mxu0 %v470
    %v797 = vpop.f32.mrf.mxu0
    %v798 = vadd.f32 %v459, %v797
    %799 = vmatmul.f32.gmra.mxu0 %v473
    %v800 = vpop.f32.mrf.mxu0
    %v801 = vadd.f32 %v459, %v800
    %802 = vmatmul.f32.gmra.mxu0 %v476
    %v803 = vpop.f32.mrf.mxu0
    %v804 = vadd.f32 %v459, %v803
    %805 = vmatmul.f32.gmra.mxu0 %v479
    %v806 = vpop.f32.mrf.mxu0
    %v807 = vadd.f32 %v459, %v806
    %808 = vmatmul.f32.gmra.mxu0 %v482
    %v809 = vpop.f32.mrf.mxu0
    %v810 = vadd.f32 %v459, %v809
    %811 = vmatmul.f32.gmra.mxu0 %v485
    %v812 = vpop.f32.mrf.mxu0
    %v813 = vadd.f32 %v459, %v812
    %814 = vmatmul.f32.gmra.mxu0 %v488
    %v815 = vpop.f32.mrf.mxu0
    %v816 = vadd.f32 %v459, %v815
    %817 = vmatmul.f32.gmra.mxu0 %v491
    %v818 = vpop.f32.mrf.mxu0
    %v819 = vadd.f32 %v459, %v818
    %820 = vdwg.mxu0
    %821 = vmatpush.msra.mxu0 %v315
    %822 = vmatpush.msra.mxu0 %v307
    %823 = vmatpush.msra.mxu0 %v299
    %824 = vmatpush.msra.mxu0 %v291
    %825 = vmatpush.msra.mxu0 %v283
    %826 = vmatpush.msra.mxu0 %v275
    %827 = vmatpush.msra.mxu0 %v267
    %828 = vmatpush.msra.mxu0 %v259
    %829 = vmatpush.msra.mxu0 %v251
    %830 = vmatpush.msra.mxu0 %v243
    %831 = vmatpush.msra.mxu0 %v235
    %832 = vmatpush.msra.mxu0 %v227
    %833 = vmatpush.msra.mxu0 %v219
    %834 = vmatpush.msra.mxu0 %v211
    %835 = vmatpush.msra.mxu0 %v203
    %836 = vmatpush.msra.mxu0 %v195
    %837 = vmatmul.f32.gmra.mxu0 0.0
    %v838 = vpop.f32.mrf.mxu0
    %v839 = vadd.f32 0.0, %v838
    %840 = vdwg.mxu0
    %841 = vmatpush.msra.mxu0 %v443
    %842 = vmatpush.msra.mxu0 %v435
    %843 = vmatpush.msra.mxu0 %v427
    %844 = vmatpush.msra.mxu0 %v419
    %845 = vmatpush.msra.mxu0 %v411
    %846 = vmatpush.msra.mxu0 %v403
    %847 = vmatpush.msra.mxu0 %v395
    %848 = vmatpush.msra.mxu0 %v387
    %849 = vmatpush.msra.mxu0 %v379
    %850 = vmatpush.msra.mxu0 %v371
    %851 = vmatpush.msra.mxu0 %v363
    %852 = vmatpush.msra.mxu0 %v355
    %853 = vmatpush.msra.mxu0 %v347
    %854 = vmatpush.msra.mxu0 %v339
    %855 = vmatpush.msra.mxu0 %v331
    %856 = vmatpush.msra.mxu0 %v323
    %857 = vmatmul.f32.gmra.mxu0 0.0
    %v858 = vpop.f32.mrf.mxu0
    %v859 = vadd.f32 %v839, %v858
    %860 = vdwg.mxu0
    %861 = vmatpush.msra.mxu0 %v316
    %862 = vmatpush.msra.mxu0 %v308
    %863 = vmatpush.msra.mxu0 %v300
    %864 = vmatpush.msra.mxu0 %v292
    %865 = vmatpush.msra.mxu0 %v284
    %866 = vmatpush.msra.mxu0 %v276
    %867 = vmatpush.msra.mxu0 %v268
    %868 = vmatpush.msra.mxu0 %v260
    %869 = vmatpush.msra.mxu0 %v252
    %870 = vmatpush.msra.mxu0 %v244
    %871 = vmatpush.msra.mxu0 %v236
    %872 = vmatpush.msra.mxu0 %v228
    %873 = vmatpush.msra.mxu0 %v220
    %874 = vmatpush.msra.mxu0 %v212
    %875 = vmatpush.msra.mxu0 %v204
    %876 = vmatpush.msra.mxu0 %v196
    %877 = vmatmul.f32.gmra.mxu0 0.0
    %v878 = vpop.f32.mrf.mxu0
    %v879 = vadd.f32 0.0, %v878
    %880 = vdwg.mxu0
    %881 = vmatpush.msra.mxu0 %v444
    %882 = vmatpush.msra.mxu0 %v436
    %883 = vmatpush.msra.mxu0 %v428
    %884 = vmatpush.msra.mxu0 %v420
    %885 = vmatpush.msra.mxu0 %v412
    %886 = vmatpush.msra.mxu0 %v404
    %887 = vmatpush.msra.mxu0 %v396
    %888 = vmatpush.msra.mxu0 %v388
    %889 = vmatpush.msra.mxu0 %v380
    %890 = vmatpush.msra.mxu0 %v372
    %891 = vmatpush.msra.mxu0 %v364
    %892 = vmatpush.msra.mxu0 %v356
    %893 = vmatpush.msra.mxu0 %v348
    %894 = vmatpush.msra.mxu0 %v340
    %895 = vmatpush.msra.mxu0 %v332
    %896 = vmatpush.msra.mxu0 %v324
    %897 = vmatmul.f32.gmra.mxu0 0.0
    %v898 = vpop.f32.mrf.mxu0
    %v899 = vadd.f32 %v879, %v898
    %900 = vdwg.mxu0
    %901 = vmatpush.msra.mxu0 %v317
    %902 = vmatpush.msra.mxu0 %v309
    %903 = vmatpush.msra.mxu0 %v301
    %904 = vmatpush.msra.mxu0 %v293
    %905 = vmatpush.msra.mxu0 %v285
    %906 = vmatpush.msra.mxu0 %v277
    %907 = vmatpush.msra.mxu0 %v269
    %908 = vmatpush.msra.mxu0 %v261
    %909 = vmatpush.msra.mxu0 %v253
    %910 = vmatpush.msra.mxu0 %v245
    %911 = vmatpush.msra.mxu0 %v237
    %912 = vmatpush.msra.mxu0 %v229
    %913 = vmatpush.msra.mxu0 %v221
    %914 = vmatpush.msra.mxu0 %v213
    %915 = vmatpush.msra.mxu0 %v205
    %916 = vmatpush.msra.mxu0 %v197
    %917 = vmatmul.f32.gmra.mxu0 0.0
    %v918 = vpop.f32.mrf.mxu0
    %v919 = vadd.f32 0.0, %v918
    %920 = vdwg.mxu0
    %921 = vmatpush.msra.mxu0 %v445
    %922 = vmatpush.msra.mxu0 %v437
    %923 = vmatpush.msra.mxu0 %v429
    %924 = vmatpush.msra.mxu0 %v421
    %925 = vmatpush.msra.mxu0 %v413
    %926 = vmatpush.msra.mxu0 %v405
    %927 = vmatpush.msra.mxu0 %v397
    %928 = vmatpush.msra.mxu0 %v389
    %929 = vmatpush.msra.mxu0 %v381
    %930 = vmatpush.msra.mxu0 %v373
    %931 = vmatpush.msra.mxu0 %v365
    %932 = vmatpush.msra.mxu0 %v357
    %933 = vmatpush.msra.mxu0 %v349
    %934 = vmatpush.msra.mxu0 %v341
    %935 = vmatpush.msra.mxu0 %v333
    %936 = vmatpush.msra.mxu0 %v325
    %937 = vmatmul.f32.gmra.mxu0 0.0
    %v938 = vpop.f32.mrf.mxu0
    %v939 = vadd.f32 %v919, %v938
    %940 = vdwg.mxu0
    %941 = vmatpush.msra.mxu0 %v318
    %942 = vmatpush.msra.mxu0 %v310
    %943 = vmatpush.msra.mxu0 %v302
    %944 = vmatpush.msra.mxu0 %v294
    %945 = vmatpush.msra.mxu0 %v286
    %946 = vmatpush.msra.mxu0 %v278
    %947 = vmatpush.msra.mxu0 %v270
    %948 = vmatpush.msra.mxu0 %v262
    %949 = vmatpush.msra.mxu0 %v254
    %950 = vmatpush.msra.mxu0 %v246
    %951 = vmatpush.msra.mxu0 %v238
    %952 = vmatpush.msra.mxu0 %v230
    %953 = vmatpush.msra.mxu0 %v222
    %954 = vmatpush.msra.mxu0 %v214
    %955 = vmatpush.msra.mxu0 %v206
    %956 = vmatpush.msra.mxu0 %v198
    %957 = vmatmul.f32.gmra.mxu0 0.0
    %v958 = vpop.f32.mrf.mxu0
    %v959 = vadd.f32 0.0, %v958
    %960 = vdwg.mxu0
    %961 = vmatpush.msra.mxu0 %v446
    %962 = vmatpush.msra.mxu0 %v438
    %963 = vmatpush.msra.mxu0 %v430
    %964 = vmatpush.msra.mxu0 %v422
    %965 = vmatpush.msra.mxu0 %v414
    %966 = vmatpush.msra.mxu0 %v406
    %967 = vmatpush.msra.mxu0 %v398
    %968 = vmatpush.msra.mxu0 %v390
    %969 = vmatpush.msra.mxu0 %v382
    %970 = vmatpush.msra.mxu0 %v374
    %971 = vmatpush.msra.mxu0 %v366
    %972 = vmatpush.msra.mxu0 %v358
    %973 = vmatpush.msra.mxu0 %v350
    %974 = vmatpush.msra.mxu0 %v342
    %975 = vmatpush.msra.mxu0 %v334
    %976 = vmatpush.msra.mxu0 %v326
    %977 = vmatmul.f32.gmra.mxu0 0.0
    %v978 = vpop.f32.mrf.mxu0
    %v979 = vadd.f32 %v959, %v978
    %980 = vdwg.mxu0
    %981 = vmatpush.msra.mxu0 %v319
    %982 = vmatpush.msra.mxu0 %v311
    %983 = vmatpush.msra.mxu0 %v303
    %984 = vmatpush.msra.mxu0 %v295
    %985 = vmatpush.msra.mxu0 %v287
    %986 = vmatpush.msra.mxu0 %v279
    %987 = vmatpush.msra.mxu0 %v271
    %988 = vmatpush.msra.mxu0 %v263
    %989 = vmatpush.msra.mxu0 %v255
    %990 = vmatpush.msra.mxu0 %v247
    %991 = vmatpush.msra.mxu0 %v239
    %992 = vmatpush.msra.mxu0 %v231
    %993 = vmatpush.msra.mxu0 %v223
    %994 = vmatpush.msra.mxu0 %v215
    %995 = vmatpush.msra.mxu0 %v207
    %996 = vmatpush.msra.mxu0 %v199
    %997 = vmatmul.f32.gmra.mxu0 0.0
    %v998 = vpop.f32.mrf.mxu0
    %v999 = vadd.f32 0.0, %v998
    %1000 = vdwg.mxu0
    %1001 = vmatpush.msra.mxu0 %v447
    %1002 = vmatpush.msra.mxu0 %v439
    %1003 = vmatpush.msra.mxu0 %v431
    %1004 = vmatpush.msra.mxu0 %v423
    %1005 = vmatpush.msra.mxu0 %v415
    %1006 = vmatpush.msra.mxu0 %v407
    %1007 = vmatpush.msra.mxu0 %v399
    %1008 = vmatpush.msra.mxu0 %v391
    %1009 = vmatpush.msra.mxu0 %v383
    %1010 = vmatpush.msra.mxu0 %v375
    %1011 = vmatpush.msra.mxu0 %v367
    %1012 = vmatpush.msra.mxu0 %v359
    %1013 = vmatpush.msra.mxu0 %v351
    %1014 = vmatpush.msra.mxu0 %v343
    %1015 = vmatpush.msra.mxu0 %v335
    %1016 = vmatpush.msra.mxu0 %v327
    %1017 = vmatmul.f32.gmra.mxu0 0.0
    %v1018 = vpop.f32.mrf.mxu0
    %v1019 = vadd.f32 %v999, %v1018
    %1020 = vdwg.mxu0
    %1021 = vmatpush.msra.mxu0 %v320
    %1022 = vmatpush.msra.mxu0 %v312
    %1023 = vmatpush.msra.mxu0 %v304
    %1024 = vmatpush.msra.mxu0 %v296
    %1025 = vmatpush.msra.mxu0 %v288
    %1026 = vmatpush.msra.mxu0 %v280
    %1027 = vmatpush.msra.mxu0 %v272
    %1028 = vmatpush.msra.mxu0 %v264
    %1029 = vmatpush.msra.mxu0 %v256
    %1030 = vmatpush.msra.mxu0 %v248
    %1031 = vmatpush.msra.mxu0 %v240
    %1032 = vmatpush.msra.mxu0 %v232
    %1033 = vmatpush.msra.mxu0 %v224
    %1034 = vmatpush.msra.mxu0 %v216
    %1035 = vmatpush.msra.mxu0 %v208
    %1036 = vmatpush.msra.mxu0 %v200
    %1037 = vmatmul.f32.gmra.mxu0 0.0
    %v1038 = vpop.f32.mrf.mxu0
    %v1039 = vadd.f32 0.0, %v1038
    %1040 = vdwg.mxu0
    %1041 = vmatpush.msra.mxu0 %v448
    %1042 = vmatpush.msra.mxu0 %v440
    %1043 = vmatpush.msra.mxu0 %v432
    %1044 = vmatpush.msra.mxu0 %v424
    %1045 = vmatpush.msra.mxu0 %v416
    %1046 = vmatpush.msra.mxu0 %v408
    %1047 = vmatpush.msra.mxu0 %v400
    %1048 = vmatpush.msra.mxu0 %v392
    %1049 = vmatpush.msra.mxu0 %v384
    %1050 = vmatpush.msra.mxu0 %v376
    %1051 = vmatpush.msra.mxu0 %v368
    %1052 = vmatpush.msra.mxu0 %v360
    %1053 = vmatpush.msra.mxu0 %v352
    %1054 = vmatpush.msra.mxu0 %v344
    %1055 = vmatpush.msra.mxu0 %v336
    %1056 = vmatpush.msra.mxu0 %v328
    %1057 = vmatmul.f32.gmra.mxu0 0.0
    %v1058 = vpop.f32.mrf.mxu0
    %v1059 = vadd.f32 %v1039, %v1058
    %1060 = vdwg.mxu0
    %1061 = vmatpush.msra.mxu0 %v321
    %1062 = vmatpush.msra.mxu0 %v313
    %1063 = vmatpush.msra.mxu0 %v305
    %1064 = vmatpush.msra.mxu0 %v297
    %1065 = vmatpush.msra.mxu0 %v289
    %1066 = vmatpush.msra.mxu0 %v281
    %1067 = vmatpush.msra.mxu0 %v273
    %1068 = vmatpush.msra.mxu0 %v265
    %1069 = vmatpush.msra.mxu0 %v257
    %1070 = vmatpush.msra.mxu0 %v249
    %1071 = vmatpush.msra.mxu0 %v241
    %1072 = vmatpush.msra.mxu0 %v233
    %1073 = vmatpush.msra.mxu0 %v225
    %1074 = vmatpush.msra.mxu0 %v217
    %1075 = vmatpush.msra.mxu0 %v209
    %1076 = vmatpush.msra.mxu0 %v201
    %1077 = vmatmul.f32.gmra.mxu0 0.0
    %v1078 = vpop.f32.mrf.mxu0
    %v1079 = vadd.f32 0.0, %v1078
    %1080 = vdwg.mxu0
    %1081 = vmatpush.msra.mxu0 %v449
    %1082 = vmatpush.msra.mxu0 %v441
    %1083 = vmatpush.msra.mxu0 %v433
    %1084 = vmatpush.msra.mxu0 %v425
    %1085 = vmatpush.msra.mxu0 %v417
    %1086 = vmatpush.msra.mxu0 %v409
    %1087 = vmatpush.msra.mxu0 %v401
    %1088 = vmatpush.msra.mxu0 %v393
    %1089 = vmatpush.msra.mxu0 %v385
    %1090 = vmatpush.msra.mxu0 %v377
    %1091 = vmatpush.msra.mxu0 %v369
    %1092 = vmatpush.msra.mxu0 %v361
    %1093 = vmatpush.msra.mxu0 %v353
    %1094 = vmatpush.msra.mxu0 %v345
    %1095 = vmatpush.msra.mxu0 %v337
    %1096 = vmatpush.msra.mxu0 %v329
    %1097 = vmatmul.f32.gmra.mxu0 0.0
    %v1098 = vpop.f32.mrf.mxu0
    %v1099 = vadd.f32 %v1079, %v1098
    %1100 = vdwg.mxu0
    %1101 = vmatpush.msra.mxu0 %v322
    %1102 = vmatpush.msra.mxu0 %v314
    %1103 = vmatpush.msra.mxu0 %v306
    %1104 = vmatpush.msra.mxu0 %v298
    %1105 = vmatpush.msra.mxu0 %v290
    %1106 = vmatpush.msra.mxu0 %v282
    %1107 = vmatpush.msra.mxu0 %v274
    %1108 = vmatpush.msra.mxu0 %v266
    %1109 = vmatpush.msra.mxu0 %v258
    %1110 = vmatpush.msra.mxu0 %v250
    %1111 = vmatpush.msra.mxu0 %v242
    %1112 = vmatpush.msra.mxu0 %v234
    %1113 = vmatpush.msra.mxu0 %v226
    %1114 = vmatpush.msra.mxu0 %v218
    %1115 = vmatpush.msra.mxu0 %v210
    %1116 = vmatpush.msra.mxu0 %v202
    %1117 = vmatmul.f32.gmra.mxu0 0.0
    %v1118 = vpop.f32.mrf.mxu0
    %v1119 = vadd.f32 0.0, %v1118
    %1120 = vdwg.mxu0
    %1121 = vmatpush.msra.mxu0 %v450
    %1122 = vmatpush.msra.mxu0 %v442
    %1123 = vmatpush.msra.mxu0 %v434
    %1124 = vmatpush.msra.mxu0 %v426
    %1125 = vmatpush.msra.mxu0 %v418
    %1126 = vmatpush.msra.mxu0 %v410
    %1127 = vmatpush.msra.mxu0 %v402
    %1128 = vmatpush.msra.mxu0 %v394
    %1129 = vmatpush.msra.mxu0 %v386
    %1130 = vmatpush.msra.mxu0 %v378
    %1131 = vmatpush.msra.mxu0 %v370
    %1132 = vmatpush.msra.mxu0 %v362
    %1133 = vmatpush.msra.mxu0 %v354
    %1134 = vmatpush.msra.mxu0 %v346
    %1135 = vmatpush.msra.mxu0 %v338
    %1136 = vmatpush.msra.mxu0 %v330
    %1137 = vmatmul.f32.gmra.mxu0 0.0
    %v1138 = vpop.f32.mrf.mxu0
    %v1139 = vadd.f32 %v1119, %v1138
    %1140 = vdwg.mxu0
    %v1141 = vadd.f32 %v511, %v859
    %v1142 = vadd.f32 %v573, %v899
    %v1143 = vadd.f32 %v593, %v939
    %v1144 = vadd.f32 %v655, %v979
    %v1145 = vadd.f32 %v675, %v1019
    %v1146 = vadd.f32 %v737, %v1059
    %v1147 = vadd.f32 %v757, %v1099
    %v1148 = vadd.f32 %v819, %v1139
    %v1149 = vxor.u32 %v1141, 2147483648
    %v1150 = vxor.u32 %v1142, 2147483648
    %v1151 = vxor.u32 %v1143, 2147483648
    %v1152 = vxor.u32 %v1144, 2147483648
    %v1153 = vxor.u32 %v1145, 2147483648
    %v1154 = vxor.u32 %v1146, 2147483648
    %v1155 = vmul.f32 %v1149, 1.442695
    %v1156 = vpow.pop %v1155
    %v1157 = vmul.f32 %v1150, 1.442695
    %v1158 = vpow.pop %v1157
    %v1159 = vmul.f32 %v1151, 1.442695
    %v1160 = vpow.pop %v1159
    %v1161 = vmul.f32 %v1152, 1.442695
    %v1162 = vpow.pop %v1161
    %v1163 = vmul.f32 %v1153, 1.442695
    %v1164 = vpow.pop %v1163
    %v1165 = vmul.f32 %v1154, 1.442695
    %v1166 = vpow.pop %v1165
    %v1167 = vadd.f32 %v1156, 1.0
    %v1168 = vadd.f32 %v1158, 1.0
    %v1169 = vadd.f32 %v1160, 1.0
    %v1170 = vadd.f32 %v1162, 1.0
    %v1171 = vadd.f32 %v1164, 1.0
    %v1172 = vadd.f32 %v1166, 1.0
    %v1173 = vrcp.pop %v1167
    %v1174 = vmul.f32 %v1167, %v1173
    %v1175 = vsub.f32 1.0, %v1174
    %v1176 = vmul.f32 %v1173, %v1175
    %v1177 = vadd.f32 %v1173, %v1176
    %vm1178 = vweird.f32 %v1167
    %vm1179 = vweird.f32 %v1173
    %vm1180 = vmor %vm1178, %vm1179
    %v1181 = vsel %vm1180, %v1173, %v1177
    %v1182 = vand.u32 2147483647, %v1167
    %vm1183 = vcmp.eq.f32.partialorder %v1182, 8.507059e+37
    %v1184 = vand.u32 %v1167, 2147483648
    %v1185 = vor.u32 1.1754944e-38, %v1184
    %v1186 = vsel %vm1183, %v1185, %v1181
    %v1187 = vmul.f32 1.0, %v1186
    %v1188 = vrcp.pop %v1168
    %v1189 = vmul.f32 %v1168, %v1188
    %v1190 = vsub.f32 1.0, %v1189
    %v1191 = vmul.f32 %v1188, %v1190
    %v1192 = vadd.f32 %v1188, %v1191
    %vm1193 = vweird.f32 %v1168
    %vm1194 = vweird.f32 %v1188
    %vm1195 = vmor %vm1193, %vm1194
    %v1196 = vsel %vm1195, %v1188, %v1192
    %v1197 = vand.u32 2147483647, %v1168
    %vm1198 = vcmp.eq.f32.partialorder %v1197, 8.507059e+37
    %v1199 = vand.u32 %v1168, 2147483648
    %v1200 = vor.u32 1.1754944e-38, %v1199
    %v1201 = vsel %vm1198, %v1200, %v1196
    %v1202 = vmul.f32 1.0, %v1201
    %v1203 = vrcp.pop %v1169
    %v1204 = vmul.f32 %v1169, %v1203
    %v1205 = vsub.f32 1.0, %v1204
    %v1206 = vmul.f32 %v1203, %v1205
    %v1207 = vadd.f32 %v1203, %v1206
    %vm1208 = vweird.f32 %v1169
    %vm1209 = vweird.f32 %v1203
    %vm1210 = vmor %vm1208, %vm1209
    %v1211 = vsel %vm1210, %v1203, %v1207
    %v1212 = vand.u32 2147483647, %v1169
    %vm1213 = vcmp.eq.f32.partialorder %v1212, 8.507059e+37
    %v1214 = vand.u32 %v1169, 2147483648
    %v1215 = vor.u32 1.1754944e-38, %v1214
    %v1216 = vsel %vm1213, %v1215, %v1211
    %v1217 = vmul.f32 1.0, %v1216
    %v1218 = vrcp.pop %v1170
    %v1219 = vmul.f32 %v1170, %v1218
    %v1220 = vsub.f32 1.0, %v1219
    %v1221 = vmul.f32 %v1218, %v1220
    %v1222 = vadd.f32 %v1218, %v1221
    %vm1223 = vweird.f32 %v1170
    %vm1224 = vweird.f32 %v1218
    %vm1225 = vmor %vm1223, %vm1224
    %v1226 = vsel %vm1225, %v1218, %v1222
    %v1227 = vand.u32 2147483647, %v1170
    %vm1228 = vcmp.eq.f32.partialorder %v1227, 8.507059e+37
    %v1229 = vand.u32 %v1170, 2147483648
    %v1230 = vor.u32 1.1754944e-38, %v1229
    %v1231 = vsel %vm1228, %v1230, %v1226
    %v1232 = vmul.f32 1.0, %v1231
    %v1233 = vrcp.pop %v1171
    %v1234 = vmul.f32 %v1171, %v1233
    %v1235 = vsub.f32 1.0, %v1234
    %v1236 = vmul.f32 %v1233, %v1235
    %v1237 = vadd.f32 %v1233, %v1236
    %vm1238 = vweird.f32 %v1171
    %vm1239 = vweird.f32 %v1233
    %vm1240 = vmor %vm1238, %vm1239
    %v1241 = vsel %vm1240, %v1233, %v1237
    %v1242 = vand.u32 2147483647, %v1171
    %vm1243 = vcmp.eq.f32.partialorder %v1242, 8.507059e+37
    %v1244 = vand.u32 %v1171, 2147483648
    %v1245 = vor.u32 1.1754944e-38, %v1244
    %v1246 = vsel %vm1243, %v1245, %v1241
    %v1247 = vmul.f32 1.0, %v1246
    %v1248 = vrcp.pop %v1172
    %v1249 = vmul.f32 %v1172, %v1248
    %v1250 = vsub.f32 1.0, %v1249
    %v1251 = vmul.f32 %v1248, %v1250
    %v1252 = vadd.f32 %v1248, %v1251
    %vm1253 = vweird.f32 %v1172
    %vm1254 = vweird.f32 %v1248
    %vm1255 = vmor %vm1253, %vm1254
    %v1256 = vsel %vm1255, %v1248, %v1252
    %v1257 = vand.u32 2147483647, %v1172
    %vm1258 = vcmp.eq.f32.partialorder %v1257, 8.507059e+37
    %v1259 = vand.u32 %v1172, 2147483648
    %v1260 = vor.u32 1.1754944e-38, %v1259
    %v1261 = vsel %vm1258, %v1260, %v1256
    %v1262 = vmul.f32 1.0, %v1261
    %v1263 = vtanh.pop %v1147
    %v1264 = vtanh.pop %v1148
    %v1265 = vmul.f32 %v1217, 0.0
    %v1266 = vmul.f32 %v1232, 0.0
    %v1267 = vmul.f32 %v1187, %v1263
    %v1268 = vmul.f32 %v1202, %v1264
    %v1269 = vadd.f32 %v1265, %v1267
    %v1270 = vadd.f32 %v1266, %v1268
    %v1271 = vtanh.pop %v1269
    %v1272 = vtanh.pop %v1270
    %v1273 = vmul.f32 %v1247, %v1271
    %v1274 = vmul.f32 %v1262, %v1272
    %1275 = vmatpush.msra.mxu0 %v315
    %1276 = vmatpush.msra.mxu0 %v307
    %1277 = vmatpush.msra.mxu0 %v299
    %1278 = vmatpush.msra.mxu0 %v291
    %1279 = vmatpush.msra.mxu0 %v283
    %1280 = vmatpush.msra.mxu0 %v275
    %1281 = vmatpush.msra.mxu0 %v267
    %1282 = vmatpush.msra.mxu0 %v259
    %1283 = vmatpush.msra.mxu0 %v251
    %1284 = vmatpush.msra.mxu0 %v243
    %1285 = vmatpush.msra.mxu0 %v235
    %1286 = vmatpush.msra.mxu0 %v227
    %1287 = vmatpush.msra.mxu0 %v219
    %1288 = vmatpush.msra.mxu0 %v211
    %1289 = vmatpush.msra.mxu0 %v203
    %1290 = vmatpush.msra.mxu0 %v195
    %1291 = vmatmul.f32.gmra.mxu0 %v1273
    %v1292 = vpop.f32.mrf.mxu0
    %v1293 = vadd.f32 0.0, %v1292
    %1294 = vdwg.mxu0
    %1295 = vmatpush.msra.mxu0 %v443
    %1296 = vmatpush.msra.mxu0 %v435
    %1297 = vmatpush.msra.mxu0 %v427
    %1298 = vmatpush.msra.mxu0 %v419
    %1299 = vmatpush.msra.mxu0 %v411
    %1300 = vmatpush.msra.mxu0 %v403
    %1301 = vmatpush.msra.mxu0 %v395
    %1302 = vmatpush.msra.mxu0 %v387
    %1303 = vmatpush.msra.mxu0 %v379
    %1304 = vmatpush.msra.mxu0 %v371
    %1305 = vmatpush.msra.mxu0 %v363
    %1306 = vmatpush.msra.mxu0 %v355
    %1307 = vmatpush.msra.mxu0 %v347
    %1308 = vmatpush.msra.mxu0 %v339
    %1309 = vmatpush.msra.mxu0 %v331
    %1310 = vmatpush.msra.mxu0 %v323
    %1311 = vmatmul.f32.gmra.mxu0 %v1274
    %v1312 = vpop.f32.mrf.mxu0
    %v1313 = vadd.f32 %v1293, %v1312
    %1314 = vdwg.mxu0
    %1315 = vmatpush.msra.mxu0 %v316
    %1316 = vmatpush.msra.mxu0 %v308
    %1317 = vmatpush.msra.mxu0 %v300
    %1318 = vmatpush.msra.mxu0 %v292
    %1319 = vmatpush.msra.mxu0 %v284
    %1320 = vmatpush.msra.mxu0 %v276
    %1321 = vmatpush.msra.mxu0 %v268
    %1322 = vmatpush.msra.mxu0 %v260
    %1323 = vmatpush.msra.mxu0 %v252
    %1324 = vmatpush.msra.mxu0 %v244
    %1325 = vmatpush.msra.mxu0 %v236
    %1326 = vmatpush.msra.mxu0 %v228
    %1327 = vmatpush.msra.mxu0 %v220
    %1328 = vmatpush.msra.mxu0 %v212
    %1329 = vmatpush.msra.mxu0 %v204
    %1330 = vmatpush.msra.mxu0 %v196
    %1331 = vmatmul.f32.gmra.mxu0 %v1273
    %v1332 = vpop.f32.mrf.mxu0
    %v1333 = vadd.f32 0.0, %v1332
    %1334 = vdwg.mxu0
    %1335 = vmatpush.msra.mxu0 %v444
    %1336 = vmatpush.msra.mxu0 %v436
    %1337 = vmatpush.msra.mxu0 %v428
    %1338 = vmatpush.msra.mxu0 %v420
    %1339 = vmatpush.msra.mxu0 %v412
    %1340 = vmatpush.msra.mxu0 %v404
    %1341 = vmatpush.msra.mxu0 %v396
    %1342 = vmatpush.msra.mxu0 %v388
    %1343 = vmatpush.msra.mxu0 %v380
    %1344 = vmatpush.msra.mxu0 %v372
    %1345 = vmatpush.msra.mxu0 %v364
    %1346 = vmatpush.msra.mxu0 %v356
    %1347 = vmatpush.msra.mxu0 %v348
    %1348 = vmatpush.msra.mxu0 %v340
    %1349 = vmatpush.msra.mxu0 %v332
    %1350 = vmatpush.msra.mxu0 %v324
    %1351 = vmatmul.f32.gmra.mxu0 %v1274
    %v1352 = vpop.f32.mrf.mxu0
    %v1353 = vadd.f32 %v1333, %v1352
    %1354 = vdwg.mxu0
    %1355 = vmatpush.msra.mxu0 %v317
    %1356 = vmatpush.msra.mxu0 %v309
    %1357 = vmatpush.msra.mxu0 %v301
    %1358 = vmatpush.msra.mxu0 %v293
    %1359 = vmatpush.msra.mxu0 %v285
    %1360 = vmatpush.msra.mxu0 %v277
    %1361 = vmatpush.msra.mxu0 %v269
    %1362 = vmatpush.msra.mxu0 %v261
    %1363 = vmatpush.msra.mxu0 %v253
    %1364 = vmatpush.msra.mxu0 %v245
    %1365 = vmatpush.msra.mxu0 %v237
    %1366 = vmatpush.msra.mxu0 %v229
    %1367 = vmatpush.msra.mxu0 %v221
    %1368 = vmatpush.msra.mxu0 %v213
    %1369 = vmatpush.msra.mxu0 %v205
    %1370 = vmatpush.msra.mxu0 %v197
    %1371 = vmatmul.f32.gmra.mxu0 %v1273
    %v1372 = vpop.f32.mrf.mxu0
    %v1373 = vadd.f32 0.0, %v1372
    %1374 = vdwg.mxu0
    %1375 = vmatpush.msra.mxu0 %v445
    %1376 = vmatpush.msra.mxu0 %v437
    %1377 = vmatpush.msra.mxu0 %v429
    %1378 = vmatpush.msra.mxu0 %v421
    %1379 = vmatpush.msra.mxu0 %v413
    %1380 = vmatpush.msra.mxu0 %v405
    %1381 = vmatpush.msra.mxu0 %v397
    %1382 = vmatpush.msra.mxu0 %v389
    %1383 = vmatpush.msra.mxu0 %v381
    %1384 = vmatpush.msra.mxu0 %v373
    %1385 = vmatpush.msra.mxu0 %v365
    %1386 = vmatpush.msra.mxu0 %v357
    %1387 = vmatpush.msra.mxu0 %v349
    %1388 = vmatpush.msra.mxu0 %v341
    %1389 = vmatpush.msra.mxu0 %v333
    %1390 = vmatpush.msra.mxu0 %v325
    %1391 = vmatmul.f32.gmra.mxu0 %v1274
    %v1392 = vpop.f32.mrf.mxu0
    %v1393 = vadd.f32 %v1373, %v1392
    %1394 = vdwg.mxu0
    %1395 = vmatpush.msra.mxu0 %v318
    %1396 = vmatpush.msra.mxu0 %v310
    %1397 = vmatpush.msra.mxu0 %v302
    %1398 = vmatpush.msra.mxu0 %v294
    %1399 = vmatpush.msra.mxu0 %v286
    %1400 = vmatpush.msra.mxu0 %v278
    %1401 = vmatpush.msra.mxu0 %v270
    %1402 = vmatpush.msra.mxu0 %v262
    %1403 = vmatpush.msra.mxu0 %v254
    %1404 = vmatpush.msra.mxu0 %v246
    %1405 = vmatpush.msra.mxu0 %v238
    %1406 = vmatpush.msra.mxu0 %v230
    %1407 = vmatpush.msra.mxu0 %v222
    %1408 = vmatpush.msra.mxu0 %v214
    %1409 = vmatpush.msra.mxu0 %v206
    %1410 = vmatpush.msra.mxu0 %v198
    %1411 = vmatmul.f32.gmra.mxu0 %v1273
    %v1412 = vpop.f32.mrf.mxu0
    %v1413 = vadd.f32 0.0, %v1412
    %1414 = vdwg.mxu0
    %1415 = vmatpush.msra.mxu0 %v446
    %1416 = vmatpush.msra.mxu0 %v438
    %1417 = vmatpush.msra.mxu0 %v430
    %1418 = vmatpush.msra.mxu0 %v422
    %1419 = vmatpush.msra.mxu0 %v414
    %1420 = vmatpush.msra.mxu0 %v406
    %1421 = vmatpush.msra.mxu0 %v398
    %1422 = vmatpush.msra.mxu0 %v390
    %1423 = vmatpush.msra.mxu0 %v382
    %1424 = vmatpush.msra.mxu0 %v374
    %1425 = vmatpush.msra.mxu0 %v366
    %1426 = vmatpush.msra.mxu0 %v358
    %1427 = vmatpush.msra.mxu0 %v350
    %1428 = vmatpush.msra.mxu0 %v342
    %1429 = vmatpush.msra.mxu0 %v334
    %1430 = vmatpush.msra.mxu0 %v326
    %1431 = vmatmul.f32.gmra.mxu0 %v1274
    %v1432 = vpop.f32.mrf.mxu0
    %v1433 = vadd.f32 %v1413, %v1432
    %1434 = vdwg.mxu0
    %1435 = vmatpush.msra.mxu0 %v319
    %1436 = vmatpush.msra.mxu0 %v311
    %1437 = vmatpush.msra.mxu0 %v303
    %1438 = vmatpush.msra.mxu0 %v295
    %1439 = vmatpush.msra.mxu0 %v287
    %1440 = vmatpush.msra.mxu0 %v279
    %1441 = vmatpush.msra.mxu0 %v271
    %1442 = vmatpush.msra.mxu0 %v263
    %1443 = vmatpush.msra.mxu0 %v255
    %1444 = vmatpush.msra.mxu0 %v247
    %1445 = vmatpush.msra.mxu0 %v239
    %1446 = vmatpush.msra.mxu0 %v231
    %1447 = vmatpush.msra.mxu0 %v223
    %1448 = vmatpush.msra.mxu0 %v215
    %1449 = vmatpush.msra.mxu0 %v207
    %1450 = vmatpush.msra.mxu0 %v199
    %1451 = vmatmul.f32.gmra.mxu0 %v1273
    %v1452 = vpop.f32.mrf.mxu0
    %v1453 = vadd.f32 0.0, %v1452
    %1454 = vdwg.mxu0
    %1455 = vmatpush.msra.mxu0 %v447
    %1456 = vmatpush.msra.mxu0 %v439
    %1457 = vmatpush.msra.mxu0 %v431
    %1458 = vmatpush.msra.mxu0 %v423
    %1459 = vmatpush.msra.mxu0 %v415
    %1460 = vmatpush.msra.mxu0 %v407
    %1461 = vmatpush.msra.mxu0 %v399
    %1462 = vmatpush.msra.mxu0 %v391
    %1463 = vmatpush.msra.mxu0 %v383
    %1464 = vmatpush.msra.mxu0 %v375
    %1465 = vmatpush.msra.mxu0 %v367
    %1466 = vmatpush.msra.mxu0 %v359
    %1467 = vmatpush.msra.mxu0 %v351
    %1468 = vmatpush.msra.mxu0 %v343
    %1469 = vmatpush.msra.mxu0 %v335
    %1470 = vmatpush.msra.mxu0 %v327
    %1471 = vmatmul.f32.gmra.mxu0 %v1274
    %v1472 = vpop.f32.mrf.mxu0
    %v1473 = vadd.f32 %v1453, %v1472
    %1474 = vdwg.mxu0
    %1475 = vmatpush.msra.mxu0 %v320
    %1476 = vmatpush.msra.mxu0 %v312
    %1477 = vmatpush.msra.mxu0 %v304
    %1478 = vmatpush.msra.mxu0 %v296
    %1479 = vmatpush.msra.mxu0 %v288
    %1480 = vmatpush.msra.mxu0 %v280
    %1481 = vmatpush.msra.mxu0 %v272
    %1482 = vmatpush.msra.mxu0 %v264
    %1483 = vmatpush.msra.mxu0 %v256
    %1484 = vmatpush.msra.mxu0 %v248
    %1485 = vmatpush.msra.mxu0 %v240
    %1486 = vmatpush.msra.mxu0 %v232
    %1487 = vmatpush.msra.mxu0 %v224
    %1488 = vmatpush.msra.mxu0 %v216
    %1489 = vmatpush.msra.mxu0 %v208
    %1490 = vmatpush.msra.mxu0 %v200
    %1491 = vmatmul.f32.gmra.mxu0 %v1273
    %v1492 = vpop.f32.mrf.mxu0
    %v1493 = vadd.f32 0.0, %v1492
    %1494 = vdwg.mxu0
    %1495 = vmatpush.msra.mxu0 %v448
    %1496 = vmatpush.msra.mxu0 %v440
    %1497 = vmatpush.msra.mxu0 %v432
    %1498 = vmatpush.msra.mxu0 %v424
    %1499 = vmatpush.msra.mxu0 %v416
    %1500 = vmatpush.msra.mxu0 %v408
    %1501 = vmatpush.msra.mxu0 %v400
    %1502 = vmatpush.msra.mxu0 %v392
    %1503 = vmatpush.msra.mxu0 %v384
    %1504 = vmatpush.msra.mxu0 %v376
    %1505 = vmatpush.msra.mxu0 %v368
    %1506 = vmatpush.msra.mxu0 %v360
    %1507 = vmatpush.msra.mxu0 %v352
    %1508 = vmatpush.msra.mxu0 %v344
    %1509 = vmatpush.msra.mxu0 %v336
    %1510 = vmatpush.msra.mxu0 %v328
    %1511 = vmatmul.f32.gmra.mxu0 %v1274
    %v1512 = vpop.f32.mrf.mxu0
    %v1513 = vadd.f32 %v1493, %v1512
    %1514 = vdwg.mxu0
    %1515 = vmatpush.msra.mxu0 %v321
    %1516 = vmatpush.msra.mxu0 %v313
    %1517 = vmatpush.msra.mxu0 %v305
    %1518 = vmatpush.msra.mxu0 %v297
    %1519 = vmatpush.msra.mxu0 %v289
    %1520 = vmatpush.msra.mxu0 %v281
    %1521 = vmatpush.msra.mxu0 %v273
    %1522 = vmatpush.msra.mxu0 %v265
    %1523 = vmatpush.msra.mxu0 %v257
    %1524 = vmatpush.msra.mxu0 %v249
    %1525 = vmatpush.msra.mxu0 %v241
    %1526 = vmatpush.msra.mxu0 %v233
    %1527 = vmatpush.msra.mxu0 %v225
    %1528 = vmatpush.msra.mxu0 %v217
    %1529 = vmatpush.msra.mxu0 %v209
    %1530 = vmatpush.msra.mxu0 %v201
    %1531 = vmatmul.f32.gmra.mxu0 %v1273
    %v1532 = vpop.f32.mrf.mxu0
    %v1533 = vadd.f32 0.0, %v1532
    %1534 = vdwg.mxu0
    %1535 = vmatpush.msra.mxu0 %v449
    %1536 = vmatpush.msra.mxu0 %v441
    %1537 = vmatpush.msra.mxu0 %v433
    %1538 = vmatpush.msra.mxu0 %v425
    %1539 = vmatpush.msra.mxu0 %v417
    %1540 = vmatpush.msra.mxu0 %v409
    %1541 = vmatpush.msra.mxu0 %v401
    %1542 = vmatpush.msra.mxu0 %v393
    %1543 = vmatpush.msra.mxu0 %v385
    %1544 = vmatpush.msra.mxu0 %v377
    %1545 = vmatpush.msra.mxu0 %v369
    %1546 = vmatpush.msra.mxu0 %v361
    %1547 = vmatpush.msra.mxu0 %v353
    %1548 = vmatpush.msra.mxu0 %v345
    %1549 = vmatpush.msra.mxu0 %v337
    %1550 = vmatpush.msra.mxu0 %v329
    %1551 = vmatmul.f32.gmra.mxu0 %v1274
    %v1552 = vpop.f32.mrf.mxu0
    %v1553 = vadd.f32 %v1533, %v1552
    %1554 = vdwg.mxu0
    %1555 = vmatpush.msra.mxu0 %v322
    %1556 = vmatpush.msra.mxu0 %v314
    %1557 = vmatpush.msra.mxu0 %v306
    %1558 = vmatpush.msra.mxu0 %v298
    %1559 = vmatpush.msra.mxu0 %v290
    %1560 = vmatpush.msra.mxu0 %v282
    %1561 = vmatpush.msra.mxu0 %v274
    %1562 = vmatpush.msra.mxu0 %v266
    %1563 = vmatpush.msra.mxu0 %v258
    %1564 = vmatpush.msra.mxu0 %v250
    %1565 = vmatpush.msra.mxu0 %v242
    %1566 = vmatpush.msra.mxu0 %v234
    %1567 = vmatpush.msra.mxu0 %v226
    %1568 = vmatpush.msra.mxu0 %v218
    %1569 = vmatpush.msra.mxu0 %v210
    %1570 = vmatpush.msra.mxu0 %v202
    %1571 = vmatmul.f32.gmra.mxu0 %v1273
    %v1572 = vpop.f32.mrf.mxu0
    %v1573 = vadd.f32 0.0, %v1572
    %1574 = vdwg.mxu0
    %1575 = vmatpush.msra.mxu0 %v450
    %1576 = vmatpush.msra.mxu0 %v442
    %1577 = vmatpush.msra.mxu0 %v434
    %1578 = vmatpush.msra.mxu0 %v426
    %1579 = vmatpush.msra.mxu0 %v418
    %1580 = vmatpush.msra.mxu0 %v410
    %1581 = vmatpush.msra.mxu0 %v402
    %1582 = vmatpush.msra.mxu0 %v394
    %1583 = vmatpush.msra.mxu0 %v386
    %1584 = vmatpush.msra.mxu0 %v378
    %1585 = vmatpush.msra.mxu0 %v370
    %1586 = vmatpush.msra.mxu0 %v362
    %1587 = vmatpush.msra.mxu0 %v354
    %1588 = vmatpush.msra.mxu0 %v346
    %1589 = vmatpush.msra.mxu0 %v338
    %1590 = vmatpush.msra.mxu0 %v330
    %1591 = vmatmul.f32.gmra.mxu0 %v1274
    %v1592 = vpop.f32.mrf.mxu0
    %v1593 = vadd.f32 %v1573, %v1592
    %1594 = vdwg.mxu0
    %v1595 = vadd.f32 %v514, %v1313
    %v1596 = vadd.f32 %v570, %v1353
    %v1597 = vadd.f32 %v596, %v1393
    %v1598 = vadd.f32 %v652, %v1433
    %v1599 = vadd.f32 %v678, %v1473
    %v1600 = vadd.f32 %v734, %v1513
    %v1601 = vadd.f32 %v760, %v1553
    %v1602 = vadd.f32 %v816, %v1593
    %v1603 = vxor.u32 %v1595, 2147483648
    %v1604 = vxor.u32 %v1596, 2147483648
    %v1605 = vxor.u32 %v1597, 2147483648
    %v1606 = vxor.u32 %v1598, 2147483648
    %v1607 = vxor.u32 %v1599, 2147483648
    %v1608 = vxor.u32 %v1600, 2147483648
    %v1609 = vmul.f32 %v1603, 1.442695
    %v1610 = vpow.pop %v1609
    %v1611 = vmul.f32 %v1604, 1.442695
    %v1612 = vpow.pop %v1611
    %v1613 = vmul.f32 %v1605, 1.442695
    %v1614 = vpow.pop %v1613
    %v1615 = vmul.f32 %v1606, 1.442695
    %v1616 = vpow.pop %v1615
    %v1617 = vmul.f32 %v1607, 1.442695
    %v1618 = vpow.pop %v1617
    %v1619 = vmul.f32 %v1608, 1.442695
    %v1620 = vpow.pop %v1619
    %v1621 = vadd.f32 %v1610, 1.0
    %v1622 = vadd.f32 %v1612, 1.0
    %v1623 = vadd.f32 %v1614, 1.0
    %v1624 = vadd.f32 %v1616, 1.0
    %v1625 = vadd.f32 %v1618, 1.0
    %v1626 = vadd.f32 %v1620, 1.0
    %v1627 = vrcp.pop %v1621
    %v1628 = vmul.f32 %v1621, %v1627
    %v1629 = vsub.f32 1.0, %v1628
    %v1630 = vmul.f32 %v1627, %v1629
    %v1631 = vadd.f32 %v1627, %v1630
    %vm1632 = vweird.f32 %v1621
    %vm1633 = vweird.f32 %v1627
    %vm1634 = vmor %vm1632, %vm1633
    %v1635 = vsel %vm1634, %v1627, %v1631
    %v1636 = vand.u32 2147483647, %v1621
    %vm1637 = vcmp.eq.f32.partialorder %v1636, 8.507059e+37
    %v1638 = vand.u32 %v1621, 2147483648
    %v1639 = vor.u32 1.1754944e-38, %v1638
    %v1640 = vsel %vm1637, %v1639, %v1635
    %v1641 = vmul.f32 1.0, %v1640
    %v1642 = vrcp.pop %v1622
    %v1643 = vmul.f32 %v1622, %v1642
    %v1644 = vsub.f32 1.0, %v1643
    %v1645 = vmul.f32 %v1642, %v1644
    %v1646 = vadd.f32 %v1642, %v1645
    %vm1647 = vweird.f32 %v1622
    %vm1648 = vweird.f32 %v1642
    %vm1649 = vmor %vm1647, %vm1648
    %v1650 = vsel %vm1649, %v1642, %v1646
    %v1651 = vand.u32 2147483647, %v1622
    %vm1652 = vcmp.eq.f32.partialorder %v1651, 8.507059e+37
    %v1653 = vand.u32 %v1622, 2147483648
    %v1654 = vor.u32 1.1754944e-38, %v1653
    %v1655 = vsel %vm1652, %v1654, %v1650
    %v1656 = vmul.f32 1.0, %v1655
    %v1657 = vrcp.pop %v1623
    %v1658 = vmul.f32 %v1623, %v1657
    %v1659 = vsub.f32 1.0, %v1658
    %v1660 = vmul.f32 %v1657, %v1659
    %v1661 = vadd.f32 %v1657, %v1660
    %vm1662 = vweird.f32 %v1623
    %vm1663 = vweird.f32 %v1657
    %vm1664 = vmor %vm1662, %vm1663
    %v1665 = vsel %vm1664, %v1657, %v1661
    %v1666 = vand.u32 2147483647, %v1623
    %vm1667 = vcmp.eq.f32.partialorder %v1666, 8.507059e+37
    %v1668 = vand.u32 %v1623, 2147483648
    %v1669 = vor.u32 1.1754944e-38, %v1668
    %v1670 = vsel %vm1667, %v1669, %v1665
    %v1671 = vmul.f32 1.0, %v1670
    %v1672 = vrcp.pop %v1624
    %v1673 = vmul.f32 %v1624, %v1672
    %v1674 = vsub.f32 1.0, %v1673
    %v1675 = vmul.f32 %v1672, %v1674
    %v1676 = vadd.f32 %v1672, %v1675
    %vm1677 = vweird.f32 %v1624
    %vm1678 = vweird.f32 %v1672
    %vm1679 = vmor %vm1677, %vm1678
    %v1680 = vsel %vm1679, %v1672, %v1676
    %v1681 = vand.u32 2147483647, %v1624
    %vm1682 = vcmp.eq.f32.partialorder %v1681, 8.507059e+37
    %v1683 = vand.u32 %v1624, 2147483648
    %v1684 = vor.u32 1.1754944e-38, %v1683
    %v1685 = vsel %vm1682, %v1684, %v1680
    %v1686 = vmul.f32 1.0, %v1685
    %v1687 = vrcp.pop %v1625
    %v1688 = vmul.f32 %v1625, %v1687
    %v1689 = vsub.f32 1.0, %v1688
    %v1690 = vmul.f32 %v1687, %v1689
    %v1691 = vadd.f32 %v1687, %v1690
    %vm1692 = vweird.f32 %v1625
    %vm1693 = vweird.f32 %v1687
    %vm1694 = vmor %vm1692, %vm1693
    %v1695 = vsel %vm1694, %v1687, %v1691
    %v1696 = vand.u32 2147483647, %v1625
    %vm1697 = vcmp.eq.f32.partialorder %v1696, 8.507059e+37
    %v1698 = vand.u32 %v1625, 2147483648
    %v1699 = vor.u32 1.1754944e-38, %v1698
    %v1700 = vsel %vm1697, %v1699, %v1695
    %v1701 = vmul.f32 1.0, %v1700
    %v1702 = vrcp.pop %v1626
    %v1703 = vmul.f32 %v1626, %v1702
    %v1704 = vsub.f32 1.0, %v1703
    %v1705 = vmul.f32 %v1702, %v1704
    %v1706 = vadd.f32 %v1702, %v1705
    %vm1707 = vweird.f32 %v1626
    %vm1708 = vweird.f32 %v1702
    %vm1709 = vmor %vm1707, %vm1708
    %v1710 = vsel %vm1709, %v1702, %v1706
    %v1711 = vand.u32 2147483647, %v1626
    %vm1712 = vcmp.eq.f32.partialorder %v1711, 8.507059e+37
    %v1713 = vand.u32 %v1626, 2147483648
    %v1714 = vor.u32 1.1754944e-38, %v1713
    %v1715 = vsel %vm1712, %v1714, %v1710
    %v1716 = vmul.f32 1.0, %v1715
    %v1717 = vtanh.pop %v1601
    %v1718 = vtanh.pop %v1602
    %v1719 = vmul.f32 %v1671, %v1269
    %v1720 = vmul.f32 %v1686, %v1270
    %v1721 = vmul.f32 %v1641, %v1717
    %v1722 = vmul.f32 %v1656, %v1718
    %v1723 = vadd.f32 %v1719, %v1721
    %v1724 = vadd.f32 %v1720, %v1722
    %v1725 = vtanh.pop %v1723
    %v1726 = vtanh.pop %v1724
    %v1727 = vmul.f32 %v1701, %v1725
    %v1728 = vmul.f32 %v1716, %v1726
    %1729 = vmatpush.msra.mxu0 %v315
    %1730 = vmatpush.msra.mxu0 %v307
    %1731 = vmatpush.msra.mxu0 %v299
    %1732 = vmatpush.msra.mxu0 %v291
    %1733 = vmatpush.msra.mxu0 %v283
    %1734 = vmatpush.msra.mxu0 %v275
    %1735 = vmatpush.msra.mxu0 %v267
    %1736 = vmatpush.msra.mxu0 %v259
    %1737 = vmatpush.msra.mxu0 %v251
    %1738 = vmatpush.msra.mxu0 %v243
    %1739 = vmatpush.msra.mxu0 %v235
    %1740 = vmatpush.msra.mxu0 %v227
    %1741 = vmatpush.msra.mxu0 %v219
    %1742 = vmatpush.msra.mxu0 %v211
    %1743 = vmatpush.msra.mxu0 %v203
    %1744 = vmatpush.msra.mxu0 %v195
    %1745 = vmatmul.f32.gmra.mxu0 %v1727
    %v1746 = vpop.f32.mrf.mxu0
    %v1747 = vadd.f32 0.0, %v1746
    %1748 = vdwg.mxu0
    %1749 = vmatpush.msra.mxu0 %v443
    %1750 = vmatpush.msra.mxu0 %v435
    %1751 = vmatpush.msra.mxu0 %v427
    %1752 = vmatpush.msra.mxu0 %v419
    %1753 = vmatpush.msra.mxu0 %v411
    %1754 = vmatpush.msra.mxu0 %v403
    %1755 = vmatpush.msra.mxu0 %v395
    %1756 = vmatpush.msra.mxu0 %v387
    %1757 = vmatpush.msra.mxu0 %v379
    %1758 = vmatpush.msra.mxu0 %v371
    %1759 = vmatpush.msra.mxu0 %v363
    %1760 = vmatpush.msra.mxu0 %v355
    %1761 = vmatpush.msra.mxu0 %v347
    %1762 = vmatpush.msra.mxu0 %v339
    %1763 = vmatpush.msra.mxu0 %v331
    %1764 = vmatpush.msra.mxu0 %v323
    %1765 = vmatmul.f32.gmra.mxu0 %v1728
    %v1766 = vpop.f32.mrf.mxu0
    %v1767 = vadd.f32 %v1747, %v1766
    %1768 = vdwg.mxu0
    %1769 = vmatpush.msra.mxu0 %v316
    %1770 = vmatpush.msra.mxu0 %v308
    %1771 = vmatpush.msra.mxu0 %v300
    %1772 = vmatpush.msra.mxu0 %v292
    %1773 = vmatpush.msra.mxu0 %v284
    %1774 = vmatpush.msra.mxu0 %v276
    %1775 = vmatpush.msra.mxu0 %v268
    %1776 = vmatpush.msra.mxu0 %v260
    %1777 = vmatpush.msra.mxu0 %v252
    %1778 = vmatpush.msra.mxu0 %v244
    %1779 = vmatpush.msra.mxu0 %v236
    %1780 = vmatpush.msra.mxu0 %v228
    %1781 = vmatpush.msra.mxu0 %v220
    %1782 = vmatpush.msra.mxu0 %v212
    %1783 = vmatpush.msra.mxu0 %v204
    %1784 = vmatpush.msra.mxu0 %v196
    %1785 = vmatmul.f32.gmra.mxu0 %v1727
    %v1786 = vpop.f32.mrf.mxu0
    %v1787 = vadd.f32 0.0, %v1786
    %1788 = vdwg.mxu0
    %1789 = vmatpush.msra.mxu0 %v444
    %1790 = vmatpush.msra.mxu0 %v436
    %1791 = vmatpush.msra.mxu0 %v428
    %1792 = vmatpush.msra.mxu0 %v420
    %1793 = vmatpush.msra.mxu0 %v412
    %1794 = vmatpush.msra.mxu0 %v404
    %1795 = vmatpush.msra.mxu0 %v396
    %1796 = vmatpush.msra.mxu0 %v388
    %1797 = vmatpush.msra.mxu0 %v380
    %1798 = vmatpush.msra.mxu0 %v372
    %1799 = vmatpush.msra.mxu0 %v364
    %1800 = vmatpush.msra.mxu0 %v356
    %1801 = vmatpush.msra.mxu0 %v348
    %1802 = vmatpush.msra.mxu0 %v340
    %1803 = vmatpush.msra.mxu0 %v332
    %1804 = vmatpush.msra.mxu0 %v324
    %1805 = vmatmul.f32.gmra.mxu0 %v1728
    %v1806 = vpop.f32.mrf.mxu0
    %v1807 = vadd.f32 %v1787, %v1806
    %1808 = vdwg.mxu0
    %1809 = vmatpush.msra.mxu0 %v317
    %1810 = vmatpush.msra.mxu0 %v309
    %1811 = vmatpush.msra.mxu0 %v301
    %1812 = vmatpush.msra.mxu0 %v293
    %1813 = vmatpush.msra.mxu0 %v285
    %1814 = vmatpush.msra.mxu0 %v277
    %1815 = vmatpush.msra.mxu0 %v269
    %1816 = vmatpush.msra.mxu0 %v261
    %1817 = vmatpush.msra.mxu0 %v253
    %1818 = vmatpush.msra.mxu0 %v245
    %1819 = vmatpush.msra.mxu0 %v237
    %1820 = vmatpush.msra.mxu0 %v229
    %1821 = vmatpush.msra.mxu0 %v221
    %1822 = vmatpush.msra.mxu0 %v213
    %1823 = vmatpush.msra.mxu0 %v205
    %1824 = vmatpush.msra.mxu0 %v197
    %1825 = vmatmul.f32.gmra.mxu0 %v1727
    %v1826 = vpop.f32.mrf.mxu0
    %v1827 = vadd.f32 0.0, %v1826
    %1828 = vdwg.mxu0
    %1829 = vmatpush.msra.mxu0 %v445
    %1830 = vmatpush.msra.mxu0 %v437
    %1831 = vmatpush.msra.mxu0 %v429
    %1832 = vmatpush.msra.mxu0 %v421
    %1833 = vmatpush.msra.mxu0 %v413
    %1834 = vmatpush.msra.mxu0 %v405
    %1835 = vmatpush.msra.mxu0 %v397
    %1836 = vmatpush.msra.mxu0 %v389
    %1837 = vmatpush.msra.mxu0 %v381
    %1838 = vmatpush.msra.mxu0 %v373
    %1839 = vmatpush.msra.mxu0 %v365
    %1840 = vmatpush.msra.mxu0 %v357
    %1841 = vmatpush.msra.mxu0 %v349
    %1842 = vmatpush.msra.mxu0 %v341
    %1843 = vmatpush.msra.mxu0 %v333
    %1844 = vmatpush.msra.mxu0 %v325
    %1845 = vmatmul.f32.gmra.mxu0 %v1728
    %v1846 = vpop.f32.mrf.mxu0
    %v1847 = vadd.f32 %v1827, %v1846
    %1848 = vdwg.mxu0
    %1849 = vmatpush.msra.mxu0 %v318
    %1850 = vmatpush.msra.mxu0 %v310
    %1851 = vmatpush.msra.mxu0 %v302
    %1852 = vmatpush.msra.mxu0 %v294
    %1853 = vmatpush.msra.mxu0 %v286
    %1854 = vmatpush.msra.mxu0 %v278
    %1855 = vmatpush.msra.mxu0 %v270
    %1856 = vmatpush.msra.mxu0 %v262
    %1857 = vmatpush.msra.mxu0 %v254
    %1858 = vmatpush.msra.mxu0 %v246
    %1859 = vmatpush.msra.mxu0 %v238
    %1860 = vmatpush.msra.mxu0 %v230
    %1861 = vmatpush.msra.mxu0 %v222
    %1862 = vmatpush.msra.mxu0 %v214
    %1863 = vmatpush.msra.mxu0 %v206
    %1864 = vmatpush.msra.mxu0 %v198
    %1865 = vmatmul.f32.gmra.mxu0 %v1727
    %v1866 = vpop.f32.mrf.mxu0
    %v1867 = vadd.f32 0.0, %v1866
    %1868 = vdwg.mxu0
    %1869 = vmatpush.msra.mxu0 %v446
    %1870 = vmatpush.msra.mxu0 %v438
    %1871 = vmatpush.msra.mxu0 %v430
    %1872 = vmatpush.msra.mxu0 %v422
    %1873 = vmatpush.msra.mxu0 %v414
    %1874 = vmatpush.msra.mxu0 %v406
    %1875 = vmatpush.msra.mxu0 %v398
    %1876 = vmatpush.msra.mxu0 %v390
    %1877 = vmatpush.msra.mxu0 %v382
    %1878 = vmatpush.msra.mxu0 %v374
    %1879 = vmatpush.msra.mxu0 %v366
    %1880 = vmatpush.msra.mxu0 %v358
    %1881 = vmatpush.msra.mxu0 %v350
    %1882 = vmatpush.msra.mxu0 %v342
    %1883 = vmatpush.msra.mxu0 %v334
    %1884 = vmatpush.msra.mxu0 %v326
    %1885 = vmatmul.f32.gmra.mxu0 %v1728
    %v1886 = vpop.f32.mrf.mxu0
    %v1887 = vadd.f32 %v1867, %v1886
    %1888 = vdwg.mxu0
    %1889 = vmatpush.msra.mxu0 %v319
    %1890 = vmatpush.msra.mxu0 %v311
    %1891 = vmatpush.msra.mxu0 %v303
    %1892 = vmatpush.msra.mxu0 %v295
    %1893 = vmatpush.msra.mxu0 %v287
    %1894 = vmatpush.msra.mxu0 %v279
    %1895 = vmatpush.msra.mxu0 %v271
    %1896 = vmatpush.msra.mxu0 %v263
    %1897 = vmatpush.msra.mxu0 %v255
    %1898 = vmatpush.msra.mxu0 %v247
    %1899 = vmatpush.msra.mxu0 %v239
    %1900 = vmatpush.msra.mxu0 %v231
    %1901 = vmatpush.msra.mxu0 %v223
    %1902 = vmatpush.msra.mxu0 %v215
    %1903 = vmatpush.msra.mxu0 %v207
    %1904 = vmatpush.msra.mxu0 %v199
    %1905 = vmatmul.f32.gmra.mxu0 %v1727
    %v1906 = vpop.f32.mrf.mxu0
    %v1907 = vadd.f32 0.0, %v1906
    %1908 = vdwg.mxu0
    %1909 = vmatpush.msra.mxu0 %v447
    %1910 = vmatpush.msra.mxu0 %v439
    %1911 = vmatpush.msra.mxu0 %v431
    %1912 = vmatpush.msra.mxu0 %v423
    %1913 = vmatpush.msra.mxu0 %v415
    %1914 = vmatpush.msra.mxu0 %v407
    %1915 = vmatpush.msra.mxu0 %v399
    %1916 = vmatpush.msra.mxu0 %v391
    %1917 = vmatpush.msra.mxu0 %v383
    %1918 = vmatpush.msra.mxu0 %v375
    %1919 = vmatpush.msra.mxu0 %v367
    %1920 = vmatpush.msra.mxu0 %v359
    %1921 = vmatpush.msra.mxu0 %v351
    %1922 = vmatpush.msra.mxu0 %v343
    %1923 = vmatpush.msra.mxu0 %v335
    %1924 = vmatpush.msra.mxu0 %v327
    %1925 = vmatmul.f32.gmra.mxu0 %v1728
    %v1926 = vpop.f32.mrf.mxu0
    %v1927 = vadd.f32 %v1907, %v1926
    %1928 = vdwg.mxu0
    %1929 = vmatpush.msra.mxu0 %v320
    %1930 = vmatpush.msra.mxu0 %v312
    %1931 = vmatpush.msra.mxu0 %v304
    %1932 = vmatpush.msra.mxu0 %v296
    %1933 = vmatpush.msra.mxu0 %v288
    %1934 = vmatpush.msra.mxu0 %v280
    %1935 = vmatpush.msra.mxu0 %v272
    %1936 = vmatpush.msra.mxu0 %v264
    %1937 = vmatpush.msra.mxu0 %v256
    %1938 = vmatpush.msra.mxu0 %v248
    %1939 = vmatpush.msra.mxu0 %v240
    %1940 = vmatpush.msra.mxu0 %v232
    %1941 = vmatpush.msra.mxu0 %v224
    %1942 = vmatpush.msra.mxu0 %v216
    %1943 = vmatpush.msra.mxu0 %v208
    %1944 = vmatpush.msra.mxu0 %v200
    %1945 = vmatmul.f32.gmra.mxu0 %v1727
    %v1946 = vpop.f32.mrf.mxu0
    %v1947 = vadd.f32 0.0, %v1946
    %1948 = vdwg.mxu0
    %1949 = vmatpush.msra.mxu0 %v448
    %1950 = vmatpush.msra.mxu0 %v440
    %1951 = vmatpush.msra.mxu0 %v432
    %1952 = vmatpush.msra.mxu0 %v424
    %1953 = vmatpush.msra.mxu0 %v416
    %1954 = vmatpush.msra.mxu0 %v408
    %1955 = vmatpush.msra.mxu0 %v400
    %1956 = vmatpush.msra.mxu0 %v392
    %1957 = vmatpush.msra.mxu0 %v384
    %1958 = vmatpush.msra.mxu0 %v376
    %1959 = vmatpush.msra.mxu0 %v368
    %1960 = vmatpush.msra.mxu0 %v360
    %1961 = vmatpush.msra.mxu0 %v352
    %1962 = vmatpush.msra.mxu0 %v344
    %1963 = vmatpush.msra.mxu0 %v336
    %1964 = vmatpush.msra.mxu0 %v328
    %1965 = vmatmul.f32.gmra.mxu0 %v1728
    %v1966 = vpop.f32.mrf.mxu0
    %v1967 = vadd.f32 %v1947, %v1966
    %1968 = vdwg.mxu0
    %1969 = vmatpush.msra.mxu0 %v321
    %1970 = vmatpush.msra.mxu0 %v313
    %1971 = vmatpush.msra.mxu0 %v305
    %1972 = vmatpush.msra.mxu0 %v297
    %1973 = vmatpush.msra.mxu0 %v289
    %1974 = vmatpush.msra.mxu0 %v281
    %1975 = vmatpush.msra.mxu0 %v273
    %1976 = vmatpush.msra.mxu0 %v265
    %1977 = vmatpush.msra.mxu0 %v257
    %1978 = vmatpush.msra.mxu0 %v249
    %1979 = vmatpush.msra.mxu0 %v241
    %1980 = vmatpush.msra.mxu0 %v233
    %1981 = vmatpush.msra.mxu0 %v225
    %1982 = vmatpush.msra.mxu0 %v217
    %1983 = vmatpush.msra.mxu0 %v209
    %1984 = vmatpush.msra.mxu0 %v201
    %1985 = vmatmul.f32.gmra.mxu0 %v1727
    %v1986 = vpop.f32.mrf.mxu0
    %v1987 = vadd.f32 0.0, %v1986
    %1988 = vdwg.mxu0
    %1989 = vmatpush.msra.mxu0 %v449
    %1990 = vmatpush.msra.mxu0 %v441
    %1991 = vmatpush.msra.mxu0 %v433
    %1992 = vmatpush.msra.mxu0 %v425
    %1993 = vmatpush.msra.mxu0 %v417
    %1994 = vmatpush.msra.mxu0 %v409
    %1995 = vmatpush.msra.mxu0 %v401
    %1996 = vmatpush.msra.mxu0 %v393
    %1997 = vmatpush.msra.mxu0 %v385
    %1998 = vmatpush.msra.mxu0 %v377
    %1999 = vmatpush.msra.mxu0 %v369
    %2000 = vmatpush.msra.mxu0 %v361
    %2001 = vmatpush.msra.mxu0 %v353
    %2002 = vmatpush.msra.mxu0 %v345
    %2003 = vmatpush.msra.mxu0 %v337
    %2004 = vmatpush.msra.mxu0 %v329
    %2005 = vmatmul.f32.gmra.mxu0 %v1728
    %v2006 = vpop.f32.mrf.mxu0
    %v2007 = vadd.f32 %v1987, %v2006
    %2008 = vdwg.mxu0
    %2009 = vmatpush.msra.mxu0 %v322
    %2010 = vmatpush.msra.mxu0 %v314
    %2011 = vmatpush.msra.mxu0 %v306
    %2012 = vmatpush.msra.mxu0 %v298
    %2013 = vmatpush.msra.mxu0 %v290
    %2014 = vmatpush.msra.mxu0 %v282
    %2015 = vmatpush.msra.mxu0 %v274
    %2016 = vmatpush.msra.mxu0 %v266
    %2017 = vmatpush.msra.mxu0 %v258
    %2018 = vmatpush.msra.mxu0 %v250
    %2019 = vmatpush.msra.mxu0 %v242
    %2020 = vmatpush.msra.mxu0 %v234
    %2021 = vmatpush.msra.mxu0 %v226
    %2022 = vmatpush.msra.mxu0 %v218
    %2023 = vmatpush.msra.mxu0 %v210
    %2024 = vmatpush.msra.mxu0 %v202
    %2025 = vmatmul.f32.gmra.mxu0 %v1727
    %v2026 = vpop.f32.mrf.mxu0
    %v2027 = vadd.f32 0.0, %v2026
    %2028 = vdwg.mxu0
    %2029 = vmatpush.msra.mxu0 %v450
    %2030 = vmatpush.msra.mxu0 %v442
    %2031 = vmatpush.msra.mxu0 %v434
    %2032 = vmatpush.msra.mxu0 %v426
    %2033 = vmatpush.msra.mxu0 %v418
    %2034 = vmatpush.msra.mxu0 %v410
    %2035 = vmatpush.msra.mxu0 %v402
    %2036 = vmatpush.msra.mxu0 %v394
    %2037 = vmatpush.msra.mxu0 %v386
    %2038 = vmatpush.msra.mxu0 %v378
    %2039 = vmatpush.msra.mxu0 %v370
    %2040 = vmatpush.msra.mxu0 %v362
    %2041 = vmatpush.msra.mxu0 %v354
    %2042 = vmatpush.msra.mxu0 %v346
    %2043 = vmatpush.msra.mxu0 %v338
    %2044 = vmatpush.msra.mxu0 %v330
    %2045 = vmatmul.f32.gmra.mxu0 %v1728
    %v2046 = vpop.f32.mrf.mxu0
    %v2047 = vadd.f32 %v2027, %v2046
    %2048 = vdwg.mxu0
    %v2049 = vadd.f32 %v517, %v1767
    %v2050 = vadd.f32 %v567, %v1807
    %v2051 = vadd.f32 %v599, %v1847
    %v2052 = vadd.f32 %v649, %v1887
    %v2053 = vadd.f32 %v681, %v1927
    %v2054 = vadd.f32 %v731, %v1967
    %v2055 = vadd.f32 %v763, %v2007
    %v2056 = vadd.f32 %v813, %v2047
    %v2057 = vxor.u32 %v2049, 2147483648
    %v2058 = vxor.u32 %v2050, 2147483648
    %v2059 = vxor.u32 %v2051, 2147483648
    %v2060 = vxor.u32 %v2052, 2147483648
    %v2061 = vxor.u32 %v2053, 2147483648
    %v2062 = vxor.u32 %v2054, 2147483648
    %v2063 = vmul.f32 %v2057, 1.442695
    %v2064 = vpow.pop %v2063
    %v2065 = vmul.f32 %v2058, 1.442695
    %v2066 = vpow.pop %v2065
    %v2067 = vmul.f32 %v2059, 1.442695
    %v2068 = vpow.pop %v2067
    %v2069 = vmul.f32 %v2060, 1.442695
    %v2070 = vpow.pop %v2069
    %v2071 = vmul.f32 %v2061, 1.442695
    %v2072 = vpow.pop %v2071
    %v2073 = vmul.f32 %v2062, 1.442695
    %v2074 = vpow.pop %v2073
    %v2075 = vadd.f32 %v2064, 1.0
    %v2076 = vadd.f32 %v2066, 1.0
    %v2077 = vadd.f32 %v2068, 1.0
    %v2078 = vadd.f32 %v2070, 1.0
    %v2079 = vadd.f32 %v2072, 1.0
    %v2080 = vadd.f32 %v2074, 1.0
    %v2081 = vrcp.pop %v2075
    %v2082 = vmul.f32 %v2075, %v2081
    %v2083 = vsub.f32 1.0, %v2082
    %v2084 = vmul.f32 %v2081, %v2083
    %v2085 = vadd.f32 %v2081, %v2084
    %vm2086 = vweird.f32 %v2075
    %vm2087 = vweird.f32 %v2081
    %vm2088 = vmor %vm2086, %vm2087
    %v2089 = vsel %vm2088, %v2081, %v2085
    %v2090 = vand.u32 2147483647, %v2075
    %vm2091 = vcmp.eq.f32.partialorder %v2090, 8.507059e+37
    %v2092 = vand.u32 %v2075, 2147483648
    %v2093 = vor.u32 1.1754944e-38, %v2092
    %v2094 = vsel %vm2091, %v2093, %v2089
    %v2095 = vmul.f32 1.0, %v2094
    %v2096 = vrcp.pop %v2076
    %v2097 = vmul.f32 %v2076, %v2096
    %v2098 = vsub.f32 1.0, %v2097
    %v2099 = vmul.f32 %v2096, %v2098
    %v2100 = vadd.f32 %v2096, %v2099
    %vm2101 = vweird.f32 %v2076
    %vm2102 = vweird.f32 %v2096
    %vm2103 = vmor %vm2101, %vm2102
    %v2104 = vsel %vm2103, %v2096, %v2100
    %v2105 = vand.u32 2147483647, %v2076
    %vm2106 = vcmp.eq.f32.partialorder %v2105, 8.507059e+37
    %v2107 = vand.u32 %v2076, 2147483648
    %v2108 = vor.u32 1.1754944e-38, %v2107
    %v2109 = vsel %vm2106, %v2108, %v2104
    %v2110 = vmul.f32 1.0, %v2109
    %v2111 = vrcp.pop %v2077
    %v2112 = vmul.f32 %v2077, %v2111
    %v2113 = vsub.f32 1.0, %v2112
    %v2114 = vmul.f32 %v2111, %v2113
    %v2115 = vadd.f32 %v2111, %v2114
    %vm2116 = vweird.f32 %v2077
    %vm2117 = vweird.f32 %v2111
    %vm2118 = vmor %vm2116, %vm2117
    %v2119 = vsel %vm2118, %v2111, %v2115
    %v2120 = vand.u32 2147483647, %v2077
    %vm2121 = vcmp.eq.f32.partialorder %v2120, 8.507059e+37
    %v2122 = vand.u32 %v2077, 2147483648
    %v2123 = vor.u32 1.1754944e-38, %v2122
    %v2124 = vsel %vm2121, %v2123, %v2119
    %v2125 = vmul.f32 1.0, %v2124
    %v2126 = vrcp.pop %v2078
    %v2127 = vmul.f32 %v2078, %v2126
    %v2128 = vsub.f32 1.0, %v2127
    %v2129 = vmul.f32 %v2126, %v2128
    %v2130 = vadd.f32 %v2126, %v2129
    %vm2131 = vweird.f32 %v2078
    %vm2132 = vweird.f32 %v2126
    %vm2133 = vmor %vm2131, %vm2132
    %v2134 = vsel %vm2133, %v2126, %v2130
    %v2135 = vand.u32 2147483647, %v2078
    %vm2136 = vcmp.eq.f32.partialorder %v2135, 8.507059e+37
    %v2137 = vand.u32 %v2078, 2147483648
    %v2138 = vor.u32 1.1754944e-38, %v2137
    %v2139 = vsel %vm2136, %v2138, %v2134
    %v2140 = vmul.f32 1.0, %v2139
    %v2141 = vrcp.pop %v2079
    %v2142 = vmul.f32 %v2079, %v2141
    %v2143 = vsub.f32 1.0, %v2142
    %v2144 = vmul.f32 %v2141, %v2143
    %v2145 = vadd.f32 %v2141, %v2144
    %vm2146 = vweird.f32 %v2079
    %vm2147 = vweird.f32 %v2141
    %vm2148 = vmor %vm2146, %vm2147
    %v2149 = vsel %vm2148, %v2141, %v2145
    %v2150 = vand.u32 2147483647, %v2079
    %vm2151 = vcmp.eq.f32.partialorder %v2150, 8.507059e+37
    %v2152 = vand.u32 %v2079, 2147483648
    %v2153 = vor.u32 1.1754944e-38, %v2152
    %v2154 = vsel %vm2151, %v2153, %v2149
    %v2155 = vmul.f32 1.0, %v2154
    %v2156 = vrcp.pop %v2080
    %v2157 = vmul.f32 %v2080, %v2156
    %v2158 = vsub.f32 1.0, %v2157
    %v2159 = vmul.f32 %v2156, %v2158
    %v2160 = vadd.f32 %v2156, %v2159
    %vm2161 = vweird.f32 %v2080
    %vm2162 = vweird.f32 %v2156
    %vm2163 = vmor %vm2161, %vm2162
    %v2164 = vsel %vm2163, %v2156, %v2160
    %v2165 = vand.u32 2147483647, %v2080
    %vm2166 = vcmp.eq.f32.partialorder %v2165, 8.507059e+37
    %v2167 = vand.u32 %v2080, 2147483648
    %v2168 = vor.u32 1.1754944e-38, %v2167
    %v2169 = vsel %vm2166, %v2168, %v2164
    %v2170 = vmul.f32 1.0, %v2169
    %v2171 = vtanh.pop %v2055
    %v2172 = vtanh.pop %v2056
    %v2173 = vmul.f32 %v2125, %v1723
    %v2174 = vmul.f32 %v2140, %v1724
    %v2175 = vmul.f32 %v2095, %v2171
    %v2176 = vmul.f32 %v2110, %v2172
    %v2177 = vadd.f32 %v2173, %v2175
    %v2178 = vadd.f32 %v2174, %v2176
    %v2179 = vtanh.pop %v2177
    %v2180 = vtanh.pop %v2178
    %v2181 = vmul.f32 %v2155, %v2179
    %v2182 = vmul.f32 %v2170, %v2180
    %2183 = vmatpush.msra.mxu0 %v315
    %2184 = vmatpush.msra.mxu0 %v307
    %2185 = vmatpush.msra.mxu0 %v299
    %2186 = vmatpush.msra.mxu0 %v291
    %2187 = vmatpush.msra.mxu0 %v283
    %2188 = vmatpush.msra.mxu0 %v275
    %2189 = vmatpush.msra.mxu0 %v267
    %2190 = vmatpush.msra.mxu0 %v259
    %2191 = vmatpush.msra.mxu0 %v251
    %2192 = vmatpush.msra.mxu0 %v243
    %2193 = vmatpush.msra.mxu0 %v235
    %2194 = vmatpush.msra.mxu0 %v227
    %2195 = vmatpush.msra.mxu0 %v219
    %2196 = vmatpush.msra.mxu0 %v211
    %2197 = vmatpush.msra.mxu0 %v203
    %2198 = vmatpush.msra.mxu0 %v195
    %2199 = vmatmul.f32.gmra.mxu0 %v2181
    %v2200 = vpop.f32.mrf.mxu0
    %v2201 = vadd.f32 0.0, %v2200
    %2202 = vdwg.mxu0
    %2203 = vmatpush.msra.mxu0 %v443
    %2204 = vmatpush.msra.mxu0 %v435
    %2205 = vmatpush.msra.mxu0 %v427
    %2206 = vmatpush.msra.mxu0 %v419
    %2207 = vmatpush.msra.mxu0 %v411
    %2208 = vmatpush.msra.mxu0 %v403
    %2209 = vmatpush.msra.mxu0 %v395
    %2210 = vmatpush.msra.mxu0 %v387
    %2211 = vmatpush.msra.mxu0 %v379
    %2212 = vmatpush.msra.mxu0 %v371
    %2213 = vmatpush.msra.mxu0 %v363
    %2214 = vmatpush.msra.mxu0 %v355
    %2215 = vmatpush.msra.mxu0 %v347
    %2216 = vmatpush.msra.mxu0 %v339
    %2217 = vmatpush.msra.mxu0 %v331
    %2218 = vmatpush.msra.mxu0 %v323
    %2219 = vmatmul.f32.gmra.mxu0 %v2182
    %v2220 = vpop.f32.mrf.mxu0
    %v2221 = vadd.f32 %v2201, %v2220
    %2222 = vdwg.mxu0
    %2223 = vmatpush.msra.mxu0 %v316
    %2224 = vmatpush.msra.mxu0 %v308
    %2225 = vmatpush.msra.mxu0 %v300
    %2226 = vmatpush.msra.mxu0 %v292
    %2227 = vmatpush.msra.mxu0 %v284
    %2228 = vmatpush.msra.mxu0 %v276
    %2229 = vmatpush.msra.mxu0 %v268
    %2230 = vmatpush.msra.mxu0 %v260
    %2231 = vmatpush.msra.mxu0 %v252
    %2232 = vmatpush.msra.mxu0 %v244
    %2233 = vmatpush.msra.mxu0 %v236
    %2234 = vmatpush.msra.mxu0 %v228
    %2235 = vmatpush.msra.mxu0 %v220
    %2236 = vmatpush.msra.mxu0 %v212
    %2237 = vmatpush.msra.mxu0 %v204
    %2238 = vmatpush.msra.mxu0 %v196
    %2239 = vmatmul.f32.gmra.mxu0 %v2181
    %v2240 = vpop.f32.mrf.mxu0
    %v2241 = vadd.f32 0.0, %v2240
    %2242 = vdwg.mxu0
    %2243 = vmatpush.msra.mxu0 %v444
    %2244 = vmatpush.msra.mxu0 %v436
    %2245 = vmatpush.msra.mxu0 %v428
    %2246 = vmatpush.msra.mxu0 %v420
    %2247 = vmatpush.msra.mxu0 %v412
    %2248 = vmatpush.msra.mxu0 %v404
    %2249 = vmatpush.msra.mxu0 %v396
    %2250 = vmatpush.msra.mxu0 %v388
    %2251 = vmatpush.msra.mxu0 %v380
    %2252 = vmatpush.msra.mxu0 %v372
    %2253 = vmatpush.msra.mxu0 %v364
    %2254 = vmatpush.msra.mxu0 %v356
    %2255 = vmatpush.msra.mxu0 %v348
    %2256 = vmatpush.msra.mxu0 %v340
    %2257 = vmatpush.msra.mxu0 %v332
    %2258 = vmatpush.msra.mxu0 %v324
    %2259 = vmatmul.f32.gmra.mxu0 %v2182
    %v2260 = vpop.f32.mrf.mxu0
    %v2261 = vadd.f32 %v2241, %v2260
    %2262 = vdwg.mxu0
    %2263 = vmatpush.msra.mxu0 %v317
    %2264 = vmatpush.msra.mxu0 %v309
    %2265 = vmatpush.msra.mxu0 %v301
    %2266 = vmatpush.msra.mxu0 %v293
    %2267 = vmatpush.msra.mxu0 %v285
    %2268 = vmatpush.msra.mxu0 %v277
    %2269 = vmatpush.msra.mxu0 %v269
    %2270 = vmatpush.msra.mxu0 %v261
    %2271 = vmatpush.msra.mxu0 %v253
    %2272 = vmatpush.msra.mxu0 %v245
    %2273 = vmatpush.msra.mxu0 %v237
    %2274 = vmatpush.msra.mxu0 %v229
    %2275 = vmatpush.msra.mxu0 %v221
    %2276 = vmatpush.msra.mxu0 %v213
    %2277 = vmatpush.msra.mxu0 %v205
    %2278 = vmatpush.msra.mxu0 %v197
    %2279 = vmatmul.f32.gmra.mxu0 %v2181
    %v2280 = vpop.f32.mrf.mxu0
    %v2281 = vadd.f32 0.0, %v2280
    %2282 = vdwg.mxu0
    %2283 = vmatpush.msra.mxu0 %v445
    %2284 = vmatpush.msra.mxu0 %v437
    %2285 = vmatpush.msra.mxu0 %v429
    %2286 = vmatpush.msra.mxu0 %v421
    %2287 = vmatpush.msra.mxu0 %v413
    %2288 = vmatpush.msra.mxu0 %v405
    %2289 = vmatpush.msra.mxu0 %v397
    %2290 = vmatpush.msra.mxu0 %v389
    %2291 = vmatpush.msra.mxu0 %v381
    %2292 = vmatpush.msra.mxu0 %v373
    %2293 = vmatpush.msra.mxu0 %v365
    %2294 = vmatpush.msra.mxu0 %v357
    %2295 = vmatpush.msra.mxu0 %v349
    %2296 = vmatpush.msra.mxu0 %v341
    %2297 = vmatpush.msra.mxu0 %v333
    %2298 = vmatpush.msra.mxu0 %v325
    %2299 = vmatmul.f32.gmra.mxu0 %v2182
    %v2300 = vpop.f32.mrf.mxu0
    %v2301 = vadd.f32 %v2281, %v2300
    %2302 = vdwg.mxu0
    %2303 = vmatpush.msra.mxu0 %v318
    %2304 = vmatpush.msra.mxu0 %v310
    %2305 = vmatpush.msra.mxu0 %v302
    %2306 = vmatpush.msra.mxu0 %v294
    %2307 = vmatpush.msra.mxu0 %v286
    %2308 = vmatpush.msra.mxu0 %v278
    %2309 = vmatpush.msra.mxu0 %v270
    %2310 = vmatpush.msra.mxu0 %v262
    %2311 = vmatpush.msra.mxu0 %v254
    %2312 = vmatpush.msra.mxu0 %v246
    %2313 = vmatpush.msra.mxu0 %v238
    %2314 = vmatpush.msra.mxu0 %v230
    %2315 = vmatpush.msra.mxu0 %v222
    %2316 = vmatpush.msra.mxu0 %v214
    %2317 = vmatpush.msra.mxu0 %v206
    %2318 = vmatpush.msra.mxu0 %v198
    %2319 = vmatmul.f32.gmra.mxu0 %v2181
    %v2320 = vpop.f32.mrf.mxu0
    %v2321 = vadd.f32 0.0, %v2320
    %2322 = vdwg.mxu0
    %2323 = vmatpush.msra.mxu0 %v446
    %2324 = vmatpush.msra.mxu0 %v438
    %2325 = vmatpush.msra.mxu0 %v430
    %2326 = vmatpush.msra.mxu0 %v422
    %2327 = vmatpush.msra.mxu0 %v414
    %2328 = vmatpush.msra.mxu0 %v406
    %2329 = vmatpush.msra.mxu0 %v398
    %2330 = vmatpush.msra.mxu0 %v390
    %2331 = vmatpush.msra.mxu0 %v382
    %2332 = vmatpush.msra.mxu0 %v374
    %2333 = vmatpush.msra.mxu0 %v366
    %2334 = vmatpush.msra.mxu0 %v358
    %2335 = vmatpush.msra.mxu0 %v350
    %2336 = vmatpush.msra.mxu0 %v342
    %2337 = vmatpush.msra.mxu0 %v334
    %2338 = vmatpush.msra.mxu0 %v326
    %2339 = vmatmul.f32.gmra.mxu0 %v2182
    %v2340 = vpop.f32.mrf.mxu0
    %v2341 = vadd.f32 %v2321, %v2340
    %2342 = vdwg.mxu0
    %2343 = vmatpush.msra.mxu0 %v319
    %2344 = vmatpush.msra.mxu0 %v311
    %2345 = vmatpush.msra.mxu0 %v303
    %2346 = vmatpush.msra.mxu0 %v295
    %2347 = vmatpush.msra.mxu0 %v287
    %2348 = vmatpush.msra.mxu0 %v279
    %2349 = vmatpush.msra.mxu0 %v271
    %2350 = vmatpush.msra.mxu0 %v263
    %2351 = vmatpush.msra.mxu0 %v255
    %2352 = vmatpush.msra.mxu0 %v247
    %2353 = vmatpush.msra.mxu0 %v239
    %2354 = vmatpush.msra.mxu0 %v231
    %2355 = vmatpush.msra.mxu0 %v223
    %2356 = vmatpush.msra.mxu0 %v215
    %2357 = vmatpush.msra.mxu0 %v207
    %2358 = vmatpush.msra.mxu0 %v199
    %2359 = vmatmul.f32.gmra.mxu0 %v2181
    %v2360 = vpop.f32.mrf.mxu0
    %v2361 = vadd.f32 0.0, %v2360
    %2362 = vdwg.mxu0
    %2363 = vmatpush.msra.mxu0 %v447
    %2364 = vmatpush.msra.mxu0 %v439
    %2365 = vmatpush.msra.mxu0 %v431
    %2366 = vmatpush.msra.mxu0 %v423
    %2367 = vmatpush.msra.mxu0 %v415
    %2368 = vmatpush.msra.mxu0 %v407
    %2369 = vmatpush.msra.mxu0 %v399
    %2370 = vmatpush.msra.mxu0 %v391
    %2371 = vmatpush.msra.mxu0 %v383
    %2372 = vmatpush.msra.mxu0 %v375
    %2373 = vmatpush.msra.mxu0 %v367
    %2374 = vmatpush.msra.mxu0 %v359
    %2375 = vmatpush.msra.mxu0 %v351
    %2376 = vmatpush.msra.mxu0 %v343
    %2377 = vmatpush.msra.mxu0 %v335
    %2378 = vmatpush.msra.mxu0 %v327
    %2379 = vmatmul.f32.gmra.mxu0 %v2182
    %v2380 = vpop.f32.mrf.mxu0
    %v2381 = vadd.f32 %v2361, %v2380
    %2382 = vdwg.mxu0
    %2383 = vmatpush.msra.mxu0 %v320
    %2384 = vmatpush.msra.mxu0 %v312
    %2385 = vmatpush.msra.mxu0 %v304
    %2386 = vmatpush.msra.mxu0 %v296
    %2387 = vmatpush.msra.mxu0 %v288
    %2388 = vmatpush.msra.mxu0 %v280
    %2389 = vmatpush.msra.mxu0 %v272
    %2390 = vmatpush.msra.mxu0 %v264
    %2391 = vmatpush.msra.mxu0 %v256
    %2392 = vmatpush.msra.mxu0 %v248
    %2393 = vmatpush.msra.mxu0 %v240
    %2394 = vmatpush.msra.mxu0 %v232
    %2395 = vmatpush.msra.mxu0 %v224
    %2396 = vmatpush.msra.mxu0 %v216
    %2397 = vmatpush.msra.mxu0 %v208
    %2398 = vmatpush.msra.mxu0 %v200
    %2399 = vmatmul.f32.gmra.mxu0 %v2181
    %v2400 = vpop.f32.mrf.mxu0
    %v2401 = vadd.f32 0.0, %v2400
    %2402 = vdwg.mxu0
    %2403 = vmatpush.msra.mxu0 %v448
    %2404 = vmatpush.msra.mxu0 %v440
    %2405 = vmatpush.msra.mxu0 %v432
    %2406 = vmatpush.msra.mxu0 %v424
    %2407 = vmatpush.msra.mxu0 %v416
    %2408 = vmatpush.msra.mxu0 %v408
    %2409 = vmatpush.msra.mxu0 %v400
    %2410 = vmatpush.msra.mxu0 %v392
    %2411 = vmatpush.msra.mxu0 %v384
    %2412 = vmatpush.msra.mxu0 %v376
    %2413 = vmatpush.msra.mxu0 %v368
    %2414 = vmatpush.msra.mxu0 %v360
    %2415 = vmatpush.msra.mxu0 %v352
    %2416 = vmatpush.msra.mxu0 %v344
    %2417 = vmatpush.msra.mxu0 %v336
    %2418 = vmatpush.msra.mxu0 %v328
    %2419 = vmatmul.f32.gmra.mxu0 %v2182
    %v2420 = vpop.f32.mrf.mxu0
    %v2421 = vadd.f32 %v2401, %v2420
    %2422 = vdwg.mxu0
    %2423 = vmatpush.msra.mxu0 %v321
    %2424 = vmatpush.msra.mxu0 %v313
    %2425 = vmatpush.msra.mxu0 %v305
    %2426 = vmatpush.msra.mxu0 %v297
    %2427 = vmatpush.msra.mxu0 %v289
    %2428 = vmatpush.msra.mxu0 %v281
    %2429 = vmatpush.msra.mxu0 %v273
    %2430 = vmatpush.msra.mxu0 %v265
    %2431 = vmatpush.msra.mxu0 %v257
    %2432 = vmatpush.msra.mxu0 %v249
    %2433 = vmatpush.msra.mxu0 %v241
    %2434 = vmatpush.msra.mxu0 %v233
    %2435 = vmatpush.msra.mxu0 %v225
    %2436 = vmatpush.msra.mxu0 %v217
    %2437 = vmatpush.msra.mxu0 %v209
    %2438 = vmatpush.msra.mxu0 %v201
    %2439 = vmatmul.f32.gmra.mxu0 %v2181
    %v2440 = vpop.f32.mrf.mxu0
    %v2441 = vadd.f32 0.0, %v2440
    %2442 = vdwg.mxu0
    %2443 = vmatpush.msra.mxu0 %v449
    %2444 = vmatpush.msra.mxu0 %v441
    %2445 = vmatpush.msra.mxu0 %v433
    %2446 = vmatpush.msra.mxu0 %v425
    %2447 = vmatpush.msra.mxu0 %v417
    %2448 = vmatpush.msra.mxu0 %v409
    %2449 = vmatpush.msra.mxu0 %v401
    %2450 = vmatpush.msra.mxu0 %v393
    %2451 = vmatpush.msra.mxu0 %v385
    %2452 = vmatpush.msra.mxu0 %v377
    %2453 = vmatpush.msra.mxu0 %v369
    %2454 = vmatpush.msra.mxu0 %v361
    %2455 = vmatpush.msra.mxu0 %v353
    %2456 = vmatpush.msra.mxu0 %v345
    %2457 = vmatpush.msra.mxu0 %v337
    %2458 = vmatpush.msra.mxu0 %v329
    %2459 = vmatmul.f32.gmra.mxu0 %v2182
    %v2460 = vpop.f32.mrf.mxu0
    %v2461 = vadd.f32 %v2441, %v2460
    %2462 = vdwg.mxu0
    %2463 = vmatpush.msra.mxu0 %v322
    %2464 = vmatpush.msra.mxu0 %v314
    %2465 = vmatpush.msra.mxu0 %v306
    %2466 = vmatpush.msra.mxu0 %v298
    %2467 = vmatpush.msra.mxu0 %v290
    %2468 = vmatpush.msra.mxu0 %v282
    %2469 = vmatpush.msra.mxu0 %v274
    %2470 = vmatpush.msra.mxu0 %v266
    %2471 = vmatpush.msra.mxu0 %v258
    %2472 = vmatpush.msra.mxu0 %v250
    %2473 = vmatpush.msra.mxu0 %v242
    %2474 = vmatpush.msra.mxu0 %v234
    %2475 = vmatpush.msra.mxu0 %v226
    %2476 = vmatpush.msra.mxu0 %v218
    %2477 = vmatpush.msra.mxu0 %v210
    %2478 = vmatpush.msra.mxu0 %v202
    %2479 = vmatmul.f32.gmra.mxu0 %v2181
    %v2480 = vpop.f32.mrf.mxu0
    %v2481 = vadd.f32 0.0, %v2480
    %2482 = vdwg.mxu0
    %2483 = vmatpush.msra.mxu0 %v450
    %2484 = vmatpush.msra.mxu0 %v442
    %2485 = vmatpush.msra.mxu0 %v434
    %2486 = vmatpush.msra.mxu0 %v426
    %2487 = vmatpush.msra.mxu0 %v418
    %2488 = vmatpush.msra.mxu0 %v410
    %2489 = vmatpush.msra.mxu0 %v402
    %2490 = vmatpush.msra.mxu0 %v394
    %2491 = vmatpush.msra.mxu0 %v386
    %2492 = vmatpush.msra.mxu0 %v378
    %2493 = vmatpush.msra.mxu0 %v370
    %2494 = vmatpush.msra.mxu0 %v362
    %2495 = vmatpush.msra.mxu0 %v354
    %2496 = vmatpush.msra.mxu0 %v346
    %2497 = vmatpush.msra.mxu0 %v338
    %2498 = vmatpush.msra.mxu0 %v330
    %2499 = vmatmul.f32.gmra.mxu0 %v2182
    %v2500 = vpop.f32.mrf.mxu0
    %v2501 = vadd.f32 %v2481, %v2500
    %2502 = vdwg.mxu0
    %v2503 = vadd.f32 %v520, %v2221
    %v2504 = vadd.f32 %v564, %v2261
    %v2505 = vadd.f32 %v602, %v2301
    %v2506 = vadd.f32 %v646, %v2341
    %v2507 = vadd.f32 %v684, %v2381
    %v2508 = vadd.f32 %v728, %v2421
    %v2509 = vadd.f32 %v766, %v2461
    %v2510 = vadd.f32 %v810, %v2501
    %v2511 = vxor.u32 %v2503, 2147483648
    %v2512 = vxor.u32 %v2504, 2147483648
    %v2513 = vxor.u32 %v2505, 2147483648
    %v2514 = vxor.u32 %v2506, 2147483648
    %v2515 = vxor.u32 %v2507, 2147483648
    %v2516 = vxor.u32 %v2508, 2147483648
    %v2517 = vmul.f32 %v2511, 1.442695
    %v2518 = vpow.pop %v2517
    %v2519 = vmul.f32 %v2512, 1.442695
    %v2520 = vpow.pop %v2519
    %v2521 = vmul.f32 %v2513, 1.442695
    %v2522 = vpow.pop %v2521
    %v2523 = vmul.f32 %v2514, 1.442695
    %v2524 = vpow.pop %v2523
    %v2525 = vmul.f32 %v2515, 1.442695
    %v2526 = vpow.pop %v2525
    %v2527 = vmul.f32 %v2516, 1.442695
    %v2528 = vpow.pop %v2527
    %v2529 = vadd.f32 %v2518, 1.0
    %v2530 = vadd.f32 %v2520, 1.0
    %v2531 = vadd.f32 %v2522, 1.0
    %v2532 = vadd.f32 %v2524, 1.0
    %v2533 = vadd.f32 %v2526, 1.0
    %v2534 = vadd.f32 %v2528, 1.0
    %v2535 = vrcp.pop %v2529
    %v2536 = vmul.f32 %v2529, %v2535
    %v2537 = vsub.f32 1.0, %v2536
    %v2538 = vmul.f32 %v2535, %v2537
    %v2539 = vadd.f32 %v2535, %v2538
    %vm2540 = vweird.f32 %v2529
    %vm2541 = vweird.f32 %v2535
    %vm2542 = vmor %vm2540, %vm2541
    %v2543 = vsel %vm2542, %v2535, %v2539
    %v2544 = vand.u32 2147483647, %v2529
    %vm2545 = vcmp.eq.f32.partialorder %v2544, 8.507059e+37
    %v2546 = vand.u32 %v2529, 2147483648
    %v2547 = vor.u32 1.1754944e-38, %v2546
    %v2548 = vsel %vm2545, %v2547, %v2543
    %v2549 = vmul.f32 1.0, %v2548
    %v2550 = vrcp.pop %v2530
    %v2551 = vmul.f32 %v2530, %v2550
    %v2552 = vsub.f32 1.0, %v2551
    %v2553 = vmul.f32 %v2550, %v2552
    %v2554 = vadd.f32 %v2550, %v2553
    %vm2555 = vweird.f32 %v2530
    %vm2556 = vweird.f32 %v2550
    %vm2557 = vmor %vm2555, %vm2556
    %v2558 = vsel %vm2557, %v2550, %v2554
    %v2559 = vand.u32 2147483647, %v2530
    %vm2560 = vcmp.eq.f32.partialorder %v2559, 8.507059e+37
    %v2561 = vand.u32 %v2530, 2147483648
    %v2562 = vor.u32 1.1754944e-38, %v2561
    %v2563 = vsel %vm2560, %v2562, %v2558
    %v2564 = vmul.f32 1.0, %v2563
    %v2565 = vrcp.pop %v2531
    %v2566 = vmul.f32 %v2531, %v2565
    %v2567 = vsub.f32 1.0, %v2566
    %v2568 = vmul.f32 %v2565, %v2567
    %v2569 = vadd.f32 %v2565, %v2568
    %vm2570 = vweird.f32 %v2531
    %vm2571 = vweird.f32 %v2565
    %vm2572 = vmor %vm2570, %vm2571
    %v2573 = vsel %vm2572, %v2565, %v2569
    %v2574 = vand.u32 2147483647, %v2531
    %vm2575 = vcmp.eq.f32.partialorder %v2574, 8.507059e+37
    %v2576 = vand.u32 %v2531, 2147483648
    %v2577 = vor.u32 1.1754944e-38, %v2576
    %v2578 = vsel %vm2575, %v2577, %v2573
    %v2579 = vmul.f32 1.0, %v2578
    %v2580 = vrcp.pop %v2532
    %v2581 = vmul.f32 %v2532, %v2580
    %v2582 = vsub.f32 1.0, %v2581
    %v2583 = vmul.f32 %v2580, %v2582
    %v2584 = vadd.f32 %v2580, %v2583
    %vm2585 = vweird.f32 %v2532
    %vm2586 = vweird.f32 %v2580
    %vm2587 = vmor %vm2585, %vm2586
    %v2588 = vsel %vm2587, %v2580, %v2584
    %v2589 = vand.u32 2147483647, %v2532
    %vm2590 = vcmp.eq.f32.partialorder %v2589, 8.507059e+37
    %v2591 = vand.u32 %v2532, 2147483648
    %v2592 = vor.u32 1.1754944e-38, %v2591
    %v2593 = vsel %vm2590, %v2592, %v2588
    %v2594 = vmul.f32 1.0, %v2593
    %v2595 = vrcp.pop %v2533
    %v2596 = vmul.f32 %v2533, %v2595
    %v2597 = vsub.f32 1.0, %v2596
    %v2598 = vmul.f32 %v2595, %v2597
    %v2599 = vadd.f32 %v2595, %v2598
    %vm2600 = vweird.f32 %v2533
    %vm2601 = vweird.f32 %v2595
    %vm2602 = vmor %vm2600, %vm2601
    %v2603 = vsel %vm2602, %v2595, %v2599
    %v2604 = vand.u32 2147483647, %v2533
    %vm2605 = vcmp.eq.f32.partialorder %v2604, 8.507059e+37
    %v2606 = vand.u32 %v2533, 2147483648
    %v2607 = vor.u32 1.1754944e-38, %v2606
    %v2608 = vsel %vm2605, %v2607, %v2603
    %v2609 = vmul.f32 1.0, %v2608
    %v2610 = vrcp.pop %v2534
    %v2611 = vmul.f32 %v2534, %v2610
    %v2612 = vsub.f32 1.0, %v2611
    %v2613 = vmul.f32 %v2610, %v2612
    %v2614 = vadd.f32 %v2610, %v2613
    %vm2615 = vweird.f32 %v2534
    %vm2616 = vweird.f32 %v2610
    %vm2617 = vmor %vm2615, %vm2616
    %v2618 = vsel %vm2617, %v2610, %v2614
    %v2619 = vand.u32 2147483647, %v2534
    %vm2620 = vcmp.eq.f32.partialorder %v2619, 8.507059e+37
    %v2621 = vand.u32 %v2534, 2147483648
    %v2622 = vor.u32 1.1754944e-38, %v2621
    %v2623 = vsel %vm2620, %v2622, %v2618
    %v2624 = vmul.f32 1.0, %v2623
    %v2625 = vtanh.pop %v2509
    %v2626 = vtanh.pop %v2510
    %v2627 = vmul.f32 %v2579, %v2177
    %v2628 = vmul.f32 %v2594, %v2178
    %v2629 = vmul.f32 %v2549, %v2625
    %v2630 = vmul.f32 %v2564, %v2626
    %v2631 = vadd.f32 %v2627, %v2629
    %v2632 = vadd.f32 %v2628, %v2630
    %v2633 = vtanh.pop %v2631
    %v2634 = vtanh.pop %v2632
    %v2635 = vmul.f32 %v2609, %v2633
    %v2636 = vmul.f32 %v2624, %v2634
    %2637 = vmatpush.msra.mxu0 %v315
    %2638 = vmatpush.msra.mxu0 %v307
    %2639 = vmatpush.msra.mxu0 %v299
    %2640 = vmatpush.msra.mxu0 %v291
    %2641 = vmatpush.msra.mxu0 %v283
    %2642 = vmatpush.msra.mxu0 %v275
    %2643 = vmatpush.msra.mxu0 %v267
    %2644 = vmatpush.msra.mxu0 %v259
    %2645 = vmatpush.msra.mxu0 %v251
    %2646 = vmatpush.msra.mxu0 %v243
    %2647 = vmatpush.msra.mxu0 %v235
    %2648 = vmatpush.msra.mxu0 %v227
    %2649 = vmatpush.msra.mxu0 %v219
    %2650 = vmatpush.msra.mxu0 %v211
    %2651 = vmatpush.msra.mxu0 %v203
    %2652 = vmatpush.msra.mxu0 %v195
    %2653 = vmatmul.f32.gmra.mxu0 %v2635
    %v2654 = vpop.f32.mrf.mxu0
    %v2655 = vadd.f32 0.0, %v2654
    %2656 = vdwg.mxu0
    %2657 = vmatpush.msra.mxu0 %v443
    %2658 = vmatpush.msra.mxu0 %v435
    %2659 = vmatpush.msra.mxu0 %v427
    %2660 = vmatpush.msra.mxu0 %v419
    %2661 = vmatpush.msra.mxu0 %v411
    %2662 = vmatpush.msra.mxu0 %v403
    %2663 = vmatpush.msra.mxu0 %v395
    %2664 = vmatpush.msra.mxu0 %v387
    %2665 = vmatpush.msra.mxu0 %v379
    %2666 = vmatpush.msra.mxu0 %v371
    %2667 = vmatpush.msra.mxu0 %v363
    %2668 = vmatpush.msra.mxu0 %v355
    %2669 = vmatpush.msra.mxu0 %v347
    %2670 = vmatpush.msra.mxu0 %v339
    %2671 = vmatpush.msra.mxu0 %v331
    %2672 = vmatpush.msra.mxu0 %v323
    %2673 = vmatmul.f32.gmra.mxu0 %v2636
    %v2674 = vpop.f32.mrf.mxu0
    %v2675 = vadd.f32 %v2655, %v2674
    %2676 = vdwg.mxu0
    %2677 = vmatpush.msra.mxu0 %v316
    %2678 = vmatpush.msra.mxu0 %v308
    %2679 = vmatpush.msra.mxu0 %v300
    %2680 = vmatpush.msra.mxu0 %v292
    %2681 = vmatpush.msra.mxu0 %v284
    %2682 = vmatpush.msra.mxu0 %v276
    %2683 = vmatpush.msra.mxu0 %v268
    %2684 = vmatpush.msra.mxu0 %v260
    %2685 = vmatpush.msra.mxu0 %v252
    %2686 = vmatpush.msra.mxu0 %v244
    %2687 = vmatpush.msra.mxu0 %v236
    %2688 = vmatpush.msra.mxu0 %v228
    %2689 = vmatpush.msra.mxu0 %v220
    %2690 = vmatpush.msra.mxu0 %v212
    %2691 = vmatpush.msra.mxu0 %v204
    %2692 = vmatpush.msra.mxu0 %v196
    %2693 = vmatmul.f32.gmra.mxu0 %v2635
    %v2694 = vpop.f32.mrf.mxu0
    %v2695 = vadd.f32 0.0, %v2694
    %2696 = vdwg.mxu0
    %2697 = vmatpush.msra.mxu0 %v444
    %2698 = vmatpush.msra.mxu0 %v436
    %2699 = vmatpush.msra.mxu0 %v428
    %2700 = vmatpush.msra.mxu0 %v420
    %2701 = vmatpush.msra.mxu0 %v412
    %2702 = vmatpush.msra.mxu0 %v404
    %2703 = vmatpush.msra.mxu0 %v396
    %2704 = vmatpush.msra.mxu0 %v388
    %2705 = vmatpush.msra.mxu0 %v380
    %2706 = vmatpush.msra.mxu0 %v372
    %2707 = vmatpush.msra.mxu0 %v364
    %2708 = vmatpush.msra.mxu0 %v356
    %2709 = vmatpush.msra.mxu0 %v348
    %2710 = vmatpush.msra.mxu0 %v340
    %2711 = vmatpush.msra.mxu0 %v332
    %2712 = vmatpush.msra.mxu0 %v324
    %2713 = vmatmul.f32.gmra.mxu0 %v2636
    %v2714 = vpop.f32.mrf.mxu0
    %v2715 = vadd.f32 %v2695, %v2714
    %2716 = vdwg.mxu0
    %2717 = vmatpush.msra.mxu0 %v317
    %2718 = vmatpush.msra.mxu0 %v309
    %2719 = vmatpush.msra.mxu0 %v301
    %2720 = vmatpush.msra.mxu0 %v293
    %2721 = vmatpush.msra.mxu0 %v285
    %2722 = vmatpush.msra.mxu0 %v277
    %2723 = vmatpush.msra.mxu0 %v269
    %2724 = vmatpush.msra.mxu0 %v261
    %2725 = vmatpush.msra.mxu0 %v253
    %2726 = vmatpush.msra.mxu0 %v245
    %2727 = vmatpush.msra.mxu0 %v237
    %2728 = vmatpush.msra.mxu0 %v229
    %2729 = vmatpush.msra.mxu0 %v221
    %2730 = vmatpush.msra.mxu0 %v213
    %2731 = vmatpush.msra.mxu0 %v205
    %2732 = vmatpush.msra.mxu0 %v197
    %2733 = vmatmul.f32.gmra.mxu0 %v2635
    %v2734 = vpop.f32.mrf.mxu0
    %v2735 = vadd.f32 0.0, %v2734
    %2736 = vdwg.mxu0
    %2737 = vmatpush.msra.mxu0 %v445
    %2738 = vmatpush.msra.mxu0 %v437
    %2739 = vmatpush.msra.mxu0 %v429
    %2740 = vmatpush.msra.mxu0 %v421
    %2741 = vmatpush.msra.mxu0 %v413
    %2742 = vmatpush.msra.mxu0 %v405
    %2743 = vmatpush.msra.mxu0 %v397
    %2744 = vmatpush.msra.mxu0 %v389
    %2745 = vmatpush.msra.mxu0 %v381
    %2746 = vmatpush.msra.mxu0 %v373
    %2747 = vmatpush.msra.mxu0 %v365
    %2748 = vmatpush.msra.mxu0 %v357
    %2749 = vmatpush.msra.mxu0 %v349
    %2750 = vmatpush.msra.mxu0 %v341
    %2751 = vmatpush.msra.mxu0 %v333
    %2752 = vmatpush.msra.mxu0 %v325
    %2753 = vmatmul.f32.gmra.mxu0 %v2636
    %v2754 = vpop.f32.mrf.mxu0
    %v2755 = vadd.f32 %v2735, %v2754
    %2756 = vdwg.mxu0
    %2757 = vmatpush.msra.mxu0 %v318
    %2758 = vmatpush.msra.mxu0 %v310
    %2759 = vmatpush.msra.mxu0 %v302
    %2760 = vmatpush.msra.mxu0 %v294
    %2761 = vmatpush.msra.mxu0 %v286
    %2762 = vmatpush.msra.mxu0 %v278
    %2763 = vmatpush.msra.mxu0 %v270
    %2764 = vmatpush.msra.mxu0 %v262
    %2765 = vmatpush.msra.mxu0 %v254
    %2766 = vmatpush.msra.mxu0 %v246
    %2767 = vmatpush.msra.mxu0 %v238
    %2768 = vmatpush.msra.mxu0 %v230
    %2769 = vmatpush.msra.mxu0 %v222
    %2770 = vmatpush.msra.mxu0 %v214
    %2771 = vmatpush.msra.mxu0 %v206
    %2772 = vmatpush.msra.mxu0 %v198
    %2773 = vmatmul.f32.gmra.mxu0 %v2635
    %v2774 = vpop.f32.mrf.mxu0
    %v2775 = vadd.f32 0.0, %v2774
    %2776 = vdwg.mxu0
    %2777 = vmatpush.msra.mxu0 %v446
    %2778 = vmatpush.msra.mxu0 %v438
    %2779 = vmatpush.msra.mxu0 %v430
    %2780 = vmatpush.msra.mxu0 %v422
    %2781 = vmatpush.msra.mxu0 %v414
    %2782 = vmatpush.msra.mxu0 %v406
    %2783 = vmatpush.msra.mxu0 %v398
    %2784 = vmatpush.msra.mxu0 %v390
    %2785 = vmatpush.msra.mxu0 %v382
    %2786 = vmatpush.msra.mxu0 %v374
    %2787 = vmatpush.msra.mxu0 %v366
    %2788 = vmatpush.msra.mxu0 %v358
    %2789 = vmatpush.msra.mxu0 %v350
    %2790 = vmatpush.msra.mxu0 %v342
    %2791 = vmatpush.msra.mxu0 %v334
    %2792 = vmatpush.msra.mxu0 %v326
    %2793 = vmatmul.f32.gmra.mxu0 %v2636
    %v2794 = vpop.f32.mrf.mxu0
    %v2795 = vadd.f32 %v2775, %v2794
    %2796 = vdwg.mxu0
    %2797 = vmatpush.msra.mxu0 %v319
    %2798 = vmatpush.msra.mxu0 %v311
    %2799 = vmatpush.msra.mxu0 %v303
    %2800 = vmatpush.msra.mxu0 %v295
    %2801 = vmatpush.msra.mxu0 %v287
    %2802 = vmatpush.msra.mxu0 %v279
    %2803 = vmatpush.msra.mxu0 %v271
    %2804 = vmatpush.msra.mxu0 %v263
    %2805 = vmatpush.msra.mxu0 %v255
    %2806 = vmatpush.msra.mxu0 %v247
    %2807 = vmatpush.msra.mxu0 %v239
    %2808 = vmatpush.msra.mxu0 %v231
    %2809 = vmatpush.msra.mxu0 %v223
    %2810 = vmatpush.msra.mxu0 %v215
    %2811 = vmatpush.msra.mxu0 %v207
    %2812 = vmatpush.msra.mxu0 %v199
    %2813 = vmatmul.f32.gmra.mxu0 %v2635
    %v2814 = vpop.f32.mrf.mxu0
    %v2815 = vadd.f32 0.0, %v2814
    %2816 = vdwg.mxu0
    %2817 = vmatpush.msra.mxu0 %v447
    %2818 = vmatpush.msra.mxu0 %v439
    %2819 = vmatpush.msra.mxu0 %v431
    %2820 = vmatpush.msra.mxu0 %v423
    %2821 = vmatpush.msra.mxu0 %v415
    %2822 = vmatpush.msra.mxu0 %v407
    %2823 = vmatpush.msra.mxu0 %v399
    %2824 = vmatpush.msra.mxu0 %v391
    %2825 = vmatpush.msra.mxu0 %v383
    %2826 = vmatpush.msra.mxu0 %v375
    %2827 = vmatpush.msra.mxu0 %v367
    %2828 = vmatpush.msra.mxu0 %v359
    %2829 = vmatpush.msra.mxu0 %v351
    %2830 = vmatpush.msra.mxu0 %v343
    %2831 = vmatpush.msra.mxu0 %v335
    %2832 = vmatpush.msra.mxu0 %v327
    %2833 = vmatmul.f32.gmra.mxu0 %v2636
    %v2834 = vpop.f32.mrf.mxu0
    %v2835 = vadd.f32 %v2815, %v2834
    %2836 = vdwg.mxu0
    %2837 = vmatpush.msra.mxu0 %v320
    %2838 = vmatpush.msra.mxu0 %v312
    %2839 = vmatpush.msra.mxu0 %v304
    %2840 = vmatpush.msra.mxu0 %v296
    %2841 = vmatpush.msra.mxu0 %v288
    %2842 = vmatpush.msra.mxu0 %v280
    %2843 = vmatpush.msra.mxu0 %v272
    %2844 = vmatpush.msra.mxu0 %v264
    %2845 = vmatpush.msra.mxu0 %v256
    %2846 = vmatpush.msra.mxu0 %v248
    %2847 = vmatpush.msra.mxu0 %v240
    %2848 = vmatpush.msra.mxu0 %v232
    %2849 = vmatpush.msra.mxu0 %v224
    %2850 = vmatpush.msra.mxu0 %v216
    %2851 = vmatpush.msra.mxu0 %v208
    %2852 = vmatpush.msra.mxu0 %v200
    %2853 = vmatmul.f32.gmra.mxu0 %v2635
    %v2854 = vpop.f32.mrf.mxu0
    %v2855 = vadd.f32 0.0, %v2854
    %2856 = vdwg.mxu0
    %2857 = vmatpush.msra.mxu0 %v448
    %2858 = vmatpush.msra.mxu0 %v440
    %2859 = vmatpush.msra.mxu0 %v432
    %2860 = vmatpush.msra.mxu0 %v424
    %2861 = vmatpush.msra.mxu0 %v416
    %2862 = vmatpush.msra.mxu0 %v408
    %2863 = vmatpush.msra.mxu0 %v400
    %2864 = vmatpush.msra.mxu0 %v392
    %2865 = vmatpush.msra.mxu0 %v384
    %2866 = vmatpush.msra.mxu0 %v376
    %2867 = vmatpush.msra.mxu0 %v368
    %2868 = vmatpush.msra.mxu0 %v360
    %2869 = vmatpush.msra.mxu0 %v352
    %2870 = vmatpush.msra.mxu0 %v344
    %2871 = vmatpush.msra.mxu0 %v336
    %2872 = vmatpush.msra.mxu0 %v328
    %2873 = vmatmul.f32.gmra.mxu0 %v2636
    %v2874 = vpop.f32.mrf.mxu0
    %v2875 = vadd.f32 %v2855, %v2874
    %2876 = vdwg.mxu0
    %2877 = vmatpush.msra.mxu0 %v321
    %2878 = vmatpush.msra.mxu0 %v313
    %2879 = vmatpush.msra.mxu0 %v305
    %2880 = vmatpush.msra.mxu0 %v297
    %2881 = vmatpush.msra.mxu0 %v289
    %2882 = vmatpush.msra.mxu0 %v281
    %2883 = vmatpush.msra.mxu0 %v273
    %2884 = vmatpush.msra.mxu0 %v265
    %2885 = vmatpush.msra.mxu0 %v257
    %2886 = vmatpush.msra.mxu0 %v249
    %2887 = vmatpush.msra.mxu0 %v241
    %2888 = vmatpush.msra.mxu0 %v233
    %2889 = vmatpush.msra.mxu0 %v225
    %2890 = vmatpush.msra.mxu0 %v217
    %2891 = vmatpush.msra.mxu0 %v209
    %2892 = vmatpush.msra.mxu0 %v201
    %2893 = vmatmul.f32.gmra.mxu0 %v2635
    %v2894 = vpop.f32.mrf.mxu0
    %v2895 = vadd.f32 0.0, %v2894
    %2896 = vdwg.mxu0
    %2897 = vmatpush.msra.mxu0 %v449
    %2898 = vmatpush.msra.mxu0 %v441
    %2899 = vmatpush.msra.mxu0 %v433
    %2900 = vmatpush.msra.mxu0 %v425
    %2901 = vmatpush.msra.mxu0 %v417
    %2902 = vmatpush.msra.mxu0 %v409
    %2903 = vmatpush.msra.mxu0 %v401
    %2904 = vmatpush.msra.mxu0 %v393
    %2905 = vmatpush.msra.mxu0 %v385
    %2906 = vmatpush.msra.mxu0 %v377
    %2907 = vmatpush.msra.mxu0 %v369
    %2908 = vmatpush.msra.mxu0 %v361
    %2909 = vmatpush.msra.mxu0 %v353
    %2910 = vmatpush.msra.mxu0 %v345
    %2911 = vmatpush.msra.mxu0 %v337
    %2912 = vmatpush.msra.mxu0 %v329
    %2913 = vmatmul.f32.gmra.mxu0 %v2636
    %v2914 = vpop.f32.mrf.mxu0
    %v2915 = vadd.f32 %v2895, %v2914
    %2916 = vdwg.mxu0
    %2917 = vmatpush.msra.mxu0 %v322
    %2918 = vmatpush.msra.mxu0 %v314
    %2919 = vmatpush.msra.mxu0 %v306
    %2920 = vmatpush.msra.mxu0 %v298
    %2921 = vmatpush.msra.mxu0 %v290
    %2922 = vmatpush.msra.mxu0 %v282
    %2923 = vmatpush.msra.mxu0 %v274
    %2924 = vmatpush.msra.mxu0 %v266
    %2925 = vmatpush.msra.mxu0 %v258
    %2926 = vmatpush.msra.mxu0 %v250
    %2927 = vmatpush.msra.mxu0 %v242
    %2928 = vmatpush.msra.mxu0 %v234
    %2929 = vmatpush.msra.mxu0 %v226
    %2930 = vmatpush.msra.mxu0 %v218
    %2931 = vmatpush.msra.mxu0 %v210
    %2932 = vmatpush.msra.mxu0 %v202
    %2933 = vmatmul.f32.gmra.mxu0 %v2635
    %v2934 = vpop.f32.mrf.mxu0
    %v2935 = vadd.f32 0.0, %v2934
    %2936 = vdwg.mxu0
    %2937 = vmatpush.msra.mxu0 %v450
    %2938 = vmatpush.msra.mxu0 %v442
    %2939 = vmatpush.msra.mxu0 %v434
    %2940 = vmatpush.msra.mxu0 %v426
    %2941 = vmatpush.msra.mxu0 %v418
    %2942 = vmatpush.msra.mxu0 %v410
    %2943 = vmatpush.msra.mxu0 %v402
    %2944 = vmatpush.msra.mxu0 %v394
    %2945 = vmatpush.msra.mxu0 %v386
    %2946 = vmatpush.msra.mxu0 %v378
    %2947 = vmatpush.msra.mxu0 %v370
    %2948 = vmatpush.msra.mxu0 %v362
    %2949 = vmatpush.msra.mxu0 %v354
    %2950 = vmatpush.msra.mxu0 %v346
    %2951 = vmatpush.msra.mxu0 %v338
    %2952 = vmatpush.msra.mxu0 %v330
    %2953 = vmatmul.f32.gmra.mxu0 %v2636
    %v2954 = vpop.f32.mrf.mxu0
    %v2955 = vadd.f32 %v2935, %v2954
    %2956 = vdwg.mxu0
    %v2957 = vadd.f32 %v523, %v2675
    %v2958 = vadd.f32 %v561, %v2715
    %v2959 = vadd.f32 %v605, %v2755
    %v2960 = vadd.f32 %v643, %v2795
    %v2961 = vadd.f32 %v687, %v2835
    %v2962 = vadd.f32 %v725, %v2875
    %v2963 = vadd.f32 %v769, %v2915
    %v2964 = vadd.f32 %v807, %v2955
    %v2965 = vxor.u32 %v2957, 2147483648
    %v2966 = vxor.u32 %v2958, 2147483648
    %v2967 = vxor.u32 %v2959, 2147483648
    %v2968 = vxor.u32 %v2960, 2147483648
    %v2969 = vxor.u32 %v2961, 2147483648
    %v2970 = vxor.u32 %v2962, 2147483648
    %v2971 = vmul.f32 %v2965, 1.442695
    %v2972 = vpow.pop %v2971
    %v2973 = vmul.f32 %v2966, 1.442695
    %v2974 = vpow.pop %v2973
    %v2975 = vmul.f32 %v2967, 1.442695
    %v2976 = vpow.pop %v2975
    %v2977 = vmul.f32 %v2968, 1.442695
    %v2978 = vpow.pop %v2977
    %v2979 = vmul.f32 %v2969, 1.442695
    %v2980 = vpow.pop %v2979
    %v2981 = vmul.f32 %v2970, 1.442695
    %v2982 = vpow.pop %v2981
    %v2983 = vadd.f32 %v2972, 1.0
    %v2984 = vadd.f32 %v2974, 1.0
    %v2985 = vadd.f32 %v2976, 1.0
    %v2986 = vadd.f32 %v2978, 1.0
    %v2987 = vadd.f32 %v2980, 1.0
    %v2988 = vadd.f32 %v2982, 1.0
    %v2989 = vrcp.pop %v2983
    %v2990 = vmul.f32 %v2983, %v2989
    %v2991 = vsub.f32 1.0, %v2990
    %v2992 = vmul.f32 %v2989, %v2991
    %v2993 = vadd.f32 %v2989, %v2992
    %vm2994 = vweird.f32 %v2983
    %vm2995 = vweird.f32 %v2989
    %vm2996 = vmor %vm2994, %vm2995
    %v2997 = vsel %vm2996, %v2989, %v2993
    %v2998 = vand.u32 2147483647, %v2983
    %vm2999 = vcmp.eq.f32.partialorder %v2998, 8.507059e+37
    %v3000 = vand.u32 %v2983, 2147483648
    %v3001 = vor.u32 1.1754944e-38, %v3000
    %v3002 = vsel %vm2999, %v3001, %v2997
    %v3003 = vmul.f32 1.0, %v3002
    %v3004 = vrcp.pop %v2984
    %v3005 = vmul.f32 %v2984, %v3004
    %v3006 = vsub.f32 1.0, %v3005
    %v3007 = vmul.f32 %v3004, %v3006
    %v3008 = vadd.f32 %v3004, %v3007
    %vm3009 = vweird.f32 %v2984
    %vm3010 = vweird.f32 %v3004
    %vm3011 = vmor %vm3009, %vm3010
    %v3012 = vsel %vm3011, %v3004, %v3008
    %v3013 = vand.u32 2147483647, %v2984
    %vm3014 = vcmp.eq.f32.partialorder %v3013, 8.507059e+37
    %v3015 = vand.u32 %v2984, 2147483648
    %v3016 = vor.u32 1.1754944e-38, %v3015
    %v3017 = vsel %vm3014, %v3016, %v3012
    %v3018 = vmul.f32 1.0, %v3017
    %v3019 = vrcp.pop %v2985
    %v3020 = vmul.f32 %v2985, %v3019
    %v3021 = vsub.f32 1.0, %v3020
    %v3022 = vmul.f32 %v3019, %v3021
    %v3023 = vadd.f32 %v3019, %v3022
    %vm3024 = vweird.f32 %v2985
    %vm3025 = vweird.f32 %v3019
    %vm3026 = vmor %vm3024, %vm3025
    %v3027 = vsel %vm3026, %v3019, %v3023
    %v3028 = vand.u32 2147483647, %v2985
    %vm3029 = vcmp.eq.f32.partialorder %v3028, 8.507059e+37
    %v3030 = vand.u32 %v2985, 2147483648
    %v3031 = vor.u32 1.1754944e-38, %v3030
    %v3032 = vsel %vm3029, %v3031, %v3027
    %v3033 = vmul.f32 1.0, %v3032
    %v3034 = vrcp.pop %v2986
    %v3035 = vmul.f32 %v2986, %v3034
    %v3036 = vsub.f32 1.0, %v3035
    %v3037 = vmul.f32 %v3034, %v3036
    %v3038 = vadd.f32 %v3034, %v3037
    %vm3039 = vweird.f32 %v2986
    %vm3040 = vweird.f32 %v3034
    %vm3041 = vmor %vm3039, %vm3040
    %v3042 = vsel %vm3041, %v3034, %v3038
    %v3043 = vand.u32 2147483647, %v2986
    %vm3044 = vcmp.eq.f32.partialorder %v3043, 8.507059e+37
    %v3045 = vand.u32 %v2986, 2147483648
    %v3046 = vor.u32 1.1754944e-38, %v3045
    %v3047 = vsel %vm3044, %v3046, %v3042
    %v3048 = vmul.f32 1.0, %v3047
    %v3049 = vrcp.pop %v2987
    %v3050 = vmul.f32 %v2987, %v3049
    %v3051 = vsub.f32 1.0, %v3050
    %v3052 = vmul.f32 %v3049, %v3051
    %v3053 = vadd.f32 %v3049, %v3052
    %vm3054 = vweird.f32 %v2987
    %vm3055 = vweird.f32 %v3049
    %vm3056 = vmor %vm3054, %vm3055
    %v3057 = vsel %vm3056, %v3049, %v3053
    %v3058 = vand.u32 2147483647, %v2987
    %vm3059 = vcmp.eq.f32.partialorder %v3058, 8.507059e+37
    %v3060 = vand.u32 %v2987, 2147483648
    %v3061 = vor.u32 1.1754944e-38, %v3060
    %v3062 = vsel %vm3059, %v3061, %v3057
    %v3063 = vmul.f32 1.0, %v3062
    %v3064 = vrcp.pop %v2988
    %v3065 = vmul.f32 %v2988, %v3064
    %v3066 = vsub.f32 1.0, %v3065
    %v3067 = vmul.f32 %v3064, %v3066
    %v3068 = vadd.f32 %v3064, %v3067
    %vm3069 = vweird.f32 %v2988
    %vm3070 = vweird.f32 %v3064
    %vm3071 = vmor %vm3069, %vm3070
    %v3072 = vsel %vm3071, %v3064, %v3068
    %v3073 = vand.u32 2147483647, %v2988
    %vm3074 = vcmp.eq.f32.partialorder %v3073, 8.507059e+37
    %v3075 = vand.u32 %v2988, 2147483648
    %v3076 = vor.u32 1.1754944e-38, %v3075
    %v3077 = vsel %vm3074, %v3076, %v3072
    %v3078 = vmul.f32 1.0, %v3077
    %v3079 = vtanh.pop %v2963
    %v3080 = vtanh.pop %v2964
    %v3081 = vmul.f32 %v3033, %v2631
    %v3082 = vmul.f32 %v3048, %v2632
    %v3083 = vmul.f32 %v3003, %v3079
    %v3084 = vmul.f32 %v3018, %v3080
    %v3085 = vadd.f32 %v3081, %v3083
    %v3086 = vadd.f32 %v3082, %v3084
    %v3087 = vtanh.pop %v3085
    %v3088 = vtanh.pop %v3086
    %v3089 = vmul.f32 %v3063, %v3087
    %v3090 = vmul.f32 %v3078, %v3088
    %3091 = vmatpush.msra.mxu0 %v315
    %3092 = vmatpush.msra.mxu0 %v307
    %3093 = vmatpush.msra.mxu0 %v299
    %3094 = vmatpush.msra.mxu0 %v291
    %3095 = vmatpush.msra.mxu0 %v283
    %3096 = vmatpush.msra.mxu0 %v275
    %3097 = vmatpush.msra.mxu0 %v267
    %3098 = vmatpush.msra.mxu0 %v259
    %3099 = vmatpush.msra.mxu0 %v251
    %3100 = vmatpush.msra.mxu0 %v243
    %3101 = vmatpush.msra.mxu0 %v235
    %3102 = vmatpush.msra.mxu0 %v227
    %3103 = vmatpush.msra.mxu0 %v219
    %3104 = vmatpush.msra.mxu0 %v211
    %3105 = vmatpush.msra.mxu0 %v203
    %3106 = vmatpush.msra.mxu0 %v195
    %3107 = vmatmul.f32.gmra.mxu0 %v3089
    %v3108 = vpop.f32.mrf.mxu0
    %v3109 = vadd.f32 0.0, %v3108
    %3110 = vdwg.mxu0
    %3111 = vmatpush.msra.mxu0 %v443
    %3112 = vmatpush.msra.mxu0 %v435
    %3113 = vmatpush.msra.mxu0 %v427
    %3114 = vmatpush.msra.mxu0 %v419
    %3115 = vmatpush.msra.mxu0 %v411
    %3116 = vmatpush.msra.mxu0 %v403
    %3117 = vmatpush.msra.mxu0 %v395
    %3118 = vmatpush.msra.mxu0 %v387
    %3119 = vmatpush.msra.mxu0 %v379
    %3120 = vmatpush.msra.mxu0 %v371
    %3121 = vmatpush.msra.mxu0 %v363
    %3122 = vmatpush.msra.mxu0 %v355
    %3123 = vmatpush.msra.mxu0 %v347
    %3124 = vmatpush.msra.mxu0 %v339
    %3125 = vmatpush.msra.mxu0 %v331
    %3126 = vmatpush.msra.mxu0 %v323
    %3127 = vmatmul.f32.gmra.mxu0 %v3090
    %v3128 = vpop.f32.mrf.mxu0
    %v3129 = vadd.f32 %v3109, %v3128
    %3130 = vdwg.mxu0
    %3131 = vmatpush.msra.mxu0 %v316
    %3132 = vmatpush.msra.mxu0 %v308
    %3133 = vmatpush.msra.mxu0 %v300
    %3134 = vmatpush.msra.mxu0 %v292
    %3135 = vmatpush.msra.mxu0 %v284
    %3136 = vmatpush.msra.mxu0 %v276
    %3137 = vmatpush.msra.mxu0 %v268
    %3138 = vmatpush.msra.mxu0 %v260
    %3139 = vmatpush.msra.mxu0 %v252
    %3140 = vmatpush.msra.mxu0 %v244
    %3141 = vmatpush.msra.mxu0 %v236
    %3142 = vmatpush.msra.mxu0 %v228
    %3143 = vmatpush.msra.mxu0 %v220
    %3144 = vmatpush.msra.mxu0 %v212
    %3145 = vmatpush.msra.mxu0 %v204
    %3146 = vmatpush.msra.mxu0 %v196
    %3147 = vmatmul.f32.gmra.mxu0 %v3089
    %v3148 = vpop.f32.mrf.mxu0
    %v3149 = vadd.f32 0.0, %v3148
    %3150 = vdwg.mxu0
    %3151 = vmatpush.msra.mxu0 %v444
    %3152 = vmatpush.msra.mxu0 %v436
    %3153 = vmatpush.msra.mxu0 %v428
    %3154 = vmatpush.msra.mxu0 %v420
    %3155 = vmatpush.msra.mxu0 %v412
    %3156 = vmatpush.msra.mxu0 %v404
    %3157 = vmatpush.msra.mxu0 %v396
    %3158 = vmatpush.msra.mxu0 %v388
    %3159 = vmatpush.msra.mxu0 %v380
    %3160 = vmatpush.msra.mxu0 %v372
    %3161 = vmatpush.msra.mxu0 %v364
    %3162 = vmatpush.msra.mxu0 %v356
    %3163 = vmatpush.msra.mxu0 %v348
    %3164 = vmatpush.msra.mxu0 %v340
    %3165 = vmatpush.msra.mxu0 %v332
    %3166 = vmatpush.msra.mxu0 %v324
    %3167 = vmatmul.f32.gmra.mxu0 %v3090
    %v3168 = vpop.f32.mrf.mxu0
    %v3169 = vadd.f32 %v3149, %v3168
    %3170 = vdwg.mxu0
    %3171 = vmatpush.msra.mxu0 %v317
    %3172 = vmatpush.msra.mxu0 %v309
    %3173 = vmatpush.msra.mxu0 %v301
    %3174 = vmatpush.msra.mxu0 %v293
    %3175 = vmatpush.msra.mxu0 %v285
    %3176 = vmatpush.msra.mxu0 %v277
    %3177 = vmatpush.msra.mxu0 %v269
    %3178 = vmatpush.msra.mxu0 %v261
    %3179 = vmatpush.msra.mxu0 %v253
    %3180 = vmatpush.msra.mxu0 %v245
    %3181 = vmatpush.msra.mxu0 %v237
    %3182 = vmatpush.msra.mxu0 %v229
    %3183 = vmatpush.msra.mxu0 %v221
    %3184 = vmatpush.msra.mxu0 %v213
    %3185 = vmatpush.msra.mxu0 %v205
    %3186 = vmatpush.msra.mxu0 %v197
    %3187 = vmatmul.f32.gmra.mxu0 %v3089
    %v3188 = vpop.f32.mrf.mxu0
    %v3189 = vadd.f32 0.0, %v3188
    %3190 = vdwg.mxu0
    %3191 = vmatpush.msra.mxu0 %v445
    %3192 = vmatpush.msra.mxu0 %v437
    %3193 = vmatpush.msra.mxu0 %v429
    %3194 = vmatpush.msra.mxu0 %v421
    %3195 = vmatpush.msra.mxu0 %v413
    %3196 = vmatpush.msra.mxu0 %v405
    %3197 = vmatpush.msra.mxu0 %v397
    %3198 = vmatpush.msra.mxu0 %v389
    %3199 = vmatpush.msra.mxu0 %v381
    %3200 = vmatpush.msra.mxu0 %v373
    %3201 = vmatpush.msra.mxu0 %v365
    %3202 = vmatpush.msra.mxu0 %v357
    %3203 = vmatpush.msra.mxu0 %v349
    %3204 = vmatpush.msra.mxu0 %v341
    %3205 = vmatpush.msra.mxu0 %v333
    %3206 = vmatpush.msra.mxu0 %v325
    %3207 = vmatmul.f32.gmra.mxu0 %v3090
    %v3208 = vpop.f32.mrf.mxu0
    %v3209 = vadd.f32 %v3189, %v3208
    %3210 = vdwg.mxu0
    %3211 = vmatpush.msra.mxu0 %v318
    %3212 = vmatpush.msra.mxu0 %v310
    %3213 = vmatpush.msra.mxu0 %v302
    %3214 = vmatpush.msra.mxu0 %v294
    %3215 = vmatpush.msra.mxu0 %v286
    %3216 = vmatpush.msra.mxu0 %v278
    %3217 = vmatpush.msra.mxu0 %v270
    %3218 = vmatpush.msra.mxu0 %v262
    %3219 = vmatpush.msra.mxu0 %v254
    %3220 = vmatpush.msra.mxu0 %v246
    %3221 = vmatpush.msra.mxu0 %v238
    %3222 = vmatpush.msra.mxu0 %v230
    %3223 = vmatpush.msra.mxu0 %v222
    %3224 = vmatpush.msra.mxu0 %v214
    %3225 = vmatpush.msra.mxu0 %v206
    %3226 = vmatpush.msra.mxu0 %v198
    %3227 = vmatmul.f32.gmra.mxu0 %v3089
    %v3228 = vpop.f32.mrf.mxu0
    %v3229 = vadd.f32 0.0, %v3228
    %3230 = vdwg.mxu0
    %3231 = vmatpush.msra.mxu0 %v446
    %3232 = vmatpush.msra.mxu0 %v438
    %3233 = vmatpush.msra.mxu0 %v430
    %3234 = vmatpush.msra.mxu0 %v422
    %3235 = vmatpush.msra.mxu0 %v414
    %3236 = vmatpush.msra.mxu0 %v406
    %3237 = vmatpush.msra.mxu0 %v398
    %3238 = vmatpush.msra.mxu0 %v390
    %3239 = vmatpush.msra.mxu0 %v382
    %3240 = vmatpush.msra.mxu0 %v374
    %3241 = vmatpush.msra.mxu0 %v366
    %3242 = vmatpush.msra.mxu0 %v358
    %3243 = vmatpush.msra.mxu0 %v350
    %3244 = vmatpush.msra.mxu0 %v342
    %3245 = vmatpush.msra.mxu0 %v334
    %3246 = vmatpush.msra.mxu0 %v326
    %3247 = vmatmul.f32.gmra.mxu0 %v3090
    %v3248 = vpop.f32.mrf.mxu0
    %v3249 = vadd.f32 %v3229, %v3248
    %3250 = vdwg.mxu0
    %3251 = vmatpush.msra.mxu0 %v319
    %3252 = vmatpush.msra.mxu0 %v311
    %3253 = vmatpush.msra.mxu0 %v303
    %3254 = vmatpush.msra.mxu0 %v295
    %3255 = vmatpush.msra.mxu0 %v287
    %3256 = vmatpush.msra.mxu0 %v279
    %3257 = vmatpush.msra.mxu0 %v271
    %3258 = vmatpush.msra.mxu0 %v263
    %3259 = vmatpush.msra.mxu0 %v255
    %3260 = vmatpush.msra.mxu0 %v247
    %3261 = vmatpush.msra.mxu0 %v239
    %3262 = vmatpush.msra.mxu0 %v231
    %3263 = vmatpush.msra.mxu0 %v223
    %3264 = vmatpush.msra.mxu0 %v215
    %3265 = vmatpush.msra.mxu0 %v207
    %3266 = vmatpush.msra.mxu0 %v199
    %3267 = vmatmul.f32.gmra.mxu0 %v3089
    %v3268 = vpop.f32.mrf.mxu0
    %v3269 = vadd.f32 0.0, %v3268
    %3270 = vdwg.mxu0
    %3271 = vmatpush.msra.mxu0 %v447
    %3272 = vmatpush.msra.mxu0 %v439
    %3273 = vmatpush.msra.mxu0 %v431
    %3274 = vmatpush.msra.mxu0 %v423
    %3275 = vmatpush.msra.mxu0 %v415
    %3276 = vmatpush.msra.mxu0 %v407
    %3277 = vmatpush.msra.mxu0 %v399
    %3278 = vmatpush.msra.mxu0 %v391
    %3279 = vmatpush.msra.mxu0 %v383
    %3280 = vmatpush.msra.mxu0 %v375
    %3281 = vmatpush.msra.mxu0 %v367
    %3282 = vmatpush.msra.mxu0 %v359
    %3283 = vmatpush.msra.mxu0 %v351
    %3284 = vmatpush.msra.mxu0 %v343
    %3285 = vmatpush.msra.mxu0 %v335
    %3286 = vmatpush.msra.mxu0 %v327
    %3287 = vmatmul.f32.gmra.mxu0 %v3090
    %v3288 = vpop.f32.mrf.mxu0
    %v3289 = vadd.f32 %v3269, %v3288
    %3290 = vdwg.mxu0
    %3291 = vmatpush.msra.mxu0 %v320
    %3292 = vmatpush.msra.mxu0 %v312
    %3293 = vmatpush.msra.mxu0 %v304
    %3294 = vmatpush.msra.mxu0 %v296
    %3295 = vmatpush.msra.mxu0 %v288
    %3296 = vmatpush.msra.mxu0 %v280
    %3297 = vmatpush.msra.mxu0 %v272
    %3298 = vmatpush.msra.mxu0 %v264
    %3299 = vmatpush.msra.mxu0 %v256
    %3300 = vmatpush.msra.mxu0 %v248
    %3301 = vmatpush.msra.mxu0 %v240
    %3302 = vmatpush.msra.mxu0 %v232
    %3303 = vmatpush.msra.mxu0 %v224
    %3304 = vmatpush.msra.mxu0 %v216
    %3305 = vmatpush.msra.mxu0 %v208
    %3306 = vmatpush.msra.mxu0 %v200
    %3307 = vmatmul.f32.gmra.mxu0 %v3089
    %v3308 = vpop.f32.mrf.mxu0
    %v3309 = vadd.f32 0.0, %v3308
    %3310 = vdwg.mxu0
    %3311 = vmatpush.msra.mxu0 %v448
    %3312 = vmatpush.msra.mxu0 %v440
    %3313 = vmatpush.msra.mxu0 %v432
    %3314 = vmatpush.msra.mxu0 %v424
    %3315 = vmatpush.msra.mxu0 %v416
    %3316 = vmatpush.msra.mxu0 %v408
    %3317 = vmatpush.msra.mxu0 %v400
    %3318 = vmatpush.msra.mxu0 %v392
    %3319 = vmatpush.msra.mxu0 %v384
    %3320 = vmatpush.msra.mxu0 %v376
    %3321 = vmatpush.msra.mxu0 %v368
    %3322 = vmatpush.msra.mxu0 %v360
    %3323 = vmatpush.msra.mxu0 %v352
    %3324 = vmatpush.msra.mxu0 %v344
    %3325 = vmatpush.msra.mxu0 %v336
    %3326 = vmatpush.msra.mxu0 %v328
    %3327 = vmatmul.f32.gmra.mxu0 %v3090
    %v3328 = vpop.f32.mrf.mxu0
    %v3329 = vadd.f32 %v3309, %v3328
    %3330 = vdwg.mxu0
    %3331 = vmatpush.msra.mxu0 %v321
    %3332 = vmatpush.msra.mxu0 %v313
    %3333 = vmatpush.msra.mxu0 %v305
    %3334 = vmatpush.msra.mxu0 %v297
    %3335 = vmatpush.msra.mxu0 %v289
    %3336 = vmatpush.msra.mxu0 %v281
    %3337 = vmatpush.msra.mxu0 %v273
    %3338 = vmatpush.msra.mxu0 %v265
    %3339 = vmatpush.msra.mxu0 %v257
    %3340 = vmatpush.msra.mxu0 %v249
    %3341 = vmatpush.msra.mxu0 %v241
    %3342 = vmatpush.msra.mxu0 %v233
    %3343 = vmatpush.msra.mxu0 %v225
    %3344 = vmatpush.msra.mxu0 %v217
    %3345 = vmatpush.msra.mxu0 %v209
    %3346 = vmatpush.msra.mxu0 %v201
    %3347 = vmatmul.f32.gmra.mxu0 %v3089
    %v3348 = vpop.f32.mrf.mxu0
    %v3349 = vadd.f32 0.0, %v3348
    %3350 = vdwg.mxu0
    %3351 = vmatpush.msra.mxu0 %v449
    %3352 = vmatpush.msra.mxu0 %v441
    %3353 = vmatpush.msra.mxu0 %v433
    %3354 = vmatpush.msra.mxu0 %v425
    %3355 = vmatpush.msra.mxu0 %v417
    %3356 = vmatpush.msra.mxu0 %v409
    %3357 = vmatpush.msra.mxu0 %v401
    %3358 = vmatpush.msra.mxu0 %v393
    %3359 = vmatpush.msra.mxu0 %v385
    %3360 = vmatpush.msra.mxu0 %v377
    %3361 = vmatpush.msra.mxu0 %v369
    %3362 = vmatpush.msra.mxu0 %v361
    %3363 = vmatpush.msra.mxu0 %v353
    %3364 = vmatpush.msra.mxu0 %v345
    %3365 = vmatpush.msra.mxu0 %v337
    %3366 = vmatpush.msra.mxu0 %v329
    %3367 = vmatmul.f32.gmra.mxu0 %v3090
    %v3368 = vpop.f32.mrf.mxu0
    %v3369 = vadd.f32 %v3349, %v3368
    %3370 = vdwg.mxu0
    %3371 = vmatpush.msra.mxu0 %v322
    %3372 = vmatpush.msra.mxu0 %v314
    %3373 = vmatpush.msra.mxu0 %v306
    %3374 = vmatpush.msra.mxu0 %v298
    %3375 = vmatpush.msra.mxu0 %v290
    %3376 = vmatpush.msra.mxu0 %v282
    %3377 = vmatpush.msra.mxu0 %v274
    %3378 = vmatpush.msra.mxu0 %v266
    %3379 = vmatpush.msra.mxu0 %v258
    %3380 = vmatpush.msra.mxu0 %v250
    %3381 = vmatpush.msra.mxu0 %v242
    %3382 = vmatpush.msra.mxu0 %v234
    %3383 = vmatpush.msra.mxu0 %v226
    %3384 = vmatpush.msra.mxu0 %v218
    %3385 = vmatpush.msra.mxu0 %v210
    %3386 = vmatpush.msra.mxu0 %v202
    %3387 = vmatmul.f32.gmra.mxu0 %v3089
    %v3388 = vpop.f32.mrf.mxu0
    %v3389 = vadd.f32 0.0, %v3388
    %3390 = vdwg.mxu0
    %3391 = vmatpush.msra.mxu0 %v450
    %3392 = vmatpush.msra.mxu0 %v442
    %3393 = vmatpush.msra.mxu0 %v434
    %3394 = vmatpush.msra.mxu0 %v426
    %3395 = vmatpush.msra.mxu0 %v418
    %3396 = vmatpush.msra.mxu0 %v410
    %3397 = vmatpush.msra.mxu0 %v402
    %3398 = vmatpush.msra.mxu0 %v394
    %3399 = vmatpush.msra.mxu0 %v386
    %3400 = vmatpush.msra.mxu0 %v378
    %3401 = vmatpush.msra.mxu0 %v370
    %3402 = vmatpush.msra.mxu0 %v362
    %3403 = vmatpush.msra.mxu0 %v354
    %3404 = vmatpush.msra.mxu0 %v346
    %3405 = vmatpush.msra.mxu0 %v338
    %3406 = vmatpush.msra.mxu0 %v330
    %3407 = vmatmul.f32.gmra.mxu0 %v3090
    %v3408 = vpop.f32.mrf.mxu0
    %v3409 = vadd.f32 %v3389, %v3408
    %3410 = vdwg.mxu0
    %v3411 = vadd.f32 %v526, %v3129
    %v3412 = vadd.f32 %v558, %v3169
    %v3413 = vadd.f32 %v608, %v3209
    %v3414 = vadd.f32 %v640, %v3249
    %v3415 = vadd.f32 %v690, %v3289
    %v3416 = vadd.f32 %v722, %v3329
    %v3417 = vadd.f32 %v772, %v3369
    %v3418 = vadd.f32 %v804, %v3409
    %v3419 = vxor.u32 %v3411, 2147483648
    %v3420 = vxor.u32 %v3412, 2147483648
    %v3421 = vxor.u32 %v3413, 2147483648
    %v3422 = vxor.u32 %v3414, 2147483648
    %v3423 = vxor.u32 %v3415, 2147483648
    %v3424 = vxor.u32 %v3416, 2147483648
    %v3425 = vmul.f32 %v3419, 1.442695
    %v3426 = vpow.pop %v3425
    %v3427 = vmul.f32 %v3420, 1.442695
    %v3428 = vpow.pop %v3427
    %v3429 = vmul.f32 %v3421, 1.442695
    %v3430 = vpow.pop %v3429
    %v3431 = vmul.f32 %v3422, 1.442695
    %v3432 = vpow.pop %v3431
    %v3433 = vmul.f32 %v3423, 1.442695
    %v3434 = vpow.pop %v3433
    %v3435 = vmul.f32 %v3424, 1.442695
    %v3436 = vpow.pop %v3435
    %v3437 = vadd.f32 %v3426, 1.0
    %v3438 = vadd.f32 %v3428, 1.0
    %v3439 = vadd.f32 %v3430, 1.0
    %v3440 = vadd.f32 %v3432, 1.0
    %v3441 = vadd.f32 %v3434, 1.0
    %v3442 = vadd.f32 %v3436, 1.0
    %v3443 = vrcp.pop %v3437
    %v3444 = vmul.f32 %v3437, %v3443
    %v3445 = vsub.f32 1.0, %v3444
    %v3446 = vmul.f32 %v3443, %v3445
    %v3447 = vadd.f32 %v3443, %v3446
    %vm3448 = vweird.f32 %v3437
    %vm3449 = vweird.f32 %v3443
    %vm3450 = vmor %vm3448, %vm3449
    %v3451 = vsel %vm3450, %v3443, %v3447
    %v3452 = vand.u32 2147483647, %v3437
    %vm3453 = vcmp.eq.f32.partialorder %v3452, 8.507059e+37
    %v3454 = vand.u32 %v3437, 2147483648
    %v3455 = vor.u32 1.1754944e-38, %v3454
    %v3456 = vsel %vm3453, %v3455, %v3451
    %v3457 = vmul.f32 1.0, %v3456
    %v3458 = vrcp.pop %v3438
    %v3459 = vmul.f32 %v3438, %v3458
    %v3460 = vsub.f32 1.0, %v3459
    %v3461 = vmul.f32 %v3458, %v3460
    %v3462 = vadd.f32 %v3458, %v3461
    %vm3463 = vweird.f32 %v3438
    %vm3464 = vweird.f32 %v3458
    %vm3465 = vmor %vm3463, %vm3464
    %v3466 = vsel %vm3465, %v3458, %v3462
    %v3467 = vand.u32 2147483647, %v3438
    %vm3468 = vcmp.eq.f32.partialorder %v3467, 8.507059e+37
    %v3469 = vand.u32 %v3438, 2147483648
    %v3470 = vor.u32 1.1754944e-38, %v3469
    %v3471 = vsel %vm3468, %v3470, %v3466
    %v3472 = vmul.f32 1.0, %v3471
    %v3473 = vrcp.pop %v3439
    %v3474 = vmul.f32 %v3439, %v3473
    %v3475 = vsub.f32 1.0, %v3474
    %v3476 = vmul.f32 %v3473, %v3475
    %v3477 = vadd.f32 %v3473, %v3476
    %vm3478 = vweird.f32 %v3439
    %vm3479 = vweird.f32 %v3473
    %vm3480 = vmor %vm3478, %vm3479
    %v3481 = vsel %vm3480, %v3473, %v3477
    %v3482 = vand.u32 2147483647, %v3439
    %vm3483 = vcmp.eq.f32.partialorder %v3482, 8.507059e+37
    %v3484 = vand.u32 %v3439, 2147483648
    %v3485 = vor.u32 1.1754944e-38, %v3484
    %v3486 = vsel %vm3483, %v3485, %v3481
    %v3487 = vmul.f32 1.0, %v3486
    %v3488 = vrcp.pop %v3440
    %v3489 = vmul.f32 %v3440, %v3488
    %v3490 = vsub.f32 1.0, %v3489
    %v3491 = vmul.f32 %v3488, %v3490
    %v3492 = vadd.f32 %v3488, %v3491
    %vm3493 = vweird.f32 %v3440
    %vm3494 = vweird.f32 %v3488
    %vm3495 = vmor %vm3493, %vm3494
    %v3496 = vsel %vm3495, %v3488, %v3492
    %v3497 = vand.u32 2147483647, %v3440
    %vm3498 = vcmp.eq.f32.partialorder %v3497, 8.507059e+37
    %v3499 = vand.u32 %v3440, 2147483648
    %v3500 = vor.u32 1.1754944e-38, %v3499
    %v3501 = vsel %vm3498, %v3500, %v3496
    %v3502 = vmul.f32 1.0, %v3501
    %v3503 = vrcp.pop %v3441
    %v3504 = vmul.f32 %v3441, %v3503
    %v3505 = vsub.f32 1.0, %v3504
    %v3506 = vmul.f32 %v3503, %v3505
    %v3507 = vadd.f32 %v3503, %v3506
    %vm3508 = vweird.f32 %v3441
    %vm3509 = vweird.f32 %v3503
    %vm3510 = vmor %vm3508, %vm3509
    %v3511 = vsel %vm3510, %v3503, %v3507
    %v3512 = vand.u32 2147483647, %v3441
    %vm3513 = vcmp.eq.f32.partialorder %v3512, 8.507059e+37
    %v3514 = vand.u32 %v3441, 2147483648
    %v3515 = vor.u32 1.1754944e-38, %v3514
    %v3516 = vsel %vm3513, %v3515, %v3511
    %v3517 = vmul.f32 1.0, %v3516
    %v3518 = vrcp.pop %v3442
    %v3519 = vmul.f32 %v3442, %v3518
    %v3520 = vsub.f32 1.0, %v3519
    %v3521 = vmul.f32 %v3518, %v3520
    %v3522 = vadd.f32 %v3518, %v3521
    %vm3523 = vweird.f32 %v3442
    %vm3524 = vweird.f32 %v3518
    %vm3525 = vmor %vm3523, %vm3524
    %v3526 = vsel %vm3525, %v3518, %v3522
    %v3527 = vand.u32 2147483647, %v3442
    %vm3528 = vcmp.eq.f32.partialorder %v3527, 8.507059e+37
    %v3529 = vand.u32 %v3442, 2147483648
    %v3530 = vor.u32 1.1754944e-38, %v3529
    %v3531 = vsel %vm3528, %v3530, %v3526
    %v3532 = vmul.f32 1.0, %v3531
    %v3533 = vtanh.pop %v3417
    %v3534 = vtanh.pop %v3418
    %v3535 = vmul.f32 %v3487, %v3085
    %v3536 = vmul.f32 %v3502, %v3086
    %v3537 = vmul.f32 %v3457, %v3533
    %v3538 = vmul.f32 %v3472, %v3534
    %v3539 = vadd.f32 %v3535, %v3537
    %v3540 = vadd.f32 %v3536, %v3538
    %v3541 = vtanh.pop %v3539
    %v3542 = vtanh.pop %v3540
    %v3543 = vmul.f32 %v3517, %v3541
    %v3544 = vmul.f32 %v3532, %v3542
    %3545 = vmatpush.msra.mxu0 %v315
    %3546 = vmatpush.msra.mxu0 %v307
    %3547 = vmatpush.msra.mxu0 %v299
    %3548 = vmatpush.msra.mxu0 %v291
    %3549 = vmatpush.msra.mxu0 %v283
    %3550 = vmatpush.msra.mxu0 %v275
    %3551 = vmatpush.msra.mxu0 %v267
    %3552 = vmatpush.msra.mxu0 %v259
    %3553 = vmatpush.msra.mxu0 %v251
    %3554 = vmatpush.msra.mxu0 %v243
    %3555 = vmatpush.msra.mxu0 %v235
    %3556 = vmatpush.msra.mxu0 %v227
    %3557 = vmatpush.msra.mxu0 %v219
    %3558 = vmatpush.msra.mxu0 %v211
    %3559 = vmatpush.msra.mxu0 %v203
    %3560 = vmatpush.msra.mxu0 %v195
    %3561 = vmatmul.f32.gmra.mxu0 %v3543
    %v3562 = vpop.f32.mrf.mxu0
    %v3563 = vadd.f32 0.0, %v3562
    %3564 = vdwg.mxu0
    %3565 = vmatpush.msra.mxu0 %v443
    %3566 = vmatpush.msra.mxu0 %v435
    %3567 = vmatpush.msra.mxu0 %v427
    %3568 = vmatpush.msra.mxu0 %v419
    %3569 = vmatpush.msra.mxu0 %v411
    %3570 = vmatpush.msra.mxu0 %v403
    %3571 = vmatpush.msra.mxu0 %v395
    %3572 = vmatpush.msra.mxu0 %v387
    %3573 = vmatpush.msra.mxu0 %v379
    %3574 = vmatpush.msra.mxu0 %v371
    %3575 = vmatpush.msra.mxu0 %v363
    %3576 = vmatpush.msra.mxu0 %v355
    %3577 = vmatpush.msra.mxu0 %v347
    %3578 = vmatpush.msra.mxu0 %v339
    %3579 = vmatpush.msra.mxu0 %v331
    %3580 = vmatpush.msra.mxu0 %v323
    %3581 = vmatmul.f32.gmra.mxu0 %v3544
    %v3582 = vpop.f32.mrf.mxu0
    %v3583 = vadd.f32 %v3563, %v3582
    %3584 = vdwg.mxu0
    %3585 = vmatpush.msra.mxu0 %v316
    %3586 = vmatpush.msra.mxu0 %v308
    %3587 = vmatpush.msra.mxu0 %v300
    %3588 = vmatpush.msra.mxu0 %v292
    %3589 = vmatpush.msra.mxu0 %v284
    %3590 = vmatpush.msra.mxu0 %v276
    %3591 = vmatpush.msra.mxu0 %v268
    %3592 = vmatpush.msra.mxu0 %v260
    %3593 = vmatpush.msra.mxu0 %v252
    %3594 = vmatpush.msra.mxu0 %v244
    %3595 = vmatpush.msra.mxu0 %v236
    %3596 = vmatpush.msra.mxu0 %v228
    %3597 = vmatpush.msra.mxu0 %v220
    %3598 = vmatpush.msra.mxu0 %v212
    %3599 = vmatpush.msra.mxu0 %v204
    %3600 = vmatpush.msra.mxu0 %v196
    %3601 = vmatmul.f32.gmra.mxu0 %v3543
    %v3602 = vpop.f32.mrf.mxu0
    %v3603 = vadd.f32 0.0, %v3602
    %3604 = vdwg.mxu0
    %3605 = vmatpush.msra.mxu0 %v444
    %3606 = vmatpush.msra.mxu0 %v436
    %3607 = vmatpush.msra.mxu0 %v428
    %3608 = vmatpush.msra.mxu0 %v420
    %3609 = vmatpush.msra.mxu0 %v412
    %3610 = vmatpush.msra.mxu0 %v404
    %3611 = vmatpush.msra.mxu0 %v396
    %3612 = vmatpush.msra.mxu0 %v388
    %3613 = vmatpush.msra.mxu0 %v380
    %3614 = vmatpush.msra.mxu0 %v372
    %3615 = vmatpush.msra.mxu0 %v364
    %3616 = vmatpush.msra.mxu0 %v356
    %3617 = vmatpush.msra.mxu0 %v348
    %3618 = vmatpush.msra.mxu0 %v340
    %3619 = vmatpush.msra.mxu0 %v332
    %3620 = vmatpush.msra.mxu0 %v324
    %3621 = vmatmul.f32.gmra.mxu0 %v3544
    %v3622 = vpop.f32.mrf.mxu0
    %v3623 = vadd.f32 %v3603, %v3622
    %3624 = vdwg.mxu0
    %3625 = vmatpush.msra.mxu0 %v317
    %3626 = vmatpush.msra.mxu0 %v309
    %3627 = vmatpush.msra.mxu0 %v301
    %3628 = vmatpush.msra.mxu0 %v293
    %3629 = vmatpush.msra.mxu0 %v285
    %3630 = vmatpush.msra.mxu0 %v277
    %3631 = vmatpush.msra.mxu0 %v269
    %3632 = vmatpush.msra.mxu0 %v261
    %3633 = vmatpush.msra.mxu0 %v253
    %3634 = vmatpush.msra.mxu0 %v245
    %3635 = vmatpush.msra.mxu0 %v237
    %3636 = vmatpush.msra.mxu0 %v229
    %3637 = vmatpush.msra.mxu0 %v221
    %3638 = vmatpush.msra.mxu0 %v213
    %3639 = vmatpush.msra.mxu0 %v205
    %3640 = vmatpush.msra.mxu0 %v197
    %3641 = vmatmul.f32.gmra.mxu0 %v3543
    %v3642 = vpop.f32.mrf.mxu0
    %v3643 = vadd.f32 0.0, %v3642
    %3644 = vdwg.mxu0
    %3645 = vmatpush.msra.mxu0 %v445
    %3646 = vmatpush.msra.mxu0 %v437
    %3647 = vmatpush.msra.mxu0 %v429
    %3648 = vmatpush.msra.mxu0 %v421
    %3649 = vmatpush.msra.mxu0 %v413
    %3650 = vmatpush.msra.mxu0 %v405
    %3651 = vmatpush.msra.mxu0 %v397
    %3652 = vmatpush.msra.mxu0 %v389
    %3653 = vmatpush.msra.mxu0 %v381
    %3654 = vmatpush.msra.mxu0 %v373
    %3655 = vmatpush.msra.mxu0 %v365
    %3656 = vmatpush.msra.mxu0 %v357
    %3657 = vmatpush.msra.mxu0 %v349
    %3658 = vmatpush.msra.mxu0 %v341
    %3659 = vmatpush.msra.mxu0 %v333
    %3660 = vmatpush.msra.mxu0 %v325
    %3661 = vmatmul.f32.gmra.mxu0 %v3544
    %v3662 = vpop.f32.mrf.mxu0
    %v3663 = vadd.f32 %v3643, %v3662
    %3664 = vdwg.mxu0
    %3665 = vmatpush.msra.mxu0 %v318
    %3666 = vmatpush.msra.mxu0 %v310
    %3667 = vmatpush.msra.mxu0 %v302
    %3668 = vmatpush.msra.mxu0 %v294
    %3669 = vmatpush.msra.mxu0 %v286
    %3670 = vmatpush.msra.mxu0 %v278
    %3671 = vmatpush.msra.mxu0 %v270
    %3672 = vmatpush.msra.mxu0 %v262
    %3673 = vmatpush.msra.mxu0 %v254
    %3674 = vmatpush.msra.mxu0 %v246
    %3675 = vmatpush.msra.mxu0 %v238
    %3676 = vmatpush.msra.mxu0 %v230
    %3677 = vmatpush.msra.mxu0 %v222
    %3678 = vmatpush.msra.mxu0 %v214
    %3679 = vmatpush.msra.mxu0 %v206
    %3680 = vmatpush.msra.mxu0 %v198
    %3681 = vmatmul.f32.gmra.mxu0 %v3543
    %v3682 = vpop.f32.mrf.mxu0
    %v3683 = vadd.f32 0.0, %v3682
    %3684 = vdwg.mxu0
    %3685 = vmatpush.msra.mxu0 %v446
    %3686 = vmatpush.msra.mxu0 %v438
    %3687 = vmatpush.msra.mxu0 %v430
    %3688 = vmatpush.msra.mxu0 %v422
    %3689 = vmatpush.msra.mxu0 %v414
    %3690 = vmatpush.msra.mxu0 %v406
    %3691 = vmatpush.msra.mxu0 %v398
    %3692 = vmatpush.msra.mxu0 %v390
    %3693 = vmatpush.msra.mxu0 %v382
    %3694 = vmatpush.msra.mxu0 %v374
    %3695 = vmatpush.msra.mxu0 %v366
    %3696 = vmatpush.msra.mxu0 %v358
    %3697 = vmatpush.msra.mxu0 %v350
    %3698 = vmatpush.msra.mxu0 %v342
    %3699 = vmatpush.msra.mxu0 %v334
    %3700 = vmatpush.msra.mxu0 %v326
    %3701 = vmatmul.f32.gmra.mxu0 %v3544
    %v3702 = vpop.f32.mrf.mxu0
    %v3703 = vadd.f32 %v3683, %v3702
    %3704 = vdwg.mxu0
    %3705 = vmatpush.msra.mxu0 %v319
    %3706 = vmatpush.msra.mxu0 %v311
    %3707 = vmatpush.msra.mxu0 %v303
    %3708 = vmatpush.msra.mxu0 %v295
    %3709 = vmatpush.msra.mxu0 %v287
    %3710 = vmatpush.msra.mxu0 %v279
    %3711 = vmatpush.msra.mxu0 %v271
    %3712 = vmatpush.msra.mxu0 %v263
    %3713 = vmatpush.msra.mxu0 %v255
    %3714 = vmatpush.msra.mxu0 %v247
    %3715 = vmatpush.msra.mxu0 %v239
    %3716 = vmatpush.msra.mxu0 %v231
    %3717 = vmatpush.msra.mxu0 %v223
    %3718 = vmatpush.msra.mxu0 %v215
    %3719 = vmatpush.msra.mxu0 %v207
    %3720 = vmatpush.msra.mxu0 %v199
    %3721 = vmatmul.f32.gmra.mxu0 %v3543
    %v3722 = vpop.f32.mrf.mxu0
    %v3723 = vadd.f32 0.0, %v3722
    %3724 = vdwg.mxu0
    %3725 = vmatpush.msra.mxu0 %v447
    %3726 = vmatpush.msra.mxu0 %v439
    %3727 = vmatpush.msra.mxu0 %v431
    %3728 = vmatpush.msra.mxu0 %v423
    %3729 = vmatpush.msra.mxu0 %v415
    %3730 = vmatpush.msra.mxu0 %v407
    %3731 = vmatpush.msra.mxu0 %v399
    %3732 = vmatpush.msra.mxu0 %v391
    %3733 = vmatpush.msra.mxu0 %v383
    %3734 = vmatpush.msra.mxu0 %v375
    %3735 = vmatpush.msra.mxu0 %v367
    %3736 = vmatpush.msra.mxu0 %v359
    %3737 = vmatpush.msra.mxu0 %v351
    %3738 = vmatpush.msra.mxu0 %v343
    %3739 = vmatpush.msra.mxu0 %v335
    %3740 = vmatpush.msra.mxu0 %v327
    %3741 = vmatmul.f32.gmra.mxu0 %v3544
    %v3742 = vpop.f32.mrf.mxu0
    %v3743 = vadd.f32 %v3723, %v3742
    %3744 = vdwg.mxu0
    %3745 = vmatpush.msra.mxu0 %v320
    %3746 = vmatpush.msra.mxu0 %v312
    %3747 = vmatpush.msra.mxu0 %v304
    %3748 = vmatpush.msra.mxu0 %v296
    %3749 = vmatpush.msra.mxu0 %v288
    %3750 = vmatpush.msra.mxu0 %v280
    %3751 = vmatpush.msra.mxu0 %v272
    %3752 = vmatpush.msra.mxu0 %v264
    %3753 = vmatpush.msra.mxu0 %v256
    %3754 = vmatpush.msra.mxu0 %v248
    %3755 = vmatpush.msra.mxu0 %v240
    %3756 = vmatpush.msra.mxu0 %v232
    %3757 = vmatpush.msra.mxu0 %v224
    %3758 = vmatpush.msra.mxu0 %v216
    %3759 = vmatpush.msra.mxu0 %v208
    %3760 = vmatpush.msra.mxu0 %v200
    %3761 = vmatmul.f32.gmra.mxu0 %v3543
    %v3762 = vpop.f32.mrf.mxu0
    %v3763 = vadd.f32 0.0, %v3762
    %3764 = vdwg.mxu0
    %3765 = vmatpush.msra.mxu0 %v448
    %3766 = vmatpush.msra.mxu0 %v440
    %3767 = vmatpush.msra.mxu0 %v432
    %3768 = vmatpush.msra.mxu0 %v424
    %3769 = vmatpush.msra.mxu0 %v416
    %3770 = vmatpush.msra.mxu0 %v408
    %3771 = vmatpush.msra.mxu0 %v400
    %3772 = vmatpush.msra.mxu0 %v392
    %3773 = vmatpush.msra.mxu0 %v384
    %3774 = vmatpush.msra.mxu0 %v376
    %3775 = vmatpush.msra.mxu0 %v368
    %3776 = vmatpush.msra.mxu0 %v360
    %3777 = vmatpush.msra.mxu0 %v352
    %3778 = vmatpush.msra.mxu0 %v344
    %3779 = vmatpush.msra.mxu0 %v336
    %3780 = vmatpush.msra.mxu0 %v328
    %3781 = vmatmul.f32.gmra.mxu0 %v3544
    %v3782 = vpop.f32.mrf.mxu0
    %v3783 = vadd.f32 %v3763, %v3782
    %3784 = vdwg.mxu0
    %3785 = vmatpush.msra.mxu0 %v321
    %3786 = vmatpush.msra.mxu0 %v313
    %3787 = vmatpush.msra.mxu0 %v305
    %3788 = vmatpush.msra.mxu0 %v297
    %3789 = vmatpush.msra.mxu0 %v289
    %3790 = vmatpush.msra.mxu0 %v281
    %3791 = vmatpush.msra.mxu0 %v273
    %3792 = vmatpush.msra.mxu0 %v265
    %3793 = vmatpush.msra.mxu0 %v257
    %3794 = vmatpush.msra.mxu0 %v249
    %3795 = vmatpush.msra.mxu0 %v241
    %3796 = vmatpush.msra.mxu0 %v233
    %3797 = vmatpush.msra.mxu0 %v225
    %3798 = vmatpush.msra.mxu0 %v217
    %3799 = vmatpush.msra.mxu0 %v209
    %3800 = vmatpush.msra.mxu0 %v201
    %3801 = vmatmul.f32.gmra.mxu0 %v3543
    %v3802 = vpop.f32.mrf.mxu0
    %v3803 = vadd.f32 0.0, %v3802
    %3804 = vdwg.mxu0
    %3805 = vmatpush.msra.mxu0 %v449
    %3806 = vmatpush.msra.mxu0 %v441
    %3807 = vmatpush.msra.mxu0 %v433
    %3808 = vmatpush.msra.mxu0 %v425
    %3809 = vmatpush.msra.mxu0 %v417
    %3810 = vmatpush.msra.mxu0 %v409
    %3811 = vmatpush.msra.mxu0 %v401
    %3812 = vmatpush.msra.mxu0 %v393
    %3813 = vmatpush.msra.mxu0 %v385
    %3814 = vmatpush.msra.mxu0 %v377
    %3815 = vmatpush.msra.mxu0 %v369
    %3816 = vmatpush.msra.mxu0 %v361
    %3817 = vmatpush.msra.mxu0 %v353
    %3818 = vmatpush.msra.mxu0 %v345
    %3819 = vmatpush.msra.mxu0 %v337
    %3820 = vmatpush.msra.mxu0 %v329
    %3821 = vmatmul.f32.gmra.mxu0 %v3544
    %v3822 = vpop.f32.mrf.mxu0
    %v3823 = vadd.f32 %v3803, %v3822
    %3824 = vdwg.mxu0
    %3825 = vmatpush.msra.mxu0 %v322
    %3826 = vmatpush.msra.mxu0 %v314
    %3827 = vmatpush.msra.mxu0 %v306
    %3828 = vmatpush.msra.mxu0 %v298
    %3829 = vmatpush.msra.mxu0 %v290
    %3830 = vmatpush.msra.mxu0 %v282
    %3831 = vmatpush.msra.mxu0 %v274
    %3832 = vmatpush.msra.mxu0 %v266
    %3833 = vmatpush.msra.mxu0 %v258
    %3834 = vmatpush.msra.mxu0 %v250
    %3835 = vmatpush.msra.mxu0 %v242
    %3836 = vmatpush.msra.mxu0 %v234
    %3837 = vmatpush.msra.mxu0 %v226
    %3838 = vmatpush.msra.mxu0 %v218
    %3839 = vmatpush.msra.mxu0 %v210
    %3840 = vmatpush.msra.mxu0 %v202
    %3841 = vmatmul.f32.gmra.mxu0 %v3543
    %v3842 = vpop.f32.mrf.mxu0
    %v3843 = vadd.f32 0.0, %v3842
    %3844 = vdwg.mxu0
    %3845 = vmatpush.msra.mxu0 %v450
    %3846 = vmatpush.msra.mxu0 %v442
    %3847 = vmatpush.msra.mxu0 %v434
    %3848 = vmatpush.msra.mxu0 %v426
    %3849 = vmatpush.msra.mxu0 %v418
    %3850 = vmatpush.msra.mxu0 %v410
    %3851 = vmatpush.msra.mxu0 %v402
    %3852 = vmatpush.msra.mxu0 %v394
    %3853 = vmatpush.msra.mxu0 %v386
    %3854 = vmatpush.msra.mxu0 %v378
    %3855 = vmatpush.msra.mxu0 %v370
    %3856 = vmatpush.msra.mxu0 %v362
    %3857 = vmatpush.msra.mxu0 %v354
    %3858 = vmatpush.msra.mxu0 %v346
    %3859 = vmatpush.msra.mxu0 %v338
    %3860 = vmatpush.msra.mxu0 %v330
    %3861 = vmatmul.f32.gmra.mxu0 %v3544
    %v3862 = vpop.f32.mrf.mxu0
    %v3863 = vadd.f32 %v3843, %v3862
    %3864 = vdwg.mxu0
    %v3865 = vadd.f32 %v529, %v3583
    %v3866 = vadd.f32 %v555, %v3623
    %v3867 = vadd.f32 %v611, %v3663
    %v3868 = vadd.f32 %v637, %v3703
    %v3869 = vadd.f32 %v693, %v3743
    %v3870 = vadd.f32 %v719, %v3783
    %v3871 = vadd.f32 %v775, %v3823
    %v3872 = vadd.f32 %v801, %v3863
    %v3873 = vxor.u32 %v3865, 2147483648
    %v3874 = vxor.u32 %v3866, 2147483648
    %v3875 = vxor.u32 %v3867, 2147483648
    %v3876 = vxor.u32 %v3868, 2147483648
    %v3877 = vxor.u32 %v3869, 2147483648
    %v3878 = vxor.u32 %v3870, 2147483648
    %v3879 = vmul.f32 %v3873, 1.442695
    %v3880 = vpow.pop %v3879
    %v3881 = vmul.f32 %v3874, 1.442695
    %v3882 = vpow.pop %v3881
    %v3883 = vmul.f32 %v3875, 1.442695
    %v3884 = vpow.pop %v3883
    %v3885 = vmul.f32 %v3876, 1.442695
    %v3886 = vpow.pop %v3885
    %v3887 = vmul.f32 %v3877, 1.442695
    %v3888 = vpow.pop %v3887
    %v3889 = vmul.f32 %v3878, 1.442695
    %v3890 = vpow.pop %v3889
    %v3891 = vadd.f32 %v3880, 1.0
    %v3892 = vadd.f32 %v3882, 1.0
    %v3893 = vadd.f32 %v3884, 1.0
    %v3894 = vadd.f32 %v3886, 1.0
    %v3895 = vadd.f32 %v3888, 1.0
    %v3896 = vadd.f32 %v3890, 1.0
    %v3897 = vrcp.pop %v3891
    %v3898 = vmul.f32 %v3891, %v3897
    %v3899 = vsub.f32 1.0, %v3898
    %v3900 = vmul.f32 %v3897, %v3899
    %v3901 = vadd.f32 %v3897, %v3900
    %vm3902 = vweird.f32 %v3891
    %vm3903 = vweird.f32 %v3897
    %vm3904 = vmor %vm3902, %vm3903
    %v3905 = vsel %vm3904, %v3897, %v3901
    %v3906 = vand.u32 2147483647, %v3891
    %vm3907 = vcmp.eq.f32.partialorder %v3906, 8.507059e+37
    %v3908 = vand.u32 %v3891, 2147483648
    %v3909 = vor.u32 1.1754944e-38, %v3908
    %v3910 = vsel %vm3907, %v3909, %v3905
    %v3911 = vmul.f32 1.0, %v3910
    %v3912 = vrcp.pop %v3892
    %v3913 = vmul.f32 %v3892, %v3912
    %v3914 = vsub.f32 1.0, %v3913
    %v3915 = vmul.f32 %v3912, %v3914
    %v3916 = vadd.f32 %v3912, %v3915
    %vm3917 = vweird.f32 %v3892
    %vm3918 = vweird.f32 %v3912
    %vm3919 = vmor %vm3917, %vm3918
    %v3920 = vsel %vm3919, %v3912, %v3916
    %v3921 = vand.u32 2147483647, %v3892
    %vm3922 = vcmp.eq.f32.partialorder %v3921, 8.507059e+37
    %v3923 = vand.u32 %v3892, 2147483648
    %v3924 = vor.u32 1.1754944e-38, %v3923
    %v3925 = vsel %vm3922, %v3924, %v3920
    %v3926 = vmul.f32 1.0, %v3925
    %v3927 = vrcp.pop %v3893
    %v3928 = vmul.f32 %v3893, %v3927
    %v3929 = vsub.f32 1.0, %v3928
    %v3930 = vmul.f32 %v3927, %v3929
    %v3931 = vadd.f32 %v3927, %v3930
    %vm3932 = vweird.f32 %v3893
    %vm3933 = vweird.f32 %v3927
    %vm3934 = vmor %vm3932, %vm3933
    %v3935 = vsel %vm3934, %v3927, %v3931
    %v3936 = vand.u32 2147483647, %v3893
    %vm3937 = vcmp.eq.f32.partialorder %v3936, 8.507059e+37
    %v3938 = vand.u32 %v3893, 2147483648
    %v3939 = vor.u32 1.1754944e-38, %v3938
    %v3940 = vsel %vm3937, %v3939, %v3935
    %v3941 = vmul.f32 1.0, %v3940
    %v3942 = vrcp.pop %v3894
    %v3943 = vmul.f32 %v3894, %v3942
    %v3944 = vsub.f32 1.0, %v3943
    %v3945 = vmul.f32 %v3942, %v3944
    %v3946 = vadd.f32 %v3942, %v3945
    %vm3947 = vweird.f32 %v3894
    %vm3948 = vweird.f32 %v3942
    %vm3949 = vmor %vm3947, %vm3948
    %v3950 = vsel %vm3949, %v3942, %v3946
    %v3951 = vand.u32 2147483647, %v3894
    %vm3952 = vcmp.eq.f32.partialorder %v3951, 8.507059e+37
    %v3953 = vand.u32 %v3894, 2147483648
    %v3954 = vor.u32 1.1754944e-38, %v3953
    %v3955 = vsel %vm3952, %v3954, %v3950
    %v3956 = vmul.f32 1.0, %v3955
    %v3957 = vrcp.pop %v3895
    %v3958 = vmul.f32 %v3895, %v3957
    %v3959 = vsub.f32 1.0, %v3958
    %v3960 = vmul.f32 %v3957, %v3959
    %v3961 = vadd.f32 %v3957, %v3960
    %vm3962 = vweird.f32 %v3895
    %vm3963 = vweird.f32 %v3957
    %vm3964 = vmor %vm3962, %vm3963
    %v3965 = vsel %vm3964, %v3957, %v3961
    %v3966 = vand.u32 2147483647, %v3895
    %vm3967 = vcmp.eq.f32.partialorder %v3966, 8.507059e+37
    %v3968 = vand.u32 %v3895, 2147483648
    %v3969 = vor.u32 1.1754944e-38, %v3968
    %v3970 = vsel %vm3967, %v3969, %v3965
    %v3971 = vmul.f32 1.0, %v3970
    %v3972 = vrcp.pop %v3896
    %v3973 = vmul.f32 %v3896, %v3972
    %v3974 = vsub.f32 1.0, %v3973
    %v3975 = vmul.f32 %v3972, %v3974
    %v3976 = vadd.f32 %v3972, %v3975
    %vm3977 = vweird.f32 %v3896
    %vm3978 = vweird.f32 %v3972
    %vm3979 = vmor %vm3977, %vm3978
    %v3980 = vsel %vm3979, %v3972, %v3976
    %v3981 = vand.u32 2147483647, %v3896
    %vm3982 = vcmp.eq.f32.partialorder %v3981, 8.507059e+37
    %v3983 = vand.u32 %v3896, 2147483648
    %v3984 = vor.u32 1.1754944e-38, %v3983
    %v3985 = vsel %vm3982, %v3984, %v3980
    %v3986 = vmul.f32 1.0, %v3985
    %v3987 = vtanh.pop %v3871
    %v3988 = vtanh.pop %v3872
    %v3989 = vmul.f32 %v3941, %v3539
    %v3990 = vmul.f32 %v3956, %v3540
    %v3991 = vmul.f32 %v3911, %v3987
    %v3992 = vmul.f32 %v3926, %v3988
    %v3993 = vadd.f32 %v3989, %v3991
    %v3994 = vadd.f32 %v3990, %v3992
    %v3995 = vtanh.pop %v3993
    %v3996 = vtanh.pop %v3994
    %v3997 = vmul.f32 %v3971, %v3995
    %v3998 = vmul.f32 %v3986, %v3996
    %3999 = vmatpush.msra.mxu0 %v315
    %4000 = vmatpush.msra.mxu0 %v307
    %4001 = vmatpush.msra.mxu0 %v299
    %4002 = vmatpush.msra.mxu0 %v291
    %4003 = vmatpush.msra.mxu0 %v283
    %4004 = vmatpush.msra.mxu0 %v275
    %4005 = vmatpush.msra.mxu0 %v267
    %4006 = vmatpush.msra.mxu0 %v259
    %4007 = vmatpush.msra.mxu0 %v251
    %4008 = vmatpush.msra.mxu0 %v243
    %4009 = vmatpush.msra.mxu0 %v235
    %4010 = vmatpush.msra.mxu0 %v227
    %4011 = vmatpush.msra.mxu0 %v219
    %4012 = vmatpush.msra.mxu0 %v211
    %4013 = vmatpush.msra.mxu0 %v203
    %4014 = vmatpush.msra.mxu0 %v195
    %4015 = vmatmul.f32.gmra.mxu0 %v3997
    %v4016 = vpop.f32.mrf.mxu0
    %v4017 = vadd.f32 0.0, %v4016
    %4018 = vdwg.mxu0
    %4019 = vmatpush.msra.mxu0 %v443
    %4020 = vmatpush.msra.mxu0 %v435
    %4021 = vmatpush.msra.mxu0 %v427
    %4022 = vmatpush.msra.mxu0 %v419
    %4023 = vmatpush.msra.mxu0 %v411
    %4024 = vmatpush.msra.mxu0 %v403
    %4025 = vmatpush.msra.mxu0 %v395
    %4026 = vmatpush.msra.mxu0 %v387
    %4027 = vmatpush.msra.mxu0 %v379
    %4028 = vmatpush.msra.mxu0 %v371
    %4029 = vmatpush.msra.mxu0 %v363
    %4030 = vmatpush.msra.mxu0 %v355
    %4031 = vmatpush.msra.mxu0 %v347
    %4032 = vmatpush.msra.mxu0 %v339
    %4033 = vmatpush.msra.mxu0 %v331
    %4034 = vmatpush.msra.mxu0 %v323
    %4035 = vmatmul.f32.gmra.mxu0 %v3998
    %v4036 = vpop.f32.mrf.mxu0
    %v4037 = vadd.f32 %v4017, %v4036
    %4038 = vdwg.mxu0
    %4039 = vmatpush.msra.mxu0 %v316
    %4040 = vmatpush.msra.mxu0 %v308
    %4041 = vmatpush.msra.mxu0 %v300
    %4042 = vmatpush.msra.mxu0 %v292
    %4043 = vmatpush.msra.mxu0 %v284
    %4044 = vmatpush.msra.mxu0 %v276
    %4045 = vmatpush.msra.mxu0 %v268
    %4046 = vmatpush.msra.mxu0 %v260
    %4047 = vmatpush.msra.mxu0 %v252
    %4048 = vmatpush.msra.mxu0 %v244
    %4049 = vmatpush.msra.mxu0 %v236
    %4050 = vmatpush.msra.mxu0 %v228
    %4051 = vmatpush.msra.mxu0 %v220
    %4052 = vmatpush.msra.mxu0 %v212
    %4053 = vmatpush.msra.mxu0 %v204
    %4054 = vmatpush.msra.mxu0 %v196
    %4055 = vmatmul.f32.gmra.mxu0 %v3997
    %v4056 = vpop.f32.mrf.mxu0
    %v4057 = vadd.f32 0.0, %v4056
    %4058 = vdwg.mxu0
    %4059 = vmatpush.msra.mxu0 %v444
    %4060 = vmatpush.msra.mxu0 %v436
    %4061 = vmatpush.msra.mxu0 %v428
    %4062 = vmatpush.msra.mxu0 %v420
    %4063 = vmatpush.msra.mxu0 %v412
    %4064 = vmatpush.msra.mxu0 %v404
    %4065 = vmatpush.msra.mxu0 %v396
    %4066 = vmatpush.msra.mxu0 %v388
    %4067 = vmatpush.msra.mxu0 %v380
    %4068 = vmatpush.msra.mxu0 %v372
    %4069 = vmatpush.msra.mxu0 %v364
    %4070 = vmatpush.msra.mxu0 %v356
    %4071 = vmatpush.msra.mxu0 %v348
    %4072 = vmatpush.msra.mxu0 %v340
    %4073 = vmatpush.msra.mxu0 %v332
    %4074 = vmatpush.msra.mxu0 %v324
    %4075 = vmatmul.f32.gmra.mxu0 %v3998
    %v4076 = vpop.f32.mrf.mxu0
    %v4077 = vadd.f32 %v4057, %v4076
    %4078 = vdwg.mxu0
    %4079 = vmatpush.msra.mxu0 %v317
    %4080 = vmatpush.msra.mxu0 %v309
    %4081 = vmatpush.msra.mxu0 %v301
    %4082 = vmatpush.msra.mxu0 %v293
    %4083 = vmatpush.msra.mxu0 %v285
    %4084 = vmatpush.msra.mxu0 %v277
    %4085 = vmatpush.msra.mxu0 %v269
    %4086 = vmatpush.msra.mxu0 %v261
    %4087 = vmatpush.msra.mxu0 %v253
    %4088 = vmatpush.msra.mxu0 %v245
    %4089 = vmatpush.msra.mxu0 %v237
    %4090 = vmatpush.msra.mxu0 %v229
    %4091 = vmatpush.msra.mxu0 %v221
    %4092 = vmatpush.msra.mxu0 %v213
    %4093 = vmatpush.msra.mxu0 %v205
    %4094 = vmatpush.msra.mxu0 %v197
    %4095 = vmatmul.f32.gmra.mxu0 %v3997
    %v4096 = vpop.f32.mrf.mxu0
    %v4097 = vadd.f32 0.0, %v4096
    %4098 = vdwg.mxu0
    %4099 = vmatpush.msra.mxu0 %v445
    %4100 = vmatpush.msra.mxu0 %v437
    %4101 = vmatpush.msra.mxu0 %v429
    %4102 = vmatpush.msra.mxu0 %v421
    %4103 = vmatpush.msra.mxu0 %v413
    %4104 = vmatpush.msra.mxu0 %v405
    %4105 = vmatpush.msra.mxu0 %v397
    %4106 = vmatpush.msra.mxu0 %v389
    %4107 = vmatpush.msra.mxu0 %v381
    %4108 = vmatpush.msra.mxu0 %v373
    %4109 = vmatpush.msra.mxu0 %v365
    %4110 = vmatpush.msra.mxu0 %v357
    %4111 = vmatpush.msra.mxu0 %v349
    %4112 = vmatpush.msra.mxu0 %v341
    %4113 = vmatpush.msra.mxu0 %v333
    %4114 = vmatpush.msra.mxu0 %v325
    %4115 = vmatmul.f32.gmra.mxu0 %v3998
    %v4116 = vpop.f32.mrf.mxu0
    %v4117 = vadd.f32 %v4097, %v4116
    %4118 = vdwg.mxu0
    %4119 = vmatpush.msra.mxu0 %v318
    %4120 = vmatpush.msra.mxu0 %v310
    %4121 = vmatpush.msra.mxu0 %v302
    %4122 = vmatpush.msra.mxu0 %v294
    %4123 = vmatpush.msra.mxu0 %v286
    %4124 = vmatpush.msra.mxu0 %v278
    %4125 = vmatpush.msra.mxu0 %v270
    %4126 = vmatpush.msra.mxu0 %v262
    %4127 = vmatpush.msra.mxu0 %v254
    %4128 = vmatpush.msra.mxu0 %v246
    %4129 = vmatpush.msra.mxu0 %v238
    %4130 = vmatpush.msra.mxu0 %v230
    %4131 = vmatpush.msra.mxu0 %v222
    %4132 = vmatpush.msra.mxu0 %v214
    %4133 = vmatpush.msra.mxu0 %v206
    %4134 = vmatpush.msra.mxu0 %v198
    %4135 = vmatmul.f32.gmra.mxu0 %v3997
    %v4136 = vpop.f32.mrf.mxu0
    %v4137 = vadd.f32 0.0, %v4136
    %4138 = vdwg.mxu0
    %4139 = vmatpush.msra.mxu0 %v446
    %4140 = vmatpush.msra.mxu0 %v438
    %4141 = vmatpush.msra.mxu0 %v430
    %4142 = vmatpush.msra.mxu0 %v422
    %4143 = vmatpush.msra.mxu0 %v414
    %4144 = vmatpush.msra.mxu0 %v406
    %4145 = vmatpush.msra.mxu0 %v398
    %4146 = vmatpush.msra.mxu0 %v390
    %4147 = vmatpush.msra.mxu0 %v382
    %4148 = vmatpush.msra.mxu0 %v374
    %4149 = vmatpush.msra.mxu0 %v366
    %4150 = vmatpush.msra.mxu0 %v358
    %4151 = vmatpush.msra.mxu0 %v350
    %4152 = vmatpush.msra.mxu0 %v342
    %4153 = vmatpush.msra.mxu0 %v334
    %4154 = vmatpush.msra.mxu0 %v326
    %4155 = vmatmul.f32.gmra.mxu0 %v3998
    %v4156 = vpop.f32.mrf.mxu0
    %v4157 = vadd.f32 %v4137, %v4156
    %4158 = vdwg.mxu0
    %4159 = vmatpush.msra.mxu0 %v319
    %4160 = vmatpush.msra.mxu0 %v311
    %4161 = vmatpush.msra.mxu0 %v303
    %4162 = vmatpush.msra.mxu0 %v295
    %4163 = vmatpush.msra.mxu0 %v287
    %4164 = vmatpush.msra.mxu0 %v279
    %4165 = vmatpush.msra.mxu0 %v271
    %4166 = vmatpush.msra.mxu0 %v263
    %4167 = vmatpush.msra.mxu0 %v255
    %4168 = vmatpush.msra.mxu0 %v247
    %4169 = vmatpush.msra.mxu0 %v239
    %4170 = vmatpush.msra.mxu0 %v231
    %4171 = vmatpush.msra.mxu0 %v223
    %4172 = vmatpush.msra.mxu0 %v215
    %4173 = vmatpush.msra.mxu0 %v207
    %4174 = vmatpush.msra.mxu0 %v199
    %4175 = vmatmul.f32.gmra.mxu0 %v3997
    %v4176 = vpop.f32.mrf.mxu0
    %v4177 = vadd.f32 0.0, %v4176
    %4178 = vdwg.mxu0
    %4179 = vmatpush.msra.mxu0 %v447
    %4180 = vmatpush.msra.mxu0 %v439
    %4181 = vmatpush.msra.mxu0 %v431
    %4182 = vmatpush.msra.mxu0 %v423
    %4183 = vmatpush.msra.mxu0 %v415
    %4184 = vmatpush.msra.mxu0 %v407
    %4185 = vmatpush.msra.mxu0 %v399
    %4186 = vmatpush.msra.mxu0 %v391
    %4187 = vmatpush.msra.mxu0 %v383
    %4188 = vmatpush.msra.mxu0 %v375
    %4189 = vmatpush.msra.mxu0 %v367
    %4190 = vmatpush.msra.mxu0 %v359
    %4191 = vmatpush.msra.mxu0 %v351
    %4192 = vmatpush.msra.mxu0 %v343
    %4193 = vmatpush.msra.mxu0 %v335
    %4194 = vmatpush.msra.mxu0 %v327
    %4195 = vmatmul.f32.gmra.mxu0 %v3998
    %v4196 = vpop.f32.mrf.mxu0
    %v4197 = vadd.f32 %v4177, %v4196
    %4198 = vdwg.mxu0
    %4199 = vmatpush.msra.mxu0 %v320
    %4200 = vmatpush.msra.mxu0 %v312
    %4201 = vmatpush.msra.mxu0 %v304
    %4202 = vmatpush.msra.mxu0 %v296
    %4203 = vmatpush.msra.mxu0 %v288
    %4204 = vmatpush.msra.mxu0 %v280
    %4205 = vmatpush.msra.mxu0 %v272
    %4206 = vmatpush.msra.mxu0 %v264
    %4207 = vmatpush.msra.mxu0 %v256
    %4208 = vmatpush.msra.mxu0 %v248
    %4209 = vmatpush.msra.mxu0 %v240
    %4210 = vmatpush.msra.mxu0 %v232
    %4211 = vmatpush.msra.mxu0 %v224
    %4212 = vmatpush.msra.mxu0 %v216
    %4213 = vmatpush.msra.mxu0 %v208
    %4214 = vmatpush.msra.mxu0 %v200
    %4215 = vmatmul.f32.gmra.mxu0 %v3997
    %v4216 = vpop.f32.mrf.mxu0
    %v4217 = vadd.f32 0.0, %v4216
    %4218 = vdwg.mxu0
    %4219 = vmatpush.msra.mxu0 %v448
    %4220 = vmatpush.msra.mxu0 %v440
    %4221 = vmatpush.msra.mxu0 %v432
    %4222 = vmatpush.msra.mxu0 %v424
    %4223 = vmatpush.msra.mxu0 %v416
    %4224 = vmatpush.msra.mxu0 %v408
    %4225 = vmatpush.msra.mxu0 %v400
    %4226 = vmatpush.msra.mxu0 %v392
    %4227 = vmatpush.msra.mxu0 %v384
    %4228 = vmatpush.msra.mxu0 %v376
    %4229 = vmatpush.msra.mxu0 %v368
    %4230 = vmatpush.msra.mxu0 %v360
    %4231 = vmatpush.msra.mxu0 %v352
    %4232 = vmatpush.msra.mxu0 %v344
    %4233 = vmatpush.msra.mxu0 %v336
    %4234 = vmatpush.msra.mxu0 %v328
    %4235 = vmatmul.f32.gmra.mxu0 %v3998
    %v4236 = vpop.f32.mrf.mxu0
    %v4237 = vadd.f32 %v4217, %v4236
    %4238 = vdwg.mxu0
    %4239 = vmatpush.msra.mxu0 %v321
    %4240 = vmatpush.msra.mxu0 %v313
    %4241 = vmatpush.msra.mxu0 %v305
    %4242 = vmatpush.msra.mxu0 %v297
    %4243 = vmatpush.msra.mxu0 %v289
    %4244 = vmatpush.msra.mxu0 %v281
    %4245 = vmatpush.msra.mxu0 %v273
    %4246 = vmatpush.msra.mxu0 %v265
    %4247 = vmatpush.msra.mxu0 %v257
    %4248 = vmatpush.msra.mxu0 %v249
    %4249 = vmatpush.msra.mxu0 %v241
    %4250 = vmatpush.msra.mxu0 %v233
    %4251 = vmatpush.msra.mxu0 %v225
    %4252 = vmatpush.msra.mxu0 %v217
    %4253 = vmatpush.msra.mxu0 %v209
    %4254 = vmatpush.msra.mxu0 %v201
    %4255 = vmatmul.f32.gmra.mxu0 %v3997
    %v4256 = vpop.f32.mrf.mxu0
    %v4257 = vadd.f32 0.0, %v4256
    %4258 = vdwg.mxu0
    %4259 = vmatpush.msra.mxu0 %v449
    %4260 = vmatpush.msra.mxu0 %v441
    %4261 = vmatpush.msra.mxu0 %v433
    %4262 = vmatpush.msra.mxu0 %v425
    %4263 = vmatpush.msra.mxu0 %v417
    %4264 = vmatpush.msra.mxu0 %v409
    %4265 = vmatpush.msra.mxu0 %v401
    %4266 = vmatpush.msra.mxu0 %v393
    %4267 = vmatpush.msra.mxu0 %v385
    %4268 = vmatpush.msra.mxu0 %v377
    %4269 = vmatpush.msra.mxu0 %v369
    %4270 = vmatpush.msra.mxu0 %v361
    %4271 = vmatpush.msra.mxu0 %v353
    %4272 = vmatpush.msra.mxu0 %v345
    %4273 = vmatpush.msra.mxu0 %v337
    %4274 = vmatpush.msra.mxu0 %v329
    %4275 = vmatmul.f32.gmra.mxu0 %v3998
    %v4276 = vpop.f32.mrf.mxu0
    %v4277 = vadd.f32 %v4257, %v4276
    %4278 = vdwg.mxu0
    %4279 = vmatpush.msra.mxu0 %v322
    %4280 = vmatpush.msra.mxu0 %v314
    %4281 = vmatpush.msra.mxu0 %v306
    %4282 = vmatpush.msra.mxu0 %v298
    %4283 = vmatpush.msra.mxu0 %v290
    %4284 = vmatpush.msra.mxu0 %v282
    %4285 = vmatpush.msra.mxu0 %v274
    %4286 = vmatpush.msra.mxu0 %v266
    %4287 = vmatpush.msra.mxu0 %v258
    %4288 = vmatpush.msra.mxu0 %v250
    %4289 = vmatpush.msra.mxu0 %v242
    %4290 = vmatpush.msra.mxu0 %v234
    %4291 = vmatpush.msra.mxu0 %v226
    %4292 = vmatpush.msra.mxu0 %v218
    %4293 = vmatpush.msra.mxu0 %v210
    %4294 = vmatpush.msra.mxu0 %v202
    %4295 = vmatmul.f32.gmra.mxu0 %v3997
    %v4296 = vpop.f32.mrf.mxu0
    %v4297 = vadd.f32 0.0, %v4296
    %4298 = vdwg.mxu0
    %4299 = vmatpush.msra.mxu0 %v450
    %4300 = vmatpush.msra.mxu0 %v442
    %4301 = vmatpush.msra.mxu0 %v434
    %4302 = vmatpush.msra.mxu0 %v426
    %4303 = vmatpush.msra.mxu0 %v418
    %4304 = vmatpush.msra.mxu0 %v410
    %4305 = vmatpush.msra.mxu0 %v402
    %4306 = vmatpush.msra.mxu0 %v394
    %4307 = vmatpush.msra.mxu0 %v386
    %4308 = vmatpush.msra.mxu0 %v378
    %4309 = vmatpush.msra.mxu0 %v370
    %4310 = vmatpush.msra.mxu0 %v362
    %4311 = vmatpush.msra.mxu0 %v354
    %4312 = vmatpush.msra.mxu0 %v346
    %4313 = vmatpush.msra.mxu0 %v338
    %4314 = vmatpush.msra.mxu0 %v330
    %4315 = vmatmul.f32.gmra.mxu0 %v3998
    %v4316 = vpop.f32.mrf.mxu0
    %v4317 = vadd.f32 %v4297, %v4316
    %4318 = vdwg.mxu0
    %v4319 = vadd.f32 %v532, %v4037
    %v4320 = vadd.f32 %v552, %v4077
    %v4321 = vadd.f32 %v614, %v4117
    %v4322 = vadd.f32 %v634, %v4157
    %v4323 = vadd.f32 %v696, %v4197
    %v4324 = vadd.f32 %v716, %v4237
    %v4325 = vadd.f32 %v778, %v4277
    %v4326 = vadd.f32 %v798, %v4317
    %v4327 = vxor.u32 %v4319, 2147483648
    %v4328 = vxor.u32 %v4320, 2147483648
    %v4329 = vxor.u32 %v4321, 2147483648
    %v4330 = vxor.u32 %v4322, 2147483648
    %v4331 = vxor.u32 %v4323, 2147483648
    %v4332 = vxor.u32 %v4324, 2147483648
    %v4333 = vmul.f32 %v4327, 1.442695
    %v4334 = vpow.pop %v4333
    %v4335 = vmul.f32 %v4328, 1.442695
    %v4336 = vpow.pop %v4335
    %v4337 = vmul.f32 %v4329, 1.442695
    %v4338 = vpow.pop %v4337
    %v4339 = vmul.f32 %v4330, 1.442695
    %v4340 = vpow.pop %v4339
    %v4341 = vmul.f32 %v4331, 1.442695
    %v4342 = vpow.pop %v4341
    %v4343 = vmul.f32 %v4332, 1.442695
    %v4344 = vpow.pop %v4343
    %v4345 = vadd.f32 %v4334, 1.0
    %v4346 = vadd.f32 %v4336, 1.0
    %v4347 = vadd.f32 %v4338, 1.0
    %v4348 = vadd.f32 %v4340, 1.0
    %v4349 = vadd.f32 %v4342, 1.0
    %v4350 = vadd.f32 %v4344, 1.0
    %v4351 = vrcp.pop %v4345
    %v4352 = vmul.f32 %v4345, %v4351
    %v4353 = vsub.f32 1.0, %v4352
    %v4354 = vmul.f32 %v4351, %v4353
    %v4355 = vadd.f32 %v4351, %v4354
    %vm4356 = vweird.f32 %v4345
    %vm4357 = vweird.f32 %v4351
    %vm4358 = vmor %vm4356, %vm4357
    %v4359 = vsel %vm4358, %v4351, %v4355
    %v4360 = vand.u32 2147483647, %v4345
    %vm4361 = vcmp.eq.f32.partialorder %v4360, 8.507059e+37
    %v4362 = vand.u32 %v4345, 2147483648
    %v4363 = vor.u32 1.1754944e-38, %v4362
    %v4364 = vsel %vm4361, %v4363, %v4359
    %v4365 = vmul.f32 1.0, %v4364
    %v4366 = vrcp.pop %v4346
    %v4367 = vmul.f32 %v4346, %v4366
    %v4368 = vsub.f32 1.0, %v4367
    %v4369 = vmul.f32 %v4366, %v4368
    %v4370 = vadd.f32 %v4366, %v4369
    %vm4371 = vweird.f32 %v4346
    %vm4372 = vweird.f32 %v4366
    %vm4373 = vmor %vm4371, %vm4372
    %v4374 = vsel %vm4373, %v4366, %v4370
    %v4375 = vand.u32 2147483647, %v4346
    %vm4376 = vcmp.eq.f32.partialorder %v4375, 8.507059e+37
    %v4377 = vand.u32 %v4346, 2147483648
    %v4378 = vor.u32 1.1754944e-38, %v4377
    %v4379 = vsel %vm4376, %v4378, %v4374
    %v4380 = vmul.f32 1.0, %v4379
    %v4381 = vrcp.pop %v4347
    %v4382 = vmul.f32 %v4347, %v4381
    %v4383 = vsub.f32 1.0, %v4382
    %v4384 = vmul.f32 %v4381, %v4383
    %v4385 = vadd.f32 %v4381, %v4384
    %vm4386 = vweird.f32 %v4347
    %vm4387 = vweird.f32 %v4381
    %vm4388 = vmor %vm4386, %vm4387
    %v4389 = vsel %vm4388, %v4381, %v4385
    %v4390 = vand.u32 2147483647, %v4347
    %vm4391 = vcmp.eq.f32.partialorder %v4390, 8.507059e+37
    %v4392 = vand.u32 %v4347, 2147483648
    %v4393 = vor.u32 1.1754944e-38, %v4392
    %v4394 = vsel %vm4391, %v4393, %v4389
    %v4395 = vmul.f32 1.0, %v4394
    %v4396 = vrcp.pop %v4348
    %v4397 = vmul.f32 %v4348, %v4396
    %v4398 = vsub.f32 1.0, %v4397
    %v4399 = vmul.f32 %v4396, %v4398
    %v4400 = vadd.f32 %v4396, %v4399
    %vm4401 = vweird.f32 %v4348
    %vm4402 = vweird.f32 %v4396
    %vm4403 = vmor %vm4401, %vm4402
    %v4404 = vsel %vm4403, %v4396, %v4400
    %v4405 = vand.u32 2147483647, %v4348
    %vm4406 = vcmp.eq.f32.partialorder %v4405, 8.507059e+37
    %v4407 = vand.u32 %v4348, 2147483648
    %v4408 = vor.u32 1.1754944e-38, %v4407
    %v4409 = vsel %vm4406, %v4408, %v4404
    %v4410 = vmul.f32 1.0, %v4409
    %v4411 = vrcp.pop %v4349
    %v4412 = vmul.f32 %v4349, %v4411
    %v4413 = vsub.f32 1.0, %v4412
    %v4414 = vmul.f32 %v4411, %v4413
    %v4415 = vadd.f32 %v4411, %v4414
    %vm4416 = vweird.f32 %v4349
    %vm4417 = vweird.f32 %v4411
    %vm4418 = vmor %vm4416, %vm4417
    %v4419 = vsel %vm4418, %v4411, %v4415
    %v4420 = vand.u32 2147483647, %v4349
    %vm4421 = vcmp.eq.f32.partialorder %v4420, 8.507059e+37
    %v4422 = vand.u32 %v4349, 2147483648
    %v4423 = vor.u32 1.1754944e-38, %v4422
    %v4424 = vsel %vm4421, %v4423, %v4419
    %v4425 = vmul.f32 1.0, %v4424
    %v4426 = vrcp.pop %v4350
    %v4427 = vmul.f32 %v4350, %v4426
    %v4428 = vsub.f32 1.0, %v4427
    %v4429 = vmul.f32 %v4426, %v4428
    %v4430 = vadd.f32 %v4426, %v4429
    %vm4431 = vweird.f32 %v4350
    %vm4432 = vweird.f32 %v4426
    %vm4433 = vmor %vm4431, %vm4432
    %v4434 = vsel %vm4433, %v4426, %v4430
    %v4435 = vand.u32 2147483647, %v4350
    %vm4436 = vcmp.eq.f32.partialorder %v4435, 8.507059e+37
    %v4437 = vand.u32 %v4350, 2147483648
    %v4438 = vor.u32 1.1754944e-38, %v4437
    %v4439 = vsel %vm4436, %v4438, %v4434
    %v4440 = vmul.f32 1.0, %v4439
    %v4441 = vtanh.pop %v4325
    %v4442 = vtanh.pop %v4326
    %v4443 = vmul.f32 %v4395, %v3993
    %v4444 = vmul.f32 %v4410, %v3994
    %v4445 = vmul.f32 %v4365, %v4441
    %v4446 = vmul.f32 %v4380, %v4442
    %v4447 = vadd.f32 %v4443, %v4445
    %v4448 = vadd.f32 %v4444, %v4446
    %v4449 = vtanh.pop %v4447
    %v4450 = vtanh.pop %v4448
    %v4451 = vmul.f32 %v4425, %v4449
    %v4452 = vmul.f32 %v4440, %v4450
    %v4453 = vld [vmem:[#allocation7] sm:$0xff]
    %v4454 = vld [vmem:[#allocation7 + $0x8] sm:$0xff]
    %v4455 = vld [vmem:[#allocation7 + $0x10] sm:$0xff]
    %v4456 = vld [vmem:[#allocation7 + $0x18] sm:$0xff]
    %v4457 = vld [vmem:[#allocation7 + $0x20] sm:$0xff]
    %v4458 = vld [vmem:[#allocation7 + $0x28] sm:$0xff]
    %v4459 = vld [vmem:[#allocation7 + $0x30] sm:$0xff]
    %v4460 = vld [vmem:[#allocation7 + $0x38] sm:$0xff]
    %v4461 = vld [vmem:[#allocation7 + $0x40] sm:$0xff]
    %v4462 = vld [vmem:[#allocation7 + $0x48] sm:$0xff]
    %v4463 = vld [vmem:[#allocation7 + $0x50] sm:$0xff]
    %v4464 = vld [vmem:[#allocation7 + $0x58] sm:$0xff]
    %v4465 = vld [vmem:[#allocation7 + $0x60] sm:$0xff]
    %v4466 = vld [vmem:[#allocation7 + $0x68] sm:$0xff]
    %v4467 = vld [vmem:[#allocation7 + $0x70] sm:$0xff]
    %v4468 = vld [vmem:[#allocation7 + $0x78] sm:$0xff]
    %v4469 = vld [vmem:[#allocation7 + $0x80] sm:$0xff]
    %v4470 = vld [vmem:[#allocation7 + $0x88] sm:$0xff]
    %v4471 = vld [vmem:[#allocation7 + $0x90] sm:$0xff]
    %v4472 = vld [vmem:[#allocation7 + $0x98] sm:$0xff]
    %v4473 = vld [vmem:[#allocation7 + $0xa0] sm:$0xff]
    %v4474 = vld [vmem:[#allocation7 + $0xa8] sm:$0xff]
    %v4475 = vld [vmem:[#allocation7 + $0xb0] sm:$0xff]
    %v4476 = vld [vmem:[#allocation7 + $0xb8] sm:$0xff]
    %v4477 = vld [vmem:[#allocation7 + $0xc0] sm:$0xff]
    %v4478 = vld [vmem:[#allocation7 + $0xc8] sm:$0xff]
    %v4479 = vld [vmem:[#allocation7 + $0xd0] sm:$0xff]
    %v4480 = vld [vmem:[#allocation7 + $0xd8] sm:$0xff]
    %v4481 = vld [vmem:[#allocation7 + $0xe0] sm:$0xff]
    %v4482 = vld [vmem:[#allocation7 + $0xe8] sm:$0xff]
    %v4483 = vld [vmem:[#allocation7 + $0xf0] sm:$0xff]
    %v4484 = vld [vmem:[#allocation7 + $0xf8] sm:$0xff]
    %v4485 = vld [vmem:[#allocation7 + $0x100] sm:$0xff]
    %v4486 = vld [vmem:[#allocation7 + $0x108] sm:$0xff]
    %v4487 = vld [vmem:[#allocation7 + $0x110] sm:$0xff]
    %v4488 = vld [vmem:[#allocation7 + $0x118] sm:$0xff]
    %v4489 = vld [vmem:[#allocation7 + $0x120] sm:$0xff]
    %v4490 = vld [vmem:[#allocation7 + $0x128] sm:$0xff]
    %v4491 = vld [vmem:[#allocation7 + $0x130] sm:$0xff]
    %v4492 = vld [vmem:[#allocation7 + $0x138] sm:$0xff]
    %v4493 = vld [vmem:[#allocation7 + $0x140] sm:$0xff]
    %v4494 = vld [vmem:[#allocation7 + $0x148] sm:$0xff]
    %v4495 = vld [vmem:[#allocation7 + $0x150] sm:$0xff]
    %v4496 = vld [vmem:[#allocation7 + $0x158] sm:$0xff]
    %v4497 = vld [vmem:[#allocation7 + $0x160] sm:$0xff]
    %v4498 = vld [vmem:[#allocation7 + $0x168] sm:$0xff]
    %v4499 = vld [vmem:[#allocation7 + $0x170] sm:$0xff]
    %v4500 = vld [vmem:[#allocation7 + $0x178] sm:$0xff]
    %v4501 = vld [vmem:[#allocation7 + $0x180] sm:$0xff]
    %v4502 = vld [vmem:[#allocation7 + $0x188] sm:$0xff]
    %v4503 = vld [vmem:[#allocation7 + $0x190] sm:$0xff]
    %v4504 = vld [vmem:[#allocation7 + $0x198] sm:$0xff]
    %v4505 = vld [vmem:[#allocation7 + $0x1a0] sm:$0xff]
    %v4506 = vld [vmem:[#allocation7 + $0x1a8] sm:$0xff]
    %v4507 = vld [vmem:[#allocation7 + $0x1b0] sm:$0xff]
    %v4508 = vld [vmem:[#allocation7 + $0x1b8] sm:$0xff]
    %v4509 = vld [vmem:[#allocation7 + $0x1c0] sm:$0xff]
    %v4510 = vld [vmem:[#allocation7 + $0x1c8] sm:$0xff]
    %v4511 = vld [vmem:[#allocation7 + $0x1d0] sm:$0xff]
    %v4512 = vld [vmem:[#allocation7 + $0x1d8] sm:$0xff]
    %v4513 = vld [vmem:[#allocation7 + $0x1e0] sm:$0xff]
    %v4514 = vld [vmem:[#allocation7 + $0x1e8] sm:$0xff]
    %v4515 = vld [vmem:[#allocation7 + $0x1f0] sm:$0xff]
    %v4516 = vld [vmem:[#allocation7 + $0x1f8] sm:$0xff]
    %v4517 = vld [vmem:[#allocation7 + $0x200] sm:$0xff]
    %v4518 = vld [vmem:[#allocation7 + $0x208] sm:$0xff]
    %v4519 = vld [vmem:[#allocation7 + $0x210] sm:$0xff]
    %v4520 = vld [vmem:[#allocation7 + $0x218] sm:$0xff]
    %v4521 = vld [vmem:[#allocation7 + $0x220] sm:$0xff]
    %v4522 = vld [vmem:[#allocation7 + $0x228] sm:$0xff]
    %v4523 = vld [vmem:[#allocation7 + $0x230] sm:$0xff]
    %v4524 = vld [vmem:[#allocation7 + $0x238] sm:$0xff]
    %v4525 = vld [vmem:[#allocation7 + $0x240] sm:$0xff]
    %v4526 = vld [vmem:[#allocation7 + $0x248] sm:$0xff]
    %v4527 = vld [vmem:[#allocation7 + $0x250] sm:$0xff]
    %v4528 = vld [vmem:[#allocation7 + $0x258] sm:$0xff]
    %v4529 = vld [vmem:[#allocation7 + $0x260] sm:$0xff]
    %v4530 = vld [vmem:[#allocation7 + $0x268] sm:$0xff]
    %v4531 = vld [vmem:[#allocation7 + $0x270] sm:$0xff]
    %v4532 = vld [vmem:[#allocation7 + $0x278] sm:$0xff]
    %v4533 = vld [vmem:[#allocation7 + $0x280] sm:$0xff]
    %v4534 = vld [vmem:[#allocation7 + $0x288] sm:$0xff]
    %v4535 = vld [vmem:[#allocation7 + $0x290] sm:$0xff]
    %v4536 = vld [vmem:[#allocation7 + $0x298] sm:$0xff]
    %v4537 = vld [vmem:[#allocation7 + $0x2a0] sm:$0xff]
    %v4538 = vld [vmem:[#allocation7 + $0x2a8] sm:$0xff]
    %v4539 = vld [vmem:[#allocation7 + $0x2b0] sm:$0xff]
    %v4540 = vld [vmem:[#allocation7 + $0x2b8] sm:$0xff]
    %v4541 = vld [vmem:[#allocation7 + $0x2c0] sm:$0xff]
    %v4542 = vld [vmem:[#allocation7 + $0x2c8] sm:$0xff]
    %v4543 = vld [vmem:[#allocation7 + $0x2d0] sm:$0xff]
    %v4544 = vld [vmem:[#allocation7 + $0x2d8] sm:$0xff]
    %v4545 = vld [vmem:[#allocation7 + $0x2e0] sm:$0xff]
    %v4546 = vld [vmem:[#allocation7 + $0x2e8] sm:$0xff]
    %v4547 = vld [vmem:[#allocation7 + $0x2f0] sm:$0xff]
    %v4548 = vld [vmem:[#allocation7 + $0x2f8] sm:$0xff]
    %v4549 = vld [vmem:[#allocation7 + $0x300] sm:$0xff]
    %v4550 = vld [vmem:[#allocation7 + $0x308] sm:$0xff]
    %v4551 = vld [vmem:[#allocation7 + $0x310] sm:$0xff]
    %v4552 = vld [vmem:[#allocation7 + $0x318] sm:$0xff]
    %v4553 = vld [vmem:[#allocation7 + $0x320] sm:$0xff]
    %v4554 = vld [vmem:[#allocation7 + $0x328] sm:$0xff]
    %v4555 = vld [vmem:[#allocation7 + $0x330] sm:$0xff]
    %v4556 = vld [vmem:[#allocation7 + $0x338] sm:$0xff]
    %v4557 = vld [vmem:[#allocation7 + $0x340] sm:$0xff]
    %v4558 = vld [vmem:[#allocation7 + $0x348] sm:$0xff]
    %v4559 = vld [vmem:[#allocation7 + $0x350] sm:$0xff]
    %v4560 = vld [vmem:[#allocation7 + $0x358] sm:$0xff]
    %v4561 = vld [vmem:[#allocation7 + $0x360] sm:$0xff]
    %v4562 = vld [vmem:[#allocation7 + $0x368] sm:$0xff]
    %v4563 = vld [vmem:[#allocation7 + $0x370] sm:$0xff]
    %v4564 = vld [vmem:[#allocation7 + $0x378] sm:$0xff]
    %v4565 = vld [vmem:[#allocation7 + $0x380] sm:$0xff]
    %v4566 = vld [vmem:[#allocation7 + $0x388] sm:$0xff]
    %v4567 = vld [vmem:[#allocation7 + $0x390] sm:$0xff]
    %v4568 = vld [vmem:[#allocation7 + $0x398] sm:$0xff]
    %v4569 = vld [vmem:[#allocation7 + $0x3a0] sm:$0xff]
    %v4570 = vld [vmem:[#allocation7 + $0x3a8] sm:$0xff]
    %v4571 = vld [vmem:[#allocation7 + $0x3b0] sm:$0xff]
    %v4572 = vld [vmem:[#allocation7 + $0x3b8] sm:$0xff]
    %v4573 = vld [vmem:[#allocation7 + $0x3c0] sm:$0xff]
    %v4574 = vld [vmem:[#allocation7 + $0x3c8] sm:$0xff]
    %v4575 = vld [vmem:[#allocation7 + $0x3d0] sm:$0xff]
    %v4576 = vld [vmem:[#allocation7 + $0x3d8] sm:$0xff]
    %v4577 = vld [vmem:[#allocation7 + $0x3e0] sm:$0xff]
    %v4578 = vld [vmem:[#allocation7 + $0x3e8] sm:$0xff]
    %v4579 = vld [vmem:[#allocation7 + $0x3f0] sm:$0xff]
    %v4580 = vld [vmem:[#allocation7 + $0x3f8] sm:$0xff]
    %v4581 = vld [vmem:[#allocation7 + $0x400] sm:$0xff]
    %v4582 = vld [vmem:[#allocation7 + $0x408] sm:$0xff]
    %v4583 = vld [vmem:[#allocation7 + $0x410] sm:$0xff]
    %v4584 = vld [vmem:[#allocation7 + $0x418] sm:$0xff]
    %v4585 = vld [vmem:[#allocation7 + $0x420] sm:$0xff]
    %v4586 = vld [vmem:[#allocation7 + $0x428] sm:$0xff]
    %v4587 = vld [vmem:[#allocation7 + $0x430] sm:$0xff]
    %v4588 = vld [vmem:[#allocation7 + $0x438] sm:$0xff]
    %v4589 = vld [vmem:[#allocation7 + $0x440] sm:$0xff]
    %v4590 = vld [vmem:[#allocation7 + $0x448] sm:$0xff]
    %v4591 = vld [vmem:[#allocation7 + $0x450] sm:$0xff]
    %v4592 = vld [vmem:[#allocation7 + $0x458] sm:$0xff]
    %v4593 = vld [vmem:[#allocation7 + $0x460] sm:$0xff]
    %v4594 = vld [vmem:[#allocation7 + $0x468] sm:$0xff]
    %v4595 = vld [vmem:[#allocation7 + $0x470] sm:$0xff]
    %v4596 = vld [vmem:[#allocation7 + $0x478] sm:$0xff]
    %v4597 = vld [vmem:[#allocation7 + $0x480] sm:$0xff]
    %v4598 = vld [vmem:[#allocation7 + $0x488] sm:$0xff]
    %v4599 = vld [vmem:[#allocation7 + $0x490] sm:$0xff]
    %v4600 = vld [vmem:[#allocation7 + $0x498] sm:$0xff]
    %v4601 = vld [vmem:[#allocation7 + $0x4a0] sm:$0xff]
    %v4602 = vld [vmem:[#allocation7 + $0x4a8] sm:$0xff]
    %v4603 = vld [vmem:[#allocation7 + $0x4b0] sm:$0xff]
    %v4604 = vld [vmem:[#allocation7 + $0x4b8] sm:$0xff]
    %v4605 = vld [vmem:[#allocation7 + $0x4c0] sm:$0xff]
    %v4606 = vld [vmem:[#allocation7 + $0x4c8] sm:$0xff]
    %v4607 = vld [vmem:[#allocation7 + $0x4d0] sm:$0xff]
    %v4608 = vld [vmem:[#allocation7 + $0x4d8] sm:$0xff]
    %v4609 = vld [vmem:[#allocation7 + $0x4e0] sm:$0xff]
    %v4610 = vld [vmem:[#allocation7 + $0x4e8] sm:$0xff]
    %v4611 = vld [vmem:[#allocation7 + $0x4f0] sm:$0xff]
    %v4612 = vld [vmem:[#allocation7 + $0x4f8] sm:$0xff]
    %v4613 = vld [vmem:[#allocation7 + $0x500] sm:$0xff]
    %v4614 = vld [vmem:[#allocation7 + $0x508] sm:$0xff]
    %v4615 = vld [vmem:[#allocation7 + $0x510] sm:$0xff]
    %v4616 = vld [vmem:[#allocation7 + $0x518] sm:$0xff]
    %v4617 = vld [vmem:[#allocation7 + $0x520] sm:$0xff]
    %v4618 = vld [vmem:[#allocation7 + $0x528] sm:$0xff]
    %v4619 = vld [vmem:[#allocation7 + $0x530] sm:$0xff]
    %v4620 = vld [vmem:[#allocation7 + $0x538] sm:$0xff]
    %v4621 = vld [vmem:[#allocation7 + $0x540] sm:$0xff]
    %v4622 = vld [vmem:[#allocation7 + $0x548] sm:$0xff]
    %v4623 = vld [vmem:[#allocation7 + $0x550] sm:$0xff]
    %v4624 = vld [vmem:[#allocation7 + $0x558] sm:$0xff]
    %v4625 = vld [vmem:[#allocation7 + $0x560] sm:$0xff]
    %v4626 = vld [vmem:[#allocation7 + $0x568] sm:$0xff]
    %v4627 = vld [vmem:[#allocation7 + $0x570] sm:$0xff]
    %v4628 = vld [vmem:[#allocation7 + $0x578] sm:$0xff]
    %v4629 = vld [vmem:[#allocation7 + $0x580] sm:$0xff]
    %v4630 = vld [vmem:[#allocation7 + $0x588] sm:$0xff]
    %v4631 = vld [vmem:[#allocation7 + $0x590] sm:$0xff]
    %v4632 = vld [vmem:[#allocation7 + $0x598] sm:$0xff]
    %v4633 = vld [vmem:[#allocation7 + $0x5a0] sm:$0xff]
    %v4634 = vld [vmem:[#allocation7 + $0x5a8] sm:$0xff]
    %v4635 = vld [vmem:[#allocation7 + $0x5b0] sm:$0xff]
    %v4636 = vld [vmem:[#allocation7 + $0x5b8] sm:$0xff]
    %v4637 = vld [vmem:[#allocation7 + $0x5c0] sm:$0xff]
    %v4638 = vld [vmem:[#allocation7 + $0x5c8] sm:$0xff]
    %v4639 = vld [vmem:[#allocation7 + $0x5d0] sm:$0xff]
    %v4640 = vld [vmem:[#allocation7 + $0x5d8] sm:$0xff]
    %v4641 = vld [vmem:[#allocation7 + $0x5e0] sm:$0xff]
    %v4642 = vld [vmem:[#allocation7 + $0x5e8] sm:$0xff]
    %v4643 = vld [vmem:[#allocation7 + $0x5f0] sm:$0xff]
    %v4644 = vld [vmem:[#allocation7 + $0x5f8] sm:$0xff]
    %v4645 = vld [vmem:[#allocation7 + $0x600] sm:$0xff]
    %v4646 = vld [vmem:[#allocation7 + $0x608] sm:$0xff]
    %v4647 = vld [vmem:[#allocation7 + $0x610] sm:$0xff]
    %v4648 = vld [vmem:[#allocation7 + $0x618] sm:$0xff]
    %v4649 = vld [vmem:[#allocation7 + $0x620] sm:$0xff]
    %v4650 = vld [vmem:[#allocation7 + $0x628] sm:$0xff]
    %v4651 = vld [vmem:[#allocation7 + $0x630] sm:$0xff]
    %v4652 = vld [vmem:[#allocation7 + $0x638] sm:$0xff]
    %v4653 = vld [vmem:[#allocation7 + $0x640] sm:$0xff]
    %v4654 = vld [vmem:[#allocation7 + $0x648] sm:$0xff]
    %v4655 = vld [vmem:[#allocation7 + $0x650] sm:$0xff]
    %v4656 = vld [vmem:[#allocation7 + $0x658] sm:$0xff]
    %v4657 = vld [vmem:[#allocation7 + $0x660] sm:$0xff]
    %v4658 = vld [vmem:[#allocation7 + $0x668] sm:$0xff]
    %v4659 = vld [vmem:[#allocation7 + $0x670] sm:$0xff]
    %v4660 = vld [vmem:[#allocation7 + $0x678] sm:$0xff]
    %v4661 = vld [vmem:[#allocation7 + $0x680] sm:$0xff]
    %v4662 = vld [vmem:[#allocation7 + $0x688] sm:$0xff]
    %v4663 = vld [vmem:[#allocation7 + $0x690] sm:$0xff]
    %v4664 = vld [vmem:[#allocation7 + $0x698] sm:$0xff]
    %v4665 = vld [vmem:[#allocation7 + $0x6a0] sm:$0xff]
    %v4666 = vld [vmem:[#allocation7 + $0x6a8] sm:$0xff]
    %v4667 = vld [vmem:[#allocation7 + $0x6b0] sm:$0xff]
    %v4668 = vld [vmem:[#allocation7 + $0x6b8] sm:$0xff]
    %v4669 = vld [vmem:[#allocation7 + $0x6c0] sm:$0xff]
    %v4670 = vld [vmem:[#allocation7 + $0x6c8] sm:$0xff]
    %v4671 = vld [vmem:[#allocation7 + $0x6d0] sm:$0xff]
    %v4672 = vld [vmem:[#allocation7 + $0x6d8] sm:$0xff]
    %v4673 = vld [vmem:[#allocation7 + $0x6e0] sm:$0xff]
    %v4674 = vld [vmem:[#allocation7 + $0x6e8] sm:$0xff]
    %v4675 = vld [vmem:[#allocation7 + $0x6f0] sm:$0xff]
    %v4676 = vld [vmem:[#allocation7 + $0x6f8] sm:$0xff]
    %v4677 = vld [vmem:[#allocation7 + $0x700] sm:$0xff]
    %v4678 = vld [vmem:[#allocation7 + $0x708] sm:$0xff]
    %v4679 = vld [vmem:[#allocation7 + $0x710] sm:$0xff]
    %v4680 = vld [vmem:[#allocation7 + $0x718] sm:$0xff]
    %v4681 = vld [vmem:[#allocation7 + $0x720] sm:$0xff]
    %v4682 = vld [vmem:[#allocation7 + $0x728] sm:$0xff]
    %v4683 = vld [vmem:[#allocation7 + $0x730] sm:$0xff]
    %v4684 = vld [vmem:[#allocation7 + $0x738] sm:$0xff]
    %v4685 = vld [vmem:[#allocation7 + $0x740] sm:$0xff]
    %v4686 = vld [vmem:[#allocation7 + $0x748] sm:$0xff]
    %v4687 = vld [vmem:[#allocation7 + $0x750] sm:$0xff]
    %v4688 = vld [vmem:[#allocation7 + $0x758] sm:$0xff]
    %v4689 = vld [vmem:[#allocation7 + $0x760] sm:$0xff]
    %v4690 = vld [vmem:[#allocation7 + $0x768] sm:$0xff]
    %v4691 = vld [vmem:[#allocation7 + $0x770] sm:$0xff]
    %v4692 = vld [vmem:[#allocation7 + $0x778] sm:$0xff]
    %v4693 = vld [vmem:[#allocation7 + $0x780] sm:$0xff]
    %v4694 = vld [vmem:[#allocation7 + $0x788] sm:$0xff]
    %v4695 = vld [vmem:[#allocation7 + $0x790] sm:$0xff]
    %v4696 = vld [vmem:[#allocation7 + $0x798] sm:$0xff]
    %v4697 = vld [vmem:[#allocation7 + $0x7a0] sm:$0xff]
    %v4698 = vld [vmem:[#allocation7 + $0x7a8] sm:$0xff]
    %v4699 = vld [vmem:[#allocation7 + $0x7b0] sm:$0xff]
    %v4700 = vld [vmem:[#allocation7 + $0x7b8] sm:$0xff]
    %v4701 = vld [vmem:[#allocation7 + $0x7c0] sm:$0xff]
    %v4702 = vld [vmem:[#allocation7 + $0x7c8] sm:$0xff]
    %v4703 = vld [vmem:[#allocation7 + $0x7d0] sm:$0xff]
    %v4704 = vld [vmem:[#allocation7 + $0x7d8] sm:$0xff]
    %v4705 = vld [vmem:[#allocation7 + $0x7e0] sm:$0xff]
    %v4706 = vld [vmem:[#allocation7 + $0x7e8] sm:$0xff]
    %v4707 = vld [vmem:[#allocation7 + $0x7f0] sm:$0xff]
    %v4708 = vld [vmem:[#allocation7 + $0x7f8] sm:$0xff]
    %v4709 = vld [vmem:[%s5] sm:$0xff]
    %v4710 = vld [vmem:[#allocation8] sm:$0xff]
    %v4711 = vld [vmem:[#allocation8 + $0x8] sm:$0xff]
    %v4712 = vld [vmem:[#allocation8 + $0x10] sm:$0xff]
    %v4713 = vld [vmem:[#allocation8 + $0x18] sm:$0xff]
    %v4714 = vld [vmem:[#allocation8 + $0x20] sm:$0xff]
    %v4715 = vld [vmem:[#allocation8 + $0x28] sm:$0xff]
    %v4716 = vld [vmem:[#allocation8 + $0x30] sm:$0xff]
    %v4717 = vld [vmem:[#allocation8 + $0x38] sm:$0xff]
    %v4718 = vld [vmem:[#allocation8 + $0x40] sm:$0xff]
    %v4719 = vld [vmem:[#allocation8 + $0x48] sm:$0xff]
    %v4720 = vld [vmem:[#allocation8 + $0x50] sm:$0xff]
    %v4721 = vld [vmem:[#allocation8 + $0x58] sm:$0xff]
    %v4722 = vld [vmem:[#allocation8 + $0x60] sm:$0xff]
    %v4723 = vld [vmem:[#allocation8 + $0x68] sm:$0xff]
    %v4724 = vld [vmem:[#allocation8 + $0x70] sm:$0xff]
    %v4725 = vld [vmem:[#allocation8 + $0x78] sm:$0xff]
    %v4726 = vld [vmem:[#allocation8 + $0x80] sm:$0xff]
    %v4727 = vld [vmem:[#allocation8 + $0x88] sm:$0xff]
    %v4728 = vld [vmem:[#allocation8 + $0x90] sm:$0xff]
    %v4729 = vld [vmem:[#allocation8 + $0x98] sm:$0xff]
    %v4730 = vld [vmem:[#allocation8 + $0xa0] sm:$0xff]
    %v4731 = vld [vmem:[#allocation8 + $0xa8] sm:$0xff]
    %v4732 = vld [vmem:[#allocation8 + $0xb0] sm:$0xff]
    %v4733 = vld [vmem:[#allocation8 + $0xb8] sm:$0xff]
    %v4734 = vld [vmem:[#allocation8 + $0xc0] sm:$0xff]
    %v4735 = vld [vmem:[#allocation8 + $0xc8] sm:$0xff]
    %v4736 = vld [vmem:[#allocation8 + $0xd0] sm:$0xff]
    %v4737 = vld [vmem:[#allocation8 + $0xd8] sm:$0xff]
    %v4738 = vld [vmem:[#allocation8 + $0xe0] sm:$0xff]
    %v4739 = vld [vmem:[#allocation8 + $0xe8] sm:$0xff]
    %v4740 = vld [vmem:[#allocation8 + $0xf0] sm:$0xff]
    %v4741 = vld [vmem:[#allocation8 + $0xf8] sm:$0xff]
    %v4742 = vld [vmem:[#allocation8 + $0x100] sm:$0xff]
    %v4743 = vld [vmem:[#allocation8 + $0x108] sm:$0xff]
    %v4744 = vld [vmem:[#allocation8 + $0x110] sm:$0xff]
    %v4745 = vld [vmem:[#allocation8 + $0x118] sm:$0xff]
    %v4746 = vld [vmem:[#allocation8 + $0x120] sm:$0xff]
    %v4747 = vld [vmem:[#allocation8 + $0x128] sm:$0xff]
    %v4748 = vld [vmem:[#allocation8 + $0x130] sm:$0xff]
    %v4749 = vld [vmem:[#allocation8 + $0x138] sm:$0xff]
    %v4750 = vld [vmem:[#allocation8 + $0x140] sm:$0xff]
    %v4751 = vld [vmem:[#allocation8 + $0x148] sm:$0xff]
    %v4752 = vld [vmem:[#allocation8 + $0x150] sm:$0xff]
    %v4753 = vld [vmem:[#allocation8 + $0x158] sm:$0xff]
    %v4754 = vld [vmem:[#allocation8 + $0x160] sm:$0xff]
    %v4755 = vld [vmem:[#allocation8 + $0x168] sm:$0xff]
    %v4756 = vld [vmem:[#allocation8 + $0x170] sm:$0xff]
    %v4757 = vld [vmem:[#allocation8 + $0x178] sm:$0xff]
    %v4758 = vld [vmem:[#allocation8 + $0x180] sm:$0xff]
    %v4759 = vld [vmem:[#allocation8 + $0x188] sm:$0xff]
    %v4760 = vld [vmem:[#allocation8 + $0x190] sm:$0xff]
    %v4761 = vld [vmem:[#allocation8 + $0x198] sm:$0xff]
    %v4762 = vld [vmem:[#allocation8 + $0x1a0] sm:$0xff]
    %v4763 = vld [vmem:[#allocation8 + $0x1a8] sm:$0xff]
    %v4764 = vld [vmem:[#allocation8 + $0x1b0] sm:$0xff]
    %v4765 = vld [vmem:[#allocation8 + $0x1b8] sm:$0xff]
    %v4766 = vld [vmem:[#allocation8 + $0x1c0] sm:$0xff]
    %v4767 = vld [vmem:[#allocation8 + $0x1c8] sm:$0xff]
    %v4768 = vld [vmem:[#allocation8 + $0x1d0] sm:$0xff]
    %v4769 = vld [vmem:[#allocation8 + $0x1d8] sm:$0xff]
    %v4770 = vld [vmem:[#allocation8 + $0x1e0] sm:$0xff]
    %v4771 = vld [vmem:[#allocation8 + $0x1e8] sm:$0xff]
    %v4772 = vld [vmem:[#allocation8 + $0x1f0] sm:$0xff]
    %v4773 = vld [vmem:[#allocation8 + $0x1f8] sm:$0xff]
    %v4774 = vld [vmem:[#allocation8 + $0x200] sm:$0xff]
    %v4775 = vld [vmem:[#allocation8 + $0x208] sm:$0xff]
    %v4776 = vld [vmem:[#allocation8 + $0x210] sm:$0xff]
    %v4777 = vld [vmem:[#allocation8 + $0x218] sm:$0xff]
    %v4778 = vld [vmem:[#allocation8 + $0x220] sm:$0xff]
    %v4779 = vld [vmem:[#allocation8 + $0x228] sm:$0xff]
    %v4780 = vld [vmem:[#allocation8 + $0x230] sm:$0xff]
    %v4781 = vld [vmem:[#allocation8 + $0x238] sm:$0xff]
    %v4782 = vld [vmem:[#allocation8 + $0x240] sm:$0xff]
    %v4783 = vld [vmem:[#allocation8 + $0x248] sm:$0xff]
    %v4784 = vld [vmem:[#allocation8 + $0x250] sm:$0xff]
    %v4785 = vld [vmem:[#allocation8 + $0x258] sm:$0xff]
    %v4786 = vld [vmem:[#allocation8 + $0x260] sm:$0xff]
    %v4787 = vld [vmem:[#allocation8 + $0x268] sm:$0xff]
    %v4788 = vld [vmem:[#allocation8 + $0x270] sm:$0xff]
    %v4789 = vld [vmem:[#allocation8 + $0x278] sm:$0xff]
    %v4790 = vld [vmem:[#allocation8 + $0x280] sm:$0xff]
    %v4791 = vld [vmem:[#allocation8 + $0x288] sm:$0xff]
    %v4792 = vld [vmem:[#allocation8 + $0x290] sm:$0xff]
    %v4793 = vld [vmem:[#allocation8 + $0x298] sm:$0xff]
    %v4794 = vld [vmem:[#allocation8 + $0x2a0] sm:$0xff]
    %v4795 = vld [vmem:[#allocation8 + $0x2a8] sm:$0xff]
    %v4796 = vld [vmem:[#allocation8 + $0x2b0] sm:$0xff]
    %v4797 = vld [vmem:[#allocation8 + $0x2b8] sm:$0xff]
    %v4798 = vld [vmem:[#allocation8 + $0x2c0] sm:$0xff]
    %v4799 = vld [vmem:[#allocation8 + $0x2c8] sm:$0xff]
    %v4800 = vld [vmem:[#allocation8 + $0x2d0] sm:$0xff]
    %v4801 = vld [vmem:[#allocation8 + $0x2d8] sm:$0xff]
    %v4802 = vld [vmem:[#allocation8 + $0x2e0] sm:$0xff]
    %v4803 = vld [vmem:[#allocation8 + $0x2e8] sm:$0xff]
    %v4804 = vld [vmem:[#allocation8 + $0x2f0] sm:$0xff]
    %v4805 = vld [vmem:[#allocation8 + $0x2f8] sm:$0xff]
    %v4806 = vld [vmem:[#allocation8 + $0x300] sm:$0xff]
    %v4807 = vld [vmem:[#allocation8 + $0x308] sm:$0xff]
    %v4808 = vld [vmem:[#allocation8 + $0x310] sm:$0xff]
    %v4809 = vld [vmem:[#allocation8 + $0x318] sm:$0xff]
    %v4810 = vld [vmem:[#allocation8 + $0x320] sm:$0xff]
    %v4811 = vld [vmem:[#allocation8 + $0x328] sm:$0xff]
    %v4812 = vld [vmem:[#allocation8 + $0x330] sm:$0xff]
    %v4813 = vld [vmem:[#allocation8 + $0x338] sm:$0xff]
    %v4814 = vld [vmem:[#allocation8 + $0x340] sm:$0xff]
    %v4815 = vld [vmem:[#allocation8 + $0x348] sm:$0xff]
    %v4816 = vld [vmem:[#allocation8 + $0x350] sm:$0xff]
    %v4817 = vld [vmem:[#allocation8 + $0x358] sm:$0xff]
    %v4818 = vld [vmem:[#allocation8 + $0x360] sm:$0xff]
    %v4819 = vld [vmem:[#allocation8 + $0x368] sm:$0xff]
    %v4820 = vld [vmem:[#allocation8 + $0x370] sm:$0xff]
    %v4821 = vld [vmem:[#allocation8 + $0x378] sm:$0xff]
    %v4822 = vld [vmem:[#allocation8 + $0x380] sm:$0xff]
    %v4823 = vld [vmem:[#allocation8 + $0x388] sm:$0xff]
    %v4824 = vld [vmem:[#allocation8 + $0x390] sm:$0xff]
    %v4825 = vld [vmem:[#allocation8 + $0x398] sm:$0xff]
    %v4826 = vld [vmem:[#allocation8 + $0x3a0] sm:$0xff]
    %v4827 = vld [vmem:[#allocation8 + $0x3a8] sm:$0xff]
    %v4828 = vld [vmem:[#allocation8 + $0x3b0] sm:$0xff]
    %v4829 = vld [vmem:[#allocation8 + $0x3b8] sm:$0xff]
    %v4830 = vld [vmem:[#allocation8 + $0x3c0] sm:$0xff]
    %v4831 = vld [vmem:[#allocation8 + $0x3c8] sm:$0xff]
    %v4832 = vld [vmem:[#allocation8 + $0x3d0] sm:$0xff]
    %v4833 = vld [vmem:[#allocation8 + $0x3d8] sm:$0xff]
    %v4834 = vld [vmem:[#allocation8 + $0x3e0] sm:$0xff]
    %v4835 = vld [vmem:[#allocation8 + $0x3e8] sm:$0xff]
    %v4836 = vld [vmem:[#allocation8 + $0x3f0] sm:$0xff]
    %v4837 = vld [vmem:[#allocation8 + $0x3f8] sm:$0xff]
    %v4838 = vld [vmem:[#allocation8 + $0x400] sm:$0xff]
    %v4839 = vld [vmem:[#allocation8 + $0x408] sm:$0xff]
    %v4840 = vld [vmem:[#allocation8 + $0x410] sm:$0xff]
    %v4841 = vld [vmem:[#allocation8 + $0x418] sm:$0xff]
    %v4842 = vld [vmem:[#allocation8 + $0x420] sm:$0xff]
    %v4843 = vld [vmem:[#allocation8 + $0x428] sm:$0xff]
    %v4844 = vld [vmem:[#allocation8 + $0x430] sm:$0xff]
    %v4845 = vld [vmem:[#allocation8 + $0x438] sm:$0xff]
    %v4846 = vld [vmem:[#allocation8 + $0x440] sm:$0xff]
    %v4847 = vld [vmem:[#allocation8 + $0x448] sm:$0xff]
    %v4848 = vld [vmem:[#allocation8 + $0x450] sm:$0xff]
    %v4849 = vld [vmem:[#allocation8 + $0x458] sm:$0xff]
    %v4850 = vld [vmem:[#allocation8 + $0x460] sm:$0xff]
    %v4851 = vld [vmem:[#allocation8 + $0x468] sm:$0xff]
    %v4852 = vld [vmem:[#allocation8 + $0x470] sm:$0xff]
    %v4853 = vld [vmem:[#allocation8 + $0x478] sm:$0xff]
    %v4854 = vld [vmem:[#allocation8 + $0x480] sm:$0xff]
    %v4855 = vld [vmem:[#allocation8 + $0x488] sm:$0xff]
    %v4856 = vld [vmem:[#allocation8 + $0x490] sm:$0xff]
    %v4857 = vld [vmem:[#allocation8 + $0x498] sm:$0xff]
    %v4858 = vld [vmem:[#allocation8 + $0x4a0] sm:$0xff]
    %v4859 = vld [vmem:[#allocation8 + $0x4a8] sm:$0xff]
    %v4860 = vld [vmem:[#allocation8 + $0x4b0] sm:$0xff]
    %v4861 = vld [vmem:[#allocation8 + $0x4b8] sm:$0xff]
    %v4862 = vld [vmem:[#allocation8 + $0x4c0] sm:$0xff]
    %v4863 = vld [vmem:[#allocation8 + $0x4c8] sm:$0xff]
    %v4864 = vld [vmem:[#allocation8 + $0x4d0] sm:$0xff]
    %v4865 = vld [vmem:[#allocation8 + $0x4d8] sm:$0xff]
    %v4866 = vld [vmem:[#allocation8 + $0x4e0] sm:$0xff]
    %v4867 = vld [vmem:[#allocation8 + $0x4e8] sm:$0xff]
    %v4868 = vld [vmem:[#allocation8 + $0x4f0] sm:$0xff]
    %v4869 = vld [vmem:[#allocation8 + $0x4f8] sm:$0xff]
    %v4870 = vld [vmem:[#allocation8 + $0x500] sm:$0xff]
    %v4871 = vld [vmem:[#allocation8 + $0x508] sm:$0xff]
    %v4872 = vld [vmem:[#allocation8 + $0x510] sm:$0xff]
    %v4873 = vld [vmem:[#allocation8 + $0x518] sm:$0xff]
    %v4874 = vld [vmem:[#allocation8 + $0x520] sm:$0xff]
    %v4875 = vld [vmem:[#allocation8 + $0x528] sm:$0xff]
    %v4876 = vld [vmem:[#allocation8 + $0x530] sm:$0xff]
    %v4877 = vld [vmem:[#allocation8 + $0x538] sm:$0xff]
    %v4878 = vld [vmem:[#allocation8 + $0x540] sm:$0xff]
    %v4879 = vld [vmem:[#allocation8 + $0x548] sm:$0xff]
    %v4880 = vld [vmem:[#allocation8 + $0x550] sm:$0xff]
    %v4881 = vld [vmem:[#allocation8 + $0x558] sm:$0xff]
    %v4882 = vld [vmem:[#allocation8 + $0x560] sm:$0xff]
    %v4883 = vld [vmem:[#allocation8 + $0x568] sm:$0xff]
    %v4884 = vld [vmem:[#allocation8 + $0x570] sm:$0xff]
    %v4885 = vld [vmem:[#allocation8 + $0x578] sm:$0xff]
    %v4886 = vld [vmem:[#allocation8 + $0x580] sm:$0xff]
    %v4887 = vld [vmem:[#allocation8 + $0x588] sm:$0xff]
    %v4888 = vld [vmem:[#allocation8 + $0x590] sm:$0xff]
    %v4889 = vld [vmem:[#allocation8 + $0x598] sm:$0xff]
    %v4890 = vld [vmem:[#allocation8 + $0x5a0] sm:$0xff]
    %v4891 = vld [vmem:[#allocation8 + $0x5a8] sm:$0xff]
    %v4892 = vld [vmem:[#allocation8 + $0x5b0] sm:$0xff]
    %v4893 = vld [vmem:[#allocation8 + $0x5b8] sm:$0xff]
    %v4894 = vld [vmem:[#allocation8 + $0x5c0] sm:$0xff]
    %v4895 = vld [vmem:[#allocation8 + $0x5c8] sm:$0xff]
    %v4896 = vld [vmem:[#allocation8 + $0x5d0] sm:$0xff]
    %v4897 = vld [vmem:[#allocation8 + $0x5d8] sm:$0xff]
    %v4898 = vld [vmem:[#allocation8 + $0x5e0] sm:$0xff]
    %v4899 = vld [vmem:[#allocation8 + $0x5e8] sm:$0xff]
    %v4900 = vld [vmem:[#allocation8 + $0x5f0] sm:$0xff]
    %v4901 = vld [vmem:[#allocation8 + $0x5f8] sm:$0xff]
    %v4902 = vld [vmem:[#allocation8 + $0x600] sm:$0xff]
    %v4903 = vld [vmem:[#allocation8 + $0x608] sm:$0xff]
    %v4904 = vld [vmem:[#allocation8 + $0x610] sm:$0xff]
    %v4905 = vld [vmem:[#allocation8 + $0x618] sm:$0xff]
    %v4906 = vld [vmem:[#allocation8 + $0x620] sm:$0xff]
    %v4907 = vld [vmem:[#allocation8 + $0x628] sm:$0xff]
    %v4908 = vld [vmem:[#allocation8 + $0x630] sm:$0xff]
    %v4909 = vld [vmem:[#allocation8 + $0x638] sm:$0xff]
    %v4910 = vld [vmem:[#allocation8 + $0x640] sm:$0xff]
    %v4911 = vld [vmem:[#allocation8 + $0x648] sm:$0xff]
    %v4912 = vld [vmem:[#allocation8 + $0x650] sm:$0xff]
    %v4913 = vld [vmem:[#allocation8 + $0x658] sm:$0xff]
    %v4914 = vld [vmem:[#allocation8 + $0x660] sm:$0xff]
    %v4915 = vld [vmem:[#allocation8 + $0x668] sm:$0xff]
    %v4916 = vld [vmem:[#allocation8 + $0x670] sm:$0xff]
    %v4917 = vld [vmem:[#allocation8 + $0x678] sm:$0xff]
    %v4918 = vld [vmem:[#allocation8 + $0x680] sm:$0xff]
    %v4919 = vld [vmem:[#allocation8 + $0x688] sm:$0xff]
    %v4920 = vld [vmem:[#allocation8 + $0x690] sm:$0xff]
    %v4921 = vld [vmem:[#allocation8 + $0x698] sm:$0xff]
    %v4922 = vld [vmem:[#allocation8 + $0x6a0] sm:$0xff]
    %v4923 = vld [vmem:[#allocation8 + $0x6a8] sm:$0xff]
    %v4924 = vld [vmem:[#allocation8 + $0x6b0] sm:$0xff]
    %v4925 = vld [vmem:[#allocation8 + $0x6b8] sm:$0xff]
    %v4926 = vld [vmem:[#allocation8 + $0x6c0] sm:$0xff]
    %v4927 = vld [vmem:[#allocation8 + $0x6c8] sm:$0xff]
    %v4928 = vld [vmem:[#allocation8 + $0x6d0] sm:$0xff]
    %v4929 = vld [vmem:[#allocation8 + $0x6d8] sm:$0xff]
    %v4930 = vld [vmem:[#allocation8 + $0x6e0] sm:$0xff]
    %v4931 = vld [vmem:[#allocation8 + $0x6e8] sm:$0xff]
    %v4932 = vld [vmem:[#allocation8 + $0x6f0] sm:$0xff]
    %v4933 = vld [vmem:[#allocation8 + $0x6f8] sm:$0xff]
    %v4934 = vld [vmem:[#allocation8 + $0x700] sm:$0xff]
    %v4935 = vld [vmem:[#allocation8 + $0x708] sm:$0xff]
    %v4936 = vld [vmem:[#allocation8 + $0x710] sm:$0xff]
    %v4937 = vld [vmem:[#allocation8 + $0x718] sm:$0xff]
    %v4938 = vld [vmem:[#allocation8 + $0x720] sm:$0xff]
    %v4939 = vld [vmem:[#allocation8 + $0x728] sm:$0xff]
    %v4940 = vld [vmem:[#allocation8 + $0x730] sm:$0xff]
    %v4941 = vld [vmem:[#allocation8 + $0x738] sm:$0xff]
    %v4942 = vld [vmem:[#allocation8 + $0x740] sm:$0xff]
    %v4943 = vld [vmem:[#allocation8 + $0x748] sm:$0xff]
    %v4944 = vld [vmem:[#allocation8 + $0x750] sm:$0xff]
    %v4945 = vld [vmem:[#allocation8 + $0x758] sm:$0xff]
    %v4946 = vld [vmem:[#allocation8 + $0x760] sm:$0xff]
    %v4947 = vld [vmem:[#allocation8 + $0x768] sm:$0xff]
    %v4948 = vld [vmem:[#allocation8 + $0x770] sm:$0xff]
    %v4949 = vld [vmem:[#allocation8 + $0x778] sm:$0xff]
    %v4950 = vld [vmem:[#allocation8 + $0x780] sm:$0xff]
    %v4951 = vld [vmem:[#allocation8 + $0x788] sm:$0xff]
    %v4952 = vld [vmem:[#allocation8 + $0x790] sm:$0xff]
    %v4953 = vld [vmem:[#allocation8 + $0x798] sm:$0xff]
    %v4954 = vld [vmem:[#allocation8 + $0x7a0] sm:$0xff]
    %v4955 = vld [vmem:[#allocation8 + $0x7a8] sm:$0xff]
    %v4956 = vld [vmem:[#allocation8 + $0x7b0] sm:$0xff]
    %v4957 = vld [vmem:[#allocation8 + $0x7b8] sm:$0xff]
    %v4958 = vld [vmem:[#allocation8 + $0x7c0] sm:$0xff]
    %v4959 = vld [vmem:[#allocation8 + $0x7c8] sm:$0xff]
    %v4960 = vld [vmem:[#allocation8 + $0x7d0] sm:$0xff]
    %v4961 = vld [vmem:[#allocation8 + $0x7d8] sm:$0xff]
    %v4962 = vld [vmem:[#allocation8 + $0x7e0] sm:$0xff]
    %v4963 = vld [vmem:[#allocation8 + $0x7e8] sm:$0xff]
    %v4964 = vld [vmem:[#allocation8 + $0x7f0] sm:$0xff]
    %v4965 = vld [vmem:[#allocation8 + $0x7f8] sm:$0xff]
    %v4967 = vperm.slane %v4709, 0
    %v4968 = vperm.slane %v4709, 1
    %v4969 = vperm.slane %v4709, 2
    %v4970 = vperm.slane %v4709, 3
    %v4971 = vperm.slane %v4709, 4
    %v4972 = vperm.slane %v4709, 5
    %v4973 = vperm.slane %v4709, 6
    %v4974 = vperm.slane %v4709, 7
    %4983 = vmatpush.msra.mxu0 %v4573
    %4984 = vmatpush.msra.mxu0 %v4565
    %4985 = vmatpush.msra.mxu0 %v4557
    %4986 = vmatpush.msra.mxu0 %v4549
    %4987 = vmatpush.msra.mxu0 %v4541
    %4988 = vmatpush.msra.mxu0 %v4533
    %4989 = vmatpush.msra.mxu0 %v4525
    %4990 = vmatpush.msra.mxu0 %v4517
    %4991 = vmatpush.msra.mxu0 %v4509
    %4992 = vmatpush.msra.mxu0 %v4501
    %4993 = vmatpush.msra.mxu0 %v4493
    %4994 = vmatpush.msra.mxu0 %v4485
    %4995 = vmatpush.msra.mxu0 %v4477
    %4996 = vmatpush.msra.mxu0 %v4469
    %4997 = vmatpush.msra.mxu0 %v4461
    %4998 = vmatpush.msra.mxu0 %v4453
    %4999 = vmatmul.f32.gmra.mxu0 %v1273
    %v5000 = vpop.f32.mrf.mxu0
    %v5001 = vadd.f32 %v4967, %v5000
    %5002 = vmatmul.f32.gmra.mxu0 %v1727
    %v5003 = vpop.f32.mrf.mxu0
    %v5004 = vadd.f32 %v4967, %v5003
    %5005 = vmatmul.f32.gmra.mxu0 %v2181
    %v5006 = vpop.f32.mrf.mxu0
    %v5007 = vadd.f32 %v4967, %v5006
    %5008 = vmatmul.f32.gmra.mxu0 %v2635
    %v5009 = vpop.f32.mrf.mxu0
    %v5010 = vadd.f32 %v4967, %v5009
    %5011 = vmatmul.f32.gmra.mxu0 %v3089
    %v5012 = vpop.f32.mrf.mxu0
    %v5013 = vadd.f32 %v4967, %v5012
    %5014 = vmatmul.f32.gmra.mxu0 %v3543
    %v5015 = vpop.f32.mrf.mxu0
    %v5016 = vadd.f32 %v4967, %v5015
    %5017 = vmatmul.f32.gmra.mxu0 %v3997
    %v5018 = vpop.f32.mrf.mxu0
    %v5019 = vadd.f32 %v4967, %v5018
    %5020 = vmatmul.f32.gmra.mxu0 %v4451
    %v5021 = vpop.f32.mrf.mxu0
    %v5022 = vadd.f32 %v4967, %v5021
    %5023 = vdwg.mxu0
    %5024 = vmatpush.msra.mxu0 %v4701
    %5025 = vmatpush.msra.mxu0 %v4693
    %5026 = vmatpush.msra.mxu0 %v4685
    %5027 = vmatpush.msra.mxu0 %v4677
    %5028 = vmatpush.msra.mxu0 %v4669
    %5029 = vmatpush.msra.mxu0 %v4661
    %5030 = vmatpush.msra.mxu0 %v4653
    %5031 = vmatpush.msra.mxu0 %v4645
    %5032 = vmatpush.msra.mxu0 %v4637
    %5033 = vmatpush.msra.mxu0 %v4629
    %5034 = vmatpush.msra.mxu0 %v4621
    %5035 = vmatpush.msra.mxu0 %v4613
    %5036 = vmatpush.msra.mxu0 %v4605
    %5037 = vmatpush.msra.mxu0 %v4597
    %5038 = vmatpush.msra.mxu0 %v4589
    %5039 = vmatpush.msra.mxu0 %v4581
    %5040 = vmatmul.f32.gmra.mxu0 %v4452
    %v5041 = vpop.f32.mrf.mxu0
    %v5042 = vadd.f32 %v5001, %v5041
    %5043 = vmatmul.f32.gmra.mxu0 %v3998
    %v5044 = vpop.f32.mrf.mxu0
    %v5045 = vadd.f32 %v5004, %v5044
    %5046 = vmatmul.f32.gmra.mxu0 %v3544
    %v5047 = vpop.f32.mrf.mxu0
    %v5048 = vadd.f32 %v5007, %v5047
    %5049 = vmatmul.f32.gmra.mxu0 %v3090
    %v5050 = vpop.f32.mrf.mxu0
    %v5051 = vadd.f32 %v5010, %v5050
    %5052 = vmatmul.f32.gmra.mxu0 %v2636
    %v5053 = vpop.f32.mrf.mxu0
    %v5054 = vadd.f32 %v5013, %v5053
    %5055 = vmatmul.f32.gmra.mxu0 %v2182
    %v5056 = vpop.f32.mrf.mxu0
    %v5057 = vadd.f32 %v5016, %v5056
    %5058 = vmatmul.f32.gmra.mxu0 %v1728
    %v5059 = vpop.f32.mrf.mxu0
    %v5060 = vadd.f32 %v5019, %v5059
    %5061 = vmatmul.f32.gmra.mxu0 %v1274
    %v5062 = vpop.f32.mrf.mxu0
    %v5063 = vadd.f32 %v5022, %v5062
    %5064 = vdwg.mxu0
    %5065 = vmatpush.msra.mxu0 %v4574
    %5066 = vmatpush.msra.mxu0 %v4566
    %5067 = vmatpush.msra.mxu0 %v4558
    %5068 = vmatpush.msra.mxu0 %v4550
    %5069 = vmatpush.msra.mxu0 %v4542
    %5070 = vmatpush.msra.mxu0 %v4534
    %5071 = vmatpush.msra.mxu0 %v4526
    %5072 = vmatpush.msra.mxu0 %v4518
    %5073 = vmatpush.msra.mxu0 %v4510
    %5074 = vmatpush.msra.mxu0 %v4502
    %5075 = vmatpush.msra.mxu0 %v4494
    %5076 = vmatpush.msra.mxu0 %v4486
    %5077 = vmatpush.msra.mxu0 %v4478
    %5078 = vmatpush.msra.mxu0 %v4470
    %5079 = vmatpush.msra.mxu0 %v4462
    %5080 = vmatpush.msra.mxu0 %v4454
    %5081 = vmatmul.f32.gmra.mxu0 %v1273
    %v5082 = vpop.f32.mrf.mxu0
    %v5083 = vadd.f32 %v4968, %v5082
    %5084 = vmatmul.f32.gmra.mxu0 %v1727
    %v5085 = vpop.f32.mrf.mxu0
    %v5086 = vadd.f32 %v4968, %v5085
    %5087 = vmatmul.f32.gmra.mxu0 %v2181
    %v5088 = vpop.f32.mrf.mxu0
    %v5089 = vadd.f32 %v4968, %v5088
    %5090 = vmatmul.f32.gmra.mxu0 %v2635
    %v5091 = vpop.f32.mrf.mxu0
    %v5092 = vadd.f32 %v4968, %v5091
    %5093 = vmatmul.f32.gmra.mxu0 %v3089
    %v5094 = vpop.f32.mrf.mxu0
    %v5095 = vadd.f32 %v4968, %v5094
    %5096 = vmatmul.f32.gmra.mxu0 %v3543
    %v5097 = vpop.f32.mrf.mxu0
    %v5098 = vadd.f32 %v4968, %v5097
    %5099 = vmatmul.f32.gmra.mxu0 %v3997
    %v5100 = vpop.f32.mrf.mxu0
    %v5101 = vadd.f32 %v4968, %v5100
    %5102 = vmatmul.f32.gmra.mxu0 %v4451
    %v5103 = vpop.f32.mrf.mxu0
    %v5104 = vadd.f32 %v4968, %v5103
    %5105 = vdwg.mxu0
    %5106 = vmatpush.msra.mxu0 %v4702
    %5107 = vmatpush.msra.mxu0 %v4694
    %5108 = vmatpush.msra.mxu0 %v4686
    %5109 = vmatpush.msra.mxu0 %v4678
    %5110 = vmatpush.msra.mxu0 %v4670
    %5111 = vmatpush.msra.mxu0 %v4662
    %5112 = vmatpush.msra.mxu0 %v4654
    %5113 = vmatpush.msra.mxu0 %v4646
    %5114 = vmatpush.msra.mxu0 %v4638
    %5115 = vmatpush.msra.mxu0 %v4630
    %5116 = vmatpush.msra.mxu0 %v4622
    %5117 = vmatpush.msra.mxu0 %v4614
    %5118 = vmatpush.msra.mxu0 %v4606
    %5119 = vmatpush.msra.mxu0 %v4598
    %5120 = vmatpush.msra.mxu0 %v4590
    %5121 = vmatpush.msra.mxu0 %v4582
    %5122 = vmatmul.f32.gmra.mxu0 %v4452
    %v5123 = vpop.f32.mrf.mxu0
    %v5124 = vadd.f32 %v5083, %v5123
    %5125 = vmatmul.f32.gmra.mxu0 %v3998
    %v5126 = vpop.f32.mrf.mxu0
    %v5127 = vadd.f32 %v5086, %v5126
    %5128 = vmatmul.f32.gmra.mxu0 %v3544
    %v5129 = vpop.f32.mrf.mxu0
    %v5130 = vadd.f32 %v5089, %v5129
    %5131 = vmatmul.f32.gmra.mxu0 %v3090
    %v5132 = vpop.f32.mrf.mxu0
    %v5133 = vadd.f32 %v5092, %v5132
    %5134 = vmatmul.f32.gmra.mxu0 %v2636
    %v5135 = vpop.f32.mrf.mxu0
    %v5136 = vadd.f32 %v5095, %v5135
    %5137 = vmatmul.f32.gmra.mxu0 %v2182
    %v5138 = vpop.f32.mrf.mxu0
    %v5139 = vadd.f32 %v5098, %v5138
    %5140 = vmatmul.f32.gmra.mxu0 %v1728
    %v5141 = vpop.f32.mrf.mxu0
    %v5142 = vadd.f32 %v5101, %v5141
    %5143 = vmatmul.f32.gmra.mxu0 %v1274
    %v5144 = vpop.f32.mrf.mxu0
    %v5145 = vadd.f32 %v5104, %v5144
    %5146 = vdwg.mxu0
    %5147 = vmatpush.msra.mxu0 %v4575
    %5148 = vmatpush.msra.mxu0 %v4567
    %5149 = vmatpush.msra.mxu0 %v4559
    %5150 = vmatpush.msra.mxu0 %v4551
    %5151 = vmatpush.msra.mxu0 %v4543
    %5152 = vmatpush.msra.mxu0 %v4535
    %5153 = vmatpush.msra.mxu0 %v4527
    %5154 = vmatpush.msra.mxu0 %v4519
    %5155 = vmatpush.msra.mxu0 %v4511
    %5156 = vmatpush.msra.mxu0 %v4503
    %5157 = vmatpush.msra.mxu0 %v4495
    %5158 = vmatpush.msra.mxu0 %v4487
    %5159 = vmatpush.msra.mxu0 %v4479
    %5160 = vmatpush.msra.mxu0 %v4471
    %5161 = vmatpush.msra.mxu0 %v4463
    %5162 = vmatpush.msra.mxu0 %v4455
    %5163 = vmatmul.f32.gmra.mxu0 %v1273
    %v5164 = vpop.f32.mrf.mxu0
    %v5165 = vadd.f32 %v4969, %v5164
    %5166 = vmatmul.f32.gmra.mxu0 %v1727
    %v5167 = vpop.f32.mrf.mxu0
    %v5168 = vadd.f32 %v4969, %v5167
    %5169 = vmatmul.f32.gmra.mxu0 %v2181
    %v5170 = vpop.f32.mrf.mxu0
    %v5171 = vadd.f32 %v4969, %v5170
    %5172 = vmatmul.f32.gmra.mxu0 %v2635
    %v5173 = vpop.f32.mrf.mxu0
    %v5174 = vadd.f32 %v4969, %v5173
    %5175 = vmatmul.f32.gmra.mxu0 %v3089
    %v5176 = vpop.f32.mrf.mxu0
    %v5177 = vadd.f32 %v4969, %v5176
    %5178 = vmatmul.f32.gmra.mxu0 %v3543
    %v5179 = vpop.f32.mrf.mxu0
    %v5180 = vadd.f32 %v4969, %v5179
    %5181 = vmatmul.f32.gmra.mxu0 %v3997
    %v5182 = vpop.f32.mrf.mxu0
    %v5183 = vadd.f32 %v4969, %v5182
    %5184 = vmatmul.f32.gmra.mxu0 %v4451
    %v5185 = vpop.f32.mrf.mxu0
    %v5186 = vadd.f32 %v4969, %v5185
    %5187 = vdwg.mxu0
    %5188 = vmatpush.msra.mxu0 %v4703
    %5189 = vmatpush.msra.mxu0 %v4695
    %5190 = vmatpush.msra.mxu0 %v4687
    %5191 = vmatpush.msra.mxu0 %v4679
    %5192 = vmatpush.msra.mxu0 %v4671
    %5193 = vmatpush.msra.mxu0 %v4663
    %5194 = vmatpush.msra.mxu0 %v4655
    %5195 = vmatpush.msra.mxu0 %v4647
    %5196 = vmatpush.msra.mxu0 %v4639
    %5197 = vmatpush.msra.mxu0 %v4631
    %5198 = vmatpush.msra.mxu0 %v4623
    %5199 = vmatpush.msra.mxu0 %v4615
    %5200 = vmatpush.msra.mxu0 %v4607
    %5201 = vmatpush.msra.mxu0 %v4599
    %5202 = vmatpush.msra.mxu0 %v4591
    %5203 = vmatpush.msra.mxu0 %v4583
    %5204 = vmatmul.f32.gmra.mxu0 %v4452
    %v5205 = vpop.f32.mrf.mxu0
    %v5206 = vadd.f32 %v5165, %v5205
    %5207 = vmatmul.f32.gmra.mxu0 %v3998
    %v5208 = vpop.f32.mrf.mxu0
    %v5209 = vadd.f32 %v5168, %v5208
    %5210 = vmatmul.f32.gmra.mxu0 %v3544
    %v5211 = vpop.f32.mrf.mxu0
    %v5212 = vadd.f32 %v5171, %v5211
    %5213 = vmatmul.f32.gmra.mxu0 %v3090
    %v5214 = vpop.f32.mrf.mxu0
    %v5215 = vadd.f32 %v5174, %v5214
    %5216 = vmatmul.f32.gmra.mxu0 %v2636
    %v5217 = vpop.f32.mrf.mxu0
    %v5218 = vadd.f32 %v5177, %v5217
    %5219 = vmatmul.f32.gmra.mxu0 %v2182
    %v5220 = vpop.f32.mrf.mxu0
    %v5221 = vadd.f32 %v5180, %v5220
    %5222 = vmatmul.f32.gmra.mxu0 %v1728
    %v5223 = vpop.f32.mrf.mxu0
    %v5224 = vadd.f32 %v5183, %v5223
    %5225 = vmatmul.f32.gmra.mxu0 %v1274
    %v5226 = vpop.f32.mrf.mxu0
    %v5227 = vadd.f32 %v5186, %v5226
    %5228 = vdwg.mxu0
    %5229 = vmatpush.msra.mxu0 %v4576
    %5230 = vmatpush.msra.mxu0 %v4568
    %5231 = vmatpush.msra.mxu0 %v4560
    %5232 = vmatpush.msra.mxu0 %v4552
    %5233 = vmatpush.msra.mxu0 %v4544
    %5234 = vmatpush.msra.mxu0 %v4536
    %5235 = vmatpush.msra.mxu0 %v4528
    %5236 = vmatpush.msra.mxu0 %v4520
    %5237 = vmatpush.msra.mxu0 %v4512
    %5238 = vmatpush.msra.mxu0 %v4504
    %5239 = vmatpush.msra.mxu0 %v4496
    %5240 = vmatpush.msra.mxu0 %v4488
    %5241 = vmatpush.msra.mxu0 %v4480
    %5242 = vmatpush.msra.mxu0 %v4472
    %5243 = vmatpush.msra.mxu0 %v4464
    %5244 = vmatpush.msra.mxu0 %v4456
    %5245 = vmatmul.f32.gmra.mxu0 %v1273
    %v5246 = vpop.f32.mrf.mxu0
    %v5247 = vadd.f32 %v4970, %v5246
    %5248 = vmatmul.f32.gmra.mxu0 %v1727
    %v5249 = vpop.f32.mrf.mxu0
    %v5250 = vadd.f32 %v4970, %v5249
    %5251 = vmatmul.f32.gmra.mxu0 %v2181
    %v5252 = vpop.f32.mrf.mxu0
    %v5253 = vadd.f32 %v4970, %v5252
    %5254 = vmatmul.f32.gmra.mxu0 %v2635
    %v5255 = vpop.f32.mrf.mxu0
    %v5256 = vadd.f32 %v4970, %v5255
    %5257 = vmatmul.f32.gmra.mxu0 %v3089
    %v5258 = vpop.f32.mrf.mxu0
    %v5259 = vadd.f32 %v4970, %v5258
    %5260 = vmatmul.f32.gmra.mxu0 %v3543
    %v5261 = vpop.f32.mrf.mxu0
    %v5262 = vadd.f32 %v4970, %v5261
    %5263 = vmatmul.f32.gmra.mxu0 %v3997
    %v5264 = vpop.f32.mrf.mxu0
    %v5265 = vadd.f32 %v4970, %v5264
    %5266 = vmatmul.f32.gmra.mxu0 %v4451
    %v5267 = vpop.f32.mrf.mxu0
    %v5268 = vadd.f32 %v4970, %v5267
    %5269 = vdwg.mxu0
    %5270 = vmatpush.msra.mxu0 %v4704
    %5271 = vmatpush.msra.mxu0 %v4696
    %5272 = vmatpush.msra.mxu0 %v4688
    %5273 = vmatpush.msra.mxu0 %v4680
    %5274 = vmatpush.msra.mxu0 %v4672
    %5275 = vmatpush.msra.mxu0 %v4664
    %5276 = vmatpush.msra.mxu0 %v4656
    %5277 = vmatpush.msra.mxu0 %v4648
    %5278 = vmatpush.msra.mxu0 %v4640
    %5279 = vmatpush.msra.mxu0 %v4632
    %5280 = vmatpush.msra.mxu0 %v4624
    %5281 = vmatpush.msra.mxu0 %v4616
    %5282 = vmatpush.msra.mxu0 %v4608
    %5283 = vmatpush.msra.mxu0 %v4600
    %5284 = vmatpush.msra.mxu0 %v4592
    %5285 = vmatpush.msra.mxu0 %v4584
    %5286 = vmatmul.f32.gmra.mxu0 %v4452
    %v5287 = vpop.f32.mrf.mxu0
    %v5288 = vadd.f32 %v5247, %v5287
    %5289 = vmatmul.f32.gmra.mxu0 %v3998
    %v5290 = vpop.f32.mrf.mxu0
    %v5291 = vadd.f32 %v5250, %v5290
    %5292 = vmatmul.f32.gmra.mxu0 %v3544
    %v5293 = vpop.f32.mrf.mxu0
    %v5294 = vadd.f32 %v5253, %v5293
    %5295 = vmatmul.f32.gmra.mxu0 %v3090
    %v5296 = vpop.f32.mrf.mxu0
    %v5297 = vadd.f32 %v5256, %v5296
    %5298 = vmatmul.f32.gmra.mxu0 %v2636
    %v5299 = vpop.f32.mrf.mxu0
    %v5300 = vadd.f32 %v5259, %v5299
    %5301 = vmatmul.f32.gmra.mxu0 %v2182
    %v5302 = vpop.f32.mrf.mxu0
    %v5303 = vadd.f32 %v5262, %v5302
    %5304 = vmatmul.f32.gmra.mxu0 %v1728
    %v5305 = vpop.f32.mrf.mxu0
    %v5306 = vadd.f32 %v5265, %v5305
    %5307 = vmatmul.f32.gmra.mxu0 %v1274
    %v5308 = vpop.f32.mrf.mxu0
    %v5309 = vadd.f32 %v5268, %v5308
    %5310 = vdwg.mxu0
    %5311 = vmatpush.msra.mxu0 %v4577
    %5312 = vmatpush.msra.mxu0 %v4569
    %5313 = vmatpush.msra.mxu0 %v4561
    %5314 = vmatpush.msra.mxu0 %v4553
    %5315 = vmatpush.msra.mxu0 %v4545
    %5316 = vmatpush.msra.mxu0 %v4537
    %5317 = vmatpush.msra.mxu0 %v4529
    %5318 = vmatpush.msra.mxu0 %v4521
    %5319 = vmatpush.msra.mxu0 %v4513
    %5320 = vmatpush.msra.mxu0 %v4505
    %5321 = vmatpush.msra.mxu0 %v4497
    %5322 = vmatpush.msra.mxu0 %v4489
    %5323 = vmatpush.msra.mxu0 %v4481
    %5324 = vmatpush.msra.mxu0 %v4473
    %5325 = vmatpush.msra.mxu0 %v4465
    %5326 = vmatpush.msra.mxu0 %v4457
    %5327 = vmatmul.f32.gmra.mxu0 %v1273
    %v5328 = vpop.f32.mrf.mxu0
    %v5329 = vadd.f32 %v4971, %v5328
    %5330 = vmatmul.f32.gmra.mxu0 %v1727
    %v5331 = vpop.f32.mrf.mxu0
    %v5332 = vadd.f32 %v4971, %v5331
    %5333 = vmatmul.f32.gmra.mxu0 %v2181
    %v5334 = vpop.f32.mrf.mxu0
    %v5335 = vadd.f32 %v4971, %v5334
    %5336 = vmatmul.f32.gmra.mxu0 %v2635
    %v5337 = vpop.f32.mrf.mxu0
    %v5338 = vadd.f32 %v4971, %v5337
    %5339 = vmatmul.f32.gmra.mxu0 %v3089
    %v5340 = vpop.f32.mrf.mxu0
    %v5341 = vadd.f32 %v4971, %v5340
    %5342 = vmatmul.f32.gmra.mxu0 %v3543
    %v5343 = vpop.f32.mrf.mxu0
    %v5344 = vadd.f32 %v4971, %v5343
    %5345 = vmatmul.f32.gmra.mxu0 %v3997
    %v5346 = vpop.f32.mrf.mxu0
    %v5347 = vadd.f32 %v4971, %v5346
    %5348 = vmatmul.f32.gmra.mxu0 %v4451
    %v5349 = vpop.f32.mrf.mxu0
    %v5350 = vadd.f32 %v4971, %v5349
    %5351 = vdwg.mxu0
    %5352 = vmatpush.msra.mxu0 %v4705
    %5353 = vmatpush.msra.mxu0 %v4697
    %5354 = vmatpush.msra.mxu0 %v4689
    %5355 = vmatpush.msra.mxu0 %v4681
    %5356 = vmatpush.msra.mxu0 %v4673
    %5357 = vmatpush.msra.mxu0 %v4665
    %5358 = vmatpush.msra.mxu0 %v4657
    %5359 = vmatpush.msra.mxu0 %v4649
    %5360 = vmatpush.msra.mxu0 %v4641
    %5361 = vmatpush.msra.mxu0 %v4633
    %5362 = vmatpush.msra.mxu0 %v4625
    %5363 = vmatpush.msra.mxu0 %v4617
    %5364 = vmatpush.msra.mxu0 %v4609
    %5365 = vmatpush.msra.mxu0 %v4601
    %5366 = vmatpush.msra.mxu0 %v4593
    %5367 = vmatpush.msra.mxu0 %v4585
    %5368 = vmatmul.f32.gmra.mxu0 %v4452
    %v5369 = vpop.f32.mrf.mxu0
    %v5370 = vadd.f32 %v5329, %v5369
    %5371 = vmatmul.f32.gmra.mxu0 %v3998
    %v5372 = vpop.f32.mrf.mxu0
    %v5373 = vadd.f32 %v5332, %v5372
    %5374 = vmatmul.f32.gmra.mxu0 %v3544
    %v5375 = vpop.f32.mrf.mxu0
    %v5376 = vadd.f32 %v5335, %v5375
    %5377 = vmatmul.f32.gmra.mxu0 %v3090
    %v5378 = vpop.f32.mrf.mxu0
    %v5379 = vadd.f32 %v5338, %v5378
    %5380 = vmatmul.f32.gmra.mxu0 %v2636
    %v5381 = vpop.f32.mrf.mxu0
    %v5382 = vadd.f32 %v5341, %v5381
    %5383 = vmatmul.f32.gmra.mxu0 %v2182
    %v5384 = vpop.f32.mrf.mxu0
    %v5385 = vadd.f32 %v5344, %v5384
    %5386 = vmatmul.f32.gmra.mxu0 %v1728
    %v5387 = vpop.f32.mrf.mxu0
    %v5388 = vadd.f32 %v5347, %v5387
    %5389 = vmatmul.f32.gmra.mxu0 %v1274
    %v5390 = vpop.f32.mrf.mxu0
    %v5391 = vadd.f32 %v5350, %v5390
    %5392 = vdwg.mxu0
    %5393 = vmatpush.msra.mxu0 %v4578
    %5394 = vmatpush.msra.mxu0 %v4570
    %5395 = vmatpush.msra.mxu0 %v4562
    %5396 = vmatpush.msra.mxu0 %v4554
    %5397 = vmatpush.msra.mxu0 %v4546
    %5398 = vmatpush.msra.mxu0 %v4538
    %5399 = vmatpush.msra.mxu0 %v4530
    %5400 = vmatpush.msra.mxu0 %v4522
    %5401 = vmatpush.msra.mxu0 %v4514
    %5402 = vmatpush.msra.mxu0 %v4506
    %5403 = vmatpush.msra.mxu0 %v4498
    %5404 = vmatpush.msra.mxu0 %v4490
    %5405 = vmatpush.msra.mxu0 %v4482
    %5406 = vmatpush.msra.mxu0 %v4474
    %5407 = vmatpush.msra.mxu0 %v4466
    %5408 = vmatpush.msra.mxu0 %v4458
    %5409 = vmatmul.f32.gmra.mxu0 %v1273
    %v5410 = vpop.f32.mrf.mxu0
    %v5411 = vadd.f32 %v4972, %v5410
    %5412 = vmatmul.f32.gmra.mxu0 %v1727
    %v5413 = vpop.f32.mrf.mxu0
    %v5414 = vadd.f32 %v4972, %v5413
    %5415 = vmatmul.f32.gmra.mxu0 %v2181
    %v5416 = vpop.f32.mrf.mxu0
    %v5417 = vadd.f32 %v4972, %v5416
    %5418 = vmatmul.f32.gmra.mxu0 %v2635
    %v5419 = vpop.f32.mrf.mxu0
    %v5420 = vadd.f32 %v4972, %v5419
    %5421 = vmatmul.f32.gmra.mxu0 %v3089
    %v5422 = vpop.f32.mrf.mxu0
    %v5423 = vadd.f32 %v4972, %v5422
    %5424 = vmatmul.f32.gmra.mxu0 %v3543
    %v5425 = vpop.f32.mrf.mxu0
    %v5426 = vadd.f32 %v4972, %v5425
    %5427 = vmatmul.f32.gmra.mxu0 %v3997
    %v5428 = vpop.f32.mrf.mxu0
    %v5429 = vadd.f32 %v4972, %v5428
    %5430 = vmatmul.f32.gmra.mxu0 %v4451
    %v5431 = vpop.f32.mrf.mxu0
    %v5432 = vadd.f32 %v4972, %v5431
    %5433 = vdwg.mxu0
    %5434 = vmatpush.msra.mxu0 %v4706
    %5435 = vmatpush.msra.mxu0 %v4698
    %5436 = vmatpush.msra.mxu0 %v4690
    %5437 = vmatpush.msra.mxu0 %v4682
    %5438 = vmatpush.msra.mxu0 %v4674
    %5439 = vmatpush.msra.mxu0 %v4666
    %5440 = vmatpush.msra.mxu0 %v4658
    %5441 = vmatpush.msra.mxu0 %v4650
    %5442 = vmatpush.msra.mxu0 %v4642
    %5443 = vmatpush.msra.mxu0 %v4634
    %5444 = vmatpush.msra.mxu0 %v4626
    %5445 = vmatpush.msra.mxu0 %v4618
    %5446 = vmatpush.msra.mxu0 %v4610
    %5447 = vmatpush.msra.mxu0 %v4602
    %5448 = vmatpush.msra.mxu0 %v4594
    %5449 = vmatpush.msra.mxu0 %v4586
    %5450 = vmatmul.f32.gmra.mxu0 %v4452
    %v5451 = vpop.f32.mrf.mxu0
    %v5452 = vadd.f32 %v5411, %v5451
    %5453 = vmatmul.f32.gmra.mxu0 %v3998
    %v5454 = vpop.f32.mrf.mxu0
    %v5455 = vadd.f32 %v5414, %v5454
    %5456 = vmatmul.f32.gmra.mxu0 %v3544
    %v5457 = vpop.f32.mrf.mxu0
    %v5458 = vadd.f32 %v5417, %v5457
    %5459 = vmatmul.f32.gmra.mxu0 %v3090
    %v5460 = vpop.f32.mrf.mxu0
    %v5461 = vadd.f32 %v5420, %v5460
    %5462 = vmatmul.f32.gmra.mxu0 %v2636
    %v5463 = vpop.f32.mrf.mxu0
    %v5464 = vadd.f32 %v5423, %v5463
    %5465 = vmatmul.f32.gmra.mxu0 %v2182
    %v5466 = vpop.f32.mrf.mxu0
    %v5467 = vadd.f32 %v5426, %v5466
    %5468 = vmatmul.f32.gmra.mxu0 %v1728
    %v5469 = vpop.f32.mrf.mxu0
    %v5470 = vadd.f32 %v5429, %v5469
    %5471 = vmatmul.f32.gmra.mxu0 %v1274
    %v5472 = vpop.f32.mrf.mxu0
    %v5473 = vadd.f32 %v5432, %v5472
    %5474 = vdwg.mxu0
    %5475 = vmatpush.msra.mxu0 %v4579
    %5476 = vmatpush.msra.mxu0 %v4571
    %5477 = vmatpush.msra.mxu0 %v4563
    %5478 = vmatpush.msra.mxu0 %v4555
    %5479 = vmatpush.msra.mxu0 %v4547
    %5480 = vmatpush.msra.mxu0 %v4539
    %5481 = vmatpush.msra.mxu0 %v4531
    %5482 = vmatpush.msra.mxu0 %v4523
    %5483 = vmatpush.msra.mxu0 %v4515
    %5484 = vmatpush.msra.mxu0 %v4507
    %5485 = vmatpush.msra.mxu0 %v4499
    %5486 = vmatpush.msra.mxu0 %v4491
    %5487 = vmatpush.msra.mxu0 %v4483
    %5488 = vmatpush.msra.mxu0 %v4475
    %5489 = vmatpush.msra.mxu0 %v4467
    %5490 = vmatpush.msra.mxu0 %v4459
    %5491 = vmatmul.f32.gmra.mxu0 %v1273
    %v5492 = vpop.f32.mrf.mxu0
    %v5493 = vadd.f32 %v4973, %v5492
    %5494 = vmatmul.f32.gmra.mxu0 %v1727
    %v5495 = vpop.f32.mrf.mxu0
    %v5496 = vadd.f32 %v4973, %v5495
    %5497 = vmatmul.f32.gmra.mxu0 %v2181
    %v5498 = vpop.f32.mrf.mxu0
    %v5499 = vadd.f32 %v4973, %v5498
    %5500 = vmatmul.f32.gmra.mxu0 %v2635
    %v5501 = vpop.f32.mrf.mxu0
    %v5502 = vadd.f32 %v4973, %v5501
    %5503 = vmatmul.f32.gmra.mxu0 %v3089
    %v5504 = vpop.f32.mrf.mxu0
    %v5505 = vadd.f32 %v4973, %v5504
    %5506 = vmatmul.f32.gmra.mxu0 %v3543
    %v5507 = vpop.f32.mrf.mxu0
    %v5508 = vadd.f32 %v4973, %v5507
    %5509 = vmatmul.f32.gmra.mxu0 %v3997
    %v5510 = vpop.f32.mrf.mxu0
    %v5511 = vadd.f32 %v4973, %v5510
    %5512 = vmatmul.f32.gmra.mxu0 %v4451
    %v5513 = vpop.f32.mrf.mxu0
    %v5514 = vadd.f32 %v4973, %v5513
    %5515 = vdwg.mxu0
    %5516 = vmatpush.msra.mxu0 %v4707
    %5517 = vmatpush.msra.mxu0 %v4699
    %5518 = vmatpush.msra.mxu0 %v4691
    %5519 = vmatpush.msra.mxu0 %v4683
    %5520 = vmatpush.msra.mxu0 %v4675
    %5521 = vmatpush.msra.mxu0 %v4667
    %5522 = vmatpush.msra.mxu0 %v4659
    %5523 = vmatpush.msra.mxu0 %v4651
    %5524 = vmatpush.msra.mxu0 %v4643
    %5525 = vmatpush.msra.mxu0 %v4635
    %5526 = vmatpush.msra.mxu0 %v4627
    %5527 = vmatpush.msra.mxu0 %v4619
    %5528 = vmatpush.msra.mxu0 %v4611
    %5529 = vmatpush.msra.mxu0 %v4603
    %5530 = vmatpush.msra.mxu0 %v4595
    %5531 = vmatpush.msra.mxu0 %v4587
    %5532 = vmatmul.f32.gmra.mxu0 %v4452
    %v5533 = vpop.f32.mrf.mxu0
    %v5534 = vadd.f32 %v5493, %v5533
    %5535 = vmatmul.f32.gmra.mxu0 %v3998
    %v5536 = vpop.f32.mrf.mxu0
    %v5537 = vadd.f32 %v5496, %v5536
    %5538 = vmatmul.f32.gmra.mxu0 %v3544
    %v5539 = vpop.f32.mrf.mxu0
    %v5540 = vadd.f32 %v5499, %v5539
    %5541 = vmatmul.f32.gmra.mxu0 %v3090
    %v5542 = vpop.f32.mrf.mxu0
    %v5543 = vadd.f32 %v5502, %v5542
    %5544 = vmatmul.f32.gmra.mxu0 %v2636
    %v5545 = vpop.f32.mrf.mxu0
    %v5546 = vadd.f32 %v5505, %v5545
    %5547 = vmatmul.f32.gmra.mxu0 %v2182
    %v5548 = vpop.f32.mrf.mxu0
    %v5549 = vadd.f32 %v5508, %v5548
    %5550 = vmatmul.f32.gmra.mxu0 %v1728
    %v5551 = vpop.f32.mrf.mxu0
    %v5552 = vadd.f32 %v5511, %v5551
    %5553 = vmatmul.f32.gmra.mxu0 %v1274
    %v5554 = vpop.f32.mrf.mxu0
    %v5555 = vadd.f32 %v5514, %v5554
    %5556 = vdwg.mxu0
    %5557 = vmatpush.msra.mxu0 %v4580
    %5558 = vmatpush.msra.mxu0 %v4572
    %5559 = vmatpush.msra.mxu0 %v4564
    %5560 = vmatpush.msra.mxu0 %v4556
    %5561 = vmatpush.msra.mxu0 %v4548
    %5562 = vmatpush.msra.mxu0 %v4540
    %5563 = vmatpush.msra.mxu0 %v4532
    %5564 = vmatpush.msra.mxu0 %v4524
    %5565 = vmatpush.msra.mxu0 %v4516
    %5566 = vmatpush.msra.mxu0 %v4508
    %5567 = vmatpush.msra.mxu0 %v4500
    %5568 = vmatpush.msra.mxu0 %v4492
    %5569 = vmatpush.msra.mxu0 %v4484
    %5570 = vmatpush.msra.mxu0 %v4476
    %5571 = vmatpush.msra.mxu0 %v4468
    %5572 = vmatpush.msra.mxu0 %v4460
    %5573 = vmatmul.f32.gmra.mxu0 %v1273
    %v5574 = vpop.f32.mrf.mxu0
    %v5575 = vadd.f32 %v4974, %v5574
    %5576 = vmatmul.f32.gmra.mxu0 %v1727
    %v5577 = vpop.f32.mrf.mxu0
    %v5578 = vadd.f32 %v4974, %v5577
    %5579 = vmatmul.f32.gmra.mxu0 %v2181
    %v5580 = vpop.f32.mrf.mxu0
    %v5581 = vadd.f32 %v4974, %v5580
    %5582 = vmatmul.f32.gmra.mxu0 %v2635
    %v5583 = vpop.f32.mrf.mxu0
    %v5584 = vadd.f32 %v4974, %v5583
    %5585 = vmatmul.f32.gmra.mxu0 %v3089
    %v5586 = vpop.f32.mrf.mxu0
    %v5587 = vadd.f32 %v4974, %v5586
    %5588 = vmatmul.f32.gmra.mxu0 %v3543
    %v5589 = vpop.f32.mrf.mxu0
    %v5590 = vadd.f32 %v4974, %v5589
    %5591 = vmatmul.f32.gmra.mxu0 %v3997
    %v5592 = vpop.f32.mrf.mxu0
    %v5593 = vadd.f32 %v4974, %v5592
    %5594 = vmatmul.f32.gmra.mxu0 %v4451
    %v5595 = vpop.f32.mrf.mxu0
    %v5596 = vadd.f32 %v4974, %v5595
    %5597 = vdwg.mxu0
    %5598 = vmatpush.msra.mxu0 %v4708
    %5599 = vmatpush.msra.mxu0 %v4700
    %5600 = vmatpush.msra.mxu0 %v4692
    %5601 = vmatpush.msra.mxu0 %v4684
    %5602 = vmatpush.msra.mxu0 %v4676
    %5603 = vmatpush.msra.mxu0 %v4668
    %5604 = vmatpush.msra.mxu0 %v4660
    %5605 = vmatpush.msra.mxu0 %v4652
    %5606 = vmatpush.msra.mxu0 %v4644
    %5607 = vmatpush.msra.mxu0 %v4636
    %5608 = vmatpush.msra.mxu0 %v4628
    %5609 = vmatpush.msra.mxu0 %v4620
    %5610 = vmatpush.msra.mxu0 %v4612
    %5611 = vmatpush.msra.mxu0 %v4604
    %5612 = vmatpush.msra.mxu0 %v4596
    %5613 = vmatpush.msra.mxu0 %v4588
    %5614 = vmatmul.f32.gmra.mxu0 %v4452
    %v5615 = vpop.f32.mrf.mxu0
    %v5616 = vadd.f32 %v5575, %v5615
    %5617 = vmatmul.f32.gmra.mxu0 %v3998
    %v5618 = vpop.f32.mrf.mxu0
    %v5619 = vadd.f32 %v5578, %v5618
    %5620 = vmatmul.f32.gmra.mxu0 %v3544
    %v5621 = vpop.f32.mrf.mxu0
    %v5622 = vadd.f32 %v5581, %v5621
    %5623 = vmatmul.f32.gmra.mxu0 %v3090
    %v5624 = vpop.f32.mrf.mxu0
    %v5625 = vadd.f32 %v5584, %v5624
    %5626 = vmatmul.f32.gmra.mxu0 %v2636
    %v5627 = vpop.f32.mrf.mxu0
    %v5628 = vadd.f32 %v5587, %v5627
    %5629 = vmatmul.f32.gmra.mxu0 %v2182
    %v5630 = vpop.f32.mrf.mxu0
    %v5631 = vadd.f32 %v5590, %v5630
    %5632 = vmatmul.f32.gmra.mxu0 %v1728
    %v5633 = vpop.f32.mrf.mxu0
    %v5634 = vadd.f32 %v5593, %v5633
    %5635 = vmatmul.f32.gmra.mxu0 %v1274
    %v5636 = vpop.f32.mrf.mxu0
    %v5637 = vadd.f32 %v5596, %v5636
    %5638 = vdwg.mxu0
    %5639 = vmatpush.msra.mxu0 %v4830
    %5640 = vmatpush.msra.mxu0 %v4822
    %5641 = vmatpush.msra.mxu0 %v4814
    %5642 = vmatpush.msra.mxu0 %v4806
    %5643 = vmatpush.msra.mxu0 %v4798
    %5644 = vmatpush.msra.mxu0 %v4790
    %5645 = vmatpush.msra.mxu0 %v4782
    %5646 = vmatpush.msra.mxu0 %v4774
    %5647 = vmatpush.msra.mxu0 %v4766
    %5648 = vmatpush.msra.mxu0 %v4758
    %5649 = vmatpush.msra.mxu0 %v4750
    %5650 = vmatpush.msra.mxu0 %v4742
    %5651 = vmatpush.msra.mxu0 %v4734
    %5652 = vmatpush.msra.mxu0 %v4726
    %5653 = vmatpush.msra.mxu0 %v4718
    %5654 = vmatpush.msra.mxu0 %v4710
    %5655 = vmatmul.f32.gmra.mxu0 0.0
    %v5656 = vpop.f32.mrf.mxu0
    %v5657 = vadd.f32 0.0, %v5656
    %5658 = vdwg.mxu0
    %5659 = vmatpush.msra.mxu0 %v4958
    %5660 = vmatpush.msra.mxu0 %v4950
    %5661 = vmatpush.msra.mxu0 %v4942
    %5662 = vmatpush.msra.mxu0 %v4934
    %5663 = vmatpush.msra.mxu0 %v4926
    %5664 = vmatpush.msra.mxu0 %v4918
    %5665 = vmatpush.msra.mxu0 %v4910
    %5666 = vmatpush.msra.mxu0 %v4902
    %5667 = vmatpush.msra.mxu0 %v4894
    %5668 = vmatpush.msra.mxu0 %v4886
    %5669 = vmatpush.msra.mxu0 %v4878
    %5670 = vmatpush.msra.mxu0 %v4870
    %5671 = vmatpush.msra.mxu0 %v4862
    %5672 = vmatpush.msra.mxu0 %v4854
    %5673 = vmatpush.msra.mxu0 %v4846
    %5674 = vmatpush.msra.mxu0 %v4838
    %5675 = vmatmul.f32.gmra.mxu0 0.0
    %v5676 = vpop.f32.mrf.mxu0
    %v5677 = vadd.f32 %v5657, %v5676
    %5678 = vdwg.mxu0
    %5679 = vmatpush.msra.mxu0 %v4831
    %5680 = vmatpush.msra.mxu0 %v4823
    %5681 = vmatpush.msra.mxu0 %v4815
    %5682 = vmatpush.msra.mxu0 %v4807
    %5683 = vmatpush.msra.mxu0 %v4799
    %5684 = vmatpush.msra.mxu0 %v4791
    %5685 = vmatpush.msra.mxu0 %v4783
    %5686 = vmatpush.msra.mxu0 %v4775
    %5687 = vmatpush.msra.mxu0 %v4767
    %5688 = vmatpush.msra.mxu0 %v4759
    %5689 = vmatpush.msra.mxu0 %v4751
    %5690 = vmatpush.msra.mxu0 %v4743
    %5691 = vmatpush.msra.mxu0 %v4735
    %5692 = vmatpush.msra.mxu0 %v4727
    %5693 = vmatpush.msra.mxu0 %v4719
    %5694 = vmatpush.msra.mxu0 %v4711
    %5695 = vmatmul.f32.gmra.mxu0 0.0
    %v5696 = vpop.f32.mrf.mxu0
    %v5697 = vadd.f32 0.0, %v5696
    %5698 = vdwg.mxu0
    %5699 = vmatpush.msra.mxu0 %v4959
    %5700 = vmatpush.msra.mxu0 %v4951
    %5701 = vmatpush.msra.mxu0 %v4943
    %5702 = vmatpush.msra.mxu0 %v4935
    %5703 = vmatpush.msra.mxu0 %v4927
    %5704 = vmatpush.msra.mxu0 %v4919
    %5705 = vmatpush.msra.mxu0 %v4911
    %5706 = vmatpush.msra.mxu0 %v4903
    %5707 = vmatpush.msra.mxu0 %v4895
    %5708 = vmatpush.msra.mxu0 %v4887
    %5709 = vmatpush.msra.mxu0 %v4879
    %5710 = vmatpush.msra.mxu0 %v4871
    %5711 = vmatpush.msra.mxu0 %v4863
    %5712 = vmatpush.msra.mxu0 %v4855
    %5713 = vmatpush.msra.mxu0 %v4847
    %5714 = vmatpush.msra.mxu0 %v4839
    %5715 = vmatmul.f32.gmra.mxu0 0.0
    %v5716 = vpop.f32.mrf.mxu0
    %v5717 = vadd.f32 %v5697, %v5716
    %5718 = vdwg.mxu0
    %5719 = vmatpush.msra.mxu0 %v4832
    %5720 = vmatpush.msra.mxu0 %v4824
    %5721 = vmatpush.msra.mxu0 %v4816
    %5722 = vmatpush.msra.mxu0 %v4808
    %5723 = vmatpush.msra.mxu0 %v4800
    %5724 = vmatpush.msra.mxu0 %v4792
    %5725 = vmatpush.msra.mxu0 %v4784
    %5726 = vmatpush.msra.mxu0 %v4776
    %5727 = vmatpush.msra.mxu0 %v4768
    %5728 = vmatpush.msra.mxu0 %v4760
    %5729 = vmatpush.msra.mxu0 %v4752
    %5730 = vmatpush.msra.mxu0 %v4744
    %5731 = vmatpush.msra.mxu0 %v4736
    %5732 = vmatpush.msra.mxu0 %v4728
    %5733 = vmatpush.msra.mxu0 %v4720
    %5734 = vmatpush.msra.mxu0 %v4712
    %5735 = vmatmul.f32.gmra.mxu0 0.0
    %v5736 = vpop.f32.mrf.mxu0
    %v5737 = vadd.f32 0.0, %v5736
    %5738 = vdwg.mxu0
    %5739 = vmatpush.msra.mxu0 %v4960
    %5740 = vmatpush.msra.mxu0 %v4952
    %5741 = vmatpush.msra.mxu0 %v4944
    %5742 = vmatpush.msra.mxu0 %v4936
    %5743 = vmatpush.msra.mxu0 %v4928
    %5744 = vmatpush.msra.mxu0 %v4920
    %5745 = vmatpush.msra.mxu0 %v4912
    %5746 = vmatpush.msra.mxu0 %v4904
    %5747 = vmatpush.msra.mxu0 %v4896
    %5748 = vmatpush.msra.mxu0 %v4888
    %5749 = vmatpush.msra.mxu0 %v4880
    %5750 = vmatpush.msra.mxu0 %v4872
    %5751 = vmatpush.msra.mxu0 %v4864
    %5752 = vmatpush.msra.mxu0 %v4856
    %5753 = vmatpush.msra.mxu0 %v4848
    %5754 = vmatpush.msra.mxu0 %v4840
    %5755 = vmatmul.f32.gmra.mxu0 0.0
    %v5756 = vpop.f32.mrf.mxu0
    %v5757 = vadd.f32 %v5737, %v5756
    %5758 = vdwg.mxu0
    %5759 = vmatpush.msra.mxu0 %v4833
    %5760 = vmatpush.msra.mxu0 %v4825
    %5761 = vmatpush.msra.mxu0 %v4817
    %5762 = vmatpush.msra.mxu0 %v4809
    %5763 = vmatpush.msra.mxu0 %v4801
    %5764 = vmatpush.msra.mxu0 %v4793
    %5765 = vmatpush.msra.mxu0 %v4785
    %5766 = vmatpush.msra.mxu0 %v4777
    %5767 = vmatpush.msra.mxu0 %v4769
    %5768 = vmatpush.msra.mxu0 %v4761
    %5769 = vmatpush.msra.mxu0 %v4753
    %5770 = vmatpush.msra.mxu0 %v4745
    %5771 = vmatpush.msra.mxu0 %v4737
    %5772 = vmatpush.msra.mxu0 %v4729
    %5773 = vmatpush.msra.mxu0 %v4721
    %5774 = vmatpush.msra.mxu0 %v4713
    %5775 = vmatmul.f32.gmra.mxu0 0.0
    %v5776 = vpop.f32.mrf.mxu0
    %v5777 = vadd.f32 0.0, %v5776
    %5778 = vdwg.mxu0
    %5779 = vmatpush.msra.mxu0 %v4961
    %5780 = vmatpush.msra.mxu0 %v4953
    %5781 = vmatpush.msra.mxu0 %v4945
    %5782 = vmatpush.msra.mxu0 %v4937
    %5783 = vmatpush.msra.mxu0 %v4929
    %5784 = vmatpush.msra.mxu0 %v4921
    %5785 = vmatpush.msra.mxu0 %v4913
    %5786 = vmatpush.msra.mxu0 %v4905
    %5787 = vmatpush.msra.mxu0 %v4897
    %5788 = vmatpush.msra.mxu0 %v4889
    %5789 = vmatpush.msra.mxu0 %v4881
    %5790 = vmatpush.msra.mxu0 %v4873
    %5791 = vmatpush.msra.mxu0 %v4865
    %5792 = vmatpush.msra.mxu0 %v4857
    %5793 = vmatpush.msra.mxu0 %v4849
    %5794 = vmatpush.msra.mxu0 %v4841
    %5795 = vmatmul.f32.gmra.mxu0 0.0
    %v5796 = vpop.f32.mrf.mxu0
    %v5797 = vadd.f32 %v5777, %v5796
    %5798 = vdwg.mxu0
    %5799 = vmatpush.msra.mxu0 %v4834
    %5800 = vmatpush.msra.mxu0 %v4826
    %5801 = vmatpush.msra.mxu0 %v4818
    %5802 = vmatpush.msra.mxu0 %v4810
    %5803 = vmatpush.msra.mxu0 %v4802
    %5804 = vmatpush.msra.mxu0 %v4794
    %5805 = vmatpush.msra.mxu0 %v4786
    %5806 = vmatpush.msra.mxu0 %v4778
    %5807 = vmatpush.msra.mxu0 %v4770
    %5808 = vmatpush.msra.mxu0 %v4762
    %5809 = vmatpush.msra.mxu0 %v4754
    %5810 = vmatpush.msra.mxu0 %v4746
    %5811 = vmatpush.msra.mxu0 %v4738
    %5812 = vmatpush.msra.mxu0 %v4730
    %5813 = vmatpush.msra.mxu0 %v4722
    %5814 = vmatpush.msra.mxu0 %v4714
    %5815 = vmatmul.f32.gmra.mxu0 0.0
    %v5816 = vpop.f32.mrf.mxu0
    %v5817 = vadd.f32 0.0, %v5816
    %5818 = vdwg.mxu0
    %5819 = vmatpush.msra.mxu0 %v4962
    %5820 = vmatpush.msra.mxu0 %v4954
    %5821 = vmatpush.msra.mxu0 %v4946
    %5822 = vmatpush.msra.mxu0 %v4938
    %5823 = vmatpush.msra.mxu0 %v4930
    %5824 = vmatpush.msra.mxu0 %v4922
    %5825 = vmatpush.msra.mxu0 %v4914
    %5826 = vmatpush.msra.mxu0 %v4906
    %5827 = vmatpush.msra.mxu0 %v4898
    %5828 = vmatpush.msra.mxu0 %v4890
    %5829 = vmatpush.msra.mxu0 %v4882
    %5830 = vmatpush.msra.mxu0 %v4874
    %5831 = vmatpush.msra.mxu0 %v4866
    %5832 = vmatpush.msra.mxu0 %v4858
    %5833 = vmatpush.msra.mxu0 %v4850
    %5834 = vmatpush.msra.mxu0 %v4842
    %5835 = vmatmul.f32.gmra.mxu0 0.0
    %v5836 = vpop.f32.mrf.mxu0
    %v5837 = vadd.f32 %v5817, %v5836
    %5838 = vdwg.mxu0
    %5839 = vmatpush.msra.mxu0 %v4835
    %5840 = vmatpush.msra.mxu0 %v4827
    %5841 = vmatpush.msra.mxu0 %v4819
    %5842 = vmatpush.msra.mxu0 %v4811
    %5843 = vmatpush.msra.mxu0 %v4803
    %5844 = vmatpush.msra.mxu0 %v4795
    %5845 = vmatpush.msra.mxu0 %v4787
    %5846 = vmatpush.msra.mxu0 %v4779
    %5847 = vmatpush.msra.mxu0 %v4771
    %5848 = vmatpush.msra.mxu0 %v4763
    %5849 = vmatpush.msra.mxu0 %v4755
    %5850 = vmatpush.msra.mxu0 %v4747
    %5851 = vmatpush.msra.mxu0 %v4739
    %5852 = vmatpush.msra.mxu0 %v4731
    %5853 = vmatpush.msra.mxu0 %v4723
    %5854 = vmatpush.msra.mxu0 %v4715
    %5855 = vmatmul.f32.gmra.mxu0 0.0
    %v5856 = vpop.f32.mrf.mxu0
    %v5857 = vadd.f32 0.0, %v5856
    %5858 = vdwg.mxu0
    %5859 = vmatpush.msra.mxu0 %v4963
    %5860 = vmatpush.msra.mxu0 %v4955
    %5861 = vmatpush.msra.mxu0 %v4947
    %5862 = vmatpush.msra.mxu0 %v4939
    %5863 = vmatpush.msra.mxu0 %v4931
    %5864 = vmatpush.msra.mxu0 %v4923
    %5865 = vmatpush.msra.mxu0 %v4915
    %5866 = vmatpush.msra.mxu0 %v4907
    %5867 = vmatpush.msra.mxu0 %v4899
    %5868 = vmatpush.msra.mxu0 %v4891
    %5869 = vmatpush.msra.mxu0 %v4883
    %5870 = vmatpush.msra.mxu0 %v4875
    %5871 = vmatpush.msra.mxu0 %v4867
    %5872 = vmatpush.msra.mxu0 %v4859
    %5873 = vmatpush.msra.mxu0 %v4851
    %5874 = vmatpush.msra.mxu0 %v4843
    %5875 = vmatmul.f32.gmra.mxu0 0.0
    %v5876 = vpop.f32.mrf.mxu0
    %v5877 = vadd.f32 %v5857, %v5876
    %5878 = vdwg.mxu0
    %5879 = vmatpush.msra.mxu0 %v4836
    %5880 = vmatpush.msra.mxu0 %v4828
    %5881 = vmatpush.msra.mxu0 %v4820
    %5882 = vmatpush.msra.mxu0 %v4812
    %5883 = vmatpush.msra.mxu0 %v4804
    %5884 = vmatpush.msra.mxu0 %v4796
    %5885 = vmatpush.msra.mxu0 %v4788
    %5886 = vmatpush.msra.mxu0 %v4780
    %5887 = vmatpush.msra.mxu0 %v4772
    %5888 = vmatpush.msra.mxu0 %v4764
    %5889 = vmatpush.msra.mxu0 %v4756
    %5890 = vmatpush.msra.mxu0 %v4748
    %5891 = vmatpush.msra.mxu0 %v4740
    %5892 = vmatpush.msra.mxu0 %v4732
    %5893 = vmatpush.msra.mxu0 %v4724
    %5894 = vmatpush.msra.mxu0 %v4716
    %5895 = vmatmul.f32.gmra.mxu0 0.0
    %v5896 = vpop.f32.mrf.mxu0
    %v5897 = vadd.f32 0.0, %v5896
    %5898 = vdwg.mxu0
    %5899 = vmatpush.msra.mxu0 %v4964
    %5900 = vmatpush.msra.mxu0 %v4956
    %5901 = vmatpush.msra.mxu0 %v4948
    %5902 = vmatpush.msra.mxu0 %v4940
    %5903 = vmatpush.msra.mxu0 %v4932
    %5904 = vmatpush.msra.mxu0 %v4924
    %5905 = vmatpush.msra.mxu0 %v4916
    %5906 = vmatpush.msra.mxu0 %v4908
    %5907 = vmatpush.msra.mxu0 %v4900
    %5908 = vmatpush.msra.mxu0 %v4892
    %5909 = vmatpush.msra.mxu0 %v4884
    %5910 = vmatpush.msra.mxu0 %v4876
    %5911 = vmatpush.msra.mxu0 %v4868
    %5912 = vmatpush.msra.mxu0 %v4860
    %5913 = vmatpush.msra.mxu0 %v4852
    %5914 = vmatpush.msra.mxu0 %v4844
    %5915 = vmatmul.f32.gmra.mxu0 0.0
    %v5916 = vpop.f32.mrf.mxu0
    %v5917 = vadd.f32 %v5897, %v5916
    %5918 = vdwg.mxu0
    %5919 = vmatpush.msra.mxu0 %v4837
    %5920 = vmatpush.msra.mxu0 %v4829
    %5921 = vmatpush.msra.mxu0 %v4821
    %5922 = vmatpush.msra.mxu0 %v4813
    %5923 = vmatpush.msra.mxu0 %v4805
    %5924 = vmatpush.msra.mxu0 %v4797
    %5925 = vmatpush.msra.mxu0 %v4789
    %5926 = vmatpush.msra.mxu0 %v4781
    %5927 = vmatpush.msra.mxu0 %v4773
    %5928 = vmatpush.msra.mxu0 %v4765
    %5929 = vmatpush.msra.mxu0 %v4757
    %5930 = vmatpush.msra.mxu0 %v4749
    %5931 = vmatpush.msra.mxu0 %v4741
    %5932 = vmatpush.msra.mxu0 %v4733
    %5933 = vmatpush.msra.mxu0 %v4725
    %5934 = vmatpush.msra.mxu0 %v4717
    %5935 = vmatmul.f32.gmra.mxu0 0.0
    %v5936 = vpop.f32.mrf.mxu0
    %v5937 = vadd.f32 0.0, %v5936
    %5938 = vdwg.mxu0
    %5939 = vmatpush.msra.mxu0 %v4965
    %5940 = vmatpush.msra.mxu0 %v4957
    %5941 = vmatpush.msra.mxu0 %v4949
    %5942 = vmatpush.msra.mxu0 %v4941
    %5943 = vmatpush.msra.mxu0 %v4933
    %5944 = vmatpush.msra.mxu0 %v4925
    %5945 = vmatpush.msra.mxu0 %v4917
    %5946 = vmatpush.msra.mxu0 %v4909
    %5947 = vmatpush.msra.mxu0 %v4901
    %5948 = vmatpush.msra.mxu0 %v4893
    %5949 = vmatpush.msra.mxu0 %v4885
    %5950 = vmatpush.msra.mxu0 %v4877
    %5951 = vmatpush.msra.mxu0 %v4869
    %5952 = vmatpush.msra.mxu0 %v4861
    %5953 = vmatpush.msra.mxu0 %v4853
    %5954 = vmatpush.msra.mxu0 %v4845
    %5955 = vmatmul.f32.gmra.mxu0 0.0
    %v5956 = vpop.f32.mrf.mxu0
    %v5957 = vadd.f32 %v5937, %v5956
    %5958 = vdwg.mxu0
    %v5959 = vadd.f32 %v5042, %v5677
    %v5960 = vadd.f32 %v5145, %v5717
    %v5961 = vadd.f32 %v5206, %v5757
    %v5962 = vadd.f32 %v5309, %v5797
    %v5963 = vadd.f32 %v5370, %v5837
    %v5964 = vadd.f32 %v5473, %v5877
    %v5965 = vadd.f32 %v5534, %v5917
    %v5966 = vadd.f32 %v5637, %v5957
    %v5967 = vxor.u32 %v5959, 2147483648
    %v5968 = vxor.u32 %v5960, 2147483648
    %v5969 = vxor.u32 %v5961, 2147483648
    %v5970 = vxor.u32 %v5962, 2147483648
    %v5971 = vxor.u32 %v5963, 2147483648
    %v5972 = vxor.u32 %v5964, 2147483648
    %v5973 = vmul.f32 %v5967, 1.442695
    %v5974 = vpow.pop %v5973
    %v5975 = vmul.f32 %v5968, 1.442695
    %v5976 = vpow.pop %v5975
    %v5977 = vmul.f32 %v5969, 1.442695
    %v5978 = vpow.pop %v5977
    %v5979 = vmul.f32 %v5970, 1.442695
    %v5980 = vpow.pop %v5979
    %v5981 = vmul.f32 %v5971, 1.442695
    %v5982 = vpow.pop %v5981
    %v5983 = vmul.f32 %v5972, 1.442695
    %v5984 = vpow.pop %v5983
    %v5985 = vadd.f32 %v5974, 1.0
    %v5986 = vadd.f32 %v5976, 1.0
    %v5987 = vadd.f32 %v5978, 1.0
    %v5988 = vadd.f32 %v5980, 1.0
    %v5989 = vadd.f32 %v5982, 1.0
    %v5990 = vadd.f32 %v5984, 1.0
    %v5991 = vrcp.pop %v5985
    %v5992 = vmul.f32 %v5985, %v5991
    %v5993 = vsub.f32 1.0, %v5992
    %v5994 = vmul.f32 %v5991, %v5993
    %v5995 = vadd.f32 %v5991, %v5994
    %vm5996 = vweird.f32 %v5985
    %vm5997 = vweird.f32 %v5991
    %vm5998 = vmor %vm5996, %vm5997
    %v5999 = vsel %vm5998, %v5991, %v5995
    %v6000 = vand.u32 2147483647, %v5985
    %vm6001 = vcmp.eq.f32.partialorder %v6000, 8.507059e+37
    %v6002 = vand.u32 %v5985, 2147483648
    %v6003 = vor.u32 1.1754944e-38, %v6002
    %v6004 = vsel %vm6001, %v6003, %v5999
    %v6005 = vmul.f32 1.0, %v6004
    %v6006 = vrcp.pop %v5986
    %v6007 = vmul.f32 %v5986, %v6006
    %v6008 = vsub.f32 1.0, %v6007
    %v6009 = vmul.f32 %v6006, %v6008
    %v6010 = vadd.f32 %v6006, %v6009
    %vm6011 = vweird.f32 %v5986
    %vm6012 = vweird.f32 %v6006
    %vm6013 = vmor %vm6011, %vm6012
    %v6014 = vsel %vm6013, %v6006, %v6010
    %v6015 = vand.u32 2147483647, %v5986
    %vm6016 = vcmp.eq.f32.partialorder %v6015, 8.507059e+37
    %v6017 = vand.u32 %v5986, 2147483648
    %v6018 = vor.u32 1.1754944e-38, %v6017
    %v6019 = vsel %vm6016, %v6018, %v6014
    %v6020 = vmul.f32 1.0, %v6019
    %v6021 = vrcp.pop %v5987
    %v6022 = vmul.f32 %v5987, %v6021
    %v6023 = vsub.f32 1.0, %v6022
    %v6024 = vmul.f32 %v6021, %v6023
    %v6025 = vadd.f32 %v6021, %v6024
    %vm6026 = vweird.f32 %v5987
    %vm6027 = vweird.f32 %v6021
    %vm6028 = vmor %vm6026, %vm6027
    %v6029 = vsel %vm6028, %v6021, %v6025
    %v6030 = vand.u32 2147483647, %v5987
    %vm6031 = vcmp.eq.f32.partialorder %v6030, 8.507059e+37
    %v6032 = vand.u32 %v5987, 2147483648
    %v6033 = vor.u32 1.1754944e-38, %v6032
    %v6034 = vsel %vm6031, %v6033, %v6029
    %v6035 = vmul.f32 1.0, %v6034
    %v6036 = vrcp.pop %v5988
    %v6037 = vmul.f32 %v5988, %v6036
    %v6038 = vsub.f32 1.0, %v6037
    %v6039 = vmul.f32 %v6036, %v6038
    %v6040 = vadd.f32 %v6036, %v6039
    %vm6041 = vweird.f32 %v5988
    %vm6042 = vweird.f32 %v6036
    %vm6043 = vmor %vm6041, %vm6042
    %v6044 = vsel %vm6043, %v6036, %v6040
    %v6045 = vand.u32 2147483647, %v5988
    %vm6046 = vcmp.eq.f32.partialorder %v6045, 8.507059e+37
    %v6047 = vand.u32 %v5988, 2147483648
    %v6048 = vor.u32 1.1754944e-38, %v6047
    %v6049 = vsel %vm6046, %v6048, %v6044
    %v6050 = vmul.f32 1.0, %v6049
    %v6051 = vrcp.pop %v5989
    %v6052 = vmul.f32 %v5989, %v6051
    %v6053 = vsub.f32 1.0, %v6052
    %v6054 = vmul.f32 %v6051, %v6053
    %v6055 = vadd.f32 %v6051, %v6054
    %vm6056 = vweird.f32 %v5989
    %vm6057 = vweird.f32 %v6051
    %vm6058 = vmor %vm6056, %vm6057
    %v6059 = vsel %vm6058, %v6051, %v6055
    %v6060 = vand.u32 2147483647, %v5989
    %vm6061 = vcmp.eq.f32.partialorder %v6060, 8.507059e+37
    %v6062 = vand.u32 %v5989, 2147483648
    %v6063 = vor.u32 1.1754944e-38, %v6062
    %v6064 = vsel %vm6061, %v6063, %v6059
    %v6065 = vmul.f32 1.0, %v6064
    %v6066 = vrcp.pop %v5990
    %v6067 = vmul.f32 %v5990, %v6066
    %v6068 = vsub.f32 1.0, %v6067
    %v6069 = vmul.f32 %v6066, %v6068
    %v6070 = vadd.f32 %v6066, %v6069
    %vm6071 = vweird.f32 %v5990
    %vm6072 = vweird.f32 %v6066
    %vm6073 = vmor %vm6071, %vm6072
    %v6074 = vsel %vm6073, %v6066, %v6070
    %v6075 = vand.u32 2147483647, %v5990
    %vm6076 = vcmp.eq.f32.partialorder %v6075, 8.507059e+37
    %v6077 = vand.u32 %v5990, 2147483648
    %v6078 = vor.u32 1.1754944e-38, %v6077
    %v6079 = vsel %vm6076, %v6078, %v6074
    %v6080 = vmul.f32 1.0, %v6079
    %v6081 = vtanh.pop %v5965
    %v6082 = vtanh.pop %v5966
    %v6083 = vmul.f32 %v6035, 0.0
    %v6084 = vmul.f32 %v6050, 0.0
    %v6085 = vmul.f32 %v6005, %v6081
    %v6086 = vmul.f32 %v6020, %v6082
    %v6087 = vadd.f32 %v6083, %v6085
    %v6088 = vadd.f32 %v6084, %v6086
    %v6089 = vtanh.pop %v6087
    %v6090 = vtanh.pop %v6088
    %v6091 = vmul.f32 %v6065, %v6089
    %v6092 = vmul.f32 %v6080, %v6090
    %6093 = vmatpush.msra.mxu0 %v4830
    %6094 = vmatpush.msra.mxu0 %v4822
    %6095 = vmatpush.msra.mxu0 %v4814
    %6096 = vmatpush.msra.mxu0 %v4806
    %6097 = vmatpush.msra.mxu0 %v4798
    %6098 = vmatpush.msra.mxu0 %v4790
    %6099 = vmatpush.msra.mxu0 %v4782
    %6100 = vmatpush.msra.mxu0 %v4774
    %6101 = vmatpush.msra.mxu0 %v4766
    %6102 = vmatpush.msra.mxu0 %v4758
    %6103 = vmatpush.msra.mxu0 %v4750
    %6104 = vmatpush.msra.mxu0 %v4742
    %6105 = vmatpush.msra.mxu0 %v4734
    %6106 = vmatpush.msra.mxu0 %v4726
    %6107 = vmatpush.msra.mxu0 %v4718
    %6108 = vmatpush.msra.mxu0 %v4710
    %6109 = vmatmul.f32.gmra.mxu0 %v6091
    %v6110 = vpop.f32.mrf.mxu0
    %v6111 = vadd.f32 0.0, %v6110
    %6112 = vdwg.mxu0
    %6113 = vmatpush.msra.mxu0 %v4958
    %6114 = vmatpush.msra.mxu0 %v4950
    %6115 = vmatpush.msra.mxu0 %v4942
    %6116 = vmatpush.msra.mxu0 %v4934
    %6117 = vmatpush.msra.mxu0 %v4926
    %6118 = vmatpush.msra.mxu0 %v4918
    %6119 = vmatpush.msra.mxu0 %v4910
    %6120 = vmatpush.msra.mxu0 %v4902
    %6121 = vmatpush.msra.mxu0 %v4894
    %6122 = vmatpush.msra.mxu0 %v4886
    %6123 = vmatpush.msra.mxu0 %v4878
    %6124 = vmatpush.msra.mxu0 %v4870
    %6125 = vmatpush.msra.mxu0 %v4862
    %6126 = vmatpush.msra.mxu0 %v4854
    %6127 = vmatpush.msra.mxu0 %v4846
    %6128 = vmatpush.msra.mxu0 %v4838
    %6129 = vmatmul.f32.gmra.mxu0 %v6092
    %v6130 = vpop.f32.mrf.mxu0
    %v6131 = vadd.f32 %v6111, %v6130
    %6132 = vdwg.mxu0
    %6133 = vmatpush.msra.mxu0 %v4831
    %6134 = vmatpush.msra.mxu0 %v4823
    %6135 = vmatpush.msra.mxu0 %v4815
    %6136 = vmatpush.msra.mxu0 %v4807
    %6137 = vmatpush.msra.mxu0 %v4799
    %6138 = vmatpush.msra.mxu0 %v4791
    %6139 = vmatpush.msra.mxu0 %v4783
    %6140 = vmatpush.msra.mxu0 %v4775
    %6141 = vmatpush.msra.mxu0 %v4767
    %6142 = vmatpush.msra.mxu0 %v4759
    %6143 = vmatpush.msra.mxu0 %v4751
    %6144 = vmatpush.msra.mxu0 %v4743
    %6145 = vmatpush.msra.mxu0 %v4735
    %6146 = vmatpush.msra.mxu0 %v4727
    %6147 = vmatpush.msra.mxu0 %v4719
    %6148 = vmatpush.msra.mxu0 %v4711
    %6149 = vmatmul.f32.gmra.mxu0 %v6091
    %v6150 = vpop.f32.mrf.mxu0
    %v6151 = vadd.f32 0.0, %v6150
    %6152 = vdwg.mxu0
    %6153 = vmatpush.msra.mxu0 %v4959
    %6154 = vmatpush.msra.mxu0 %v4951
    %6155 = vmatpush.msra.mxu0 %v4943
    %6156 = vmatpush.msra.mxu0 %v4935
    %6157 = vmatpush.msra.mxu0 %v4927
    %6158 = vmatpush.msra.mxu0 %v4919
    %6159 = vmatpush.msra.mxu0 %v4911
    %6160 = vmatpush.msra.mxu0 %v4903
    %6161 = vmatpush.msra.mxu0 %v4895
    %6162 = vmatpush.msra.mxu0 %v4887
    %6163 = vmatpush.msra.mxu0 %v4879
    %6164 = vmatpush.msra.mxu0 %v4871
    %6165 = vmatpush.msra.mxu0 %v4863
    %6166 = vmatpush.msra.mxu0 %v4855
    %6167 = vmatpush.msra.mxu0 %v4847
    %6168 = vmatpush.msra.mxu0 %v4839
    %6169 = vmatmul.f32.gmra.mxu0 %v6092
    %v6170 = vpop.f32.mrf.mxu0
    %v6171 = vadd.f32 %v6151, %v6170
    %6172 = vdwg.mxu0
    %6173 = vmatpush.msra.mxu0 %v4832
    %6174 = vmatpush.msra.mxu0 %v4824
    %6175 = vmatpush.msra.mxu0 %v4816
    %6176 = vmatpush.msra.mxu0 %v4808
    %6177 = vmatpush.msra.mxu0 %v4800
    %6178 = vmatpush.msra.mxu0 %v4792
    %6179 = vmatpush.msra.mxu0 %v4784
    %6180 = vmatpush.msra.mxu0 %v4776
    %6181 = vmatpush.msra.mxu0 %v4768
    %6182 = vmatpush.msra.mxu0 %v4760
    %6183 = vmatpush.msra.mxu0 %v4752
    %6184 = vmatpush.msra.mxu0 %v4744
    %6185 = vmatpush.msra.mxu0 %v4736
    %6186 = vmatpush.msra.mxu0 %v4728
    %6187 = vmatpush.msra.mxu0 %v4720
    %6188 = vmatpush.msra.mxu0 %v4712
    %6189 = vmatmul.f32.gmra.mxu0 %v6091
    %v6190 = vpop.f32.mrf.mxu0
    %v6191 = vadd.f32 0.0, %v6190
    %6192 = vdwg.mxu0
    %6193 = vmatpush.msra.mxu0 %v4960
    %6194 = vmatpush.msra.mxu0 %v4952
    %6195 = vmatpush.msra.mxu0 %v4944
    %6196 = vmatpush.msra.mxu0 %v4936
    %6197 = vmatpush.msra.mxu0 %v4928
    %6198 = vmatpush.msra.mxu0 %v4920
    %6199 = vmatpush.msra.mxu0 %v4912
    %6200 = vmatpush.msra.mxu0 %v4904
    %6201 = vmatpush.msra.mxu0 %v4896
    %6202 = vmatpush.msra.mxu0 %v4888
    %6203 = vmatpush.msra.mxu0 %v4880
    %6204 = vmatpush.msra.mxu0 %v4872
    %6205 = vmatpush.msra.mxu0 %v4864
    %6206 = vmatpush.msra.mxu0 %v4856
    %6207 = vmatpush.msra.mxu0 %v4848
    %6208 = vmatpush.msra.mxu0 %v4840
    %6209 = vmatmul.f32.gmra.mxu0 %v6092
    %v6210 = vpop.f32.mrf.mxu0
    %v6211 = vadd.f32 %v6191, %v6210
    %6212 = vdwg.mxu0
    %6213 = vmatpush.msra.mxu0 %v4833
    %6214 = vmatpush.msra.mxu0 %v4825
    %6215 = vmatpush.msra.mxu0 %v4817
    %6216 = vmatpush.msra.mxu0 %v4809
    %6217 = vmatpush.msra.mxu0 %v4801
    %6218 = vmatpush.msra.mxu0 %v4793
    %6219 = vmatpush.msra.mxu0 %v4785
    %6220 = vmatpush.msra.mxu0 %v4777
    %6221 = vmatpush.msra.mxu0 %v4769
    %6222 = vmatpush.msra.mxu0 %v4761
    %6223 = vmatpush.msra.mxu0 %v4753
    %6224 = vmatpush.msra.mxu0 %v4745
    %6225 = vmatpush.msra.mxu0 %v4737
    %6226 = vmatpush.msra.mxu0 %v4729
    %6227 = vmatpush.msra.mxu0 %v4721
    %6228 = vmatpush.msra.mxu0 %v4713
    %6229 = vmatmul.f32.gmra.mxu0 %v6091
    %v6230 = vpop.f32.mrf.mxu0
    %v6231 = vadd.f32 0.0, %v6230
    %6232 = vdwg.mxu0
    %6233 = vmatpush.msra.mxu0 %v4961
    %6234 = vmatpush.msra.mxu0 %v4953
    %6235 = vmatpush.msra.mxu0 %v4945
    %6236 = vmatpush.msra.mxu0 %v4937
    %6237 = vmatpush.msra.mxu0 %v4929
    %6238 = vmatpush.msra.mxu0 %v4921
    %6239 = vmatpush.msra.mxu0 %v4913
    %6240 = vmatpush.msra.mxu0 %v4905
    %6241 = vmatpush.msra.mxu0 %v4897
    %6242 = vmatpush.msra.mxu0 %v4889
    %6243 = vmatpush.msra.mxu0 %v4881
    %6244 = vmatpush.msra.mxu0 %v4873
    %6245 = vmatpush.msra.mxu0 %v4865
    %6246 = vmatpush.msra.mxu0 %v4857
    %6247 = vmatpush.msra.mxu0 %v4849
    %6248 = vmatpush.msra.mxu0 %v4841
    %6249 = vmatmul.f32.gmra.mxu0 %v6092
    %v6250 = vpop.f32.mrf.mxu0
    %v6251 = vadd.f32 %v6231, %v6250
    %6252 = vdwg.mxu0
    %6253 = vmatpush.msra.mxu0 %v4834
    %6254 = vmatpush.msra.mxu0 %v4826
    %6255 = vmatpush.msra.mxu0 %v4818
    %6256 = vmatpush.msra.mxu0 %v4810
    %6257 = vmatpush.msra.mxu0 %v4802
    %6258 = vmatpush.msra.mxu0 %v4794
    %6259 = vmatpush.msra.mxu0 %v4786
    %6260 = vmatpush.msra.mxu0 %v4778
    %6261 = vmatpush.msra.mxu0 %v4770
    %6262 = vmatpush.msra.mxu0 %v4762
    %6263 = vmatpush.msra.mxu0 %v4754
    %6264 = vmatpush.msra.mxu0 %v4746
    %6265 = vmatpush.msra.mxu0 %v4738
    %6266 = vmatpush.msra.mxu0 %v4730
    %6267 = vmatpush.msra.mxu0 %v4722
    %6268 = vmatpush.msra.mxu0 %v4714
    %6269 = vmatmul.f32.gmra.mxu0 %v6091
    %v6270 = vpop.f32.mrf.mxu0
    %v6271 = vadd.f32 0.0, %v6270
    %6272 = vdwg.mxu0
    %6273 = vmatpush.msra.mxu0 %v4962
    %6274 = vmatpush.msra.mxu0 %v4954
    %6275 = vmatpush.msra.mxu0 %v4946
    %6276 = vmatpush.msra.mxu0 %v4938
    %6277 = vmatpush.msra.mxu0 %v4930
    %6278 = vmatpush.msra.mxu0 %v4922
    %6279 = vmatpush.msra.mxu0 %v4914
    %6280 = vmatpush.msra.mxu0 %v4906
    %6281 = vmatpush.msra.mxu0 %v4898
    %6282 = vmatpush.msra.mxu0 %v4890
    %6283 = vmatpush.msra.mxu0 %v4882
    %6284 = vmatpush.msra.mxu0 %v4874
    %6285 = vmatpush.msra.mxu0 %v4866
    %6286 = vmatpush.msra.mxu0 %v4858
    %6287 = vmatpush.msra.mxu0 %v4850
    %6288 = vmatpush.msra.mxu0 %v4842
    %6289 = vmatmul.f32.gmra.mxu0 %v6092
    %v6290 = vpop.f32.mrf.mxu0
    %v6291 = vadd.f32 %v6271, %v6290
    %6292 = vdwg.mxu0
    %6293 = vmatpush.msra.mxu0 %v4835
    %6294 = vmatpush.msra.mxu0 %v4827
    %6295 = vmatpush.msra.mxu0 %v4819
    %6296 = vmatpush.msra.mxu0 %v4811
    %6297 = vmatpush.msra.mxu0 %v4803
    %6298 = vmatpush.msra.mxu0 %v4795
    %6299 = vmatpush.msra.mxu0 %v4787
    %6300 = vmatpush.msra.mxu0 %v4779
    %6301 = vmatpush.msra.mxu0 %v4771
    %6302 = vmatpush.msra.mxu0 %v4763
    %6303 = vmatpush.msra.mxu0 %v4755
    %6304 = vmatpush.msra.mxu0 %v4747
    %6305 = vmatpush.msra.mxu0 %v4739
    %6306 = vmatpush.msra.mxu0 %v4731
    %6307 = vmatpush.msra.mxu0 %v4723
    %6308 = vmatpush.msra.mxu0 %v4715
    %6309 = vmatmul.f32.gmra.mxu0 %v6091
    %v6310 = vpop.f32.mrf.mxu0
    %v6311 = vadd.f32 0.0, %v6310
    %6312 = vdwg.mxu0
    %6313 = vmatpush.msra.mxu0 %v4963
    %6314 = vmatpush.msra.mxu0 %v4955
    %6315 = vmatpush.msra.mxu0 %v4947
    %6316 = vmatpush.msra.mxu0 %v4939
    %6317 = vmatpush.msra.mxu0 %v4931
    %6318 = vmatpush.msra.mxu0 %v4923
    %6319 = vmatpush.msra.mxu0 %v4915
    %6320 = vmatpush.msra.mxu0 %v4907
    %6321 = vmatpush.msra.mxu0 %v4899
    %6322 = vmatpush.msra.mxu0 %v4891
    %6323 = vmatpush.msra.mxu0 %v4883
    %6324 = vmatpush.msra.mxu0 %v4875
    %6325 = vmatpush.msra.mxu0 %v4867
    %6326 = vmatpush.msra.mxu0 %v4859
    %6327 = vmatpush.msra.mxu0 %v4851
    %6328 = vmatpush.msra.mxu0 %v4843
    %6329 = vmatmul.f32.gmra.mxu0 %v6092
    %v6330 = vpop.f32.mrf.mxu0
    %v6331 = vadd.f32 %v6311, %v6330
    %6332 = vdwg.mxu0
    %6333 = vmatpush.msra.mxu0 %v4836
    %6334 = vmatpush.msra.mxu0 %v4828
    %6335 = vmatpush.msra.mxu0 %v4820
    %6336 = vmatpush.msra.mxu0 %v4812
    %6337 = vmatpush.msra.mxu0 %v4804
    %6338 = vmatpush.msra.mxu0 %v4796
    %6339 = vmatpush.msra.mxu0 %v4788
    %6340 = vmatpush.msra.mxu0 %v4780
    %6341 = vmatpush.msra.mxu0 %v4772
    %6342 = vmatpush.msra.mxu0 %v4764
    %6343 = vmatpush.msra.mxu0 %v4756
    %6344 = vmatpush.msra.mxu0 %v4748
    %6345 = vmatpush.msra.mxu0 %v4740
    %6346 = vmatpush.msra.mxu0 %v4732
    %6347 = vmatpush.msra.mxu0 %v4724
    %6348 = vmatpush.msra.mxu0 %v4716
    %6349 = vmatmul.f32.gmra.mxu0 %v6091
    %v6350 = vpop.f32.mrf.mxu0
    %v6351 = vadd.f32 0.0, %v6350
    %6352 = vdwg.mxu0
    %6353 = vmatpush.msra.mxu0 %v4964
    %6354 = vmatpush.msra.mxu0 %v4956
    %6355 = vmatpush.msra.mxu0 %v4948
    %6356 = vmatpush.msra.mxu0 %v4940
    %6357 = vmatpush.msra.mxu0 %v4932
    %6358 = vmatpush.msra.mxu0 %v4924
    %6359 = vmatpush.msra.mxu0 %v4916
    %6360 = vmatpush.msra.mxu0 %v4908
    %6361 = vmatpush.msra.mxu0 %v4900
    %6362 = vmatpush.msra.mxu0 %v4892
    %6363 = vmatpush.msra.mxu0 %v4884
    %6364 = vmatpush.msra.mxu0 %v4876
    %6365 = vmatpush.msra.mxu0 %v4868
    %6366 = vmatpush.msra.mxu0 %v4860
    %6367 = vmatpush.msra.mxu0 %v4852
    %6368 = vmatpush.msra.mxu0 %v4844
    %6369 = vmatmul.f32.gmra.mxu0 %v6092
    %v6370 = vpop.f32.mrf.mxu0
    %v6371 = vadd.f32 %v6351, %v6370
    %6372 = vdwg.mxu0
    %6373 = vmatpush.msra.mxu0 %v4837
    %6374 = vmatpush.msra.mxu0 %v4829
    %6375 = vmatpush.msra.mxu0 %v4821
    %6376 = vmatpush.msra.mxu0 %v4813
    %6377 = vmatpush.msra.mxu0 %v4805
    %6378 = vmatpush.msra.mxu0 %v4797
    %6379 = vmatpush.msra.mxu0 %v4789
    %6380 = vmatpush.msra.mxu0 %v4781
    %6381 = vmatpush.msra.mxu0 %v4773
    %6382 = vmatpush.msra.mxu0 %v4765
    %6383 = vmatpush.msra.mxu0 %v4757
    %6384 = vmatpush.msra.mxu0 %v4749
    %6385 = vmatpush.msra.mxu0 %v4741
    %6386 = vmatpush.msra.mxu0 %v4733
    %6387 = vmatpush.msra.mxu0 %v4725
    %6388 = vmatpush.msra.mxu0 %v4717
    %6389 = vmatmul.f32.gmra.mxu0 %v6091
    %v6390 = vpop.f32.mrf.mxu0
    %v6391 = vadd.f32 0.0, %v6390
    %6392 = vdwg.mxu0
    %6393 = vmatpush.msra.mxu0 %v4965
    %6394 = vmatpush.msra.mxu0 %v4957
    %6395 = vmatpush.msra.mxu0 %v4949
    %6396 = vmatpush.msra.mxu0 %v4941
    %6397 = vmatpush.msra.mxu0 %v4933
    %6398 = vmatpush.msra.mxu0 %v4925
    %6399 = vmatpush.msra.mxu0 %v4917
    %6400 = vmatpush.msra.mxu0 %v4909
    %6401 = vmatpush.msra.mxu0 %v4901
    %6402 = vmatpush.msra.mxu0 %v4893
    %6403 = vmatpush.msra.mxu0 %v4885
    %6404 = vmatpush.msra.mxu0 %v4877
    %6405 = vmatpush.msra.mxu0 %v4869
    %6406 = vmatpush.msra.mxu0 %v4861
    %6407 = vmatpush.msra.mxu0 %v4853
    %6408 = vmatpush.msra.mxu0 %v4845
    %6409 = vmatmul.f32.gmra.mxu0 %v6092
    %v6410 = vpop.f32.mrf.mxu0
    %v6411 = vadd.f32 %v6391, %v6410
    %6412 = vdwg.mxu0
    %v6413 = vadd.f32 %v5045, %v6131
    %v6414 = vadd.f32 %v5142, %v6171
    %v6415 = vadd.f32 %v5209, %v6211
    %v6416 = vadd.f32 %v5306, %v6251
    %v6417 = vadd.f32 %v5373, %v6291
    %v6418 = vadd.f32 %v5470, %v6331
    %v6419 = vadd.f32 %v5537, %v6371
    %v6420 = vadd.f32 %v5634, %v6411
    %v6421 = vxor.u32 %v6413, 2147483648
    %v6422 = vxor.u32 %v6414, 2147483648
    %v6423 = vxor.u32 %v6415, 2147483648
    %v6424 = vxor.u32 %v6416, 2147483648
    %v6425 = vxor.u32 %v6417, 2147483648
    %v6426 = vxor.u32 %v6418, 2147483648
    %v6427 = vmul.f32 %v6421, 1.442695
    %v6428 = vpow.pop %v6427
    %v6429 = vmul.f32 %v6422, 1.442695
    %v6430 = vpow.pop %v6429
    %v6431 = vmul.f32 %v6423, 1.442695
    %v6432 = vpow.pop %v6431
    %v6433 = vmul.f32 %v6424, 1.442695
    %v6434 = vpow.pop %v6433
    %v6435 = vmul.f32 %v6425, 1.442695
    %v6436 = vpow.pop %v6435
    %v6437 = vmul.f32 %v6426, 1.442695
    %v6438 = vpow.pop %v6437
    %v6439 = vadd.f32 %v6428, 1.0
    %v6440 = vadd.f32 %v6430, 1.0
    %v6441 = vadd.f32 %v6432, 1.0
    %v6442 = vadd.f32 %v6434, 1.0
    %v6443 = vadd.f32 %v6436, 1.0
    %v6444 = vadd.f32 %v6438, 1.0
    %v6445 = vrcp.pop %v6439
    %v6446 = vmul.f32 %v6439, %v6445
    %v6447 = vsub.f32 1.0, %v6446
    %v6448 = vmul.f32 %v6445, %v6447
    %v6449 = vadd.f32 %v6445, %v6448
    %vm6450 = vweird.f32 %v6439
    %vm6451 = vweird.f32 %v6445
    %vm6452 = vmor %vm6450, %vm6451
    %v6453 = vsel %vm6452, %v6445, %v6449
    %v6454 = vand.u32 2147483647, %v6439
    %vm6455 = vcmp.eq.f32.partialorder %v6454, 8.507059e+37
    %v6456 = vand.u32 %v6439, 2147483648
    %v6457 = vor.u32 1.1754944e-38, %v6456
    %v6458 = vsel %vm6455, %v6457, %v6453
    %v6459 = vmul.f32 1.0, %v6458
    %v6460 = vrcp.pop %v6440
    %v6461 = vmul.f32 %v6440, %v6460
    %v6462 = vsub.f32 1.0, %v6461
    %v6463 = vmul.f32 %v6460, %v6462
    %v6464 = vadd.f32 %v6460, %v6463
    %vm6465 = vweird.f32 %v6440
    %vm6466 = vweird.f32 %v6460
    %vm6467 = vmor %vm6465, %vm6466
    %v6468 = vsel %vm6467, %v6460, %v6464
    %v6469 = vand.u32 2147483647, %v6440
    %vm6470 = vcmp.eq.f32.partialorder %v6469, 8.507059e+37
    %v6471 = vand.u32 %v6440, 2147483648
    %v6472 = vor.u32 1.1754944e-38, %v6471
    %v6473 = vsel %vm6470, %v6472, %v6468
    %v6474 = vmul.f32 1.0, %v6473
    %v6475 = vrcp.pop %v6441
    %v6476 = vmul.f32 %v6441, %v6475
    %v6477 = vsub.f32 1.0, %v6476
    %v6478 = vmul.f32 %v6475, %v6477
    %v6479 = vadd.f32 %v6475, %v6478
    %vm6480 = vweird.f32 %v6441
    %vm6481 = vweird.f32 %v6475
    %vm6482 = vmor %vm6480, %vm6481
    %v6483 = vsel %vm6482, %v6475, %v6479
    %v6484 = vand.u32 2147483647, %v6441
    %vm6485 = vcmp.eq.f32.partialorder %v6484, 8.507059e+37
    %v6486 = vand.u32 %v6441, 2147483648
    %v6487 = vor.u32 1.1754944e-38, %v6486
    %v6488 = vsel %vm6485, %v6487, %v6483
    %v6489 = vmul.f32 1.0, %v6488
    %v6490 = vrcp.pop %v6442
    %v6491 = vmul.f32 %v6442, %v6490
    %v6492 = vsub.f32 1.0, %v6491
    %v6493 = vmul.f32 %v6490, %v6492
    %v6494 = vadd.f32 %v6490, %v6493
    %vm6495 = vweird.f32 %v6442
    %vm6496 = vweird.f32 %v6490
    %vm6497 = vmor %vm6495, %vm6496
    %v6498 = vsel %vm6497, %v6490, %v6494
    %v6499 = vand.u32 2147483647, %v6442
    %vm6500 = vcmp.eq.f32.partialorder %v6499, 8.507059e+37
    %v6501 = vand.u32 %v6442, 2147483648
    %v6502 = vor.u32 1.1754944e-38, %v6501
    %v6503 = vsel %vm6500, %v6502, %v6498
    %v6504 = vmul.f32 1.0, %v6503
    %v6505 = vrcp.pop %v6443
    %v6506 = vmul.f32 %v6443, %v6505
    %v6507 = vsub.f32 1.0, %v6506
    %v6508 = vmul.f32 %v6505, %v6507
    %v6509 = vadd.f32 %v6505, %v6508
    %vm6510 = vweird.f32 %v6443
    %vm6511 = vweird.f32 %v6505
    %vm6512 = vmor %vm6510, %vm6511
    %v6513 = vsel %vm6512, %v6505, %v6509
    %v6514 = vand.u32 2147483647, %v6443
    %vm6515 = vcmp.eq.f32.partialorder %v6514, 8.507059e+37
    %v6516 = vand.u32 %v6443, 2147483648
    %v6517 = vor.u32 1.1754944e-38, %v6516
    %v6518 = vsel %vm6515, %v6517, %v6513
    %v6519 = vmul.f32 1.0, %v6518
    %v6520 = vrcp.pop %v6444
    %v6521 = vmul.f32 %v6444, %v6520
    %v6522 = vsub.f32 1.0, %v6521
    %v6523 = vmul.f32 %v6520, %v6522
    %v6524 = vadd.f32 %v6520, %v6523
    %vm6525 = vweird.f32 %v6444
    %vm6526 = vweird.f32 %v6520
    %vm6527 = vmor %vm6525, %vm6526
    %v6528 = vsel %vm6527, %v6520, %v6524
    %v6529 = vand.u32 2147483647, %v6444
    %vm6530 = vcmp.eq.f32.partialorder %v6529, 8.507059e+37
    %v6531 = vand.u32 %v6444, 2147483648
    %v6532 = vor.u32 1.1754944e-38, %v6531
    %v6533 = vsel %vm6530, %v6532, %v6528
    %v6534 = vmul.f32 1.0, %v6533
    %v6535 = vtanh.pop %v6419
    %v6536 = vtanh.pop %v6420
    %v6537 = vmul.f32 %v6489, %v6087
    %v6538 = vmul.f32 %v6504, %v6088
    %v6539 = vmul.f32 %v6459, %v6535
    %v6540 = vmul.f32 %v6474, %v6536
    %v6541 = vadd.f32 %v6537, %v6539
    %v6542 = vadd.f32 %v6538, %v6540
    %v6543 = vtanh.pop %v6541
    %v6544 = vtanh.pop %v6542
    %v6545 = vmul.f32 %v6519, %v6543
    %v6546 = vmul.f32 %v6534, %v6544
    %6547 = vmatpush.msra.mxu0 %v4830
    %6548 = vmatpush.msra.mxu0 %v4822
    %6549 = vmatpush.msra.mxu0 %v4814
    %6550 = vmatpush.msra.mxu0 %v4806
    %6551 = vmatpush.msra.mxu0 %v4798
    %6552 = vmatpush.msra.mxu0 %v4790
    %6553 = vmatpush.msra.mxu0 %v4782
    %6554 = vmatpush.msra.mxu0 %v4774
    %6555 = vmatpush.msra.mxu0 %v4766
    %6556 = vmatpush.msra.mxu0 %v4758
    %6557 = vmatpush.msra.mxu0 %v4750
    %6558 = vmatpush.msra.mxu0 %v4742
    %6559 = vmatpush.msra.mxu0 %v4734
    %6560 = vmatpush.msra.mxu0 %v4726
    %6561 = vmatpush.msra.mxu0 %v4718
    %6562 = vmatpush.msra.mxu0 %v4710
    %6563 = vmatmul.f32.gmra.mxu0 %v6545
    %v6564 = vpop.f32.mrf.mxu0
    %v6565 = vadd.f32 0.0, %v6564
    %6566 = vdwg.mxu0
    %6567 = vmatpush.msra.mxu0 %v4958
    %6568 = vmatpush.msra.mxu0 %v4950
    %6569 = vmatpush.msra.mxu0 %v4942
    %6570 = vmatpush.msra.mxu0 %v4934
    %6571 = vmatpush.msra.mxu0 %v4926
    %6572 = vmatpush.msra.mxu0 %v4918
    %6573 = vmatpush.msra.mxu0 %v4910
    %6574 = vmatpush.msra.mxu0 %v4902
    %6575 = vmatpush.msra.mxu0 %v4894
    %6576 = vmatpush.msra.mxu0 %v4886
    %6577 = vmatpush.msra.mxu0 %v4878
    %6578 = vmatpush.msra.mxu0 %v4870
    %6579 = vmatpush.msra.mxu0 %v4862
    %6580 = vmatpush.msra.mxu0 %v4854
    %6581 = vmatpush.msra.mxu0 %v4846
    %6582 = vmatpush.msra.mxu0 %v4838
    %6583 = vmatmul.f32.gmra.mxu0 %v6546
    %v6584 = vpop.f32.mrf.mxu0
    %v6585 = vadd.f32 %v6565, %v6584
    %6586 = vdwg.mxu0
    %6587 = vmatpush.msra.mxu0 %v4831
    %6588 = vmatpush.msra.mxu0 %v4823
    %6589 = vmatpush.msra.mxu0 %v4815
    %6590 = vmatpush.msra.mxu0 %v4807
    %6591 = vmatpush.msra.mxu0 %v4799
    %6592 = vmatpush.msra.mxu0 %v4791
    %6593 = vmatpush.msra.mxu0 %v4783
    %6594 = vmatpush.msra.mxu0 %v4775
    %6595 = vmatpush.msra.mxu0 %v4767
    %6596 = vmatpush.msra.mxu0 %v4759
    %6597 = vmatpush.msra.mxu0 %v4751
    %6598 = vmatpush.msra.mxu0 %v4743
    %6599 = vmatpush.msra.mxu0 %v4735
    %6600 = vmatpush.msra.mxu0 %v4727
    %6601 = vmatpush.msra.mxu0 %v4719
    %6602 = vmatpush.msra.mxu0 %v4711
    %6603 = vmatmul.f32.gmra.mxu0 %v6545
    %v6604 = vpop.f32.mrf.mxu0
    %v6605 = vadd.f32 0.0, %v6604
    %6606 = vdwg.mxu0
    %6607 = vmatpush.msra.mxu0 %v4959
    %6608 = vmatpush.msra.mxu0 %v4951
    %6609 = vmatpush.msra.mxu0 %v4943
    %6610 = vmatpush.msra.mxu0 %v4935
    %6611 = vmatpush.msra.mxu0 %v4927
    %6612 = vmatpush.msra.mxu0 %v4919
    %6613 = vmatpush.msra.mxu0 %v4911
    %6614 = vmatpush.msra.mxu0 %v4903
    %6615 = vmatpush.msra.mxu0 %v4895
    %6616 = vmatpush.msra.mxu0 %v4887
    %6617 = vmatpush.msra.mxu0 %v4879
    %6618 = vmatpush.msra.mxu0 %v4871
    %6619 = vmatpush.msra.mxu0 %v4863
    %6620 = vmatpush.msra.mxu0 %v4855
    %6621 = vmatpush.msra.mxu0 %v4847
    %6622 = vmatpush.msra.mxu0 %v4839
    %6623 = vmatmul.f32.gmra.mxu0 %v6546
    %v6624 = vpop.f32.mrf.mxu0
    %v6625 = vadd.f32 %v6605, %v6624
    %6626 = vdwg.mxu0
    %6627 = vmatpush.msra.mxu0 %v4832
    %6628 = vmatpush.msra.mxu0 %v4824
    %6629 = vmatpush.msra.mxu0 %v4816
    %6630 = vmatpush.msra.mxu0 %v4808
    %6631 = vmatpush.msra.mxu0 %v4800
    %6632 = vmatpush.msra.mxu0 %v4792
    %6633 = vmatpush.msra.mxu0 %v4784
    %6634 = vmatpush.msra.mxu0 %v4776
    %6635 = vmatpush.msra.mxu0 %v4768
    %6636 = vmatpush.msra.mxu0 %v4760
    %6637 = vmatpush.msra.mxu0 %v4752
    %6638 = vmatpush.msra.mxu0 %v4744
    %6639 = vmatpush.msra.mxu0 %v4736
    %6640 = vmatpush.msra.mxu0 %v4728
    %6641 = vmatpush.msra.mxu0 %v4720
    %6642 = vmatpush.msra.mxu0 %v4712
    %6643 = vmatmul.f32.gmra.mxu0 %v6545
    %v6644 = vpop.f32.mrf.mxu0
    %v6645 = vadd.f32 0.0, %v6644
    %6646 = vdwg.mxu0
    %6647 = vmatpush.msra.mxu0 %v4960
    %6648 = vmatpush.msra.mxu0 %v4952
    %6649 = vmatpush.msra.mxu0 %v4944
    %6650 = vmatpush.msra.mxu0 %v4936
    %6651 = vmatpush.msra.mxu0 %v4928
    %6652 = vmatpush.msra.mxu0 %v4920
    %6653 = vmatpush.msra.mxu0 %v4912
    %6654 = vmatpush.msra.mxu0 %v4904
    %6655 = vmatpush.msra.mxu0 %v4896
    %6656 = vmatpush.msra.mxu0 %v4888
    %6657 = vmatpush.msra.mxu0 %v4880
    %6658 = vmatpush.msra.mxu0 %v4872
    %6659 = vmatpush.msra.mxu0 %v4864
    %6660 = vmatpush.msra.mxu0 %v4856
    %6661 = vmatpush.msra.mxu0 %v4848
    %6662 = vmatpush.msra.mxu0 %v4840
    %6663 = vmatmul.f32.gmra.mxu0 %v6546
    %v6664 = vpop.f32.mrf.mxu0
    %v6665 = vadd.f32 %v6645, %v6664
    %6666 = vdwg.mxu0
    %6667 = vmatpush.msra.mxu0 %v4833
    %6668 = vmatpush.msra.mxu0 %v4825
    %6669 = vmatpush.msra.mxu0 %v4817
    %6670 = vmatpush.msra.mxu0 %v4809
    %6671 = vmatpush.msra.mxu0 %v4801
    %6672 = vmatpush.msra.mxu0 %v4793
    %6673 = vmatpush.msra.mxu0 %v4785
    %6674 = vmatpush.msra.mxu0 %v4777
    %6675 = vmatpush.msra.mxu0 %v4769
    %6676 = vmatpush.msra.mxu0 %v4761
    %6677 = vmatpush.msra.mxu0 %v4753
    %6678 = vmatpush.msra.mxu0 %v4745
    %6679 = vmatpush.msra.mxu0 %v4737
    %6680 = vmatpush.msra.mxu0 %v4729
    %6681 = vmatpush.msra.mxu0 %v4721
    %6682 = vmatpush.msra.mxu0 %v4713
    %6683 = vmatmul.f32.gmra.mxu0 %v6545
    %v6684 = vpop.f32.mrf.mxu0
    %v6685 = vadd.f32 0.0, %v6684
    %6686 = vdwg.mxu0
    %6687 = vmatpush.msra.mxu0 %v4961
    %6688 = vmatpush.msra.mxu0 %v4953
    %6689 = vmatpush.msra.mxu0 %v4945
    %6690 = vmatpush.msra.mxu0 %v4937
    %6691 = vmatpush.msra.mxu0 %v4929
    %6692 = vmatpush.msra.mxu0 %v4921
    %6693 = vmatpush.msra.mxu0 %v4913
    %6694 = vmatpush.msra.mxu0 %v4905
    %6695 = vmatpush.msra.mxu0 %v4897
    %6696 = vmatpush.msra.mxu0 %v4889
    %6697 = vmatpush.msra.mxu0 %v4881
    %6698 = vmatpush.msra.mxu0 %v4873
    %6699 = vmatpush.msra.mxu0 %v4865
    %6700 = vmatpush.msra.mxu0 %v4857
    %6701 = vmatpush.msra.mxu0 %v4849
    %6702 = vmatpush.msra.mxu0 %v4841
    %6703 = vmatmul.f32.gmra.mxu0 %v6546
    %v6704 = vpop.f32.mrf.mxu0
    %v6705 = vadd.f32 %v6685, %v6704
    %6706 = vdwg.mxu0
    %6707 = vmatpush.msra.mxu0 %v4834
    %6708 = vmatpush.msra.mxu0 %v4826
    %6709 = vmatpush.msra.mxu0 %v4818
    %6710 = vmatpush.msra.mxu0 %v4810
    %6711 = vmatpush.msra.mxu0 %v4802
    %6712 = vmatpush.msra.mxu0 %v4794
    %6713 = vmatpush.msra.mxu0 %v4786
    %6714 = vmatpush.msra.mxu0 %v4778
    %6715 = vmatpush.msra.mxu0 %v4770
    %6716 = vmatpush.msra.mxu0 %v4762
    %6717 = vmatpush.msra.mxu0 %v4754
    %6718 = vmatpush.msra.mxu0 %v4746
    %6719 = vmatpush.msra.mxu0 %v4738
    %6720 = vmatpush.msra.mxu0 %v4730
    %6721 = vmatpush.msra.mxu0 %v4722
    %6722 = vmatpush.msra.mxu0 %v4714
    %6723 = vmatmul.f32.gmra.mxu0 %v6545
    %v6724 = vpop.f32.mrf.mxu0
    %v6725 = vadd.f32 0.0, %v6724
    %6726 = vdwg.mxu0
    %6727 = vmatpush.msra.mxu0 %v4962
    %6728 = vmatpush.msra.mxu0 %v4954
    %6729 = vmatpush.msra.mxu0 %v4946
    %6730 = vmatpush.msra.mxu0 %v4938
    %6731 = vmatpush.msra.mxu0 %v4930
    %6732 = vmatpush.msra.mxu0 %v4922
    %6733 = vmatpush.msra.mxu0 %v4914
    %6734 = vmatpush.msra.mxu0 %v4906
    %6735 = vmatpush.msra.mxu0 %v4898
    %6736 = vmatpush.msra.mxu0 %v4890
    %6737 = vmatpush.msra.mxu0 %v4882
    %6738 = vmatpush.msra.mxu0 %v4874
    %6739 = vmatpush.msra.mxu0 %v4866
    %6740 = vmatpush.msra.mxu0 %v4858
    %6741 = vmatpush.msra.mxu0 %v4850
    %6742 = vmatpush.msra.mxu0 %v4842
    %6743 = vmatmul.f32.gmra.mxu0 %v6546
    %v6744 = vpop.f32.mrf.mxu0
    %v6745 = vadd.f32 %v6725, %v6744
    %6746 = vdwg.mxu0
    %6747 = vmatpush.msra.mxu0 %v4835
    %6748 = vmatpush.msra.mxu0 %v4827
    %6749 = vmatpush.msra.mxu0 %v4819
    %6750 = vmatpush.msra.mxu0 %v4811
    %6751 = vmatpush.msra.mxu0 %v4803
    %6752 = vmatpush.msra.mxu0 %v4795
    %6753 = vmatpush.msra.mxu0 %v4787
    %6754 = vmatpush.msra.mxu0 %v4779
    %6755 = vmatpush.msra.mxu0 %v4771
    %6756 = vmatpush.msra.mxu0 %v4763
    %6757 = vmatpush.msra.mxu0 %v4755
    %6758 = vmatpush.msra.mxu0 %v4747
    %6759 = vmatpush.msra.mxu0 %v4739
    %6760 = vmatpush.msra.mxu0 %v4731
    %6761 = vmatpush.msra.mxu0 %v4723
    %6762 = vmatpush.msra.mxu0 %v4715
    %6763 = vmatmul.f32.gmra.mxu0 %v6545
    %v6764 = vpop.f32.mrf.mxu0
    %v6765 = vadd.f32 0.0, %v6764
    %6766 = vdwg.mxu0
    %6767 = vmatpush.msra.mxu0 %v4963
    %6768 = vmatpush.msra.mxu0 %v4955
    %6769 = vmatpush.msra.mxu0 %v4947
    %6770 = vmatpush.msra.mxu0 %v4939
    %6771 = vmatpush.msra.mxu0 %v4931
    %6772 = vmatpush.msra.mxu0 %v4923
    %6773 = vmatpush.msra.mxu0 %v4915
    %6774 = vmatpush.msra.mxu0 %v4907
    %6775 = vmatpush.msra.mxu0 %v4899
    %6776 = vmatpush.msra.mxu0 %v4891
    %6777 = vmatpush.msra.mxu0 %v4883
    %6778 = vmatpush.msra.mxu0 %v4875
    %6779 = vmatpush.msra.mxu0 %v4867
    %6780 = vmatpush.msra.mxu0 %v4859
    %6781 = vmatpush.msra.mxu0 %v4851
    %6782 = vmatpush.msra.mxu0 %v4843
    %6783 = vmatmul.f32.gmra.mxu0 %v6546
    %v6784 = vpop.f32.mrf.mxu0
    %v6785 = vadd.f32 %v6765, %v6784
    %6786 = vdwg.mxu0
    %6787 = vmatpush.msra.mxu0 %v4836
    %6788 = vmatpush.msra.mxu0 %v4828
    %6789 = vmatpush.msra.mxu0 %v4820
    %6790 = vmatpush.msra.mxu0 %v4812
    %6791 = vmatpush.msra.mxu0 %v4804
    %6792 = vmatpush.msra.mxu0 %v4796
    %6793 = vmatpush.msra.mxu0 %v4788
    %6794 = vmatpush.msra.mxu0 %v4780
    %6795 = vmatpush.msra.mxu0 %v4772
    %6796 = vmatpush.msra.mxu0 %v4764
    %6797 = vmatpush.msra.mxu0 %v4756
    %6798 = vmatpush.msra.mxu0 %v4748
    %6799 = vmatpush.msra.mxu0 %v4740
    %6800 = vmatpush.msra.mxu0 %v4732
    %6801 = vmatpush.msra.mxu0 %v4724
    %6802 = vmatpush.msra.mxu0 %v4716
    %6803 = vmatmul.f32.gmra.mxu0 %v6545
    %v6804 = vpop.f32.mrf.mxu0
    %v6805 = vadd.f32 0.0, %v6804
    %6806 = vdwg.mxu0
    %6807 = vmatpush.msra.mxu0 %v4964
    %6808 = vmatpush.msra.mxu0 %v4956
    %6809 = vmatpush.msra.mxu0 %v4948
    %6810 = vmatpush.msra.mxu0 %v4940
    %6811 = vmatpush.msra.mxu0 %v4932
    %6812 = vmatpush.msra.mxu0 %v4924
    %6813 = vmatpush.msra.mxu0 %v4916
    %6814 = vmatpush.msra.mxu0 %v4908
    %6815 = vmatpush.msra.mxu0 %v4900
    %6816 = vmatpush.msra.mxu0 %v4892
    %6817 = vmatpush.msra.mxu0 %v4884
    %6818 = vmatpush.msra.mxu0 %v4876
    %6819 = vmatpush.msra.mxu0 %v4868
    %6820 = vmatpush.msra.mxu0 %v4860
    %6821 = vmatpush.msra.mxu0 %v4852
    %6822 = vmatpush.msra.mxu0 %v4844
    %6823 = vmatmul.f32.gmra.mxu0 %v6546
    %v6824 = vpop.f32.mrf.mxu0
    %v6825 = vadd.f32 %v6805, %v6824
    %6826 = vdwg.mxu0
    %6827 = vmatpush.msra.mxu0 %v4837
    %6828 = vmatpush.msra.mxu0 %v4829
    %6829 = vmatpush.msra.mxu0 %v4821
    %6830 = vmatpush.msra.mxu0 %v4813
    %6831 = vmatpush.msra.mxu0 %v4805
    %6832 = vmatpush.msra.mxu0 %v4797
    %6833 = vmatpush.msra.mxu0 %v4789
    %6834 = vmatpush.msra.mxu0 %v4781
    %6835 = vmatpush.msra.mxu0 %v4773
    %6836 = vmatpush.msra.mxu0 %v4765
    %6837 = vmatpush.msra.mxu0 %v4757
    %6838 = vmatpush.msra.mxu0 %v4749
    %6839 = vmatpush.msra.mxu0 %v4741
    %6840 = vmatpush.msra.mxu0 %v4733
    %6841 = vmatpush.msra.mxu0 %v4725
    %6842 = vmatpush.msra.mxu0 %v4717
    %6843 = vmatmul.f32.gmra.mxu0 %v6545
    %v6844 = vpop.f32.mrf.mxu0
    %v6845 = vadd.f32 0.0, %v6844
    %6846 = vdwg.mxu0
    %6847 = vmatpush.msra.mxu0 %v4965
    %6848 = vmatpush.msra.mxu0 %v4957
    %6849 = vmatpush.msra.mxu0 %v4949
    %6850 = vmatpush.msra.mxu0 %v4941
    %6851 = vmatpush.msra.mxu0 %v4933
    %6852 = vmatpush.msra.mxu0 %v4925
    %6853 = vmatpush.msra.mxu0 %v4917
    %6854 = vmatpush.msra.mxu0 %v4909
    %6855 = vmatpush.msra.mxu0 %v4901
    %6856 = vmatpush.msra.mxu0 %v4893
    %6857 = vmatpush.msra.mxu0 %v4885
    %6858 = vmatpush.msra.mxu0 %v4877
    %6859 = vmatpush.msra.mxu0 %v4869
    %6860 = vmatpush.msra.mxu0 %v4861
    %6861 = vmatpush.msra.mxu0 %v4853
    %6862 = vmatpush.msra.mxu0 %v4845
    %6863 = vmatmul.f32.gmra.mxu0 %v6546
    %v6864 = vpop.f32.mrf.mxu0
    %v6865 = vadd.f32 %v6845, %v6864
    %6866 = vdwg.mxu0
    %v6867 = vadd.f32 %v5048, %v6585
    %v6868 = vadd.f32 %v5139, %v6625
    %v6869 = vadd.f32 %v5212, %v6665
    %v6870 = vadd.f32 %v5303, %v6705
    %v6871 = vadd.f32 %v5376, %v6745
    %v6872 = vadd.f32 %v5467, %v6785
    %v6873 = vadd.f32 %v5540, %v6825
    %v6874 = vadd.f32 %v5631, %v6865
    %v6875 = vxor.u32 %v6867, 2147483648
    %v6876 = vxor.u32 %v6868, 2147483648
    %v6877 = vxor.u32 %v6869, 2147483648
    %v6878 = vxor.u32 %v6870, 2147483648
    %v6879 = vxor.u32 %v6871, 2147483648
    %v6880 = vxor.u32 %v6872, 2147483648
    %v6881 = vmul.f32 %v6875, 1.442695
    %v6882 = vpow.pop %v6881
    %v6883 = vmul.f32 %v6876, 1.442695
    %v6884 = vpow.pop %v6883
    %v6885 = vmul.f32 %v6877, 1.442695
    %v6886 = vpow.pop %v6885
    %v6887 = vmul.f32 %v6878, 1.442695
    %v6888 = vpow.pop %v6887
    %v6889 = vmul.f32 %v6879, 1.442695
    %v6890 = vpow.pop %v6889
    %v6891 = vmul.f32 %v6880, 1.442695
    %v6892 = vpow.pop %v6891
    %v6893 = vadd.f32 %v6882, 1.0
    %v6894 = vadd.f32 %v6884, 1.0
    %v6895 = vadd.f32 %v6886, 1.0
    %v6896 = vadd.f32 %v6888, 1.0
    %v6897 = vadd.f32 %v6890, 1.0
    %v6898 = vadd.f32 %v6892, 1.0
    %v6899 = vrcp.pop %v6893
    %v6900 = vmul.f32 %v6893, %v6899
    %v6901 = vsub.f32 1.0, %v6900
    %v6902 = vmul.f32 %v6899, %v6901
    %v6903 = vadd.f32 %v6899, %v6902
    %vm6904 = vweird.f32 %v6893
    %vm6905 = vweird.f32 %v6899
    %vm6906 = vmor %vm6904, %vm6905
    %v6907 = vsel %vm6906, %v6899, %v6903
    %v6908 = vand.u32 2147483647, %v6893
    %vm6909 = vcmp.eq.f32.partialorder %v6908, 8.507059e+37
    %v6910 = vand.u32 %v6893, 2147483648
    %v6911 = vor.u32 1.1754944e-38, %v6910
    %v6912 = vsel %vm6909, %v6911, %v6907
    %v6913 = vmul.f32 1.0, %v6912
    %v6914 = vrcp.pop %v6894
    %v6915 = vmul.f32 %v6894, %v6914
    %v6916 = vsub.f32 1.0, %v6915
    %v6917 = vmul.f32 %v6914, %v6916
    %v6918 = vadd.f32 %v6914, %v6917
    %vm6919 = vweird.f32 %v6894
    %vm6920 = vweird.f32 %v6914
    %vm6921 = vmor %vm6919, %vm6920
    %v6922 = vsel %vm6921, %v6914, %v6918
    %v6923 = vand.u32 2147483647, %v6894
    %vm6924 = vcmp.eq.f32.partialorder %v6923, 8.507059e+37
    %v6925 = vand.u32 %v6894, 2147483648
    %v6926 = vor.u32 1.1754944e-38, %v6925
    %v6927 = vsel %vm6924, %v6926, %v6922
    %v6928 = vmul.f32 1.0, %v6927
    %v6929 = vrcp.pop %v6895
    %v6930 = vmul.f32 %v6895, %v6929
    %v6931 = vsub.f32 1.0, %v6930
    %v6932 = vmul.f32 %v6929, %v6931
    %v6933 = vadd.f32 %v6929, %v6932
    %vm6934 = vweird.f32 %v6895
    %vm6935 = vweird.f32 %v6929
    %vm6936 = vmor %vm6934, %vm6935
    %v6937 = vsel %vm6936, %v6929, %v6933
    %v6938 = vand.u32 2147483647, %v6895
    %vm6939 = vcmp.eq.f32.partialorder %v6938, 8.507059e+37
    %v6940 = vand.u32 %v6895, 2147483648
    %v6941 = vor.u32 1.1754944e-38, %v6940
    %v6942 = vsel %vm6939, %v6941, %v6937
    %v6943 = vmul.f32 1.0, %v6942
    %v6944 = vrcp.pop %v6896
    %v6945 = vmul.f32 %v6896, %v6944
    %v6946 = vsub.f32 1.0, %v6945
    %v6947 = vmul.f32 %v6944, %v6946
    %v6948 = vadd.f32 %v6944, %v6947
    %vm6949 = vweird.f32 %v6896
    %vm6950 = vweird.f32 %v6944
    %vm6951 = vmor %vm6949, %vm6950
    %v6952 = vsel %vm6951, %v6944, %v6948
    %v6953 = vand.u32 2147483647, %v6896
    %vm6954 = vcmp.eq.f32.partialorder %v6953, 8.507059e+37
    %v6955 = vand.u32 %v6896, 2147483648
    %v6956 = vor.u32 1.1754944e-38, %v6955
    %v6957 = vsel %vm6954, %v6956, %v6952
    %v6958 = vmul.f32 1.0, %v6957
    %v6959 = vrcp.pop %v6897
    %v6960 = vmul.f32 %v6897, %v6959
    %v6961 = vsub.f32 1.0, %v6960
    %v6962 = vmul.f32 %v6959, %v6961
    %v6963 = vadd.f32 %v6959, %v6962
    %vm6964 = vweird.f32 %v6897
    %vm6965 = vweird.f32 %v6959
    %vm6966 = vmor %vm6964, %vm6965
    %v6967 = vsel %vm6966, %v6959, %v6963
    %v6968 = vand.u32 2147483647, %v6897
    %vm6969 = vcmp.eq.f32.partialorder %v6968, 8.507059e+37
    %v6970 = vand.u32 %v6897, 2147483648
    %v6971 = vor.u32 1.1754944e-38, %v6970
    %v6972 = vsel %vm6969, %v6971, %v6967
    %v6973 = vmul.f32 1.0, %v6972
    %v6974 = vrcp.pop %v6898
    %v6975 = vmul.f32 %v6898, %v6974
    %v6976 = vsub.f32 1.0, %v6975
    %v6977 = vmul.f32 %v6974, %v6976
    %v6978 = vadd.f32 %v6974, %v6977
    %vm6979 = vweird.f32 %v6898
    %vm6980 = vweird.f32 %v6974
    %vm6981 = vmor %vm6979, %vm6980
    %v6982 = vsel %vm6981, %v6974, %v6978
    %v6983 = vand.u32 2147483647, %v6898
    %vm6984 = vcmp.eq.f32.partialorder %v6983, 8.507059e+37
    %v6985 = vand.u32 %v6898, 2147483648
    %v6986 = vor.u32 1.1754944e-38, %v6985
    %v6987 = vsel %vm6984, %v6986, %v6982
    %v6988 = vmul.f32 1.0, %v6987
    %v6989 = vtanh.pop %v6873
    %v6990 = vtanh.pop %v6874
    %v6991 = vmul.f32 %v6943, %v6541
    %v6992 = vmul.f32 %v6958, %v6542
    %v6993 = vmul.f32 %v6913, %v6989
    %v6994 = vmul.f32 %v6928, %v6990
    %v6995 = vadd.f32 %v6991, %v6993
    %v6996 = vadd.f32 %v6992, %v6994
    %v6997 = vtanh.pop %v6995
    %v6998 = vtanh.pop %v6996
    %v6999 = vmul.f32 %v6973, %v6997
    %v7000 = vmul.f32 %v6988, %v6998
    %7001 = vmatpush.msra.mxu0 %v4830
    %7002 = vmatpush.msra.mxu0 %v4822
    %7003 = vmatpush.msra.mxu0 %v4814
    %7004 = vmatpush.msra.mxu0 %v4806
    %7005 = vmatpush.msra.mxu0 %v4798
    %7006 = vmatpush.msra.mxu0 %v4790
    %7007 = vmatpush.msra.mxu0 %v4782
    %7008 = vmatpush.msra.mxu0 %v4774
    %7009 = vmatpush.msra.mxu0 %v4766
    %7010 = vmatpush.msra.mxu0 %v4758
    %7011 = vmatpush.msra.mxu0 %v4750
    %7012 = vmatpush.msra.mxu0 %v4742
    %7013 = vmatpush.msra.mxu0 %v4734
    %7014 = vmatpush.msra.mxu0 %v4726
    %7015 = vmatpush.msra.mxu0 %v4718
    %7016 = vmatpush.msra.mxu0 %v4710
    %7017 = vmatmul.f32.gmra.mxu0 %v6999
    %v7018 = vpop.f32.mrf.mxu0
    %v7019 = vadd.f32 0.0, %v7018
    %7020 = vdwg.mxu0
    %7021 = vmatpush.msra.mxu0 %v4958
    %7022 = vmatpush.msra.mxu0 %v4950
    %7023 = vmatpush.msra.mxu0 %v4942
    %7024 = vmatpush.msra.mxu0 %v4934
    %7025 = vmatpush.msra.mxu0 %v4926
    %7026 = vmatpush.msra.mxu0 %v4918
    %7027 = vmatpush.msra.mxu0 %v4910
    %7028 = vmatpush.msra.mxu0 %v4902
    %7029 = vmatpush.msra.mxu0 %v4894
    %7030 = vmatpush.msra.mxu0 %v4886
    %7031 = vmatpush.msra.mxu0 %v4878
    %7032 = vmatpush.msra.mxu0 %v4870
    %7033 = vmatpush.msra.mxu0 %v4862
    %7034 = vmatpush.msra.mxu0 %v4854
    %7035 = vmatpush.msra.mxu0 %v4846
    %7036 = vmatpush.msra.mxu0 %v4838
    %7037 = vmatmul.f32.gmra.mxu0 %v7000
    %v7038 = vpop.f32.mrf.mxu0
    %v7039 = vadd.f32 %v7019, %v7038
    %7040 = vdwg.mxu0
    %7041 = vmatpush.msra.mxu0 %v4831
    %7042 = vmatpush.msra.mxu0 %v4823
    %7043 = vmatpush.msra.mxu0 %v4815
    %7044 = vmatpush.msra.mxu0 %v4807
    %7045 = vmatpush.msra.mxu0 %v4799
    %7046 = vmatpush.msra.mxu0 %v4791
    %7047 = vmatpush.msra.mxu0 %v4783
    %7048 = vmatpush.msra.mxu0 %v4775
    %7049 = vmatpush.msra.mxu0 %v4767
    %7050 = vmatpush.msra.mxu0 %v4759
    %7051 = vmatpush.msra.mxu0 %v4751
    %7052 = vmatpush.msra.mxu0 %v4743
    %7053 = vmatpush.msra.mxu0 %v4735
    %7054 = vmatpush.msra.mxu0 %v4727
    %7055 = vmatpush.msra.mxu0 %v4719
    %7056 = vmatpush.msra.mxu0 %v4711
    %7057 = vmatmul.f32.gmra.mxu0 %v6999
    %v7058 = vpop.f32.mrf.mxu0
    %v7059 = vadd.f32 0.0, %v7058
    %7060 = vdwg.mxu0
    %7061 = vmatpush.msra.mxu0 %v4959
    %7062 = vmatpush.msra.mxu0 %v4951
    %7063 = vmatpush.msra.mxu0 %v4943
    %7064 = vmatpush.msra.mxu0 %v4935
    %7065 = vmatpush.msra.mxu0 %v4927
    %7066 = vmatpush.msra.mxu0 %v4919
    %7067 = vmatpush.msra.mxu0 %v4911
    %7068 = vmatpush.msra.mxu0 %v4903
    %7069 = vmatpush.msra.mxu0 %v4895
    %7070 = vmatpush.msra.mxu0 %v4887
    %7071 = vmatpush.msra.mxu0 %v4879
    %7072 = vmatpush.msra.mxu0 %v4871
    %7073 = vmatpush.msra.mxu0 %v4863
    %7074 = vmatpush.msra.mxu0 %v4855
    %7075 = vmatpush.msra.mxu0 %v4847
    %7076 = vmatpush.msra.mxu0 %v4839
    %7077 = vmatmul.f32.gmra.mxu0 %v7000
    %v7078 = vpop.f32.mrf.mxu0
    %v7079 = vadd.f32 %v7059, %v7078
    %7080 = vdwg.mxu0
    %7081 = vmatpush.msra.mxu0 %v4832
    %7082 = vmatpush.msra.mxu0 %v4824
    %7083 = vmatpush.msra.mxu0 %v4816
    %7084 = vmatpush.msra.mxu0 %v4808
    %7085 = vmatpush.msra.mxu0 %v4800
    %7086 = vmatpush.msra.mxu0 %v4792
    %7087 = vmatpush.msra.mxu0 %v4784
    %7088 = vmatpush.msra.mxu0 %v4776
    %7089 = vmatpush.msra.mxu0 %v4768
    %7090 = vmatpush.msra.mxu0 %v4760
    %7091 = vmatpush.msra.mxu0 %v4752
    %7092 = vmatpush.msra.mxu0 %v4744
    %7093 = vmatpush.msra.mxu0 %v4736
    %7094 = vmatpush.msra.mxu0 %v4728
    %7095 = vmatpush.msra.mxu0 %v4720
    %7096 = vmatpush.msra.mxu0 %v4712
    %7097 = vmatmul.f32.gmra.mxu0 %v6999
    %v7098 = vpop.f32.mrf.mxu0
    %v7099 = vadd.f32 0.0, %v7098
    %7100 = vdwg.mxu0
    %7101 = vmatpush.msra.mxu0 %v4960
    %7102 = vmatpush.msra.mxu0 %v4952
    %7103 = vmatpush.msra.mxu0 %v4944
    %7104 = vmatpush.msra.mxu0 %v4936
    %7105 = vmatpush.msra.mxu0 %v4928
    %7106 = vmatpush.msra.mxu0 %v4920
    %7107 = vmatpush.msra.mxu0 %v4912
    %7108 = vmatpush.msra.mxu0 %v4904
    %7109 = vmatpush.msra.mxu0 %v4896
    %7110 = vmatpush.msra.mxu0 %v4888
    %7111 = vmatpush.msra.mxu0 %v4880
    %7112 = vmatpush.msra.mxu0 %v4872
    %7113 = vmatpush.msra.mxu0 %v4864
    %7114 = vmatpush.msra.mxu0 %v4856
    %7115 = vmatpush.msra.mxu0 %v4848
    %7116 = vmatpush.msra.mxu0 %v4840
    %7117 = vmatmul.f32.gmra.mxu0 %v7000
    %v7118 = vpop.f32.mrf.mxu0
    %v7119 = vadd.f32 %v7099, %v7118
    %7120 = vdwg.mxu0
    %7121 = vmatpush.msra.mxu0 %v4833
    %7122 = vmatpush.msra.mxu0 %v4825
    %7123 = vmatpush.msra.mxu0 %v4817
    %7124 = vmatpush.msra.mxu0 %v4809
    %7125 = vmatpush.msra.mxu0 %v4801
    %7126 = vmatpush.msra.mxu0 %v4793
    %7127 = vmatpush.msra.mxu0 %v4785
    %7128 = vmatpush.msra.mxu0 %v4777
    %7129 = vmatpush.msra.mxu0 %v4769
    %7130 = vmatpush.msra.mxu0 %v4761
    %7131 = vmatpush.msra.mxu0 %v4753
    %7132 = vmatpush.msra.mxu0 %v4745
    %7133 = vmatpush.msra.mxu0 %v4737
    %7134 = vmatpush.msra.mxu0 %v4729
    %7135 = vmatpush.msra.mxu0 %v4721
    %7136 = vmatpush.msra.mxu0 %v4713
    %7137 = vmatmul.f32.gmra.mxu0 %v6999
    %v7138 = vpop.f32.mrf.mxu0
    %v7139 = vadd.f32 0.0, %v7138
    %7140 = vdwg.mxu0
    %7141 = vmatpush.msra.mxu0 %v4961
    %7142 = vmatpush.msra.mxu0 %v4953
    %7143 = vmatpush.msra.mxu0 %v4945
    %7144 = vmatpush.msra.mxu0 %v4937
    %7145 = vmatpush.msra.mxu0 %v4929
    %7146 = vmatpush.msra.mxu0 %v4921
    %7147 = vmatpush.msra.mxu0 %v4913
    %7148 = vmatpush.msra.mxu0 %v4905
    %7149 = vmatpush.msra.mxu0 %v4897
    %7150 = vmatpush.msra.mxu0 %v4889
    %7151 = vmatpush.msra.mxu0 %v4881
    %7152 = vmatpush.msra.mxu0 %v4873
    %7153 = vmatpush.msra.mxu0 %v4865
    %7154 = vmatpush.msra.mxu0 %v4857
    %7155 = vmatpush.msra.mxu0 %v4849
    %7156 = vmatpush.msra.mxu0 %v4841
    %7157 = vmatmul.f32.gmra.mxu0 %v7000
    %v7158 = vpop.f32.mrf.mxu0
    %v7159 = vadd.f32 %v7139, %v7158
    %7160 = vdwg.mxu0
    %7161 = vmatpush.msra.mxu0 %v4834
    %7162 = vmatpush.msra.mxu0 %v4826
    %7163 = vmatpush.msra.mxu0 %v4818
    %7164 = vmatpush.msra.mxu0 %v4810
    %7165 = vmatpush.msra.mxu0 %v4802
    %7166 = vmatpush.msra.mxu0 %v4794
    %7167 = vmatpush.msra.mxu0 %v4786
    %7168 = vmatpush.msra.mxu0 %v4778
    %7169 = vmatpush.msra.mxu0 %v4770
    %7170 = vmatpush.msra.mxu0 %v4762
    %7171 = vmatpush.msra.mxu0 %v4754
    %7172 = vmatpush.msra.mxu0 %v4746
    %7173 = vmatpush.msra.mxu0 %v4738
    %7174 = vmatpush.msra.mxu0 %v4730
    %7175 = vmatpush.msra.mxu0 %v4722
    %7176 = vmatpush.msra.mxu0 %v4714
    %7177 = vmatmul.f32.gmra.mxu0 %v6999
    %v7178 = vpop.f32.mrf.mxu0
    %v7179 = vadd.f32 0.0, %v7178
    %7180 = vdwg.mxu0
    %7181 = vmatpush.msra.mxu0 %v4962
    %7182 = vmatpush.msra.mxu0 %v4954
    %7183 = vmatpush.msra.mxu0 %v4946
    %7184 = vmatpush.msra.mxu0 %v4938
    %7185 = vmatpush.msra.mxu0 %v4930
    %7186 = vmatpush.msra.mxu0 %v4922
    %7187 = vmatpush.msra.mxu0 %v4914
    %7188 = vmatpush.msra.mxu0 %v4906
    %7189 = vmatpush.msra.mxu0 %v4898
    %7190 = vmatpush.msra.mxu0 %v4890
    %7191 = vmatpush.msra.mxu0 %v4882
    %7192 = vmatpush.msra.mxu0 %v4874
    %7193 = vmatpush.msra.mxu0 %v4866
    %7194 = vmatpush.msra.mxu0 %v4858
    %7195 = vmatpush.msra.mxu0 %v4850
    %7196 = vmatpush.msra.mxu0 %v4842
    %7197 = vmatmul.f32.gmra.mxu0 %v7000
    %v7198 = vpop.f32.mrf.mxu0
    %v7199 = vadd.f32 %v7179, %v7198
    %7200 = vdwg.mxu0
    %7201 = vmatpush.msra.mxu0 %v4835
    %7202 = vmatpush.msra.mxu0 %v4827
    %7203 = vmatpush.msra.mxu0 %v4819
    %7204 = vmatpush.msra.mxu0 %v4811
    %7205 = vmatpush.msra.mxu0 %v4803
    %7206 = vmatpush.msra.mxu0 %v4795
    %7207 = vmatpush.msra.mxu0 %v4787
    %7208 = vmatpush.msra.mxu0 %v4779
    %7209 = vmatpush.msra.mxu0 %v4771
    %7210 = vmatpush.msra.mxu0 %v4763
    %7211 = vmatpush.msra.mxu0 %v4755
    %7212 = vmatpush.msra.mxu0 %v4747
    %7213 = vmatpush.msra.mxu0 %v4739
    %7214 = vmatpush.msra.mxu0 %v4731
    %7215 = vmatpush.msra.mxu0 %v4723
    %7216 = vmatpush.msra.mxu0 %v4715
    %7217 = vmatmul.f32.gmra.mxu0 %v6999
    %v7218 = vpop.f32.mrf.mxu0
    %v7219 = vadd.f32 0.0, %v7218
    %7220 = vdwg.mxu0
    %7221 = vmatpush.msra.mxu0 %v4963
    %7222 = vmatpush.msra.mxu0 %v4955
    %7223 = vmatpush.msra.mxu0 %v4947
    %7224 = vmatpush.msra.mxu0 %v4939
    %7225 = vmatpush.msra.mxu0 %v4931
    %7226 = vmatpush.msra.mxu0 %v4923
    %7227 = vmatpush.msra.mxu0 %v4915
    %7228 = vmatpush.msra.mxu0 %v4907
    %7229 = vmatpush.msra.mxu0 %v4899
    %7230 = vmatpush.msra.mxu0 %v4891
    %7231 = vmatpush.msra.mxu0 %v4883
    %7232 = vmatpush.msra.mxu0 %v4875
    %7233 = vmatpush.msra.mxu0 %v4867
    %7234 = vmatpush.msra.mxu0 %v4859
    %7235 = vmatpush.msra.mxu0 %v4851
    %7236 = vmatpush.msra.mxu0 %v4843
    %7237 = vmatmul.f32.gmra.mxu0 %v7000
    %v7238 = vpop.f32.mrf.mxu0
    %v7239 = vadd.f32 %v7219, %v7238
    %7240 = vdwg.mxu0
    %7241 = vmatpush.msra.mxu0 %v4836
    %7242 = vmatpush.msra.mxu0 %v4828
    %7243 = vmatpush.msra.mxu0 %v4820
    %7244 = vmatpush.msra.mxu0 %v4812
    %7245 = vmatpush.msra.mxu0 %v4804
    %7246 = vmatpush.msra.mxu0 %v4796
    %7247 = vmatpush.msra.mxu0 %v4788
    %7248 = vmatpush.msra.mxu0 %v4780
    %7249 = vmatpush.msra.mxu0 %v4772
    %7250 = vmatpush.msra.mxu0 %v4764
    %7251 = vmatpush.msra.mxu0 %v4756
    %7252 = vmatpush.msra.mxu0 %v4748
    %7253 = vmatpush.msra.mxu0 %v4740
    %7254 = vmatpush.msra.mxu0 %v4732
    %7255 = vmatpush.msra.mxu0 %v4724
    %7256 = vmatpush.msra.mxu0 %v4716
    %7257 = vmatmul.f32.gmra.mxu0 %v6999
    %v7258 = vpop.f32.mrf.mxu0
    %v7259 = vadd.f32 0.0, %v7258
    %7260 = vdwg.mxu0
    %7261 = vmatpush.msra.mxu0 %v4964
    %7262 = vmatpush.msra.mxu0 %v4956
    %7263 = vmatpush.msra.mxu0 %v4948
    %7264 = vmatpush.msra.mxu0 %v4940
    %7265 = vmatpush.msra.mxu0 %v4932
    %7266 = vmatpush.msra.mxu0 %v4924
    %7267 = vmatpush.msra.mxu0 %v4916
    %7268 = vmatpush.msra.mxu0 %v4908
    %7269 = vmatpush.msra.mxu0 %v4900
    %7270 = vmatpush.msra.mxu0 %v4892
    %7271 = vmatpush.msra.mxu0 %v4884
    %7272 = vmatpush.msra.mxu0 %v4876
    %7273 = vmatpush.msra.mxu0 %v4868
    %7274 = vmatpush.msra.mxu0 %v4860
    %7275 = vmatpush.msra.mxu0 %v4852
    %7276 = vmatpush.msra.mxu0 %v4844
    %7277 = vmatmul.f32.gmra.mxu0 %v7000
    %v7278 = vpop.f32.mrf.mxu0
    %v7279 = vadd.f32 %v7259, %v7278
    %7280 = vdwg.mxu0
    %7281 = vmatpush.msra.mxu0 %v4837
    %7282 = vmatpush.msra.mxu0 %v4829
    %7283 = vmatpush.msra.mxu0 %v4821
    %7284 = vmatpush.msra.mxu0 %v4813
    %7285 = vmatpush.msra.mxu0 %v4805
    %7286 = vmatpush.msra.mxu0 %v4797
    %7287 = vmatpush.msra.mxu0 %v4789
    %7288 = vmatpush.msra.mxu0 %v4781
    %7289 = vmatpush.msra.mxu0 %v4773
    %7290 = vmatpush.msra.mxu0 %v4765
    %7291 = vmatpush.msra.mxu0 %v4757
    %7292 = vmatpush.msra.mxu0 %v4749
    %7293 = vmatpush.msra.mxu0 %v4741
    %7294 = vmatpush.msra.mxu0 %v4733
    %7295 = vmatpush.msra.mxu0 %v4725
    %7296 = vmatpush.msra.mxu0 %v4717
    %7297 = vmatmul.f32.gmra.mxu0 %v6999
    %v7298 = vpop.f32.mrf.mxu0
    %v7299 = vadd.f32 0.0, %v7298
    %7300 = vdwg.mxu0
    %7301 = vmatpush.msra.mxu0 %v4965
    %7302 = vmatpush.msra.mxu0 %v4957
    %7303 = vmatpush.msra.mxu0 %v4949
    %7304 = vmatpush.msra.mxu0 %v4941
    %7305 = vmatpush.msra.mxu0 %v4933
    %7306 = vmatpush.msra.mxu0 %v4925
    %7307 = vmatpush.msra.mxu0 %v4917
    %7308 = vmatpush.msra.mxu0 %v4909
    %7309 = vmatpush.msra.mxu0 %v4901
    %7310 = vmatpush.msra.mxu0 %v4893
    %7311 = vmatpush.msra.mxu0 %v4885
    %7312 = vmatpush.msra.mxu0 %v4877
    %7313 = vmatpush.msra.mxu0 %v4869
    %7314 = vmatpush.msra.mxu0 %v4861
    %7315 = vmatpush.msra.mxu0 %v4853
    %7316 = vmatpush.msra.mxu0 %v4845
    %7317 = vmatmul.f32.gmra.mxu0 %v7000
    %v7318 = vpop.f32.mrf.mxu0
    %v7319 = vadd.f32 %v7299, %v7318
    %7320 = vdwg.mxu0
    %v7321 = vadd.f32 %v5051, %v7039
    %v7322 = vadd.f32 %v5136, %v7079
    %v7323 = vadd.f32 %v5215, %v7119
    %v7324 = vadd.f32 %v5300, %v7159
    %v7325 = vadd.f32 %v5379, %v7199
    %v7326 = vadd.f32 %v5464, %v7239
    %v7327 = vadd.f32 %v5543, %v7279
    %v7328 = vadd.f32 %v5628, %v7319
    %v7329 = vxor.u32 %v7321, 2147483648
    %v7330 = vxor.u32 %v7322, 2147483648
    %v7331 = vxor.u32 %v7323, 2147483648
    %v7332 = vxor.u32 %v7324, 2147483648
    %v7333 = vxor.u32 %v7325, 2147483648
    %v7334 = vxor.u32 %v7326, 2147483648
    %v7335 = vmul.f32 %v7329, 1.442695
    %v7336 = vpow.pop %v7335
    %v7337 = vmul.f32 %v7330, 1.442695
    %v7338 = vpow.pop %v7337
    %v7339 = vmul.f32 %v7331, 1.442695
    %v7340 = vpow.pop %v7339
    %v7341 = vmul.f32 %v7332, 1.442695
    %v7342 = vpow.pop %v7341
    %v7343 = vmul.f32 %v7333, 1.442695
    %v7344 = vpow.pop %v7343
    %v7345 = vmul.f32 %v7334, 1.442695
    %v7346 = vpow.pop %v7345
    %v7347 = vadd.f32 %v7336, 1.0
    %v7348 = vadd.f32 %v7338, 1.0
    %v7349 = vadd.f32 %v7340, 1.0
    %v7350 = vadd.f32 %v7342, 1.0
    %v7351 = vadd.f32 %v7344, 1.0
    %v7352 = vadd.f32 %v7346, 1.0
    %v7353 = vrcp.pop %v7347
    %v7354 = vmul.f32 %v7347, %v7353
    %v7355 = vsub.f32 1.0, %v7354
    %v7356 = vmul.f32 %v7353, %v7355
    %v7357 = vadd.f32 %v7353, %v7356
    %vm7358 = vweird.f32 %v7347
    %vm7359 = vweird.f32 %v7353
    %vm7360 = vmor %vm7358, %vm7359
    %v7361 = vsel %vm7360, %v7353, %v7357
    %v7362 = vand.u32 2147483647, %v7347
    %vm7363 = vcmp.eq.f32.partialorder %v7362, 8.507059e+37
    %v7364 = vand.u32 %v7347, 2147483648
    %v7365 = vor.u32 1.1754944e-38, %v7364
    %v7366 = vsel %vm7363, %v7365, %v7361
    %v7367 = vmul.f32 1.0, %v7366
    %v7368 = vrcp.pop %v7348
    %v7369 = vmul.f32 %v7348, %v7368
    %v7370 = vsub.f32 1.0, %v7369
    %v7371 = vmul.f32 %v7368, %v7370
    %v7372 = vadd.f32 %v7368, %v7371
    %vm7373 = vweird.f32 %v7348
    %vm7374 = vweird.f32 %v7368
    %vm7375 = vmor %vm7373, %vm7374
    %v7376 = vsel %vm7375, %v7368, %v7372
    %v7377 = vand.u32 2147483647, %v7348
    %vm7378 = vcmp.eq.f32.partialorder %v7377, 8.507059e+37
    %v7379 = vand.u32 %v7348, 2147483648
    %v7380 = vor.u32 1.1754944e-38, %v7379
    %v7381 = vsel %vm7378, %v7380, %v7376
    %v7382 = vmul.f32 1.0, %v7381
    %v7383 = vrcp.pop %v7349
    %v7384 = vmul.f32 %v7349, %v7383
    %v7385 = vsub.f32 1.0, %v7384
    %v7386 = vmul.f32 %v7383, %v7385
    %v7387 = vadd.f32 %v7383, %v7386
    %vm7388 = vweird.f32 %v7349
    %vm7389 = vweird.f32 %v7383
    %vm7390 = vmor %vm7388, %vm7389
    %v7391 = vsel %vm7390, %v7383, %v7387
    %v7392 = vand.u32 2147483647, %v7349
    %vm7393 = vcmp.eq.f32.partialorder %v7392, 8.507059e+37
    %v7394 = vand.u32 %v7349, 2147483648
    %v7395 = vor.u32 1.1754944e-38, %v7394
    %v7396 = vsel %vm7393, %v7395, %v7391
    %v7397 = vmul.f32 1.0, %v7396
    %v7398 = vrcp.pop %v7350
    %v7399 = vmul.f32 %v7350, %v7398
    %v7400 = vsub.f32 1.0, %v7399
    %v7401 = vmul.f32 %v7398, %v7400
    %v7402 = vadd.f32 %v7398, %v7401
    %vm7403 = vweird.f32 %v7350
    %vm7404 = vweird.f32 %v7398
    %vm7405 = vmor %vm7403, %vm7404
    %v7406 = vsel %vm7405, %v7398, %v7402
    %v7407 = vand.u32 2147483647, %v7350
    %vm7408 = vcmp.eq.f32.partialorder %v7407, 8.507059e+37
    %v7409 = vand.u32 %v7350, 2147483648
    %v7410 = vor.u32 1.1754944e-38, %v7409
    %v7411 = vsel %vm7408, %v7410, %v7406
    %v7412 = vmul.f32 1.0, %v7411
    %v7413 = vrcp.pop %v7351
    %v7414 = vmul.f32 %v7351, %v7413
    %v7415 = vsub.f32 1.0, %v7414
    %v7416 = vmul.f32 %v7413, %v7415
    %v7417 = vadd.f32 %v7413, %v7416
    %vm7418 = vweird.f32 %v7351
    %vm7419 = vweird.f32 %v7413
    %vm7420 = vmor %vm7418, %vm7419
    %v7421 = vsel %vm7420, %v7413, %v7417
    %v7422 = vand.u32 2147483647, %v7351
    %vm7423 = vcmp.eq.f32.partialorder %v7422, 8.507059e+37
    %v7424 = vand.u32 %v7351, 2147483648
    %v7425 = vor.u32 1.1754944e-38, %v7424
    %v7426 = vsel %vm7423, %v7425, %v7421
    %v7427 = vmul.f32 1.0, %v7426
    %v7428 = vrcp.pop %v7352
    %v7429 = vmul.f32 %v7352, %v7428
    %v7430 = vsub.f32 1.0, %v7429
    %v7431 = vmul.f32 %v7428, %v7430
    %v7432 = vadd.f32 %v7428, %v7431
    %vm7433 = vweird.f32 %v7352
    %vm7434 = vweird.f32 %v7428
    %vm7435 = vmor %vm7433, %vm7434
    %v7436 = vsel %vm7435, %v7428, %v7432
    %v7437 = vand.u32 2147483647, %v7352
    %vm7438 = vcmp.eq.f32.partialorder %v7437, 8.507059e+37
    %v7439 = vand.u32 %v7352, 2147483648
    %v7440 = vor.u32 1.1754944e-38, %v7439
    %v7441 = vsel %vm7438, %v7440, %v7436
    %v7442 = vmul.f32 1.0, %v7441
    %v7443 = vtanh.pop %v7327
    %v7444 = vtanh.pop %v7328
    %v7445 = vmul.f32 %v7397, %v6995
    %v7446 = vmul.f32 %v7412, %v6996
    %v7447 = vmul.f32 %v7367, %v7443
    %v7448 = vmul.f32 %v7382, %v7444
    %v7449 = vadd.f32 %v7445, %v7447
    %v7450 = vadd.f32 %v7446, %v7448
    %v7451 = vtanh.pop %v7449
    %v7452 = vtanh.pop %v7450
    %v7453 = vmul.f32 %v7427, %v7451
    %v7454 = vmul.f32 %v7442, %v7452
    %7455 = vmatpush.msra.mxu0 %v4830
    %7456 = vmatpush.msra.mxu0 %v4822
    %7457 = vmatpush.msra.mxu0 %v4814
    %7458 = vmatpush.msra.mxu0 %v4806
    %7459 = vmatpush.msra.mxu0 %v4798
    %7460 = vmatpush.msra.mxu0 %v4790
    %7461 = vmatpush.msra.mxu0 %v4782
    %7462 = vmatpush.msra.mxu0 %v4774
    %7463 = vmatpush.msra.mxu0 %v4766
    %7464 = vmatpush.msra.mxu0 %v4758
    %7465 = vmatpush.msra.mxu0 %v4750
    %7466 = vmatpush.msra.mxu0 %v4742
    %7467 = vmatpush.msra.mxu0 %v4734
    %7468 = vmatpush.msra.mxu0 %v4726
    %7469 = vmatpush.msra.mxu0 %v4718
    %7470 = vmatpush.msra.mxu0 %v4710
    %7471 = vmatmul.f32.gmra.mxu0 %v7453
    %v7472 = vpop.f32.mrf.mxu0
    %v7473 = vadd.f32 0.0, %v7472
    %7474 = vdwg.mxu0
    %7475 = vmatpush.msra.mxu0 %v4958
    %7476 = vmatpush.msra.mxu0 %v4950
    %7477 = vmatpush.msra.mxu0 %v4942
    %7478 = vmatpush.msra.mxu0 %v4934
    %7479 = vmatpush.msra.mxu0 %v4926
    %7480 = vmatpush.msra.mxu0 %v4918
    %7481 = vmatpush.msra.mxu0 %v4910
    %7482 = vmatpush.msra.mxu0 %v4902
    %7483 = vmatpush.msra.mxu0 %v4894
    %7484 = vmatpush.msra.mxu0 %v4886
    %7485 = vmatpush.msra.mxu0 %v4878
    %7486 = vmatpush.msra.mxu0 %v4870
    %7487 = vmatpush.msra.mxu0 %v4862
    %7488 = vmatpush.msra.mxu0 %v4854
    %7489 = vmatpush.msra.mxu0 %v4846
    %7490 = vmatpush.msra.mxu0 %v4838
    %7491 = vmatmul.f32.gmra.mxu0 %v7454
    %v7492 = vpop.f32.mrf.mxu0
    %v7493 = vadd.f32 %v7473, %v7492
    %7494 = vdwg.mxu0
    %7495 = vmatpush.msra.mxu0 %v4831
    %7496 = vmatpush.msra.mxu0 %v4823
    %7497 = vmatpush.msra.mxu0 %v4815
    %7498 = vmatpush.msra.mxu0 %v4807
    %7499 = vmatpush.msra.mxu0 %v4799
    %7500 = vmatpush.msra.mxu0 %v4791
    %7501 = vmatpush.msra.mxu0 %v4783
    %7502 = vmatpush.msra.mxu0 %v4775
    %7503 = vmatpush.msra.mxu0 %v4767
    %7504 = vmatpush.msra.mxu0 %v4759
    %7505 = vmatpush.msra.mxu0 %v4751
    %7506 = vmatpush.msra.mxu0 %v4743
    %7507 = vmatpush.msra.mxu0 %v4735
    %7508 = vmatpush.msra.mxu0 %v4727
    %7509 = vmatpush.msra.mxu0 %v4719
    %7510 = vmatpush.msra.mxu0 %v4711
    %7511 = vmatmul.f32.gmra.mxu0 %v7453
    %v7512 = vpop.f32.mrf.mxu0
    %v7513 = vadd.f32 0.0, %v7512
    %7514 = vdwg.mxu0
    %7515 = vmatpush.msra.mxu0 %v4959
    %7516 = vmatpush.msra.mxu0 %v4951
    %7517 = vmatpush.msra.mxu0 %v4943
    %7518 = vmatpush.msra.mxu0 %v4935
    %7519 = vmatpush.msra.mxu0 %v4927
    %7520 = vmatpush.msra.mxu0 %v4919
    %7521 = vmatpush.msra.mxu0 %v4911
    %7522 = vmatpush.msra.mxu0 %v4903
    %7523 = vmatpush.msra.mxu0 %v4895
    %7524 = vmatpush.msra.mxu0 %v4887
    %7525 = vmatpush.msra.mxu0 %v4879
    %7526 = vmatpush.msra.mxu0 %v4871
    %7527 = vmatpush.msra.mxu0 %v4863
    %7528 = vmatpush.msra.mxu0 %v4855
    %7529 = vmatpush.msra.mxu0 %v4847
    %7530 = vmatpush.msra.mxu0 %v4839
    %7531 = vmatmul.f32.gmra.mxu0 %v7454
    %v7532 = vpop.f32.mrf.mxu0
    %v7533 = vadd.f32 %v7513, %v7532
    %7534 = vdwg.mxu0
    %7535 = vmatpush.msra.mxu0 %v4832
    %7536 = vmatpush.msra.mxu0 %v4824
    %7537 = vmatpush.msra.mxu0 %v4816
    %7538 = vmatpush.msra.mxu0 %v4808
    %7539 = vmatpush.msra.mxu0 %v4800
    %7540 = vmatpush.msra.mxu0 %v4792
    %7541 = vmatpush.msra.mxu0 %v4784
    %7542 = vmatpush.msra.mxu0 %v4776
    %7543 = vmatpush.msra.mxu0 %v4768
    %7544 = vmatpush.msra.mxu0 %v4760
    %7545 = vmatpush.msra.mxu0 %v4752
    %7546 = vmatpush.msra.mxu0 %v4744
    %7547 = vmatpush.msra.mxu0 %v4736
    %7548 = vmatpush.msra.mxu0 %v4728
    %7549 = vmatpush.msra.mxu0 %v4720
    %7550 = vmatpush.msra.mxu0 %v4712
    %7551 = vmatmul.f32.gmra.mxu0 %v7453
    %v7552 = vpop.f32.mrf.mxu0
    %v7553 = vadd.f32 0.0, %v7552
    %7554 = vdwg.mxu0
    %7555 = vmatpush.msra.mxu0 %v4960
    %7556 = vmatpush.msra.mxu0 %v4952
    %7557 = vmatpush.msra.mxu0 %v4944
    %7558 = vmatpush.msra.mxu0 %v4936
    %7559 = vmatpush.msra.mxu0 %v4928
    %7560 = vmatpush.msra.mxu0 %v4920
    %7561 = vmatpush.msra.mxu0 %v4912
    %7562 = vmatpush.msra.mxu0 %v4904
    %7563 = vmatpush.msra.mxu0 %v4896
    %7564 = vmatpush.msra.mxu0 %v4888
    %7565 = vmatpush.msra.mxu0 %v4880
    %7566 = vmatpush.msra.mxu0 %v4872
    %7567 = vmatpush.msra.mxu0 %v4864
    %7568 = vmatpush.msra.mxu0 %v4856
    %7569 = vmatpush.msra.mxu0 %v4848
    %7570 = vmatpush.msra.mxu0 %v4840
    %7571 = vmatmul.f32.gmra.mxu0 %v7454
    %v7572 = vpop.f32.mrf.mxu0
    %v7573 = vadd.f32 %v7553, %v7572
    %7574 = vdwg.mxu0
    %7575 = vmatpush.msra.mxu0 %v4833
    %7576 = vmatpush.msra.mxu0 %v4825
    %7577 = vmatpush.msra.mxu0 %v4817
    %7578 = vmatpush.msra.mxu0 %v4809
    %7579 = vmatpush.msra.mxu0 %v4801
    %7580 = vmatpush.msra.mxu0 %v4793
    %7581 = vmatpush.msra.mxu0 %v4785
    %7582 = vmatpush.msra.mxu0 %v4777
    %7583 = vmatpush.msra.mxu0 %v4769
    %7584 = vmatpush.msra.mxu0 %v4761
    %7585 = vmatpush.msra.mxu0 %v4753
    %7586 = vmatpush.msra.mxu0 %v4745
    %7587 = vmatpush.msra.mxu0 %v4737
    %7588 = vmatpush.msra.mxu0 %v4729
    %7589 = vmatpush.msra.mxu0 %v4721
    %7590 = vmatpush.msra.mxu0 %v4713
    %7591 = vmatmul.f32.gmra.mxu0 %v7453
    %v7592 = vpop.f32.mrf.mxu0
    %v7593 = vadd.f32 0.0, %v7592
    %7594 = vdwg.mxu0
    %7595 = vmatpush.msra.mxu0 %v4961
    %7596 = vmatpush.msra.mxu0 %v4953
    %7597 = vmatpush.msra.mxu0 %v4945
    %7598 = vmatpush.msra.mxu0 %v4937
    %7599 = vmatpush.msra.mxu0 %v4929
    %7600 = vmatpush.msra.mxu0 %v4921
    %7601 = vmatpush.msra.mxu0 %v4913
    %7602 = vmatpush.msra.mxu0 %v4905
    %7603 = vmatpush.msra.mxu0 %v4897
    %7604 = vmatpush.msra.mxu0 %v4889
    %7605 = vmatpush.msra.mxu0 %v4881
    %7606 = vmatpush.msra.mxu0 %v4873
    %7607 = vmatpush.msra.mxu0 %v4865
    %7608 = vmatpush.msra.mxu0 %v4857
    %7609 = vmatpush.msra.mxu0 %v4849
    %7610 = vmatpush.msra.mxu0 %v4841
    %7611 = vmatmul.f32.gmra.mxu0 %v7454
    %v7612 = vpop.f32.mrf.mxu0
    %v7613 = vadd.f32 %v7593, %v7612
    %7614 = vdwg.mxu0
    %7615 = vmatpush.msra.mxu0 %v4834
    %7616 = vmatpush.msra.mxu0 %v4826
    %7617 = vmatpush.msra.mxu0 %v4818
    %7618 = vmatpush.msra.mxu0 %v4810
    %7619 = vmatpush.msra.mxu0 %v4802
    %7620 = vmatpush.msra.mxu0 %v4794
    %7621 = vmatpush.msra.mxu0 %v4786
    %7622 = vmatpush.msra.mxu0 %v4778
    %7623 = vmatpush.msra.mxu0 %v4770
    %7624 = vmatpush.msra.mxu0 %v4762
    %7625 = vmatpush.msra.mxu0 %v4754
    %7626 = vmatpush.msra.mxu0 %v4746
    %7627 = vmatpush.msra.mxu0 %v4738
    %7628 = vmatpush.msra.mxu0 %v4730
    %7629 = vmatpush.msra.mxu0 %v4722
    %7630 = vmatpush.msra.mxu0 %v4714
    %7631 = vmatmul.f32.gmra.mxu0 %v7453
    %v7632 = vpop.f32.mrf.mxu0
    %v7633 = vadd.f32 0.0, %v7632
    %7634 = vdwg.mxu0
    %7635 = vmatpush.msra.mxu0 %v4962
    %7636 = vmatpush.msra.mxu0 %v4954
    %7637 = vmatpush.msra.mxu0 %v4946
    %7638 = vmatpush.msra.mxu0 %v4938
    %7639 = vmatpush.msra.mxu0 %v4930
    %7640 = vmatpush.msra.mxu0 %v4922
    %7641 = vmatpush.msra.mxu0 %v4914
    %7642 = vmatpush.msra.mxu0 %v4906
    %7643 = vmatpush.msra.mxu0 %v4898
    %7644 = vmatpush.msra.mxu0 %v4890
    %7645 = vmatpush.msra.mxu0 %v4882
    %7646 = vmatpush.msra.mxu0 %v4874
    %7647 = vmatpush.msra.mxu0 %v4866
    %7648 = vmatpush.msra.mxu0 %v4858
    %7649 = vmatpush.msra.mxu0 %v4850
    %7650 = vmatpush.msra.mxu0 %v4842
    %7651 = vmatmul.f32.gmra.mxu0 %v7454
    %v7652 = vpop.f32.mrf.mxu0
    %v7653 = vadd.f32 %v7633, %v7652
    %7654 = vdwg.mxu0
    %7655 = vmatpush.msra.mxu0 %v4835
    %7656 = vmatpush.msra.mxu0 %v4827
    %7657 = vmatpush.msra.mxu0 %v4819
    %7658 = vmatpush.msra.mxu0 %v4811
    %7659 = vmatpush.msra.mxu0 %v4803
    %7660 = vmatpush.msra.mxu0 %v4795
    %7661 = vmatpush.msra.mxu0 %v4787
    %7662 = vmatpush.msra.mxu0 %v4779
    %7663 = vmatpush.msra.mxu0 %v4771
    %7664 = vmatpush.msra.mxu0 %v4763
    %7665 = vmatpush.msra.mxu0 %v4755
    %7666 = vmatpush.msra.mxu0 %v4747
    %7667 = vmatpush.msra.mxu0 %v4739
    %7668 = vmatpush.msra.mxu0 %v4731
    %7669 = vmatpush.msra.mxu0 %v4723
    %7670 = vmatpush.msra.mxu0 %v4715
    %7671 = vmatmul.f32.gmra.mxu0 %v7453
    %v7672 = vpop.f32.mrf.mxu0
    %v7673 = vadd.f32 0.0, %v7672
    %7674 = vdwg.mxu0
    %7675 = vmatpush.msra.mxu0 %v4963
    %7676 = vmatpush.msra.mxu0 %v4955
    %7677 = vmatpush.msra.mxu0 %v4947
    %7678 = vmatpush.msra.mxu0 %v4939
    %7679 = vmatpush.msra.mxu0 %v4931
    %7680 = vmatpush.msra.mxu0 %v4923
    %7681 = vmatpush.msra.mxu0 %v4915
    %7682 = vmatpush.msra.mxu0 %v4907
    %7683 = vmatpush.msra.mxu0 %v4899
    %7684 = vmatpush.msra.mxu0 %v4891
    %7685 = vmatpush.msra.mxu0 %v4883
    %7686 = vmatpush.msra.mxu0 %v4875
    %7687 = vmatpush.msra.mxu0 %v4867
    %7688 = vmatpush.msra.mxu0 %v4859
    %7689 = vmatpush.msra.mxu0 %v4851
    %7690 = vmatpush.msra.mxu0 %v4843
    %7691 = vmatmul.f32.gmra.mxu0 %v7454
    %v7692 = vpop.f32.mrf.mxu0
    %v7693 = vadd.f32 %v7673, %v7692
    %7694 = vdwg.mxu0
    %7695 = vmatpush.msra.mxu0 %v4836
    %7696 = vmatpush.msra.mxu0 %v4828
    %7697 = vmatpush.msra.mxu0 %v4820
    %7698 = vmatpush.msra.mxu0 %v4812
    %7699 = vmatpush.msra.mxu0 %v4804
    %7700 = vmatpush.msra.mxu0 %v4796
    %7701 = vmatpush.msra.mxu0 %v4788
    %7702 = vmatpush.msra.mxu0 %v4780
    %7703 = vmatpush.msra.mxu0 %v4772
    %7704 = vmatpush.msra.mxu0 %v4764
    %7705 = vmatpush.msra.mxu0 %v4756
    %7706 = vmatpush.msra.mxu0 %v4748
    %7707 = vmatpush.msra.mxu0 %v4740
    %7708 = vmatpush.msra.mxu0 %v4732
    %7709 = vmatpush.msra.mxu0 %v4724
    %7710 = vmatpush.msra.mxu0 %v4716
    %7711 = vmatmul.f32.gmra.mxu0 %v7453
    %v7712 = vpop.f32.mrf.mxu0
    %v7713 = vadd.f32 0.0, %v7712
    %7714 = vdwg.mxu0
    %7715 = vmatpush.msra.mxu0 %v4964
    %7716 = vmatpush.msra.mxu0 %v4956
    %7717 = vmatpush.msra.mxu0 %v4948
    %7718 = vmatpush.msra.mxu0 %v4940
    %7719 = vmatpush.msra.mxu0 %v4932
    %7720 = vmatpush.msra.mxu0 %v4924
    %7721 = vmatpush.msra.mxu0 %v4916
    %7722 = vmatpush.msra.mxu0 %v4908
    %7723 = vmatpush.msra.mxu0 %v4900
    %7724 = vmatpush.msra.mxu0 %v4892
    %7725 = vmatpush.msra.mxu0 %v4884
    %7726 = vmatpush.msra.mxu0 %v4876
    %7727 = vmatpush.msra.mxu0 %v4868
    %7728 = vmatpush.msra.mxu0 %v4860
    %7729 = vmatpush.msra.mxu0 %v4852
    %7730 = vmatpush.msra.mxu0 %v4844
    %7731 = vmatmul.f32.gmra.mxu0 %v7454
    %v7732 = vpop.f32.mrf.mxu0
    %v7733 = vadd.f32 %v7713, %v7732
    %7734 = vdwg.mxu0
    %7735 = vmatpush.msra.mxu0 %v4837
    %7736 = vmatpush.msra.mxu0 %v4829
    %7737 = vmatpush.msra.mxu0 %v4821
    %7738 = vmatpush.msra.mxu0 %v4813
    %7739 = vmatpush.msra.mxu0 %v4805
    %7740 = vmatpush.msra.mxu0 %v4797
    %7741 = vmatpush.msra.mxu0 %v4789
    %7742 = vmatpush.msra.mxu0 %v4781
    %7743 = vmatpush.msra.mxu0 %v4773
    %7744 = vmatpush.msra.mxu0 %v4765
    %7745 = vmatpush.msra.mxu0 %v4757
    %7746 = vmatpush.msra.mxu0 %v4749
    %7747 = vmatpush.msra.mxu0 %v4741
    %7748 = vmatpush.msra.mxu0 %v4733
    %7749 = vmatpush.msra.mxu0 %v4725
    %7750 = vmatpush.msra.mxu0 %v4717
    %7751 = vmatmul.f32.gmra.mxu0 %v7453
    %v7752 = vpop.f32.mrf.mxu0
    %v7753 = vadd.f32 0.0, %v7752
    %7754 = vdwg.mxu0
    %7755 = vmatpush.msra.mxu0 %v4965
    %7756 = vmatpush.msra.mxu0 %v4957
    %7757 = vmatpush.msra.mxu0 %v4949
    %7758 = vmatpush.msra.mxu0 %v4941
    %7759 = vmatpush.msra.mxu0 %v4933
    %7760 = vmatpush.msra.mxu0 %v4925
    %7761 = vmatpush.msra.mxu0 %v4917
    %7762 = vmatpush.msra.mxu0 %v4909
    %7763 = vmatpush.msra.mxu0 %v4901
    %7764 = vmatpush.msra.mxu0 %v4893
    %7765 = vmatpush.msra.mxu0 %v4885
    %7766 = vmatpush.msra.mxu0 %v4877
    %7767 = vmatpush.msra.mxu0 %v4869
    %7768 = vmatpush.msra.mxu0 %v4861
    %7769 = vmatpush.msra.mxu0 %v4853
    %7770 = vmatpush.msra.mxu0 %v4845
    %7771 = vmatmul.f32.gmra.mxu0 %v7454
    %v7772 = vpop.f32.mrf.mxu0
    %v7773 = vadd.f32 %v7753, %v7772
    %7774 = vdwg.mxu0
    %v7775 = vadd.f32 %v5054, %v7493
    %v7776 = vadd.f32 %v5133, %v7533
    %v7777 = vadd.f32 %v5218, %v7573
    %v7778 = vadd.f32 %v5297, %v7613
    %v7779 = vadd.f32 %v5382, %v7653
    %v7780 = vadd.f32 %v5461, %v7693
    %v7781 = vadd.f32 %v5546, %v7733
    %v7782 = vadd.f32 %v5625, %v7773
    %v7783 = vxor.u32 %v7775, 2147483648
    %v7784 = vxor.u32 %v7776, 2147483648
    %v7785 = vxor.u32 %v7777, 2147483648
    %v7786 = vxor.u32 %v7778, 2147483648
    %v7787 = vxor.u32 %v7779, 2147483648
    %v7788 = vxor.u32 %v7780, 2147483648
    %v7789 = vmul.f32 %v7783, 1.442695
    %v7790 = vpow.pop %v7789
    %v7791 = vmul.f32 %v7784, 1.442695
    %v7792 = vpow.pop %v7791
    %v7793 = vmul.f32 %v7785, 1.442695
    %v7794 = vpow.pop %v7793
    %v7795 = vmul.f32 %v7786, 1.442695
    %v7796 = vpow.pop %v7795
    %v7797 = vmul.f32 %v7787, 1.442695
    %v7798 = vpow.pop %v7797
    %v7799 = vmul.f32 %v7788, 1.442695
    %v7800 = vpow.pop %v7799
    %v7801 = vadd.f32 %v7790, 1.0
    %v7802 = vadd.f32 %v7792, 1.0
    %v7803 = vadd.f32 %v7794, 1.0
    %v7804 = vadd.f32 %v7796, 1.0
    %v7805 = vadd.f32 %v7798, 1.0
    %v7806 = vadd.f32 %v7800, 1.0
    %v7807 = vrcp.pop %v7801
    %v7808 = vmul.f32 %v7801, %v7807
    %v7809 = vsub.f32 1.0, %v7808
    %v7810 = vmul.f32 %v7807, %v7809
    %v7811 = vadd.f32 %v7807, %v7810
    %vm7812 = vweird.f32 %v7801
    %vm7813 = vweird.f32 %v7807
    %vm7814 = vmor %vm7812, %vm7813
    %v7815 = vsel %vm7814, %v7807, %v7811
    %v7816 = vand.u32 2147483647, %v7801
    %vm7817 = vcmp.eq.f32.partialorder %v7816, 8.507059e+37
    %v7818 = vand.u32 %v7801, 2147483648
    %v7819 = vor.u32 1.1754944e-38, %v7818
    %v7820 = vsel %vm7817, %v7819, %v7815
    %v7821 = vmul.f32 1.0, %v7820
    %v7822 = vrcp.pop %v7802
    %v7823 = vmul.f32 %v7802, %v7822
    %v7824 = vsub.f32 1.0, %v7823
    %v7825 = vmul.f32 %v7822, %v7824
    %v7826 = vadd.f32 %v7822, %v7825
    %vm7827 = vweird.f32 %v7802
    %vm7828 = vweird.f32 %v7822
    %vm7829 = vmor %vm7827, %vm7828
    %v7830 = vsel %vm7829, %v7822, %v7826
    %v7831 = vand.u32 2147483647, %v7802
    %vm7832 = vcmp.eq.f32.partialorder %v7831, 8.507059e+37
    %v7833 = vand.u32 %v7802, 2147483648
    %v7834 = vor.u32 1.1754944e-38, %v7833
    %v7835 = vsel %vm7832, %v7834, %v7830
    %v7836 = vmul.f32 1.0, %v7835
    %v7837 = vrcp.pop %v7803
    %v7838 = vmul.f32 %v7803, %v7837
    %v7839 = vsub.f32 1.0, %v7838
    %v7840 = vmul.f32 %v7837, %v7839
    %v7841 = vadd.f32 %v7837, %v7840
    %vm7842 = vweird.f32 %v7803
    %vm7843 = vweird.f32 %v7837
    %vm7844 = vmor %vm7842, %vm7843
    %v7845 = vsel %vm7844, %v7837, %v7841
    %v7846 = vand.u32 2147483647, %v7803
    %vm7847 = vcmp.eq.f32.partialorder %v7846, 8.507059e+37
    %v7848 = vand.u32 %v7803, 2147483648
    %v7849 = vor.u32 1.1754944e-38, %v7848
    %v7850 = vsel %vm7847, %v7849, %v7845
    %v7851 = vmul.f32 1.0, %v7850
    %v7852 = vrcp.pop %v7804
    %v7853 = vmul.f32 %v7804, %v7852
    %v7854 = vsub.f32 1.0, %v7853
    %v7855 = vmul.f32 %v7852, %v7854
    %v7856 = vadd.f32 %v7852, %v7855
    %vm7857 = vweird.f32 %v7804
    %vm7858 = vweird.f32 %v7852
    %vm7859 = vmor %vm7857, %vm7858
    %v7860 = vsel %vm7859, %v7852, %v7856
    %v7861 = vand.u32 2147483647, %v7804
    %vm7862 = vcmp.eq.f32.partialorder %v7861, 8.507059e+37
    %v7863 = vand.u32 %v7804, 2147483648
    %v7864 = vor.u32 1.1754944e-38, %v7863
    %v7865 = vsel %vm7862, %v7864, %v7860
    %v7866 = vmul.f32 1.0, %v7865
    %v7867 = vrcp.pop %v7805
    %v7868 = vmul.f32 %v7805, %v7867
    %v7869 = vsub.f32 1.0, %v7868
    %v7870 = vmul.f32 %v7867, %v7869
    %v7871 = vadd.f32 %v7867, %v7870
    %vm7872 = vweird.f32 %v7805
    %vm7873 = vweird.f32 %v7867
    %vm7874 = vmor %vm7872, %vm7873
    %v7875 = vsel %vm7874, %v7867, %v7871
    %v7876 = vand.u32 2147483647, %v7805
    %vm7877 = vcmp.eq.f32.partialorder %v7876, 8.507059e+37
    %v7878 = vand.u32 %v7805, 2147483648
    %v7879 = vor.u32 1.1754944e-38, %v7878
    %v7880 = vsel %vm7877, %v7879, %v7875
    %v7881 = vmul.f32 1.0, %v7880
    %v7882 = vrcp.pop %v7806
    %v7883 = vmul.f32 %v7806, %v7882
    %v7884 = vsub.f32 1.0, %v7883
    %v7885 = vmul.f32 %v7882, %v7884
    %v7886 = vadd.f32 %v7882, %v7885
    %vm7887 = vweird.f32 %v7806
    %vm7888 = vweird.f32 %v7882
    %vm7889 = vmor %vm7887, %vm7888
    %v7890 = vsel %vm7889, %v7882, %v7886
    %v7891 = vand.u32 2147483647, %v7806
    %vm7892 = vcmp.eq.f32.partialorder %v7891, 8.507059e+37
    %v7893 = vand.u32 %v7806, 2147483648
    %v7894 = vor.u32 1.1754944e-38, %v7893
    %v7895 = vsel %vm7892, %v7894, %v7890
    %v7896 = vmul.f32 1.0, %v7895
    %v7897 = vtanh.pop %v7781
    %v7898 = vtanh.pop %v7782
    %v7899 = vmul.f32 %v7851, %v7449
    %v7900 = vmul.f32 %v7866, %v7450
    %v7901 = vmul.f32 %v7821, %v7897
    %v7902 = vmul.f32 %v7836, %v7898
    %v7903 = vadd.f32 %v7899, %v7901
    %v7904 = vadd.f32 %v7900, %v7902
    %v7905 = vtanh.pop %v7903
    %v7906 = vtanh.pop %v7904
    %v7907 = vmul.f32 %v7881, %v7905
    %v7908 = vmul.f32 %v7896, %v7906
    %7909 = vmatpush.msra.mxu0 %v4830
    %7910 = vmatpush.msra.mxu0 %v4822
    %7911 = vmatpush.msra.mxu0 %v4814
    %7912 = vmatpush.msra.mxu0 %v4806
    %7913 = vmatpush.msra.mxu0 %v4798
    %7914 = vmatpush.msra.mxu0 %v4790
    %7915 = vmatpush.msra.mxu0 %v4782
    %7916 = vmatpush.msra.mxu0 %v4774
    %7917 = vmatpush.msra.mxu0 %v4766
    %7918 = vmatpush.msra.mxu0 %v4758
    %7919 = vmatpush.msra.mxu0 %v4750
    %7920 = vmatpush.msra.mxu0 %v4742
    %7921 = vmatpush.msra.mxu0 %v4734
    %7922 = vmatpush.msra.mxu0 %v4726
    %7923 = vmatpush.msra.mxu0 %v4718
    %7924 = vmatpush.msra.mxu0 %v4710
    %7925 = vmatmul.f32.gmra.mxu0 %v7907
    %v7926 = vpop.f32.mrf.mxu0
    %v7927 = vadd.f32 0.0, %v7926
    %7928 = vdwg.mxu0
    %7929 = vmatpush.msra.mxu0 %v4958
    %7930 = vmatpush.msra.mxu0 %v4950
    %7931 = vmatpush.msra.mxu0 %v4942
    %7932 = vmatpush.msra.mxu0 %v4934
    %7933 = vmatpush.msra.mxu0 %v4926
    %7934 = vmatpush.msra.mxu0 %v4918
    %7935 = vmatpush.msra.mxu0 %v4910
    %7936 = vmatpush.msra.mxu0 %v4902
    %7937 = vmatpush.msra.mxu0 %v4894
    %7938 = vmatpush.msra.mxu0 %v4886
    %7939 = vmatpush.msra.mxu0 %v4878
    %7940 = vmatpush.msra.mxu0 %v4870
    %7941 = vmatpush.msra.mxu0 %v4862
    %7942 = vmatpush.msra.mxu0 %v4854
    %7943 = vmatpush.msra.mxu0 %v4846
    %7944 = vmatpush.msra.mxu0 %v4838
    %7945 = vmatmul.f32.gmra.mxu0 %v7908
    %v7946 = vpop.f32.mrf.mxu0
    %v7947 = vadd.f32 %v7927, %v7946
    %7948 = vdwg.mxu0
    %7949 = vmatpush.msra.mxu0 %v4831
    %7950 = vmatpush.msra.mxu0 %v4823
    %7951 = vmatpush.msra.mxu0 %v4815
    %7952 = vmatpush.msra.mxu0 %v4807
    %7953 = vmatpush.msra.mxu0 %v4799
    %7954 = vmatpush.msra.mxu0 %v4791
    %7955 = vmatpush.msra.mxu0 %v4783
    %7956 = vmatpush.msra.mxu0 %v4775
    %7957 = vmatpush.msra.mxu0 %v4767
    %7958 = vmatpush.msra.mxu0 %v4759
    %7959 = vmatpush.msra.mxu0 %v4751
    %7960 = vmatpush.msra.mxu0 %v4743
    %7961 = vmatpush.msra.mxu0 %v4735
    %7962 = vmatpush.msra.mxu0 %v4727
    %7963 = vmatpush.msra.mxu0 %v4719
    %7964 = vmatpush.msra.mxu0 %v4711
    %7965 = vmatmul.f32.gmra.mxu0 %v7907
    %v7966 = vpop.f32.mrf.mxu0
    %v7967 = vadd.f32 0.0, %v7966
    %7968 = vdwg.mxu0
    %7969 = vmatpush.msra.mxu0 %v4959
    %7970 = vmatpush.msra.mxu0 %v4951
    %7971 = vmatpush.msra.mxu0 %v4943
    %7972 = vmatpush.msra.mxu0 %v4935
    %7973 = vmatpush.msra.mxu0 %v4927
    %7974 = vmatpush.msra.mxu0 %v4919
    %7975 = vmatpush.msra.mxu0 %v4911
    %7976 = vmatpush.msra.mxu0 %v4903
    %7977 = vmatpush.msra.mxu0 %v4895
    %7978 = vmatpush.msra.mxu0 %v4887
    %7979 = vmatpush.msra.mxu0 %v4879
    %7980 = vmatpush.msra.mxu0 %v4871
    %7981 = vmatpush.msra.mxu0 %v4863
    %7982 = vmatpush.msra.mxu0 %v4855
    %7983 = vmatpush.msra.mxu0 %v4847
    %7984 = vmatpush.msra.mxu0 %v4839
    %7985 = vmatmul.f32.gmra.mxu0 %v7908
    %v7986 = vpop.f32.mrf.mxu0
    %v7987 = vadd.f32 %v7967, %v7986
    %7988 = vdwg.mxu0
    %7989 = vmatpush.msra.mxu0 %v4832
    %7990 = vmatpush.msra.mxu0 %v4824
    %7991 = vmatpush.msra.mxu0 %v4816
    %7992 = vmatpush.msra.mxu0 %v4808
    %7993 = vmatpush.msra.mxu0 %v4800
    %7994 = vmatpush.msra.mxu0 %v4792
    %7995 = vmatpush.msra.mxu0 %v4784
    %7996 = vmatpush.msra.mxu0 %v4776
    %7997 = vmatpush.msra.mxu0 %v4768
    %7998 = vmatpush.msra.mxu0 %v4760
    %7999 = vmatpush.msra.mxu0 %v4752
    %8000 = vmatpush.msra.mxu0 %v4744
    %8001 = vmatpush.msra.mxu0 %v4736
    %8002 = vmatpush.msra.mxu0 %v4728
    %8003 = vmatpush.msra.mxu0 %v4720
    %8004 = vmatpush.msra.mxu0 %v4712
    %8005 = vmatmul.f32.gmra.mxu0 %v7907
    %v8006 = vpop.f32.mrf.mxu0
    %v8007 = vadd.f32 0.0, %v8006
    %8008 = vdwg.mxu0
    %8009 = vmatpush.msra.mxu0 %v4960
    %8010 = vmatpush.msra.mxu0 %v4952
    %8011 = vmatpush.msra.mxu0 %v4944
    %8012 = vmatpush.msra.mxu0 %v4936
    %8013 = vmatpush.msra.mxu0 %v4928
    %8014 = vmatpush.msra.mxu0 %v4920
    %8015 = vmatpush.msra.mxu0 %v4912
    %8016 = vmatpush.msra.mxu0 %v4904
    %8017 = vmatpush.msra.mxu0 %v4896
    %8018 = vmatpush.msra.mxu0 %v4888
    %8019 = vmatpush.msra.mxu0 %v4880
    %8020 = vmatpush.msra.mxu0 %v4872
    %8021 = vmatpush.msra.mxu0 %v4864
    %8022 = vmatpush.msra.mxu0 %v4856
    %8023 = vmatpush.msra.mxu0 %v4848
    %8024 = vmatpush.msra.mxu0 %v4840
    %8025 = vmatmul.f32.gmra.mxu0 %v7908
    %v8026 = vpop.f32.mrf.mxu0
    %v8027 = vadd.f32 %v8007, %v8026
    %8028 = vdwg.mxu0
    %8029 = vmatpush.msra.mxu0 %v4833
    %8030 = vmatpush.msra.mxu0 %v4825
    %8031 = vmatpush.msra.mxu0 %v4817
    %8032 = vmatpush.msra.mxu0 %v4809
    %8033 = vmatpush.msra.mxu0 %v4801
    %8034 = vmatpush.msra.mxu0 %v4793
    %8035 = vmatpush.msra.mxu0 %v4785
    %8036 = vmatpush.msra.mxu0 %v4777
    %8037 = vmatpush.msra.mxu0 %v4769
    %8038 = vmatpush.msra.mxu0 %v4761
    %8039 = vmatpush.msra.mxu0 %v4753
    %8040 = vmatpush.msra.mxu0 %v4745
    %8041 = vmatpush.msra.mxu0 %v4737
    %8042 = vmatpush.msra.mxu0 %v4729
    %8043 = vmatpush.msra.mxu0 %v4721
    %8044 = vmatpush.msra.mxu0 %v4713
    %8045 = vmatmul.f32.gmra.mxu0 %v7907
    %v8046 = vpop.f32.mrf.mxu0
    %v8047 = vadd.f32 0.0, %v8046
    %8048 = vdwg.mxu0
    %8049 = vmatpush.msra.mxu0 %v4961
    %8050 = vmatpush.msra.mxu0 %v4953
    %8051 = vmatpush.msra.mxu0 %v4945
    %8052 = vmatpush.msra.mxu0 %v4937
    %8053 = vmatpush.msra.mxu0 %v4929
    %8054 = vmatpush.msra.mxu0 %v4921
    %8055 = vmatpush.msra.mxu0 %v4913
    %8056 = vmatpush.msra.mxu0 %v4905
    %8057 = vmatpush.msra.mxu0 %v4897
    %8058 = vmatpush.msra.mxu0 %v4889
    %8059 = vmatpush.msra.mxu0 %v4881
    %8060 = vmatpush.msra.mxu0 %v4873
    %8061 = vmatpush.msra.mxu0 %v4865
    %8062 = vmatpush.msra.mxu0 %v4857
    %8063 = vmatpush.msra.mxu0 %v4849
    %8064 = vmatpush.msra.mxu0 %v4841
    %8065 = vmatmul.f32.gmra.mxu0 %v7908
    %v8066 = vpop.f32.mrf.mxu0
    %v8067 = vadd.f32 %v8047, %v8066
    %8068 = vdwg.mxu0
    %8069 = vmatpush.msra.mxu0 %v4834
    %8070 = vmatpush.msra.mxu0 %v4826
    %8071 = vmatpush.msra.mxu0 %v4818
    %8072 = vmatpush.msra.mxu0 %v4810
    %8073 = vmatpush.msra.mxu0 %v4802
    %8074 = vmatpush.msra.mxu0 %v4794
    %8075 = vmatpush.msra.mxu0 %v4786
    %8076 = vmatpush.msra.mxu0 %v4778
    %8077 = vmatpush.msra.mxu0 %v4770
    %8078 = vmatpush.msra.mxu0 %v4762
    %8079 = vmatpush.msra.mxu0 %v4754
    %8080 = vmatpush.msra.mxu0 %v4746
    %8081 = vmatpush.msra.mxu0 %v4738
    %8082 = vmatpush.msra.mxu0 %v4730
    %8083 = vmatpush.msra.mxu0 %v4722
    %8084 = vmatpush.msra.mxu0 %v4714
    %8085 = vmatmul.f32.gmra.mxu0 %v7907
    %v8086 = vpop.f32.mrf.mxu0
    %v8087 = vadd.f32 0.0, %v8086
    %8088 = vdwg.mxu0
    %8089 = vmatpush.msra.mxu0 %v4962
    %8090 = vmatpush.msra.mxu0 %v4954
    %8091 = vmatpush.msra.mxu0 %v4946
    %8092 = vmatpush.msra.mxu0 %v4938
    %8093 = vmatpush.msra.mxu0 %v4930
    %8094 = vmatpush.msra.mxu0 %v4922
    %8095 = vmatpush.msra.mxu0 %v4914
    %8096 = vmatpush.msra.mxu0 %v4906
    %8097 = vmatpush.msra.mxu0 %v4898
    %8098 = vmatpush.msra.mxu0 %v4890
    %8099 = vmatpush.msra.mxu0 %v4882
    %8100 = vmatpush.msra.mxu0 %v4874
    %8101 = vmatpush.msra.mxu0 %v4866
    %8102 = vmatpush.msra.mxu0 %v4858
    %8103 = vmatpush.msra.mxu0 %v4850
    %8104 = vmatpush.msra.mxu0 %v4842
    %8105 = vmatmul.f32.gmra.mxu0 %v7908
    %v8106 = vpop.f32.mrf.mxu0
    %v8107 = vadd.f32 %v8087, %v8106
    %8108 = vdwg.mxu0
    %8109 = vmatpush.msra.mxu0 %v4835
    %8110 = vmatpush.msra.mxu0 %v4827
    %8111 = vmatpush.msra.mxu0 %v4819
    %8112 = vmatpush.msra.mxu0 %v4811
    %8113 = vmatpush.msra.mxu0 %v4803
    %8114 = vmatpush.msra.mxu0 %v4795
    %8115 = vmatpush.msra.mxu0 %v4787
    %8116 = vmatpush.msra.mxu0 %v4779
    %8117 = vmatpush.msra.mxu0 %v4771
    %8118 = vmatpush.msra.mxu0 %v4763
    %8119 = vmatpush.msra.mxu0 %v4755
    %8120 = vmatpush.msra.mxu0 %v4747
    %8121 = vmatpush.msra.mxu0 %v4739
    %8122 = vmatpush.msra.mxu0 %v4731
    %8123 = vmatpush.msra.mxu0 %v4723
    %8124 = vmatpush.msra.mxu0 %v4715
    %8125 = vmatmul.f32.gmra.mxu0 %v7907
    %v8126 = vpop.f32.mrf.mxu0
    %v8127 = vadd.f32 0.0, %v8126
    %8128 = vdwg.mxu0
    %8129 = vmatpush.msra.mxu0 %v4963
    %8130 = vmatpush.msra.mxu0 %v4955
    %8131 = vmatpush.msra.mxu0 %v4947
    %8132 = vmatpush.msra.mxu0 %v4939
    %8133 = vmatpush.msra.mxu0 %v4931
    %8134 = vmatpush.msra.mxu0 %v4923
    %8135 = vmatpush.msra.mxu0 %v4915
    %8136 = vmatpush.msra.mxu0 %v4907
    %8137 = vmatpush.msra.mxu0 %v4899
    %8138 = vmatpush.msra.mxu0 %v4891
    %8139 = vmatpush.msra.mxu0 %v4883
    %8140 = vmatpush.msra.mxu0 %v4875
    %8141 = vmatpush.msra.mxu0 %v4867
    %8142 = vmatpush.msra.mxu0 %v4859
    %8143 = vmatpush.msra.mxu0 %v4851
    %8144 = vmatpush.msra.mxu0 %v4843
    %8145 = vmatmul.f32.gmra.mxu0 %v7908
    %v8146 = vpop.f32.mrf.mxu0
    %v8147 = vadd.f32 %v8127, %v8146
    %8148 = vdwg.mxu0
    %8149 = vmatpush.msra.mxu0 %v4836
    %8150 = vmatpush.msra.mxu0 %v4828
    %8151 = vmatpush.msra.mxu0 %v4820
    %8152 = vmatpush.msra.mxu0 %v4812
    %8153 = vmatpush.msra.mxu0 %v4804
    %8154 = vmatpush.msra.mxu0 %v4796
    %8155 = vmatpush.msra.mxu0 %v4788
    %8156 = vmatpush.msra.mxu0 %v4780
    %8157 = vmatpush.msra.mxu0 %v4772
    %8158 = vmatpush.msra.mxu0 %v4764
    %8159 = vmatpush.msra.mxu0 %v4756
    %8160 = vmatpush.msra.mxu0 %v4748
    %8161 = vmatpush.msra.mxu0 %v4740
    %8162 = vmatpush.msra.mxu0 %v4732
    %8163 = vmatpush.msra.mxu0 %v4724
    %8164 = vmatpush.msra.mxu0 %v4716
    %8165 = vmatmul.f32.gmra.mxu0 %v7907
    %v8166 = vpop.f32.mrf.mxu0
    %v8167 = vadd.f32 0.0, %v8166
    %8168 = vdwg.mxu0
    %8169 = vmatpush.msra.mxu0 %v4964
    %8170 = vmatpush.msra.mxu0 %v4956
    %8171 = vmatpush.msra.mxu0 %v4948
    %8172 = vmatpush.msra.mxu0 %v4940
    %8173 = vmatpush.msra.mxu0 %v4932
    %8174 = vmatpush.msra.mxu0 %v4924
    %8175 = vmatpush.msra.mxu0 %v4916
    %8176 = vmatpush.msra.mxu0 %v4908
    %8177 = vmatpush.msra.mxu0 %v4900
    %8178 = vmatpush.msra.mxu0 %v4892
    %8179 = vmatpush.msra.mxu0 %v4884
    %8180 = vmatpush.msra.mxu0 %v4876
    %8181 = vmatpush.msra.mxu0 %v4868
    %8182 = vmatpush.msra.mxu0 %v4860
    %8183 = vmatpush.msra.mxu0 %v4852
    %8184 = vmatpush.msra.mxu0 %v4844
    %8185 = vmatmul.f32.gmra.mxu0 %v7908
    %v8186 = vpop.f32.mrf.mxu0
    %v8187 = vadd.f32 %v8167, %v8186
    %8188 = vdwg.mxu0
    %8189 = vmatpush.msra.mxu0 %v4837
    %8190 = vmatpush.msra.mxu0 %v4829
    %8191 = vmatpush.msra.mxu0 %v4821
    %8192 = vmatpush.msra.mxu0 %v4813
    %8193 = vmatpush.msra.mxu0 %v4805
    %8194 = vmatpush.msra.mxu0 %v4797
    %8195 = vmatpush.msra.mxu0 %v4789
    %8196 = vmatpush.msra.mxu0 %v4781
    %8197 = vmatpush.msra.mxu0 %v4773
    %8198 = vmatpush.msra.mxu0 %v4765
    %8199 = vmatpush.msra.mxu0 %v4757
    %8200 = vmatpush.msra.mxu0 %v4749
    %8201 = vmatpush.msra.mxu0 %v4741
    %8202 = vmatpush.msra.mxu0 %v4733
    %8203 = vmatpush.msra.mxu0 %v4725
    %8204 = vmatpush.msra.mxu0 %v4717
    %8205 = vmatmul.f32.gmra.mxu0 %v7907
    %v8206 = vpop.f32.mrf.mxu0
    %v8207 = vadd.f32 0.0, %v8206
    %8208 = vdwg.mxu0
    %8209 = vmatpush.msra.mxu0 %v4965
    %8210 = vmatpush.msra.mxu0 %v4957
    %8211 = vmatpush.msra.mxu0 %v4949
    %8212 = vmatpush.msra.mxu0 %v4941
    %8213 = vmatpush.msra.mxu0 %v4933
    %8214 = vmatpush.msra.mxu0 %v4925
    %8215 = vmatpush.msra.mxu0 %v4917
    %8216 = vmatpush.msra.mxu0 %v4909
    %8217 = vmatpush.msra.mxu0 %v4901
    %8218 = vmatpush.msra.mxu0 %v4893
    %8219 = vmatpush.msra.mxu0 %v4885
    %8220 = vmatpush.msra.mxu0 %v4877
    %8221 = vmatpush.msra.mxu0 %v4869
    %8222 = vmatpush.msra.mxu0 %v4861
    %8223 = vmatpush.msra.mxu0 %v4853
    %8224 = vmatpush.msra.mxu0 %v4845
    %8225 = vmatmul.f32.gmra.mxu0 %v7908
    %v8226 = vpop.f32.mrf.mxu0
    %v8227 = vadd.f32 %v8207, %v8226
    %8228 = vdwg.mxu0
    %v8229 = vadd.f32 %v5057, %v7947
    %v8230 = vadd.f32 %v5130, %v7987
    %v8231 = vadd.f32 %v5221, %v8027
    %v8232 = vadd.f32 %v5294, %v8067
    %v8233 = vadd.f32 %v5385, %v8107
    %v8234 = vadd.f32 %v5458, %v8147
    %v8235 = vadd.f32 %v5549, %v8187
    %v8236 = vadd.f32 %v5622, %v8227
    %v8237 = vxor.u32 %v8229, 2147483648
    %v8238 = vxor.u32 %v8230, 2147483648
    %v8239 = vxor.u32 %v8231, 2147483648
    %v8240 = vxor.u32 %v8232, 2147483648
    %v8241 = vxor.u32 %v8233, 2147483648
    %v8242 = vxor.u32 %v8234, 2147483648
    %v8243 = vmul.f32 %v8237, 1.442695
    %v8244 = vpow.pop %v8243
    %v8245 = vmul.f32 %v8238, 1.442695
    %v8246 = vpow.pop %v8245
    %v8247 = vmul.f32 %v8239, 1.442695
    %v8248 = vpow.pop %v8247
    %v8249 = vmul.f32 %v8240, 1.442695
    %v8250 = vpow.pop %v8249
    %v8251 = vmul.f32 %v8241, 1.442695
    %v8252 = vpow.pop %v8251
    %v8253 = vmul.f32 %v8242, 1.442695
    %v8254 = vpow.pop %v8253
    %v8255 = vadd.f32 %v8244, 1.0
    %v8256 = vadd.f32 %v8246, 1.0
    %v8257 = vadd.f32 %v8248, 1.0
    %v8258 = vadd.f32 %v8250, 1.0
    %v8259 = vadd.f32 %v8252, 1.0
    %v8260 = vadd.f32 %v8254, 1.0
    %v8261 = vrcp.pop %v8255
    %v8262 = vmul.f32 %v8255, %v8261
    %v8263 = vsub.f32 1.0, %v8262
    %v8264 = vmul.f32 %v8261, %v8263
    %v8265 = vadd.f32 %v8261, %v8264
    %vm8266 = vweird.f32 %v8255
    %vm8267 = vweird.f32 %v8261
    %vm8268 = vmor %vm8266, %vm8267
    %v8269 = vsel %vm8268, %v8261, %v8265
    %v8270 = vand.u32 2147483647, %v8255
    %vm8271 = vcmp.eq.f32.partialorder %v8270, 8.507059e+37
    %v8272 = vand.u32 %v8255, 2147483648
    %v8273 = vor.u32 1.1754944e-38, %v8272
    %v8274 = vsel %vm8271, %v8273, %v8269
    %v8275 = vmul.f32 1.0, %v8274
    %v8276 = vrcp.pop %v8256
    %v8277 = vmul.f32 %v8256, %v8276
    %v8278 = vsub.f32 1.0, %v8277
    %v8279 = vmul.f32 %v8276, %v8278
    %v8280 = vadd.f32 %v8276, %v8279
    %vm8281 = vweird.f32 %v8256
    %vm8282 = vweird.f32 %v8276
    %vm8283 = vmor %vm8281, %vm8282
    %v8284 = vsel %vm8283, %v8276, %v8280
    %v8285 = vand.u32 2147483647, %v8256
    %vm8286 = vcmp.eq.f32.partialorder %v8285, 8.507059e+37
    %v8287 = vand.u32 %v8256, 2147483648
    %v8288 = vor.u32 1.1754944e-38, %v8287
    %v8289 = vsel %vm8286, %v8288, %v8284
    %v8290 = vmul.f32 1.0, %v8289
    %v8291 = vrcp.pop %v8257
    %v8292 = vmul.f32 %v8257, %v8291
    %v8293 = vsub.f32 1.0, %v8292
    %v8294 = vmul.f32 %v8291, %v8293
    %v8295 = vadd.f32 %v8291, %v8294
    %vm8296 = vweird.f32 %v8257
    %vm8297 = vweird.f32 %v8291
    %vm8298 = vmor %vm8296, %vm8297
    %v8299 = vsel %vm8298, %v8291, %v8295
    %v8300 = vand.u32 2147483647, %v8257
    %vm8301 = vcmp.eq.f32.partialorder %v8300, 8.507059e+37
    %v8302 = vand.u32 %v8257, 2147483648
    %v8303 = vor.u32 1.1754944e-38, %v8302
    %v8304 = vsel %vm8301, %v8303, %v8299
    %v8305 = vmul.f32 1.0, %v8304
    %v8306 = vrcp.pop %v8258
    %v8307 = vmul.f32 %v8258, %v8306
    %v8308 = vsub.f32 1.0, %v8307
    %v8309 = vmul.f32 %v8306, %v8308
    %v8310 = vadd.f32 %v8306, %v8309
    %vm8311 = vweird.f32 %v8258
    %vm8312 = vweird.f32 %v8306
    %vm8313 = vmor %vm8311, %vm8312
    %v8314 = vsel %vm8313, %v8306, %v8310
    %v8315 = vand.u32 2147483647, %v8258
    %vm8316 = vcmp.eq.f32.partialorder %v8315, 8.507059e+37
    %v8317 = vand.u32 %v8258, 2147483648
    %v8318 = vor.u32 1.1754944e-38, %v8317
    %v8319 = vsel %vm8316, %v8318, %v8314
    %v8320 = vmul.f32 1.0, %v8319
    %v8321 = vrcp.pop %v8259
    %v8322 = vmul.f32 %v8259, %v8321
    %v8323 = vsub.f32 1.0, %v8322
    %v8324 = vmul.f32 %v8321, %v8323
    %v8325 = vadd.f32 %v8321, %v8324
    %vm8326 = vweird.f32 %v8259
    %vm8327 = vweird.f32 %v8321
    %vm8328 = vmor %vm8326, %vm8327
    %v8329 = vsel %vm8328, %v8321, %v8325
    %v8330 = vand.u32 2147483647, %v8259
    %vm8331 = vcmp.eq.f32.partialorder %v8330, 8.507059e+37
    %v8332 = vand.u32 %v8259, 2147483648
    %v8333 = vor.u32 1.1754944e-38, %v8332
    %v8334 = vsel %vm8331, %v8333, %v8329
    %v8335 = vmul.f32 1.0, %v8334
    %v8336 = vrcp.pop %v8260
    %v8337 = vmul.f32 %v8260, %v8336
    %v8338 = vsub.f32 1.0, %v8337
    %v8339 = vmul.f32 %v8336, %v8338
    %v8340 = vadd.f32 %v8336, %v8339
    %vm8341 = vweird.f32 %v8260
    %vm8342 = vweird.f32 %v8336
    %vm8343 = vmor %vm8341, %vm8342
    %v8344 = vsel %vm8343, %v8336, %v8340
    %v8345 = vand.u32 2147483647, %v8260
    %vm8346 = vcmp.eq.f32.partialorder %v8345, 8.507059e+37
    %v8347 = vand.u32 %v8260, 2147483648
    %v8348 = vor.u32 1.1754944e-38, %v8347
    %v8349 = vsel %vm8346, %v8348, %v8344
    %v8350 = vmul.f32 1.0, %v8349
    %v8351 = vtanh.pop %v8235
    %v8352 = vtanh.pop %v8236
    %v8353 = vmul.f32 %v8305, %v7903
    %v8354 = vmul.f32 %v8320, %v7904
    %v8355 = vmul.f32 %v8275, %v8351
    %v8356 = vmul.f32 %v8290, %v8352
    %v8357 = vadd.f32 %v8353, %v8355
    %v8358 = vadd.f32 %v8354, %v8356
    %v8359 = vtanh.pop %v8357
    %v8360 = vtanh.pop %v8358
    %v8361 = vmul.f32 %v8335, %v8359
    %v8362 = vmul.f32 %v8350, %v8360
    %8363 = vmatpush.msra.mxu0 %v4830
    %8364 = vmatpush.msra.mxu0 %v4822
    %8365 = vmatpush.msra.mxu0 %v4814
    %8366 = vmatpush.msra.mxu0 %v4806
    %8367 = vmatpush.msra.mxu0 %v4798
    %8368 = vmatpush.msra.mxu0 %v4790
    %8369 = vmatpush.msra.mxu0 %v4782
    %8370 = vmatpush.msra.mxu0 %v4774
    %8371 = vmatpush.msra.mxu0 %v4766
    %8372 = vmatpush.msra.mxu0 %v4758
    %8373 = vmatpush.msra.mxu0 %v4750
    %8374 = vmatpush.msra.mxu0 %v4742
    %8375 = vmatpush.msra.mxu0 %v4734
    %8376 = vmatpush.msra.mxu0 %v4726
    %8377 = vmatpush.msra.mxu0 %v4718
    %8378 = vmatpush.msra.mxu0 %v4710
    %8379 = vmatmul.f32.gmra.mxu0 %v8361
    %v8380 = vpop.f32.mrf.mxu0
    %v8381 = vadd.f32 0.0, %v8380
    %8382 = vdwg.mxu0
    %8383 = vmatpush.msra.mxu0 %v4958
    %8384 = vmatpush.msra.mxu0 %v4950
    %8385 = vmatpush.msra.mxu0 %v4942
    %8386 = vmatpush.msra.mxu0 %v4934
    %8387 = vmatpush.msra.mxu0 %v4926
    %8388 = vmatpush.msra.mxu0 %v4918
    %8389 = vmatpush.msra.mxu0 %v4910
    %8390 = vmatpush.msra.mxu0 %v4902
    %8391 = vmatpush.msra.mxu0 %v4894
    %8392 = vmatpush.msra.mxu0 %v4886
    %8393 = vmatpush.msra.mxu0 %v4878
    %8394 = vmatpush.msra.mxu0 %v4870
    %8395 = vmatpush.msra.mxu0 %v4862
    %8396 = vmatpush.msra.mxu0 %v4854
    %8397 = vmatpush.msra.mxu0 %v4846
    %8398 = vmatpush.msra.mxu0 %v4838
    %8399 = vmatmul.f32.gmra.mxu0 %v8362
    %v8400 = vpop.f32.mrf.mxu0
    %v8401 = vadd.f32 %v8381, %v8400
    %8402 = vdwg.mxu0
    %8403 = vmatpush.msra.mxu0 %v4831
    %8404 = vmatpush.msra.mxu0 %v4823
    %8405 = vmatpush.msra.mxu0 %v4815
    %8406 = vmatpush.msra.mxu0 %v4807
    %8407 = vmatpush.msra.mxu0 %v4799
    %8408 = vmatpush.msra.mxu0 %v4791
    %8409 = vmatpush.msra.mxu0 %v4783
    %8410 = vmatpush.msra.mxu0 %v4775
    %8411 = vmatpush.msra.mxu0 %v4767
    %8412 = vmatpush.msra.mxu0 %v4759
    %8413 = vmatpush.msra.mxu0 %v4751
    %8414 = vmatpush.msra.mxu0 %v4743
    %8415 = vmatpush.msra.mxu0 %v4735
    %8416 = vmatpush.msra.mxu0 %v4727
    %8417 = vmatpush.msra.mxu0 %v4719
    %8418 = vmatpush.msra.mxu0 %v4711
    %8419 = vmatmul.f32.gmra.mxu0 %v8361
    %v8420 = vpop.f32.mrf.mxu0
    %v8421 = vadd.f32 0.0, %v8420
    %8422 = vdwg.mxu0
    %8423 = vmatpush.msra.mxu0 %v4959
    %8424 = vmatpush.msra.mxu0 %v4951
    %8425 = vmatpush.msra.mxu0 %v4943
    %8426 = vmatpush.msra.mxu0 %v4935
    %8427 = vmatpush.msra.mxu0 %v4927
    %8428 = vmatpush.msra.mxu0 %v4919
    %8429 = vmatpush.msra.mxu0 %v4911
    %8430 = vmatpush.msra.mxu0 %v4903
    %8431 = vmatpush.msra.mxu0 %v4895
    %8432 = vmatpush.msra.mxu0 %v4887
    %8433 = vmatpush.msra.mxu0 %v4879
    %8434 = vmatpush.msra.mxu0 %v4871
    %8435 = vmatpush.msra.mxu0 %v4863
    %8436 = vmatpush.msra.mxu0 %v4855
    %8437 = vmatpush.msra.mxu0 %v4847
    %8438 = vmatpush.msra.mxu0 %v4839
    %8439 = vmatmul.f32.gmra.mxu0 %v8362
    %v8440 = vpop.f32.mrf.mxu0
    %v8441 = vadd.f32 %v8421, %v8440
    %8442 = vdwg.mxu0
    %8443 = vmatpush.msra.mxu0 %v4832
    %8444 = vmatpush.msra.mxu0 %v4824
    %8445 = vmatpush.msra.mxu0 %v4816
    %8446 = vmatpush.msra.mxu0 %v4808
    %8447 = vmatpush.msra.mxu0 %v4800
    %8448 = vmatpush.msra.mxu0 %v4792
    %8449 = vmatpush.msra.mxu0 %v4784
    %8450 = vmatpush.msra.mxu0 %v4776
    %8451 = vmatpush.msra.mxu0 %v4768
    %8452 = vmatpush.msra.mxu0 %v4760
    %8453 = vmatpush.msra.mxu0 %v4752
    %8454 = vmatpush.msra.mxu0 %v4744
    %8455 = vmatpush.msra.mxu0 %v4736
    %8456 = vmatpush.msra.mxu0 %v4728
    %8457 = vmatpush.msra.mxu0 %v4720
    %8458 = vmatpush.msra.mxu0 %v4712
    %8459 = vmatmul.f32.gmra.mxu0 %v8361
    %v8460 = vpop.f32.mrf.mxu0
    %v8461 = vadd.f32 0.0, %v8460
    %8462 = vdwg.mxu0
    %8463 = vmatpush.msra.mxu0 %v4960
    %8464 = vmatpush.msra.mxu0 %v4952
    %8465 = vmatpush.msra.mxu0 %v4944
    %8466 = vmatpush.msra.mxu0 %v4936
    %8467 = vmatpush.msra.mxu0 %v4928
    %8468 = vmatpush.msra.mxu0 %v4920
    %8469 = vmatpush.msra.mxu0 %v4912
    %8470 = vmatpush.msra.mxu0 %v4904
    %8471 = vmatpush.msra.mxu0 %v4896
    %8472 = vmatpush.msra.mxu0 %v4888
    %8473 = vmatpush.msra.mxu0 %v4880
    %8474 = vmatpush.msra.mxu0 %v4872
    %8475 = vmatpush.msra.mxu0 %v4864
    %8476 = vmatpush.msra.mxu0 %v4856
    %8477 = vmatpush.msra.mxu0 %v4848
    %8478 = vmatpush.msra.mxu0 %v4840
    %8479 = vmatmul.f32.gmra.mxu0 %v8362
    %v8480 = vpop.f32.mrf.mxu0
    %v8481 = vadd.f32 %v8461, %v8480
    %8482 = vdwg.mxu0
    %8483 = vmatpush.msra.mxu0 %v4833
    %8484 = vmatpush.msra.mxu0 %v4825
    %8485 = vmatpush.msra.mxu0 %v4817
    %8486 = vmatpush.msra.mxu0 %v4809
    %8487 = vmatpush.msra.mxu0 %v4801
    %8488 = vmatpush.msra.mxu0 %v4793
    %8489 = vmatpush.msra.mxu0 %v4785
    %8490 = vmatpush.msra.mxu0 %v4777
    %8491 = vmatpush.msra.mxu0 %v4769
    %8492 = vmatpush.msra.mxu0 %v4761
    %8493 = vmatpush.msra.mxu0 %v4753
    %8494 = vmatpush.msra.mxu0 %v4745
    %8495 = vmatpush.msra.mxu0 %v4737
    %8496 = vmatpush.msra.mxu0 %v4729
    %8497 = vmatpush.msra.mxu0 %v4721
    %8498 = vmatpush.msra.mxu0 %v4713
    %8499 = vmatmul.f32.gmra.mxu0 %v8361
    %v8500 = vpop.f32.mrf.mxu0
    %v8501 = vadd.f32 0.0, %v8500
    %8502 = vdwg.mxu0
    %8503 = vmatpush.msra.mxu0 %v4961
    %8504 = vmatpush.msra.mxu0 %v4953
    %8505 = vmatpush.msra.mxu0 %v4945
    %8506 = vmatpush.msra.mxu0 %v4937
    %8507 = vmatpush.msra.mxu0 %v4929
    %8508 = vmatpush.msra.mxu0 %v4921
    %8509 = vmatpush.msra.mxu0 %v4913
    %8510 = vmatpush.msra.mxu0 %v4905
    %8511 = vmatpush.msra.mxu0 %v4897
    %8512 = vmatpush.msra.mxu0 %v4889
    %8513 = vmatpush.msra.mxu0 %v4881
    %8514 = vmatpush.msra.mxu0 %v4873
    %8515 = vmatpush.msra.mxu0 %v4865
    %8516 = vmatpush.msra.mxu0 %v4857
    %8517 = vmatpush.msra.mxu0 %v4849
    %8518 = vmatpush.msra.mxu0 %v4841
    %8519 = vmatmul.f32.gmra.mxu0 %v8362
    %v8520 = vpop.f32.mrf.mxu0
    %v8521 = vadd.f32 %v8501, %v8520
    %8522 = vdwg.mxu0
    %8523 = vmatpush.msra.mxu0 %v4834
    %8524 = vmatpush.msra.mxu0 %v4826
    %8525 = vmatpush.msra.mxu0 %v4818
    %8526 = vmatpush.msra.mxu0 %v4810
    %8527 = vmatpush.msra.mxu0 %v4802
    %8528 = vmatpush.msra.mxu0 %v4794
    %8529 = vmatpush.msra.mxu0 %v4786
    %8530 = vmatpush.msra.mxu0 %v4778
    %8531 = vmatpush.msra.mxu0 %v4770
    %8532 = vmatpush.msra.mxu0 %v4762
    %8533 = vmatpush.msra.mxu0 %v4754
    %8534 = vmatpush.msra.mxu0 %v4746
    %8535 = vmatpush.msra.mxu0 %v4738
    %8536 = vmatpush.msra.mxu0 %v4730
    %8537 = vmatpush.msra.mxu0 %v4722
    %8538 = vmatpush.msra.mxu0 %v4714
    %8539 = vmatmul.f32.gmra.mxu0 %v8361
    %v8540 = vpop.f32.mrf.mxu0
    %v8541 = vadd.f32 0.0, %v8540
    %8542 = vdwg.mxu0
    %8543 = vmatpush.msra.mxu0 %v4962
    %8544 = vmatpush.msra.mxu0 %v4954
    %8545 = vmatpush.msra.mxu0 %v4946
    %8546 = vmatpush.msra.mxu0 %v4938
    %8547 = vmatpush.msra.mxu0 %v4930
    %8548 = vmatpush.msra.mxu0 %v4922
    %8549 = vmatpush.msra.mxu0 %v4914
    %8550 = vmatpush.msra.mxu0 %v4906
    %8551 = vmatpush.msra.mxu0 %v4898
    %8552 = vmatpush.msra.mxu0 %v4890
    %8553 = vmatpush.msra.mxu0 %v4882
    %8554 = vmatpush.msra.mxu0 %v4874
    %8555 = vmatpush.msra.mxu0 %v4866
    %8556 = vmatpush.msra.mxu0 %v4858
    %8557 = vmatpush.msra.mxu0 %v4850
    %8558 = vmatpush.msra.mxu0 %v4842
    %8559 = vmatmul.f32.gmra.mxu0 %v8362
    %v8560 = vpop.f32.mrf.mxu0
    %v8561 = vadd.f32 %v8541, %v8560
    %8562 = vdwg.mxu0
    %8563 = vmatpush.msra.mxu0 %v4835
    %8564 = vmatpush.msra.mxu0 %v4827
    %8565 = vmatpush.msra.mxu0 %v4819
    %8566 = vmatpush.msra.mxu0 %v4811
    %8567 = vmatpush.msra.mxu0 %v4803
    %8568 = vmatpush.msra.mxu0 %v4795
    %8569 = vmatpush.msra.mxu0 %v4787
    %8570 = vmatpush.msra.mxu0 %v4779
    %8571 = vmatpush.msra.mxu0 %v4771
    %8572 = vmatpush.msra.mxu0 %v4763
    %8573 = vmatpush.msra.mxu0 %v4755
    %8574 = vmatpush.msra.mxu0 %v4747
    %8575 = vmatpush.msra.mxu0 %v4739
    %8576 = vmatpush.msra.mxu0 %v4731
    %8577 = vmatpush.msra.mxu0 %v4723
    %8578 = vmatpush.msra.mxu0 %v4715
    %8579 = vmatmul.f32.gmra.mxu0 %v8361
    %v8580 = vpop.f32.mrf.mxu0
    %v8581 = vadd.f32 0.0, %v8580
    %8582 = vdwg.mxu0
    %8583 = vmatpush.msra.mxu0 %v4963
    %8584 = vmatpush.msra.mxu0 %v4955
    %8585 = vmatpush.msra.mxu0 %v4947
    %8586 = vmatpush.msra.mxu0 %v4939
    %8587 = vmatpush.msra.mxu0 %v4931
    %8588 = vmatpush.msra.mxu0 %v4923
    %8589 = vmatpush.msra.mxu0 %v4915
    %8590 = vmatpush.msra.mxu0 %v4907
    %8591 = vmatpush.msra.mxu0 %v4899
    %8592 = vmatpush.msra.mxu0 %v4891
    %8593 = vmatpush.msra.mxu0 %v4883
    %8594 = vmatpush.msra.mxu0 %v4875
    %8595 = vmatpush.msra.mxu0 %v4867
    %8596 = vmatpush.msra.mxu0 %v4859
    %8597 = vmatpush.msra.mxu0 %v4851
    %8598 = vmatpush.msra.mxu0 %v4843
    %8599 = vmatmul.f32.gmra.mxu0 %v8362
    %v8600 = vpop.f32.mrf.mxu0
    %v8601 = vadd.f32 %v8581, %v8600
    %8602 = vdwg.mxu0
    %8603 = vmatpush.msra.mxu0 %v4836
    %8604 = vmatpush.msra.mxu0 %v4828
    %8605 = vmatpush.msra.mxu0 %v4820
    %8606 = vmatpush.msra.mxu0 %v4812
    %8607 = vmatpush.msra.mxu0 %v4804
    %8608 = vmatpush.msra.mxu0 %v4796
    %8609 = vmatpush.msra.mxu0 %v4788
    %8610 = vmatpush.msra.mxu0 %v4780
    %8611 = vmatpush.msra.mxu0 %v4772
    %8612 = vmatpush.msra.mxu0 %v4764
    %8613 = vmatpush.msra.mxu0 %v4756
    %8614 = vmatpush.msra.mxu0 %v4748
    %8615 = vmatpush.msra.mxu0 %v4740
    %8616 = vmatpush.msra.mxu0 %v4732
    %8617 = vmatpush.msra.mxu0 %v4724
    %8618 = vmatpush.msra.mxu0 %v4716
    %8619 = vmatmul.f32.gmra.mxu0 %v8361
    %v8620 = vpop.f32.mrf.mxu0
    %v8621 = vadd.f32 0.0, %v8620
    %8622 = vdwg.mxu0
    %8623 = vmatpush.msra.mxu0 %v4964
    %8624 = vmatpush.msra.mxu0 %v4956
    %8625 = vmatpush.msra.mxu0 %v4948
    %8626 = vmatpush.msra.mxu0 %v4940
    %8627 = vmatpush.msra.mxu0 %v4932
    %8628 = vmatpush.msra.mxu0 %v4924
    %8629 = vmatpush.msra.mxu0 %v4916
    %8630 = vmatpush.msra.mxu0 %v4908
    %8631 = vmatpush.msra.mxu0 %v4900
    %8632 = vmatpush.msra.mxu0 %v4892
    %8633 = vmatpush.msra.mxu0 %v4884
    %8634 = vmatpush.msra.mxu0 %v4876
    %8635 = vmatpush.msra.mxu0 %v4868
    %8636 = vmatpush.msra.mxu0 %v4860
    %8637 = vmatpush.msra.mxu0 %v4852
    %8638 = vmatpush.msra.mxu0 %v4844
    %8639 = vmatmul.f32.gmra.mxu0 %v8362
    %v8640 = vpop.f32.mrf.mxu0
    %v8641 = vadd.f32 %v8621, %v8640
    %8642 = vdwg.mxu0
    %8643 = vmatpush.msra.mxu0 %v4837
    %8644 = vmatpush.msra.mxu0 %v4829
    %8645 = vmatpush.msra.mxu0 %v4821
    %8646 = vmatpush.msra.mxu0 %v4813
    %8647 = vmatpush.msra.mxu0 %v4805
    %8648 = vmatpush.msra.mxu0 %v4797
    %8649 = vmatpush.msra.mxu0 %v4789
    %8650 = vmatpush.msra.mxu0 %v4781
    %8651 = vmatpush.msra.mxu0 %v4773
    %8652 = vmatpush.msra.mxu0 %v4765
    %8653 = vmatpush.msra.mxu0 %v4757
    %8654 = vmatpush.msra.mxu0 %v4749
    %8655 = vmatpush.msra.mxu0 %v4741
    %8656 = vmatpush.msra.mxu0 %v4733
    %8657 = vmatpush.msra.mxu0 %v4725
    %8658 = vmatpush.msra.mxu0 %v4717
    %8659 = vmatmul.f32.gmra.mxu0 %v8361
    %v8660 = vpop.f32.mrf.mxu0
    %v8661 = vadd.f32 0.0, %v8660
    %8662 = vdwg.mxu0
    %8663 = vmatpush.msra.mxu0 %v4965
    %8664 = vmatpush.msra.mxu0 %v4957
    %8665 = vmatpush.msra.mxu0 %v4949
    %8666 = vmatpush.msra.mxu0 %v4941
    %8667 = vmatpush.msra.mxu0 %v4933
    %8668 = vmatpush.msra.mxu0 %v4925
    %8669 = vmatpush.msra.mxu0 %v4917
    %8670 = vmatpush.msra.mxu0 %v4909
    %8671 = vmatpush.msra.mxu0 %v4901
    %8672 = vmatpush.msra.mxu0 %v4893
    %8673 = vmatpush.msra.mxu0 %v4885
    %8674 = vmatpush.msra.mxu0 %v4877
    %8675 = vmatpush.msra.mxu0 %v4869
    %8676 = vmatpush.msra.mxu0 %v4861
    %8677 = vmatpush.msra.mxu0 %v4853
    %8678 = vmatpush.msra.mxu0 %v4845
    %8679 = vmatmul.f32.gmra.mxu0 %v8362
    %v8680 = vpop.f32.mrf.mxu0
    %v8681 = vadd.f32 %v8661, %v8680
    %8682 = vdwg.mxu0
    %v8683 = vadd.f32 %v5060, %v8401
    %v8684 = vadd.f32 %v5127, %v8441
    %v8685 = vadd.f32 %v5224, %v8481
    %v8686 = vadd.f32 %v5291, %v8521
    %v8687 = vadd.f32 %v5388, %v8561
    %v8688 = vadd.f32 %v5455, %v8601
    %v8689 = vadd.f32 %v5552, %v8641
    %v8690 = vadd.f32 %v5619, %v8681
    %v8691 = vxor.u32 %v8683, 2147483648
    %v8692 = vxor.u32 %v8684, 2147483648
    %v8693 = vxor.u32 %v8685, 2147483648
    %v8694 = vxor.u32 %v8686, 2147483648
    %v8695 = vxor.u32 %v8687, 2147483648
    %v8696 = vxor.u32 %v8688, 2147483648
    %v8697 = vmul.f32 %v8691, 1.442695
    %v8698 = vpow.pop %v8697
    %v8699 = vmul.f32 %v8692, 1.442695
    %v8700 = vpow.pop %v8699
    %v8701 = vmul.f32 %v8693, 1.442695
    %v8702 = vpow.pop %v8701
    %v8703 = vmul.f32 %v8694, 1.442695
    %v8704 = vpow.pop %v8703
    %v8705 = vmul.f32 %v8695, 1.442695
    %v8706 = vpow.pop %v8705
    %v8707 = vmul.f32 %v8696, 1.442695
    %v8708 = vpow.pop %v8707
    %v8709 = vadd.f32 %v8698, 1.0
    %v8710 = vadd.f32 %v8700, 1.0
    %v8711 = vadd.f32 %v8702, 1.0
    %v8712 = vadd.f32 %v8704, 1.0
    %v8713 = vadd.f32 %v8706, 1.0
    %v8714 = vadd.f32 %v8708, 1.0
    %v8715 = vrcp.pop %v8709
    %v8716 = vmul.f32 %v8709, %v8715
    %v8717 = vsub.f32 1.0, %v8716
    %v8718 = vmul.f32 %v8715, %v8717
    %v8719 = vadd.f32 %v8715, %v8718
    %vm8720 = vweird.f32 %v8709
    %vm8721 = vweird.f32 %v8715
    %vm8722 = vmor %vm8720, %vm8721
    %v8723 = vsel %vm8722, %v8715, %v8719
    %v8724 = vand.u32 2147483647, %v8709
    %vm8725 = vcmp.eq.f32.partialorder %v8724, 8.507059e+37
    %v8726 = vand.u32 %v8709, 2147483648
    %v8727 = vor.u32 1.1754944e-38, %v8726
    %v8728 = vsel %vm8725, %v8727, %v8723
    %v8729 = vmul.f32 1.0, %v8728
    %v8730 = vrcp.pop %v8710
    %v8731 = vmul.f32 %v8710, %v8730
    %v8732 = vsub.f32 1.0, %v8731
    %v8733 = vmul.f32 %v8730, %v8732
    %v8734 = vadd.f32 %v8730, %v8733
    %vm8735 = vweird.f32 %v8710
    %vm8736 = vweird.f32 %v8730
    %vm8737 = vmor %vm8735, %vm8736
    %v8738 = vsel %vm8737, %v8730, %v8734
    %v8739 = vand.u32 2147483647, %v8710
    %vm8740 = vcmp.eq.f32.partialorder %v8739, 8.507059e+37
    %v8741 = vand.u32 %v8710, 2147483648
    %v8742 = vor.u32 1.1754944e-38, %v8741
    %v8743 = vsel %vm8740, %v8742, %v8738
    %v8744 = vmul.f32 1.0, %v8743
    %v8745 = vrcp.pop %v8711
    %v8746 = vmul.f32 %v8711, %v8745
    %v8747 = vsub.f32 1.0, %v8746
    %v8748 = vmul.f32 %v8745, %v8747
    %v8749 = vadd.f32 %v8745, %v8748
    %vm8750 = vweird.f32 %v8711
    %vm8751 = vweird.f32 %v8745
    %vm8752 = vmor %vm8750, %vm8751
    %v8753 = vsel %vm8752, %v8745, %v8749
    %v8754 = vand.u32 2147483647, %v8711
    %vm8755 = vcmp.eq.f32.partialorder %v8754, 8.507059e+37
    %v8756 = vand.u32 %v8711, 2147483648
    %v8757 = vor.u32 1.1754944e-38, %v8756
    %v8758 = vsel %vm8755, %v8757, %v8753
    %v8759 = vmul.f32 1.0, %v8758
    %v8760 = vrcp.pop %v8712
    %v8761 = vmul.f32 %v8712, %v8760
    %v8762 = vsub.f32 1.0, %v8761
    %v8763 = vmul.f32 %v8760, %v8762
    %v8764 = vadd.f32 %v8760, %v8763
    %vm8765 = vweird.f32 %v8712
    %vm8766 = vweird.f32 %v8760
    %vm8767 = vmor %vm8765, %vm8766
    %v8768 = vsel %vm8767, %v8760, %v8764
    %v8769 = vand.u32 2147483647, %v8712
    %vm8770 = vcmp.eq.f32.partialorder %v8769, 8.507059e+37
    %v8771 = vand.u32 %v8712, 2147483648
    %v8772 = vor.u32 1.1754944e-38, %v8771
    %v8773 = vsel %vm8770, %v8772, %v8768
    %v8774 = vmul.f32 1.0, %v8773
    %v8775 = vrcp.pop %v8713
    %v8776 = vmul.f32 %v8713, %v8775
    %v8777 = vsub.f32 1.0, %v8776
    %v8778 = vmul.f32 %v8775, %v8777
    %v8779 = vadd.f32 %v8775, %v8778
    %vm8780 = vweird.f32 %v8713
    %vm8781 = vweird.f32 %v8775
    %vm8782 = vmor %vm8780, %vm8781
    %v8783 = vsel %vm8782, %v8775, %v8779
    %v8784 = vand.u32 2147483647, %v8713
    %vm8785 = vcmp.eq.f32.partialorder %v8784, 8.507059e+37
    %v8786 = vand.u32 %v8713, 2147483648
    %v8787 = vor.u32 1.1754944e-38, %v8786
    %v8788 = vsel %vm8785, %v8787, %v8783
    %v8789 = vmul.f32 1.0, %v8788
    %v8790 = vrcp.pop %v8714
    %v8791 = vmul.f32 %v8714, %v8790
    %v8792 = vsub.f32 1.0, %v8791
    %v8793 = vmul.f32 %v8790, %v8792
    %v8794 = vadd.f32 %v8790, %v8793
    %vm8795 = vweird.f32 %v8714
    %vm8796 = vweird.f32 %v8790
    %vm8797 = vmor %vm8795, %vm8796
    %v8798 = vsel %vm8797, %v8790, %v8794
    %v8799 = vand.u32 2147483647, %v8714
    %vm8800 = vcmp.eq.f32.partialorder %v8799, 8.507059e+37
    %v8801 = vand.u32 %v8714, 2147483648
    %v8802 = vor.u32 1.1754944e-38, %v8801
    %v8803 = vsel %vm8800, %v8802, %v8798
    %v8804 = vmul.f32 1.0, %v8803
    %v8805 = vtanh.pop %v8689
    %v8806 = vtanh.pop %v8690
    %v8807 = vmul.f32 %v8759, %v8357
    %v8808 = vmul.f32 %v8774, %v8358
    %v8809 = vmul.f32 %v8729, %v8805
    %v8810 = vmul.f32 %v8744, %v8806
    %v8811 = vadd.f32 %v8807, %v8809
    %v8812 = vadd.f32 %v8808, %v8810
    %v8813 = vtanh.pop %v8811
    %v8814 = vtanh.pop %v8812
    %v8815 = vmul.f32 %v8789, %v8813
    %v8816 = vmul.f32 %v8804, %v8814
    %8817 = vmatpush.msra.mxu0 %v4830
    %8818 = vmatpush.msra.mxu0 %v4822
    %8819 = vmatpush.msra.mxu0 %v4814
    %8820 = vmatpush.msra.mxu0 %v4806
    %8821 = vmatpush.msra.mxu0 %v4798
    %8822 = vmatpush.msra.mxu0 %v4790
    %8823 = vmatpush.msra.mxu0 %v4782
    %8824 = vmatpush.msra.mxu0 %v4774
    %8825 = vmatpush.msra.mxu0 %v4766
    %8826 = vmatpush.msra.mxu0 %v4758
    %8827 = vmatpush.msra.mxu0 %v4750
    %8828 = vmatpush.msra.mxu0 %v4742
    %8829 = vmatpush.msra.mxu0 %v4734
    %8830 = vmatpush.msra.mxu0 %v4726
    %8831 = vmatpush.msra.mxu0 %v4718
    %8832 = vmatpush.msra.mxu0 %v4710
    %8833 = vmatmul.f32.gmra.mxu0 %v8815
    %v8834 = vpop.f32.mrf.mxu0
    %v8835 = vadd.f32 0.0, %v8834
    %8836 = vdwg.mxu0
    %8837 = vmatpush.msra.mxu0 %v4958
    %8838 = vmatpush.msra.mxu0 %v4950
    %8839 = vmatpush.msra.mxu0 %v4942
    %8840 = vmatpush.msra.mxu0 %v4934
    %8841 = vmatpush.msra.mxu0 %v4926
    %8842 = vmatpush.msra.mxu0 %v4918
    %8843 = vmatpush.msra.mxu0 %v4910
    %8844 = vmatpush.msra.mxu0 %v4902
    %8845 = vmatpush.msra.mxu0 %v4894
    %8846 = vmatpush.msra.mxu0 %v4886
    %8847 = vmatpush.msra.mxu0 %v4878
    %8848 = vmatpush.msra.mxu0 %v4870
    %8849 = vmatpush.msra.mxu0 %v4862
    %8850 = vmatpush.msra.mxu0 %v4854
    %8851 = vmatpush.msra.mxu0 %v4846
    %8852 = vmatpush.msra.mxu0 %v4838
    %8853 = vmatmul.f32.gmra.mxu0 %v8816
    %v8854 = vpop.f32.mrf.mxu0
    %v8855 = vadd.f32 %v8835, %v8854
    %8856 = vdwg.mxu0
    %8857 = vmatpush.msra.mxu0 %v4831
    %8858 = vmatpush.msra.mxu0 %v4823
    %8859 = vmatpush.msra.mxu0 %v4815
    %8860 = vmatpush.msra.mxu0 %v4807
    %8861 = vmatpush.msra.mxu0 %v4799
    %8862 = vmatpush.msra.mxu0 %v4791
    %8863 = vmatpush.msra.mxu0 %v4783
    %8864 = vmatpush.msra.mxu0 %v4775
    %8865 = vmatpush.msra.mxu0 %v4767
    %8866 = vmatpush.msra.mxu0 %v4759
    %8867 = vmatpush.msra.mxu0 %v4751
    %8868 = vmatpush.msra.mxu0 %v4743
    %8869 = vmatpush.msra.mxu0 %v4735
    %8870 = vmatpush.msra.mxu0 %v4727
    %8871 = vmatpush.msra.mxu0 %v4719
    %8872 = vmatpush.msra.mxu0 %v4711
    %8873 = vmatmul.f32.gmra.mxu0 %v8815
    %v8874 = vpop.f32.mrf.mxu0
    %v8875 = vadd.f32 0.0, %v8874
    %8876 = vdwg.mxu0
    %8877 = vmatpush.msra.mxu0 %v4959
    %8878 = vmatpush.msra.mxu0 %v4951
    %8879 = vmatpush.msra.mxu0 %v4943
    %8880 = vmatpush.msra.mxu0 %v4935
    %8881 = vmatpush.msra.mxu0 %v4927
    %8882 = vmatpush.msra.mxu0 %v4919
    %8883 = vmatpush.msra.mxu0 %v4911
    %8884 = vmatpush.msra.mxu0 %v4903
    %8885 = vmatpush.msra.mxu0 %v4895
    %8886 = vmatpush.msra.mxu0 %v4887
    %8887 = vmatpush.msra.mxu0 %v4879
    %8888 = vmatpush.msra.mxu0 %v4871
    %8889 = vmatpush.msra.mxu0 %v4863
    %8890 = vmatpush.msra.mxu0 %v4855
    %8891 = vmatpush.msra.mxu0 %v4847
    %8892 = vmatpush.msra.mxu0 %v4839
    %8893 = vmatmul.f32.gmra.mxu0 %v8816
    %v8894 = vpop.f32.mrf.mxu0
    %v8895 = vadd.f32 %v8875, %v8894
    %8896 = vdwg.mxu0
    %8897 = vmatpush.msra.mxu0 %v4832
    %8898 = vmatpush.msra.mxu0 %v4824
    %8899 = vmatpush.msra.mxu0 %v4816
    %8900 = vmatpush.msra.mxu0 %v4808
    %8901 = vmatpush.msra.mxu0 %v4800
    %8902 = vmatpush.msra.mxu0 %v4792
    %8903 = vmatpush.msra.mxu0 %v4784
    %8904 = vmatpush.msra.mxu0 %v4776
    %8905 = vmatpush.msra.mxu0 %v4768
    %8906 = vmatpush.msra.mxu0 %v4760
    %8907 = vmatpush.msra.mxu0 %v4752
    %8908 = vmatpush.msra.mxu0 %v4744
    %8909 = vmatpush.msra.mxu0 %v4736
    %8910 = vmatpush.msra.mxu0 %v4728
    %8911 = vmatpush.msra.mxu0 %v4720
    %8912 = vmatpush.msra.mxu0 %v4712
    %8913 = vmatmul.f32.gmra.mxu0 %v8815
    %v8914 = vpop.f32.mrf.mxu0
    %v8915 = vadd.f32 0.0, %v8914
    %8916 = vdwg.mxu0
    %8917 = vmatpush.msra.mxu0 %v4960
    %8918 = vmatpush.msra.mxu0 %v4952
    %8919 = vmatpush.msra.mxu0 %v4944
    %8920 = vmatpush.msra.mxu0 %v4936
    %8921 = vmatpush.msra.mxu0 %v4928
    %8922 = vmatpush.msra.mxu0 %v4920
    %8923 = vmatpush.msra.mxu0 %v4912
    %8924 = vmatpush.msra.mxu0 %v4904
    %8925 = vmatpush.msra.mxu0 %v4896
    %8926 = vmatpush.msra.mxu0 %v4888
    %8927 = vmatpush.msra.mxu0 %v4880
    %8928 = vmatpush.msra.mxu0 %v4872
    %8929 = vmatpush.msra.mxu0 %v4864
    %8930 = vmatpush.msra.mxu0 %v4856
    %8931 = vmatpush.msra.mxu0 %v4848
    %8932 = vmatpush.msra.mxu0 %v4840
    %8933 = vmatmul.f32.gmra.mxu0 %v8816
    %v8934 = vpop.f32.mrf.mxu0
    %v8935 = vadd.f32 %v8915, %v8934
    %8936 = vdwg.mxu0
    %8937 = vmatpush.msra.mxu0 %v4833
    %8938 = vmatpush.msra.mxu0 %v4825
    %8939 = vmatpush.msra.mxu0 %v4817
    %8940 = vmatpush.msra.mxu0 %v4809
    %8941 = vmatpush.msra.mxu0 %v4801
    %8942 = vmatpush.msra.mxu0 %v4793
    %8943 = vmatpush.msra.mxu0 %v4785
    %8944 = vmatpush.msra.mxu0 %v4777
    %8945 = vmatpush.msra.mxu0 %v4769
    %8946 = vmatpush.msra.mxu0 %v4761
    %8947 = vmatpush.msra.mxu0 %v4753
    %8948 = vmatpush.msra.mxu0 %v4745
    %8949 = vmatpush.msra.mxu0 %v4737
    %8950 = vmatpush.msra.mxu0 %v4729
    %8951 = vmatpush.msra.mxu0 %v4721
    %8952 = vmatpush.msra.mxu0 %v4713
    %8953 = vmatmul.f32.gmra.mxu0 %v8815
    %v8954 = vpop.f32.mrf.mxu0
    %v8955 = vadd.f32 0.0, %v8954
    %8956 = vdwg.mxu0
    %8957 = vmatpush.msra.mxu0 %v4961
    %8958 = vmatpush.msra.mxu0 %v4953
    %8959 = vmatpush.msra.mxu0 %v4945
    %8960 = vmatpush.msra.mxu0 %v4937
    %8961 = vmatpush.msra.mxu0 %v4929
    %8962 = vmatpush.msra.mxu0 %v4921
    %8963 = vmatpush.msra.mxu0 %v4913
    %8964 = vmatpush.msra.mxu0 %v4905
    %8965 = vmatpush.msra.mxu0 %v4897
    %8966 = vmatpush.msra.mxu0 %v4889
    %8967 = vmatpush.msra.mxu0 %v4881
    %8968 = vmatpush.msra.mxu0 %v4873
    %8969 = vmatpush.msra.mxu0 %v4865
    %8970 = vmatpush.msra.mxu0 %v4857
    %8971 = vmatpush.msra.mxu0 %v4849
    %8972 = vmatpush.msra.mxu0 %v4841
    %8973 = vmatmul.f32.gmra.mxu0 %v8816
    %v8974 = vpop.f32.mrf.mxu0
    %v8975 = vadd.f32 %v8955, %v8974
    %8976 = vdwg.mxu0
    %8977 = vmatpush.msra.mxu0 %v4834
    %8978 = vmatpush.msra.mxu0 %v4826
    %8979 = vmatpush.msra.mxu0 %v4818
    %8980 = vmatpush.msra.mxu0 %v4810
    %8981 = vmatpush.msra.mxu0 %v4802
    %8982 = vmatpush.msra.mxu0 %v4794
    %8983 = vmatpush.msra.mxu0 %v4786
    %8984 = vmatpush.msra.mxu0 %v4778
    %8985 = vmatpush.msra.mxu0 %v4770
    %8986 = vmatpush.msra.mxu0 %v4762
    %8987 = vmatpush.msra.mxu0 %v4754
    %8988 = vmatpush.msra.mxu0 %v4746
    %8989 = vmatpush.msra.mxu0 %v4738
    %8990 = vmatpush.msra.mxu0 %v4730
    %8991 = vmatpush.msra.mxu0 %v4722
    %8992 = vmatpush.msra.mxu0 %v4714
    %8993 = vmatmul.f32.gmra.mxu0 %v8815
    %v8994 = vpop.f32.mrf.mxu0
    %v8995 = vadd.f32 0.0, %v8994
    %8996 = vdwg.mxu0
    %8997 = vmatpush.msra.mxu0 %v4962
    %8998 = vmatpush.msra.mxu0 %v4954
    %8999 = vmatpush.msra.mxu0 %v4946
    %9000 = vmatpush.msra.mxu0 %v4938
    %9001 = vmatpush.msra.mxu0 %v4930
    %9002 = vmatpush.msra.mxu0 %v4922
    %9003 = vmatpush.msra.mxu0 %v4914
    %9004 = vmatpush.msra.mxu0 %v4906
    %9005 = vmatpush.msra.mxu0 %v4898
    %9006 = vmatpush.msra.mxu0 %v4890
    %9007 = vmatpush.msra.mxu0 %v4882
    %9008 = vmatpush.msra.mxu0 %v4874
    %9009 = vmatpush.msra.mxu0 %v4866
    %9010 = vmatpush.msra.mxu0 %v4858
    %9011 = vmatpush.msra.mxu0 %v4850
    %9012 = vmatpush.msra.mxu0 %v4842
    %9013 = vmatmul.f32.gmra.mxu0 %v8816
    %v9014 = vpop.f32.mrf.mxu0
    %v9015 = vadd.f32 %v8995, %v9014
    %9016 = vdwg.mxu0
    %9017 = vmatpush.msra.mxu0 %v4835
    %9018 = vmatpush.msra.mxu0 %v4827
    %9019 = vmatpush.msra.mxu0 %v4819
    %9020 = vmatpush.msra.mxu0 %v4811
    %9021 = vmatpush.msra.mxu0 %v4803
    %9022 = vmatpush.msra.mxu0 %v4795
    %9023 = vmatpush.msra.mxu0 %v4787
    %9024 = vmatpush.msra.mxu0 %v4779
    %9025 = vmatpush.msra.mxu0 %v4771
    %9026 = vmatpush.msra.mxu0 %v4763
    %9027 = vmatpush.msra.mxu0 %v4755
    %9028 = vmatpush.msra.mxu0 %v4747
    %9029 = vmatpush.msra.mxu0 %v4739
    %9030 = vmatpush.msra.mxu0 %v4731
    %9031 = vmatpush.msra.mxu0 %v4723
    %9032 = vmatpush.msra.mxu0 %v4715
    %9033 = vmatmul.f32.gmra.mxu0 %v8815
    %v9034 = vpop.f32.mrf.mxu0
    %v9035 = vadd.f32 0.0, %v9034
    %9036 = vdwg.mxu0
    %9037 = vmatpush.msra.mxu0 %v4963
    %9038 = vmatpush.msra.mxu0 %v4955
    %9039 = vmatpush.msra.mxu0 %v4947
    %9040 = vmatpush.msra.mxu0 %v4939
    %9041 = vmatpush.msra.mxu0 %v4931
    %9042 = vmatpush.msra.mxu0 %v4923
    %9043 = vmatpush.msra.mxu0 %v4915
    %9044 = vmatpush.msra.mxu0 %v4907
    %9045 = vmatpush.msra.mxu0 %v4899
    %9046 = vmatpush.msra.mxu0 %v4891
    %9047 = vmatpush.msra.mxu0 %v4883
    %9048 = vmatpush.msra.mxu0 %v4875
    %9049 = vmatpush.msra.mxu0 %v4867
    %9050 = vmatpush.msra.mxu0 %v4859
    %9051 = vmatpush.msra.mxu0 %v4851
    %9052 = vmatpush.msra.mxu0 %v4843
    %9053 = vmatmul.f32.gmra.mxu0 %v8816
    %v9054 = vpop.f32.mrf.mxu0
    %v9055 = vadd.f32 %v9035, %v9054
    %9056 = vdwg.mxu0
    %9057 = vmatpush.msra.mxu0 %v4836
    %9058 = vmatpush.msra.mxu0 %v4828
    %9059 = vmatpush.msra.mxu0 %v4820
    %9060 = vmatpush.msra.mxu0 %v4812
    %9061 = vmatpush.msra.mxu0 %v4804
    %9062 = vmatpush.msra.mxu0 %v4796
    %9063 = vmatpush.msra.mxu0 %v4788
    %9064 = vmatpush.msra.mxu0 %v4780
    %9065 = vmatpush.msra.mxu0 %v4772
    %9066 = vmatpush.msra.mxu0 %v4764
    %9067 = vmatpush.msra.mxu0 %v4756
    %9068 = vmatpush.msra.mxu0 %v4748
    %9069 = vmatpush.msra.mxu0 %v4740
    %9070 = vmatpush.msra.mxu0 %v4732
    %9071 = vmatpush.msra.mxu0 %v4724
    %9072 = vmatpush.msra.mxu0 %v4716
    %9073 = vmatmul.f32.gmra.mxu0 %v8815
    %v9074 = vpop.f32.mrf.mxu0
    %v9075 = vadd.f32 0.0, %v9074
    %9076 = vdwg.mxu0
    %9077 = vmatpush.msra.mxu0 %v4964
    %9078 = vmatpush.msra.mxu0 %v4956
    %9079 = vmatpush.msra.mxu0 %v4948
    %9080 = vmatpush.msra.mxu0 %v4940
    %9081 = vmatpush.msra.mxu0 %v4932
    %9082 = vmatpush.msra.mxu0 %v4924
    %9083 = vmatpush.msra.mxu0 %v4916
    %9084 = vmatpush.msra.mxu0 %v4908
    %9085 = vmatpush.msra.mxu0 %v4900
    %9086 = vmatpush.msra.mxu0 %v4892
    %9087 = vmatpush.msra.mxu0 %v4884
    %9088 = vmatpush.msra.mxu0 %v4876
    %9089 = vmatpush.msra.mxu0 %v4868
    %9090 = vmatpush.msra.mxu0 %v4860
    %9091 = vmatpush.msra.mxu0 %v4852
    %9092 = vmatpush.msra.mxu0 %v4844
    %9093 = vmatmul.f32.gmra.mxu0 %v8816
    %v9094 = vpop.f32.mrf.mxu0
    %v9095 = vadd.f32 %v9075, %v9094
    %9096 = vdwg.mxu0
    %9097 = vmatpush.msra.mxu0 %v4837
    %9098 = vmatpush.msra.mxu0 %v4829
    %9099 = vmatpush.msra.mxu0 %v4821
    %9100 = vmatpush.msra.mxu0 %v4813
    %9101 = vmatpush.msra.mxu0 %v4805
    %9102 = vmatpush.msra.mxu0 %v4797
    %9103 = vmatpush.msra.mxu0 %v4789
    %9104 = vmatpush.msra.mxu0 %v4781
    %9105 = vmatpush.msra.mxu0 %v4773
    %9106 = vmatpush.msra.mxu0 %v4765
    %9107 = vmatpush.msra.mxu0 %v4757
    %9108 = vmatpush.msra.mxu0 %v4749
    %9109 = vmatpush.msra.mxu0 %v4741
    %9110 = vmatpush.msra.mxu0 %v4733
    %9111 = vmatpush.msra.mxu0 %v4725
    %9112 = vmatpush.msra.mxu0 %v4717
    %9113 = vmatmul.f32.gmra.mxu0 %v8815
    %v9114 = vpop.f32.mrf.mxu0
    %v9115 = vadd.f32 0.0, %v9114
    %9116 = vdwg.mxu0
    %9117 = vmatpush.msra.mxu0 %v4965
    %9118 = vmatpush.msra.mxu0 %v4957
    %9119 = vmatpush.msra.mxu0 %v4949
    %9120 = vmatpush.msra.mxu0 %v4941
    %9121 = vmatpush.msra.mxu0 %v4933
    %9122 = vmatpush.msra.mxu0 %v4925
    %9123 = vmatpush.msra.mxu0 %v4917
    %9124 = vmatpush.msra.mxu0 %v4909
    %9125 = vmatpush.msra.mxu0 %v4901
    %9126 = vmatpush.msra.mxu0 %v4893
    %9127 = vmatpush.msra.mxu0 %v4885
    %9128 = vmatpush.msra.mxu0 %v4877
    %9129 = vmatpush.msra.mxu0 %v4869
    %9130 = vmatpush.msra.mxu0 %v4861
    %9131 = vmatpush.msra.mxu0 %v4853
    %9132 = vmatpush.msra.mxu0 %v4845
    %9133 = vmatmul.f32.gmra.mxu0 %v8816
    %v9134 = vpop.f32.mrf.mxu0
    %v9135 = vadd.f32 %v9115, %v9134
    %9136 = vdwg.mxu0
    %v9137 = vadd.f32 %v5063, %v8855
    %v9138 = vadd.f32 %v5124, %v8895
    %v9139 = vadd.f32 %v5227, %v8935
    %v9140 = vadd.f32 %v5288, %v8975
    %v9141 = vadd.f32 %v5391, %v9015
    %v9142 = vadd.f32 %v5452, %v9055
    %v9143 = vadd.f32 %v5555, %v9095
    %v9144 = vadd.f32 %v5616, %v9135
    %v9145 = vxor.u32 %v9137, 2147483648
    %v9146 = vxor.u32 %v9138, 2147483648
    %v9147 = vxor.u32 %v9139, 2147483648
    %v9148 = vxor.u32 %v9140, 2147483648
    %v9149 = vxor.u32 %v9141, 2147483648
    %v9150 = vxor.u32 %v9142, 2147483648
    %v9151 = vmul.f32 %v9145, 1.442695
    %v9152 = vpow.pop %v9151
    %v9153 = vmul.f32 %v9146, 1.442695
    %v9154 = vpow.pop %v9153
    %v9155 = vmul.f32 %v9147, 1.442695
    %v9156 = vpow.pop %v9155
    %v9157 = vmul.f32 %v9148, 1.442695
    %v9158 = vpow.pop %v9157
    %v9159 = vmul.f32 %v9149, 1.442695
    %v9160 = vpow.pop %v9159
    %v9161 = vmul.f32 %v9150, 1.442695
    %v9162 = vpow.pop %v9161
    %v9163 = vadd.f32 %v9152, 1.0
    %v9164 = vadd.f32 %v9154, 1.0
    %v9165 = vadd.f32 %v9156, 1.0
    %v9166 = vadd.f32 %v9158, 1.0
    %v9167 = vadd.f32 %v9160, 1.0
    %v9168 = vadd.f32 %v9162, 1.0
    %v9169 = vrcp.pop %v9163
    %v9170 = vmul.f32 %v9163, %v9169
    %v9171 = vsub.f32 1.0, %v9170
    %v9172 = vmul.f32 %v9169, %v9171
    %v9173 = vadd.f32 %v9169, %v9172
    %vm9174 = vweird.f32 %v9163
    %vm9175 = vweird.f32 %v9169
    %vm9176 = vmor %vm9174, %vm9175
    %v9177 = vsel %vm9176, %v9169, %v9173
    %v9178 = vand.u32 2147483647, %v9163
    %vm9179 = vcmp.eq.f32.partialorder %v9178, 8.507059e+37
    %v9180 = vand.u32 %v9163, 2147483648
    %v9181 = vor.u32 1.1754944e-38, %v9180
    %v9182 = vsel %vm9179, %v9181, %v9177
    %v9183 = vmul.f32 1.0, %v9182
    %v9184 = vrcp.pop %v9164
    %v9185 = vmul.f32 %v9164, %v9184
    %v9186 = vsub.f32 1.0, %v9185
    %v9187 = vmul.f32 %v9184, %v9186
    %v9188 = vadd.f32 %v9184, %v9187
    %vm9189 = vweird.f32 %v9164
    %vm9190 = vweird.f32 %v9184
    %vm9191 = vmor %vm9189, %vm9190
    %v9192 = vsel %vm9191, %v9184, %v9188
    %v9193 = vand.u32 2147483647, %v9164
    %vm9194 = vcmp.eq.f32.partialorder %v9193, 8.507059e+37
    %v9195 = vand.u32 %v9164, 2147483648
    %v9196 = vor.u32 1.1754944e-38, %v9195
    %v9197 = vsel %vm9194, %v9196, %v9192
    %v9198 = vmul.f32 1.0, %v9197
    %v9199 = vrcp.pop %v9165
    %v9200 = vmul.f32 %v9165, %v9199
    %v9201 = vsub.f32 1.0, %v9200
    %v9202 = vmul.f32 %v9199, %v9201
    %v9203 = vadd.f32 %v9199, %v9202
    %vm9204 = vweird.f32 %v9165
    %vm9205 = vweird.f32 %v9199
    %vm9206 = vmor %vm9204, %vm9205
    %v9207 = vsel %vm9206, %v9199, %v9203
    %v9208 = vand.u32 2147483647, %v9165
    %vm9209 = vcmp.eq.f32.partialorder %v9208, 8.507059e+37
    %v9210 = vand.u32 %v9165, 2147483648
    %v9211 = vor.u32 1.1754944e-38, %v9210
    %v9212 = vsel %vm9209, %v9211, %v9207
    %v9213 = vmul.f32 1.0, %v9212
    %v9214 = vrcp.pop %v9166
    %v9215 = vmul.f32 %v9166, %v9214
    %v9216 = vsub.f32 1.0, %v9215
    %v9217 = vmul.f32 %v9214, %v9216
    %v9218 = vadd.f32 %v9214, %v9217
    %vm9219 = vweird.f32 %v9166
    %vm9220 = vweird.f32 %v9214
    %vm9221 = vmor %vm9219, %vm9220
    %v9222 = vsel %vm9221, %v9214, %v9218
    %v9223 = vand.u32 2147483647, %v9166
    %vm9224 = vcmp.eq.f32.partialorder %v9223, 8.507059e+37
    %v9225 = vand.u32 %v9166, 2147483648
    %v9226 = vor.u32 1.1754944e-38, %v9225
    %v9227 = vsel %vm9224, %v9226, %v9222
    %v9228 = vmul.f32 1.0, %v9227
    %v9229 = vrcp.pop %v9167
    %v9230 = vmul.f32 %v9167, %v9229
    %v9231 = vsub.f32 1.0, %v9230
    %v9232 = vmul.f32 %v9229, %v9231
    %v9233 = vadd.f32 %v9229, %v9232
    %vm9234 = vweird.f32 %v9167
    %vm9235 = vweird.f32 %v9229
    %vm9236 = vmor %vm9234, %vm9235
    %v9237 = vsel %vm9236, %v9229, %v9233
    %v9238 = vand.u32 2147483647, %v9167
    %vm9239 = vcmp.eq.f32.partialorder %v9238, 8.507059e+37
    %v9240 = vand.u32 %v9167, 2147483648
    %v9241 = vor.u32 1.1754944e-38, %v9240
    %v9242 = vsel %vm9239, %v9241, %v9237
    %v9243 = vmul.f32 1.0, %v9242
    %v9244 = vrcp.pop %v9168
    %v9245 = vmul.f32 %v9168, %v9244
    %v9246 = vsub.f32 1.0, %v9245
    %v9247 = vmul.f32 %v9244, %v9246
    %v9248 = vadd.f32 %v9244, %v9247
    %vm9249 = vweird.f32 %v9168
    %vm9250 = vweird.f32 %v9244
    %vm9251 = vmor %vm9249, %vm9250
    %v9252 = vsel %vm9251, %v9244, %v9248
    %v9253 = vand.u32 2147483647, %v9168
    %vm9254 = vcmp.eq.f32.partialorder %v9253, 8.507059e+37
    %v9255 = vand.u32 %v9168, 2147483648
    %v9256 = vor.u32 1.1754944e-38, %v9255
    %v9257 = vsel %vm9254, %v9256, %v9252
    %v9258 = vmul.f32 1.0, %v9257
    %v9259 = vtanh.pop %v9143
    %v9260 = vtanh.pop %v9144
    %v9261 = vmul.f32 %v9213, %v8811
    %v9262 = vmul.f32 %v9228, %v8812
    %v9263 = vmul.f32 %v9183, %v9259
    %v9264 = vmul.f32 %v9198, %v9260
    %v9265 = vadd.f32 %v9261, %v9263
    %v9266 = vadd.f32 %v9262, %v9264
    %v9267 = vtanh.pop %v9265
    %v9268 = vtanh.pop %v9266
    %v9269 = vmul.f32 %v9243, %v9267
    %v9270 = vmul.f32 %v9258, %v9268
    %v9271 = vadd.f32 %v6091, %v9269
    %v9272 = vadd.f32 %v9270, %v6092
    %v9273 = vld [vmem:[#allocation10] sm:$0xff]
    %v9274 = vld [vmem:[#allocation10 + $0x8] sm:$0xff]
    %v9275 = vld [vmem:[#allocation10 + $0x10] sm:$0xff]
    %v9276 = vld [vmem:[#allocation10 + $0x18] sm:$0xff]
    %v9277 = vld [vmem:[#allocation10 + $0x20] sm:$0xff]
    %v9278 = vld [vmem:[#allocation10 + $0x28] sm:$0xff]
    %v9279 = vld [vmem:[#allocation10 + $0x30] sm:$0xff]
    %v9280 = vld [vmem:[#allocation10 + $0x38] sm:$0xff]
    %v9281 = vld [vmem:[#allocation10 + $0x40] sm:$0xff]
    %v9282 = vld [vmem:[#allocation10 + $0x48] sm:$0xff]
    %v9283 = vld [vmem:[#allocation10 + $0x50] sm:$0xff]
    %v9284 = vld [vmem:[#allocation10 + $0x58] sm:$0xff]
    %v9285 = vld [vmem:[#allocation10 + $0x60] sm:$0xff]
    %v9286 = vld [vmem:[#allocation10 + $0x68] sm:$0xff]
    %v9287 = vld [vmem:[#allocation10 + $0x70] sm:$0xff]
    %v9288 = vld [vmem:[#allocation10 + $0x78] sm:$0xff]
    %v9289 = vld [vmem:[#allocation10 + $0x80] sm:$0xff]
    %v9290 = vld [vmem:[#allocation10 + $0x88] sm:$0xff]
    %v9291 = vld [vmem:[#allocation10 + $0x90] sm:$0xff]
    %v9292 = vld [vmem:[#allocation10 + $0x98] sm:$0xff]
    %v9293 = vld [vmem:[#allocation10 + $0xa0] sm:$0xff]
    %v9294 = vld [vmem:[#allocation10 + $0xa8] sm:$0xff]
    %v9295 = vld [vmem:[#allocation10 + $0xb0] sm:$0xff]
    %v9296 = vld [vmem:[#allocation10 + $0xb8] sm:$0xff]
    %v9297 = vld [vmem:[#allocation10 + $0xc0] sm:$0xff]
    %v9298 = vld [vmem:[#allocation10 + $0xc8] sm:$0xff]
    %v9299 = vld [vmem:[#allocation10 + $0xd0] sm:$0xff]
    %v9300 = vld [vmem:[#allocation10 + $0xd8] sm:$0xff]
    %v9301 = vld [vmem:[#allocation10 + $0xe0] sm:$0xff]
    %v9302 = vld [vmem:[#allocation10 + $0xe8] sm:$0xff]
    %v9303 = vld [vmem:[#allocation10 + $0xf0] sm:$0xff]
    %v9304 = vld [vmem:[#allocation10 + $0xf8] sm:$0xff]
    %v9305 = vld [vmem:[%s8] sm:$0x1]
    %v9307 = vperm.slane %v9305, 0
    %9309 = vmatpush.msra.mxu0 %v9288
    %9310 = vmatpush.msra.mxu0 %v9287
    %9311 = vmatpush.msra.mxu0 %v9286
    %9312 = vmatpush.msra.mxu0 %v9285
    %9313 = vmatpush.msra.mxu0 %v9284
    %9314 = vmatpush.msra.mxu0 %v9283
    %9315 = vmatpush.msra.mxu0 %v9282
    %9316 = vmatpush.msra.mxu0 %v9281
    %9317 = vmatpush.msra.mxu0 %v9280
    %9318 = vmatpush.msra.mxu0 %v9279
    %9319 = vmatpush.msra.mxu0 %v9278
    %9320 = vmatpush.msra.mxu0 %v9277
    %9321 = vmatpush.msra.mxu0 %v9276
    %9322 = vmatpush.msra.mxu0 %v9275
    %9323 = vmatpush.msra.mxu0 %v9274
    %9324 = vmatpush.msra.mxu0 %v9273
    %9325 = vmatmul.f32.gmra.mxu0 %v9271
    %v9326 = vpop.f32.mrf.mxu0
    %v9327 = vadd.f32 %v9307, %v9326
    %9328 = vdwg.mxu0
    %9329 = vmatpush.msra.mxu0 %v9304
    %9330 = vmatpush.msra.mxu0 %v9303
    %9331 = vmatpush.msra.mxu0 %v9302
    %9332 = vmatpush.msra.mxu0 %v9301
    %9333 = vmatpush.msra.mxu0 %v9300
    %9334 = vmatpush.msra.mxu0 %v9299
    %9335 = vmatpush.msra.mxu0 %v9298
    %9336 = vmatpush.msra.mxu0 %v9297
    %9337 = vmatpush.msra.mxu0 %v9296
    %9338 = vmatpush.msra.mxu0 %v9295
    %9339 = vmatpush.msra.mxu0 %v9294
    %9340 = vmatpush.msra.mxu0 %v9293
    %9341 = vmatpush.msra.mxu0 %v9292
    %9342 = vmatpush.msra.mxu0 %v9291
    %9343 = vmatpush.msra.mxu0 %v9290
    %9344 = vmatpush.msra.mxu0 %v9289
    %9345 = vmatmul.f32.gmra.mxu0 %v9272
    %v9346 = vpop.f32.mrf.mxu0
    %v9347 = vadd.f32 %v9327, %v9346
    %9348 = vdwg.mxu0
    %v9349 = vmax.f32 %v9347, 0.0
    %v9350 = vld [vmem:[#allocation11] sm:$0xff]
    %v9351 = vld [vmem:[#allocation11 + $0x8] sm:$0xff]
    %v9352 = vld [vmem:[#allocation11 + $0x10] sm:$0xff]
    %v9353 = vld [vmem:[#allocation11 + $0x18] sm:$0xff]
    %v9354 = vld [vmem:[#allocation11 + $0x20] sm:$0xff]
    %v9355 = vld [vmem:[#allocation11 + $0x28] sm:$0xff]
    %v9356 = vld [vmem:[#allocation11 + $0x30] sm:$0xff]
    %v9357 = vld [vmem:[#allocation11 + $0x38] sm:$0xff]
    %v9358 = vld [vmem:[#allocation11 + $0x40] sm:$0xff]
    %v9359 = vld [vmem:[#allocation11 + $0x48] sm:$0xff]
    %v9360 = vld [vmem:[#allocation11 + $0x50] sm:$0xff]
    %v9361 = vld [vmem:[#allocation11 + $0x58] sm:$0xff]
    %v9362 = vld [vmem:[#allocation11 + $0x60] sm:$0xff]
    %v9363 = vld [vmem:[#allocation11 + $0x68] sm:$0xff]
    %v9364 = vld [vmem:[#allocation11 + $0x70] sm:$0xff]
    %v9365 = vld [vmem:[#allocation11 + $0x78] sm:$0xff]
    %v9366 = vld [vmem:[#allocation11 + $0x80] sm:$0xff]
    %v9367 = vld [vmem:[#allocation11 + $0x88] sm:$0xff]
    %v9368 = vld [vmem:[#allocation11 + $0x90] sm:$0xff]
    %v9369 = vld [vmem:[#allocation11 + $0x98] sm:$0xff]
    %v9370 = vld [vmem:[#allocation11 + $0xa0] sm:$0xff]
    %v9371 = vld [vmem:[#allocation11 + $0xa8] sm:$0xff]
    %v9372 = vld [vmem:[#allocation11 + $0xb0] sm:$0xff]
    %v9373 = vld [vmem:[#allocation11 + $0xb8] sm:$0xff]
    %v9374 = vld [vmem:[#allocation11 + $0xc0] sm:$0xff]
    %v9375 = vld [vmem:[#allocation11 + $0xc8] sm:$0xff]
    %v9376 = vld [vmem:[#allocation11 + $0xd0] sm:$0xff]
    %v9377 = vld [vmem:[#allocation11 + $0xd8] sm:$0xff]
    %v9378 = vld [vmem:[#allocation11 + $0xe0] sm:$0xff]
    %v9379 = vld [vmem:[#allocation11 + $0xe8] sm:$0xff]
    %v9380 = vld [vmem:[#allocation11 + $0xf0] sm:$0xff]
    %v9381 = vld [vmem:[#allocation11 + $0xf8] sm:$0xff]
    %v9382 = vld [vmem:[%s10] sm:$0x3]
    %v9384 = vperm.slane %v9382, 0
    %v9385 = vperm.slane %v9382, 1
    %9388 = vmatpush.msra.mxu0 %v9380
    %9389 = vmatpush.msra.mxu0 %v9378
    %9390 = vmatpush.msra.mxu0 %v9376
    %9391 = vmatpush.msra.mxu0 %v9374
    %9392 = vmatpush.msra.mxu0 %v9372
    %9393 = vmatpush.msra.mxu0 %v9370
    %9394 = vmatpush.msra.mxu0 %v9368
    %9395 = vmatpush.msra.mxu0 %v9366
    %9396 = vmatpush.msra.mxu0 %v9364
    %9397 = vmatpush.msra.mxu0 %v9362
    %9398 = vmatpush.msra.mxu0 %v9360
    %9399 = vmatpush.msra.mxu0 %v9358
    %9400 = vmatpush.msra.mxu0 %v9356
    %9401 = vmatpush.msra.mxu0 %v9354
    %9402 = vmatpush.msra.mxu0 %v9352
    %9403 = vmatpush.msra.mxu0 %v9350
    %9404 = vmatmul.f32.gmra.mxu0 %v9349
    %v9405 = vpop.f32.mrf.mxu0
    %v9406 = vadd.f32 %v9384, %v9405
    %9407 = vdwg.mxu0
    %9408 = vmatpush.msra.mxu0 %v9381
    %9409 = vmatpush.msra.mxu0 %v9379
    %9410 = vmatpush.msra.mxu0 %v9377
    %9411 = vmatpush.msra.mxu0 %v9375
    %9412 = vmatpush.msra.mxu0 %v9373
    %9413 = vmatpush.msra.mxu0 %v9371
    %9414 = vmatpush.msra.mxu0 %v9369
    %9415 = vmatpush.msra.mxu0 %v9367
    %9416 = vmatpush.msra.mxu0 %v9365
    %9417 = vmatpush.msra.mxu0 %v9363
    %9418 = vmatpush.msra.mxu0 %v9361
    %9419 = vmatpush.msra.mxu0 %v9359
    %9420 = vmatpush.msra.mxu0 %v9357
    %9421 = vmatpush.msra.mxu0 %v9355
    %9422 = vmatpush.msra.mxu0 %v9353
    %9423 = vmatpush.msra.mxu0 %v9351
    %9424 = vmatmul.f32.gmra.mxu0 %v9349
    %v9425 = vpop.f32.mrf.mxu0
    %v9426 = vadd.f32 %v9385, %v9425
    %9427 = vdwg.mxu0
    %v9428 = vmax.f32 %v9406, 0.0
    %v9429 = vmax.f32 %v9426, 0.0
    %v9430 = vld [vmem:[#allocation13] sm:$0xff]
    %v9431 = vld [vmem:[#allocation13 + $0x8] sm:$0xff]
    %v9432 = vld [vmem:[#allocation13 + $0x10] sm:$0xff]
    %v9433 = vld [vmem:[#allocation13 + $0x18] sm:$0xff]
    %v9434 = vld [vmem:[#allocation13 + $0x20] sm:$0xff]
    %v9435 = vld [vmem:[#allocation13 + $0x28] sm:$0xff]
    %v9436 = vld [vmem:[#allocation13 + $0x30] sm:$0xff]
    %v9437 = vld [vmem:[#allocation13 + $0x38] sm:$0xff]
    %v9438 = vld [vmem:[#allocation13 + $0x40] sm:$0xff]
    %v9439 = vld [vmem:[#allocation13 + $0x48] sm:$0xff]
    %v9440 = vld [vmem:[#allocation13 + $0x50] sm:$0xff]
    %v9441 = vld [vmem:[#allocation13 + $0x58] sm:$0xff]
    %v9442 = vld [vmem:[#allocation13 + $0x60] sm:$0xff]
    %v9443 = vld [vmem:[#allocation13 + $0x68] sm:$0xff]
    %v9444 = vld [vmem:[#allocation13 + $0x70] sm:$0xff]
    %v9445 = vld [vmem:[#allocation13 + $0x78] sm:$0xff]
    %v9446 = vld [vmem:[#allocation13 + $0x80] sm:$0xff]
    %v9447 = vld [vmem:[#allocation13 + $0x88] sm:$0xff]
    %v9448 = vld [vmem:[#allocation13 + $0x90] sm:$0xff]
    %v9449 = vld [vmem:[#allocation13 + $0x98] sm:$0xff]
    %v9450 = vld [vmem:[#allocation13 + $0xa0] sm:$0xff]
    %v9451 = vld [vmem:[#allocation13 + $0xa8] sm:$0xff]
    %v9452 = vld [vmem:[#allocation13 + $0xb0] sm:$0xff]
    %v9453 = vld [vmem:[#allocation13 + $0xb8] sm:$0xff]
    %v9454 = vld [vmem:[#allocation13 + $0xc0] sm:$0xff]
    %v9455 = vld [vmem:[#allocation13 + $0xc8] sm:$0xff]
    %v9456 = vld [vmem:[#allocation13 + $0xd0] sm:$0xff]
    %v9457 = vld [vmem:[#allocation13 + $0xd8] sm:$0xff]
    %v9458 = vld [vmem:[#allocation13 + $0xe0] sm:$0xff]
    %v9459 = vld [vmem:[#allocation13 + $0xe8] sm:$0xff]
    %v9460 = vld [vmem:[#allocation13 + $0xf0] sm:$0xff]
    %v9461 = vld [vmem:[#allocation13 + $0xf8] sm:$0xff]
    %v9462 = vld [vmem:[%s12] sm:$0x1]
    %v9464 = vperm.slane %v9462, 0
    %9466 = vmatpush.msra.mxu0 %v9445
    %9467 = vmatpush.msra.mxu0 %v9444
    %9468 = vmatpush.msra.mxu0 %v9443
    %9469 = vmatpush.msra.mxu0 %v9442
    %9470 = vmatpush.msra.mxu0 %v9441
    %9471 = vmatpush.msra.mxu0 %v9440
    %9472 = vmatpush.msra.mxu0 %v9439
    %9473 = vmatpush.msra.mxu0 %v9438
    %9474 = vmatpush.msra.mxu0 %v9437
    %9475 = vmatpush.msra.mxu0 %v9436
    %9476 = vmatpush.msra.mxu0 %v9435
    %9477 = vmatpush.msra.mxu0 %v9434
    %9478 = vmatpush.msra.mxu0 %v9433
    %9479 = vmatpush.msra.mxu0 %v9432
    %9480 = vmatpush.msra.mxu0 %v9431
    %9481 = vmatpush.msra.mxu0 %v9430
    %9482 = vmatmul.f32.gmra.mxu0 %v9428
    %v9483 = vpop.f32.mrf.mxu0
    %v9484 = vadd.f32 %v9464, %v9483
    %9485 = vdwg.mxu0
    %9486 = vmatpush.msra.mxu0 %v9461
    %9487 = vmatpush.msra.mxu0 %v9460
    %9488 = vmatpush.msra.mxu0 %v9459
    %9489 = vmatpush.msra.mxu0 %v9458
    %9490 = vmatpush.msra.mxu0 %v9457
    %9491 = vmatpush.msra.mxu0 %v9456
    %9492 = vmatpush.msra.mxu0 %v9455
    %9493 = vmatpush.msra.mxu0 %v9454
    %9494 = vmatpush.msra.mxu0 %v9453
    %9495 = vmatpush.msra.mxu0 %v9452
    %9496 = vmatpush.msra.mxu0 %v9451
    %9497 = vmatpush.msra.mxu0 %v9450
    %9498 = vmatpush.msra.mxu0 %v9449
    %9499 = vmatpush.msra.mxu0 %v9448
    %9500 = vmatpush.msra.mxu0 %v9447
    %9501 = vmatpush.msra.mxu0 %v9446
    %9502 = vmatmul.f32.gmra.mxu0 %v9429
    %v9503 = vpop.f32.mrf.mxu0
    %v9504 = vadd.f32 %v9484, %v9503
    %9505 = vdwg.mxu0
    %9506 = vst [vmem:[#allocation14] sm:$0xff] %v9504
    // Predicated region
    $region82: #{tpu_custom_call.1} parent=1 // pred_check
      _
    $region83: #{tpu_custom_call.1} parent=1 // pred_check_branch
      %9508 = sbr.rel (0) target = $region85
    $region84: #{tpu_custom_call.1} parent=1 // pred_region
      %9510 = vsyncadd [#allocation4], 0
      %s9512 = sshll.u32 [#allocation14], 4
      %s9513 = int_to_ptr.vmem [resolvable:$true] %s9512
      %s9514 = sshll.u32 %s13, 4
      %s9515 = int_to_ptr.hbm [resolvable:$true] %s9514
      %9517 = dma.vmem_to_hbm [thread:$0]  %s9513, 128, %s9515, [#allocation4]
    $region85: #{tpu_custom_call.1} parent=1 // pred_fallthru
      _
    // Predicated region
    $region86: #{tpu_custom_call.1} parent=1 // pred_check
      _
    $region87: #{tpu_custom_call.1} parent=1 // pred_check_branch
      %9519 = sbr.rel (0) target = $region89
    $region88: #{tpu_custom_call.1} parent=1 // pred_region
      %9521 = dma.done [#allocation4], 128
    $region89: #{tpu_custom_call.1} parent=1 // pred_fallthru
      _
    %9522 = vsyncpa [#allocation3], 1
    %9523 = vsyncpa [#allocation6], 1
    %9524 = vsyncpa [#allocation9], 1
    %9525 = vsyncpa [#allocation12], 1
    %9526 = vsyncpa [#allocation4], 1

</llo_original>
